<compile_context>
chip_gen: v6e
topology: v6e:2x2x1
jax: 0.10.0
libtpu: 0.0.40
codegen_flags: <defaults>
</compile_context>

<pallas_src>
import jax
import jax.numpy as jnp
from jax.experimental import pallas as pl
from jax.experimental.pallas import tpu as pltpu


def _round_up(v, m):
    return (v + m - 1) // m * m


def convgru_kernel(h_ref, x_ref, wm_ref, bm_ref, wqh_ref, out_ref,
                   hxp_ref, patch_ref, rhp_ref, qpatch_ref):
    """One (batch, H-tile) step of the ConvGRU update."""
    _, TH, W, Cd = h_ref.shape
    Ci_p = x_ref.shape[3]
    Cin_p = Cd + Ci_p                       # lane-padded input channels
    cdt = hxp_ref.dtype                     # MXU operand dtype (bf16)

    h = h_ref[0]                            # (TH, W, Cd) f32
    h_flat = h.reshape(TH * W, Cd)

    # ---- width-padded [h | x] buffer (pad = 2 each side of W), bf16 ---------
    hxp_ref[:, :2, :] = jnp.zeros((TH, 2, Cin_p), cdt)
    hxp_ref[:, W + 2:, :] = jnp.zeros((TH, 2, Cin_p), cdt)
    hxp_ref[:, 2:W + 2, :Cd] = h.astype(cdt)
    hxp_ref[:, 2:W + 2, Cd:] = x_ref[0]     # already bf16 + lane-padded

    # ---- im2col: 5 lane-slab writes, then ONE deep-K MXU matmul -------------
    for k in range(5):                      # static unroll over the taps
        patch_ref[:, :, k * Cin_p:(k + 1) * Cin_p] = hxp_ref[:, k:k + W, :]
    patch = patch_ref[...].reshape(TH * W, 5 * Cin_p)
    gates = jnp.dot(patch, wm_ref[...], preferred_element_type=jnp.float32)
    gates = gates + bm_ref[...]             # fused bias [bz | br | bq], f32

    z = jax.nn.sigmoid(gates[:, :Cd])       # (TH*W, Cd) f32
    r = jax.nn.sigmoid(gates[:, Cd:2 * Cd])
    q_acc = gates[:, 2 * Cd:]               # x-contribution of q (+ bq)

    # ---- correction conv: q's h-term = conv(r*h, Wq_h), also via im2col -----
    rh = (r * h_flat).reshape(TH, W, Cd).astype(cdt)
    rhp_ref[:, :2, :] = jnp.zeros((TH, 2, Cd), cdt)
    rhp_ref[:, W + 2:, :] = jnp.zeros((TH, 2, Cd), cdt)
    rhp_ref[:, 2:W + 2, :] = rh
    for k in range(5):
        qpatch_ref[:, :, k * Cd:(k + 1) * Cd] = rhp_ref[:, k:k + W, :]
    qpatch = qpatch_ref[...].reshape(TH * W, 5 * Cd)
    q_acc = q_acc + jnp.dot(qpatch, wqh_ref[...],
                            preferred_element_type=jnp.float32)
    q = jnp.tanh(q_acc)

    # ---- GRU blend in f32; lane-dense (Cd multiple of 128) store ------------
    out = (1.0 - z) * h_flat + z * q
    out_ref[0] = out.reshape(TH, W, Cd).astype(out_ref.dtype)


def prepare_convgru_params(params, compute_dtype=jnp.bfloat16):
    """One-time gate-conv fusion (hoisted out of the per-call path).

    Returns the stacked im2col weight [Wz | Wr | Wq(x-rows only)] with its K
    dimension zero-padded from Cin to Cd + round_up(Ci, 128), the fused bias,
    and the h-rows of Wq used by the in-kernel r*h correction conv.
    """
    wz, wr, wq = params["wz"], params["wr"], params["wq"]   # (5, Cin, Cd)
    _, Cin, Cd = wq.shape
    Ci = Cin - Cd
    Ci_p = _round_up(Ci, 128)
    Cin_p = Cd + Ci_p

    # q's h-rows are zeroed here; the h-term (which needs r) is added in-kernel
    # by the small correction conv over r*h.
    wq_x_only = wq.at[:, :Cd, :].set(0.0)
    w_main = jnp.concatenate([wz, wr, wq_x_only], axis=-1)   # (5, Cin, 3Cd)
    w_main = jnp.pad(w_main, ((0, 0), (0, Cin_p - Cin), (0, 0)))
    w_main = w_main.reshape(5 * Cin_p, 3 * Cd).astype(compute_dtype)

    b_main = jnp.concatenate(
        [params["bz"], params["br"], params["bq"]], axis=-1
    ).reshape(1, 3 * Cd).astype(jnp.float32)

    wq_h = wq[:, :Cd, :].reshape(5 * Cd, Cd).astype(compute_dtype)

    return {"w_main": w_main, "b_main": b_main, "wq_h": wq_h,
            "Cd": Cd, "Ci": Ci, "Ci_p": Ci_p}


def convgru_pallas(h_nhwc, x_nhwc, fused, *, tile_h=8,
                   compute_dtype=jnp.bfloat16):
    B, H, W, Cd = h_nhwc.shape
    assert Cd == fused["Cd"] and x_nhwc.shape[-1] == fused["Ci"]
    assert Cd % 128 == 0, "hidden_dim must be a multiple of 128 (lane-dense)"
    assert W % 8 == 0, "W must be a multiple of 8 for free (TH*W) reshapes"
    tile_h = min(tile_h, H)
    assert H % tile_h == 0, "H must be divisible by tile_h"
    Ci_p = fused["Ci_p"]
    Cin_p = Cd + Ci_p

    # x is only ever an MXU operand: cast to bf16 and lane-pad (320 -> 384
    # channels) wrapper-side so every in-kernel copy is lane-dense.
    x_pad = jnp.pad(x_nhwc, ((0, 0), (0, 0), (0, 0), (0, Ci_p - fused["Ci"])))
    x_pad = x_pad.astype(compute_dtype)

    img = lambda C: pl.BlockSpec((1, tile_h, W, C), lambda b, t: (b, t, 0, 0))
    const2d = lambda shape: pl.BlockSpec(shape, lambda b, t: (0, 0))

    return pl.pallas_call(
        convgru_kernel,
        out_shape=jax.ShapeDtypeStruct((B, H, W, Cd), h_nhwc.dtype),
        grid_spec=pltpu.PrefetchScalarGridSpec(
            num_scalar_prefetch=0,
            grid=(B, H // tile_h),
            in_specs=[
                img(Cd),                                # h (f32)
                img(Ci_p),                              # x (bf16, lane-padded)
                const2d((5 * Cin_p, 3 * Cd)),           # fused gate weight
                const2d((1, 3 * Cd)),                   # fused gate bias
                const2d((5 * Cd, Cd)),                  # Wq h-rows
            ],
            out_specs=img(Cd),
            scratch_shapes=[
                pltpu.VMEM((tile_h, W + 4, Cin_p), compute_dtype),  # padded [h,x]
                pltpu.VMEM((tile_h, W, 5 * Cin_p), compute_dtype),  # im2col main
                pltpu.VMEM((tile_h, W + 4, Cd), compute_dtype),     # padded r*h
                pltpu.VMEM((tile_h, W, 5 * Cd), compute_dtype),     # im2col corr
            ],
        ),
        compiler_params=pltpu.CompilerParams(
            dimension_semantics=("parallel", "parallel"),
            vmem_limit_bytes=32 * 1024 * 1024),
    )(h_nhwc, x_pad, fused["w_main"], fused["b_main"], fused["wq_h"])


# ----------------------------- pure-JAX reference -----------------------------
def _conv1x5_ref(inp, w, b):
    # inp: (B,H,W,C); w: (5, Cin, Cout) -> HWIO (1,5,Cin,Cout); pad (0,2).
    out = jax.lax.conv_general_dilated(
        inp, w[None], window_strides=(1, 1), padding=((0, 0), (2, 2)),
        dimension_numbers=("NHWC", "HWIO", "NHWC"),
        preferred_element_type=jnp.float32)
    return out + b.reshape(1, 1, 1, -1)


def convgru_ref(h, x, params, conv_dtype=jnp.float32):
    cd = conv_dtype
    hc, xc = h.astype(cd), x.astype(cd)
    hx = jnp.concatenate([hc, xc], axis=-1)
    z = jax.nn.sigmoid(_conv1x5_ref(hx, params["wz"].astype(cd), params["bz"]))
    r = jax.nn.sigmoid(_conv1x5_ref(hx, params["wr"].astype(cd), params["br"]))
    rhx = jnp.concatenate([(r * h).astype(cd), xc], axis=-1)
    q = jnp.tanh(_conv1x5_ref(rhx, params["wq"].astype(cd), params["bq"]))
    return (1.0 - z) * h + z * q


if __name__ == "__main__":
    # Module defaults: hidden_dim=128, input_dim=192+128=320; small spatial dims.
    B, H, W = 2, 16, 16
    Cd, Ci = 128, 192 + 128
    Cin = Cd + Ci

    key = jax.random.PRNGKey(0)
    ks = jax.random.split(key, 8)

    # Inputs in PyTorch NCHW convention.
    h_nchw = jax.random.normal(ks[0], (B, Cd, H, W), jnp.float32)
    x_nchw = jax.random.normal(ks[1], (B, Ci, H, W), jnp.float32)

    # PyTorch Conv2d weight is OIHW = (Cd, Cin, 1, 5); convert -> (5, Cin, Cd).
    def init_conv(kw_key, kb_key):
        w_oihw = 0.05 * jax.random.normal(kw_key, (Cd, Cin, 1, 5), jnp.float32)
        b = 0.05 * jax.random.normal(kb_key, (Cd,), jnp.float32)
        return jnp.transpose(w_oihw[:, :, 0, :], (2, 1, 0)), b.reshape(1, Cd)

    params = {}
    params["wz"], params["bz"] = init_conv(ks[2], ks[3])
    params["wr"], params["br"] = init_conv(ks[4], ks[5])
    params["wq"], params["bq"] = init_conv(ks[6], ks[7])

    # Weight fusion hoisted: computed once, reused for every forward call.
    fused = prepare_convgru_params(params, compute_dtype=jnp.bfloat16)

    # NCHW -> NHWC for the kernel.
    h = jnp.transpose(h_nchw, (0, 2, 3, 1))
    x = jnp.transpose(x_nchw, (0, 2, 3, 1))

    out = convgru_pallas(h, x, fused, tile_h=8)
    out = jax.block_until_ready(out)
    out_nchw = jnp.transpose(out, (0, 3, 1, 2))        # back to PyTorch layout
    assert out_nchw.shape == (B, Cd, H, W)

    # Primary check: matched-precision reference (bf16 conv operands, f32
    # accumulation and f32 elementwise), tight tolerance.
    ref_bf16 = convgru_ref(h, x, params, conv_dtype=jnp.bfloat16)
    err = float(jnp.max(jnp.abs(out - ref_bf16)))
    assert jnp.allclose(out, ref_bf16, atol=5e-3, rtol=5e-3), err

    # Loose sanity check of the bf16 path against the full-f32 reference.
    ref_f32 = convgru_ref(h, x, params, conv_dtype=jnp.float32)
    err32 = float(jnp.max(jnp.abs(out - ref_f32)))
    assert jnp.allclose(out, ref_f32, atol=1e-1, rtol=1e-1), err32

    print("KERNEL_OK")
</pallas_src>

<mosaic_0001>
module attributes {stable_mosaic.version = 11 : i64} {
  func.func @convgru_kernel(%arg0: i32, %arg1: i32, %arg2: memref<1x8x16x128xf32, #tpu.memory_space<vmem>>, %arg3: memref<1x8x16x384xbf16, #tpu.memory_space<vmem>>, %arg4: memref<2560x384xbf16, #tpu.memory_space<vmem>>, %arg5: memref<1x384xf32, #tpu.memory_space<vmem>>, %arg6: memref<640x128xbf16, #tpu.memory_space<vmem>>, %arg7: memref<1x8x16x128xf32, #tpu.memory_space<vmem>>, %arg8: memref<8x20x512xbf16, #tpu.memory_space<vmem>>, %arg9: memref<8x16x2560xbf16, #tpu.memory_space<vmem>>, %arg10: memref<8x20x128xbf16, #tpu.memory_space<vmem>>, %arg11: memref<8x16x640xbf16, #tpu.memory_space<vmem>>) attributes {dimension_semantics = [#tpu.dimension_semantics<parallel>, #tpu.dimension_semantics<parallel>], iteration_bounds = array<i64: 2, 2>, scalar_prefetch = 0 : i64, scratch_operands = 4 : i64, tpu.core_type = #tpu.core_type<tc>, window_params = [{transform_indices = @transform_0, window_bounds = array<i64: 1, 8, 16, 128>}, {transform_indices = @transform_1, window_bounds = array<i64: 1, 8, 16, 384>}, {pipeline_mode = #tpu.pipeline_mode<synchronous>, transform_indices = @transform_2, window_bounds = array<i64: 2560, 384>}, {pipeline_mode = #tpu.pipeline_mode<synchronous>, transform_indices = @transform_3, window_bounds = array<i64: 1, 384>}, {pipeline_mode = #tpu.pipeline_mode<synchronous>, transform_indices = @transform_4, window_bounds = array<i64: 640, 128>}, {transform_indices = @transform_5, window_bounds = array<i64: 1, 8, 16, 128>}]} {
    %c0 = arith.constant 0 : index
    %c0_0 = arith.constant 0 : index
    %c0_1 = arith.constant 0 : index
    %c0_2 = arith.constant 0 : index
    %0 = vector.load %arg2[%c0, %c0_0, %c0_1, %c0_2] : memref<1x8x16x128xf32, #tpu.memory_space<vmem>>, vector<1x8x16x128xf32>
    %1 = vector.shape_cast %0 : vector<1x8x16x128xf32> to vector<8x16x128xf32>
    %2 = vector.shape_cast %1 : vector<8x16x128xf32> to vector<128x128xf32>
    %cst = arith.constant 0.000000e+00 : bf16
    %3 = vector.broadcast %cst : bf16 to vector<8x2x512xbf16>
    %c0_3 = arith.constant 0 : index
    %c0_4 = arith.constant 0 : index
    %c0_5 = arith.constant 0 : index
    %4 = vector.load %arg8[%c0_3, %c0_4, %c0_5] : memref<8x20x512xbf16, #tpu.memory_space<vmem>>, vector<8x2x512xbf16>
    tpu.vector_store %arg8[%c0_3, %c0_4, %c0_5], %3 {strides = array<i32>} : memref<8x20x512xbf16, #tpu.memory_space<vmem>>, vector<8x2x512xbf16>,
    %cst_6 = arith.constant 0.000000e+00 : bf16
    %5 = vector.broadcast %cst_6 : bf16 to vector<8x2x512xbf16>
    %c0_7 = arith.constant 0 : index
    %c18 = arith.constant 18 : index
    %c0_8 = arith.constant 0 : index
    %6 = vector.load %arg8[%c0_7, %c18, %c0_8] : memref<8x20x512xbf16, #tpu.memory_space<vmem>>, vector<8x2x512xbf16>
    tpu.vector_store %arg8[%c0_7, %c18, %c0_8], %5 {strides = array<i32>} : memref<8x20x512xbf16, #tpu.memory_space<vmem>>, vector<8x2x512xbf16>,
    %7 = arith.truncf %1 : vector<8x16x128xf32> to vector<8x16x128xbf16>
    %c0_9 = arith.constant 0 : index
    %c2 = arith.constant 2 : index
    %c0_10 = arith.constant 0 : index
    %8 = vector.load %arg8[%c0_9, %c2, %c0_10] : memref<8x20x512xbf16, #tpu.memory_space<vmem>>, vector<8x16x128xbf16>
    tpu.vector_store %arg8[%c0_9, %c2, %c0_10], %7 {strides = array<i32>} : memref<8x20x512xbf16, #tpu.memory_space<vmem>>, vector<8x16x128xbf16>,
    %c0_11 = arith.constant 0 : index
    %c0_12 = arith.constant 0 : index
    %c0_13 = arith.constant 0 : index
    %c0_14 = arith.constant 0 : index
    %9 = vector.load %arg3[%c0_11, %c0_12, %c0_13, %c0_14] : memref<1x8x16x384xbf16, #tpu.memory_space<vmem>>, vector<1x8x16x384xbf16>
    %10 = vector.shape_cast %9 : vector<1x8x16x384xbf16> to vector<8x16x384xbf16>
    %c0_15 = arith.constant 0 : index
    %c2_16 = arith.constant 2 : index
    %c128 = arith.constant 128 : index
    %11 = vector.load %arg8[%c0_15, %c2_16, %c128] : memref<8x20x512xbf16, #tpu.memory_space<vmem>>, vector<8x16x384xbf16>
    tpu.vector_store %arg8[%c0_15, %c2_16, %c128], %10 {strides = array<i32>} : memref<8x20x512xbf16, #tpu.memory_space<vmem>>, vector<8x16x384xbf16>,
    %c0_17 = arith.constant 0 : index
    %c0_18 = arith.constant 0 : index
    %c0_19 = arith.constant 0 : index
    %12 = vector.load %arg8[%c0_17, %c0_18, %c0_19] : memref<8x20x512xbf16, #tpu.memory_space<vmem>>, vector<8x16x512xbf16>
    %c0_20 = arith.constant 0 : index
    %c0_21 = arith.constant 0 : index
    %c0_22 = arith.constant 0 : index
    %13 = vector.load %arg9[%c0_20, %c0_21, %c0_22] : memref<8x16x2560xbf16, #tpu.memory_space<vmem>>, vector<8x16x512xbf16>
    tpu.vector_store %arg9[%c0_20, %c0_21, %c0_22], %12 {strides = array<i32>} : memref<8x16x2560xbf16, #tpu.memory_space<vmem>>, vector<8x16x512xbf16>,
    %c0_23 = arith.constant 0 : index
    %c1 = arith.constant 1 : index
    %c0_24 = arith.constant 0 : index
    %14 = vector.load %arg8[%c0_23, %c1, %c0_24] : memref<8x20x512xbf16, #tpu.memory_space<vmem>>, vector<8x16x512xbf16>
    %c0_25 = arith.constant 0 : index
    %c0_26 = arith.constant 0 : index
    %c512 = arith.constant 512 : index
    %15 = vector.load %arg9[%c0_25, %c0_26, %c512] : memref<8x16x2560xbf16, #tpu.memory_space<vmem>>, vector<8x16x512xbf16>
    tpu.vector_store %arg9[%c0_25, %c0_26, %c512], %14 {strides = array<i32>} : memref<8x16x2560xbf16, #tpu.memory_space<vmem>>, vector<8x16x512xbf16>,
    %c0_27 = arith.constant 0 : index
    %c2_28 = arith.constant 2 : index
    %c0_29 = arith.constant 0 : index
    %16 = vector.load %arg8[%c0_27, %c2_28, %c0_29] : memref<8x20x512xbf16, #tpu.memory_space<vmem>>, vector<8x16x512xbf16>
    %c0_30 = arith.constant 0 : index
    %c0_31 = arith.constant 0 : index
    %c1024 = arith.constant 1024 : index
    %17 = vector.load %arg9[%c0_30, %c0_31, %c1024] : memref<8x16x2560xbf16, #tpu.memory_space<vmem>>, vector<8x16x512xbf16>
    tpu.vector_store %arg9[%c0_30, %c0_31, %c1024], %16 {strides = array<i32>} : memref<8x16x2560xbf16, #tpu.memory_space<vmem>>, vector<8x16x512xbf16>,
    %c0_32 = arith.constant 0 : index
    %c3 = arith.constant 3 : index
    %c0_33 = arith.constant 0 : index
    %18 = vector.load %arg8[%c0_32, %c3, %c0_33] : memref<8x20x512xbf16, #tpu.memory_space<vmem>>, vector<8x16x512xbf16>
    %c0_34 = arith.constant 0 : index
    %c0_35 = arith.constant 0 : index
    %c1536 = arith.constant 1536 : index
    %19 = vector.load %arg9[%c0_34, %c0_35, %c1536] : memref<8x16x2560xbf16, #tpu.memory_space<vmem>>, vector<8x16x512xbf16>
    tpu.vector_store %arg9[%c0_34, %c0_35, %c1536], %18 {strides = array<i32>} : memref<8x16x2560xbf16, #tpu.memory_space<vmem>>, vector<8x16x512xbf16>,
    %c0_36 = arith.constant 0 : index
    %c4 = arith.constant 4 : index
    %c0_37 = arith.constant 0 : index
    %20 = vector.load %arg8[%c0_36, %c4, %c0_37] : memref<8x20x512xbf16, #tpu.memory_space<vmem>>, vector<8x16x512xbf16>
    %c0_38 = arith.constant 0 : index
    %c0_39 = arith.constant 0 : index
    %c2048 = arith.constant 2048 : index
    %21 = vector.load %arg9[%c0_38, %c0_39, %c2048] : memref<8x16x2560xbf16, #tpu.memory_space<vmem>>, vector<8x16x512xbf16>
    tpu.vector_store %arg9[%c0_38, %c0_39, %c2048], %20 {strides = array<i32>} : memref<8x16x2560xbf16, #tpu.memory_space<vmem>>, vector<8x16x512xbf16>,
    %c0_40 = arith.constant 0 : index
    %c0_41 = arith.constant 0 : index
    %c0_42 = arith.constant 0 : index
    %22 = vector.load %arg9[%c0_40, %c0_41, %c0_42] : memref<8x16x2560xbf16, #tpu.memory_space<vmem>>, vector<8x16x2560xbf16>
    %23 = vector.shape_cast %22 : vector<8x16x2560xbf16> to vector<128x2560xbf16>
    %c0_43 = arith.constant 0 : index
    %c0_44 = arith.constant 0 : index
    %24 = vector.load %arg4[%c0_43, %c0_44] : memref<2560x384xbf16, #tpu.memory_space<vmem>>, vector<2560x384xbf16>
    %cst_45 = arith.constant dense<0.000000e+00> : vector<128x384xf32>
    %25 = tpu.matmul %23, %24, %cst_45 {dimension_numbers = #tpu.dot_dimension_numbers<[1], [0], [0], [1], [0, 0, 1, 1], [], []>} : vector<128x2560xbf16>, vector<2560x384xbf16>, vector<128x384xf32> -> vector<128x384xf32>
    %c0_46 = arith.constant 0 : index
    %c0_47 = arith.constant 0 : index
    %26 = vector.load %arg5[%c0_46, %c0_47] : memref<1x384xf32, #tpu.memory_space<vmem>>, vector<1x384xf32>
    %27 = vector.broadcast %26 : vector<1x384xf32> to vector<128x384xf32>
    %28 = arith.addf %25, %27 : vector<128x384xf32>
    %29 = vector.extract_strided_slice %28 {offsets = [0, 0], sizes = [128, 128], strides = [1, 1]} : vector<128x384xf32> to vector<128x128xf32>
    %30 = arith.negf %29 : vector<128x128xf32>
    %31 = math.exp %30 : vector<128x128xf32>
    %cst_48 = arith.constant 1.000000e+00 : f32
    %32 = vector.broadcast %cst_48 : f32 to vector<128x128xf32>
    %33 = arith.addf %32, %31 : vector<128x128xf32>
    %34 = arith.divf %32, %33 : vector<128x128xf32>
    %35 = vector.extract_strided_slice %28 {offsets = [0, 128], sizes = [128, 128], strides = [1, 1]} : vector<128x384xf32> to vector<128x128xf32>
    %36 = arith.negf %35 : vector<128x128xf32>
    %37 = math.exp %36 : vector<128x128xf32>
    %cst_49 = arith.constant 1.000000e+00 : f32
    %38 = vector.broadcast %cst_49 : f32 to vector<128x128xf32>
    %39 = arith.addf %38, %37 : vector<128x128xf32>
    %40 = arith.divf %38, %39 : vector<128x128xf32>
    %41 = vector.extract_strided_slice %28 {offsets = [0, 256], sizes = [128, 128], strides = [1, 1]} : vector<128x384xf32> to vector<128x128xf32>
    %42 = arith.mulf %40, %2 : vector<128x128xf32>
    %43 = vector.shape_cast %42 : vector<128x128xf32> to vector<8x16x128xf32>
    %44 = arith.truncf %43 : vector<8x16x128xf32> to vector<8x16x128xbf16>
    %cst_50 = arith.constant 0.000000e+00 : bf16
    %45 = vector.broadcast %cst_50 : bf16 to vector<8x2x128xbf16>
    %c0_51 = arith.constant 0 : index
    %c0_52 = arith.constant 0 : index
    %c0_53 = arith.constant 0 : index
    %46 = vector.load %arg10[%c0_51, %c0_52, %c0_53] : memref<8x20x128xbf16, #tpu.memory_space<vmem>>, vector<8x2x128xbf16>
    tpu.vector_store %arg10[%c0_51, %c0_52, %c0_53], %45 {strides = array<i32>} : memref<8x20x128xbf16, #tpu.memory_space<vmem>>, vector<8x2x128xbf16>,
    %cst_54 = arith.constant 0.000000e+00 : bf16
    %47 = vector.broadcast %cst_54 : bf16 to vector<8x2x128xbf16>
    %c0_55 = arith.constant 0 : index
    %c18_56 = arith.constant 18 : index
    %c0_57 = arith.constant 0 : index
    %48 = vector.load %arg10[%c0_55, %c18_56, %c0_57] : memref<8x20x128xbf16, #tpu.memory_space<vmem>>, vector<8x2x128xbf16>
    tpu.vector_store %arg10[%c0_55, %c18_56, %c0_57], %47 {strides = array<i32>} : memref<8x20x128xbf16, #tpu.memory_space<vmem>>, vector<8x2x128xbf16>,
    %c0_58 = arith.constant 0 : index
    %c2_59 = arith.constant 2 : index
    %c0_60 = arith.constant 0 : index
    %49 = vector.load %arg10[%c0_58, %c2_59, %c0_60] : memref<8x20x128xbf16, #tpu.memory_space<vmem>>, vector<8x16x128xbf16>
    tpu.vector_store %arg10[%c0_58, %c2_59, %c0_60], %44 {strides = array<i32>} : memref<8x20x128xbf16, #tpu.memory_space<vmem>>, vector<8x16x128xbf16>,
    %c0_61 = arith.constant 0 : index
    %c0_62 = arith.constant 0 : index
    %c0_63 = arith.constant 0 : index
    %50 = vector.load %arg10[%c0_61, %c0_62, %c0_63] : memref<8x20x128xbf16, #tpu.memory_space<vmem>>, vector<8x16x128xbf16>
    %c0_64 = arith.constant 0 : index
    %c0_65 = arith.constant 0 : index
    %c0_66 = arith.constant 0 : index
    %51 = vector.load %arg11[%c0_64, %c0_65, %c0_66] : memref<8x16x640xbf16, #tpu.memory_space<vmem>>, vector<8x16x128xbf16>
    tpu.vector_store %arg11[%c0_64, %c0_65, %c0_66], %50 {strides = array<i32>} : memref<8x16x640xbf16, #tpu.memory_space<vmem>>, vector<8x16x128xbf16>,
    %c0_67 = arith.constant 0 : index
    %c1_68 = arith.constant 1 : index
    %c0_69 = arith.constant 0 : index
    %52 = vector.load %arg10[%c0_67, %c1_68, %c0_69] : memref<8x20x128xbf16, #tpu.memory_space<vmem>>, vector<8x16x128xbf16>
    %c0_70 = arith.constant 0 : index
    %c0_71 = arith.constant 0 : index
    %c128_72 = arith.constant 128 : index
    %53 = vector.load %arg11[%c0_70, %c0_71, %c128_72] : memref<8x16x640xbf16, #tpu.memory_space<vmem>>, vector<8x16x128xbf16>
    tpu.vector_store %arg11[%c0_70, %c0_71, %c128_72], %52 {strides = array<i32>} : memref<8x16x640xbf16, #tpu.memory_space<vmem>>, vector<8x16x128xbf16>,
    %c0_73 = arith.constant 0 : index
    %c2_74 = arith.constant 2 : index
    %c0_75 = arith.constant 0 : index
    %54 = vector.load %arg10[%c0_73, %c2_74, %c0_75] : memref<8x20x128xbf16, #tpu.memory_space<vmem>>, vector<8x16x128xbf16>
    %c0_76 = arith.constant 0 : index
    %c0_77 = arith.constant 0 : index
    %c256 = arith.constant 256 : index
    %55 = vector.load %arg11[%c0_76, %c0_77, %c256] : memref<8x16x640xbf16, #tpu.memory_space<vmem>>, vector<8x16x128xbf16>
    tpu.vector_store %arg11[%c0_76, %c0_77, %c256], %54 {strides = array<i32>} : memref<8x16x640xbf16, #tpu.memory_space<vmem>>, vector<8x16x128xbf16>,
    %c0_78 = arith.constant 0 : index
    %c3_79 = arith.constant 3 : index
    %c0_80 = arith.constant 0 : index
    %56 = vector.load %arg10[%c0_78, %c3_79, %c0_80] : memref<8x20x128xbf16, #tpu.memory_space<vmem>>, vector<8x16x128xbf16>
    %c0_81 = arith.constant 0 : index
    %c0_82 = arith.constant 0 : index
    %c384 = arith.constant 384 : index
    %57 = vector.load %arg11[%c0_81, %c0_82, %c384] : memref<8x16x640xbf16, #tpu.memory_space<vmem>>, vector<8x16x128xbf16>
    tpu.vector_store %arg11[%c0_81, %c0_82, %c384], %56 {strides = array<i32>} : memref<8x16x640xbf16, #tpu.memory_space<vmem>>, vector<8x16x128xbf16>,
    %c0_83 = arith.constant 0 : index
    %c4_84 = arith.constant 4 : index
    %c0_85 = arith.constant 0 : index
    %58 = vector.load %arg10[%c0_83, %c4_84, %c0_85] : memref<8x20x128xbf16, #tpu.memory_space<vmem>>, vector<8x16x128xbf16>
    %c0_86 = arith.constant 0 : index
    %c0_87 = arith.constant 0 : index
    %c512_88 = arith.constant 512 : index
    %59 = vector.load %arg11[%c0_86, %c0_87, %c512_88] : memref<8x16x640xbf16, #tpu.memory_space<vmem>>, vector<8x16x128xbf16>
    tpu.vector_store %arg11[%c0_86, %c0_87, %c512_88], %58 {strides = array<i32>} : memref<8x16x640xbf16, #tpu.memory_space<vmem>>, vector<8x16x128xbf16>,
    %c0_89 = arith.constant 0 : index
    %c0_90 = arith.constant 0 : index
    %c0_91 = arith.constant 0 : index
    %60 = vector.load %arg11[%c0_89, %c0_90, %c0_91] : memref<8x16x640xbf16, #tpu.memory_space<vmem>>, vector<8x16x640xbf16>
    %61 = vector.shape_cast %60 : vector<8x16x640xbf16> to vector<128x640xbf16>
    %c0_92 = arith.constant 0 : index
    %c0_93 = arith.constant 0 : index
    %62 = vector.load %arg6[%c0_92, %c0_93] : memref<640x128xbf16, #tpu.memory_space<vmem>>, vector<640x128xbf16>
    %cst_94 = arith.constant dense<0.000000e+00> : vector<128x128xf32>
    %63 = tpu.matmul %61, %62, %cst_94 {dimension_numbers = #tpu.dot_dimension_numbers<[1], [0], [0], [1], [0, 0, 1, 1], [], []>} : vector<128x640xbf16>, vector<640x128xbf16>, vector<128x128xf32> -> vector<128x128xf32>
    %64 = arith.addf %41, %63 : vector<128x128xf32>
    %65 = math.tanh %64 : vector<128x128xf32>
    %cst_95 = arith.constant 1.000000e+00 : f32
    %66 = vector.broadcast %cst_95 : f32 to vector<128x128xf32>
    %67 = arith.subf %66, %34 : vector<128x128xf32>
    %68 = arith.mulf %67, %2 : vector<128x128xf32>
    %69 = arith.mulf %34, %65 : vector<128x128xf32>
    %70 = arith.addf %68, %69 : vector<128x128xf32>
    %71 = vector.shape_cast %70 : vector<128x128xf32> to vector<8x16x128xf32>
    %c0_96 = arith.constant 0 : index
    %c0_97 = arith.constant 0 : index
    %c0_98 = arith.constant 0 : index
    %c0_99 = arith.constant 0 : index
    %72 = vector.load %arg7[%c0_96, %c0_97, %c0_98, %c0_99] : memref<1x8x16x128xf32, #tpu.memory_space<vmem>>, vector<1x8x16x128xf32>
    %73 = vector.shape_cast %72 : vector<1x8x16x128xf32> to vector<8x16x128xf32>
    %74 = vector.shape_cast %71 : vector<8x16x128xf32> to vector<1x8x16x128xf32>
    tpu.vector_store %arg7[%c0_96, %c0_97, %c0_98, %c0_99], %74 {strides = array<i32>} : memref<1x8x16x128xf32, #tpu.memory_space<vmem>>, vector<1x8x16x128xf32>,
    return
  }
  func.func @transform_0(%arg0: i32, %arg1: i32) -> (i32, i32, i32, i32) {
    %c0_i32 = arith.constant 0 : i32
    %c0_i32_0 = arith.constant 0 : i32
    %c0_i32_1 = arith.constant 0 : i32
    return %arg0, %arg1, %c0_i32, %c0_i32_0 : i32, i32, i32, i32
  }
  func.func @transform_1(%arg0: i32, %arg1: i32) -> (i32, i32, i32, i32) {
    %c0_i32 = arith.constant 0 : i32
    %c0_i32_0 = arith.constant 0 : i32
    %c0_i32_1 = arith.constant 0 : i32
    return %arg0, %arg1, %c0_i32, %c0_i32_0 : i32, i32, i32, i32
  }
  func.func @transform_2(%arg0: i32, %arg1: i32) -> (i32, i32) {
    %c0_i32 = arith.constant 0 : i32
    %c0_i32_0 = arith.constant 0 : i32
    %c0_i32_1 = arith.constant 0 : i32
    return %c0_i32, %c0_i32_0 : i32, i32
  }
  func.func @transform_3(%arg0: i32, %arg1: i32) -> (i32, i32) {
    %c0_i32 = arith.constant 0 : i32
    %c0_i32_0 = arith.constant 0 : i32
    %c0_i32_1 = arith.constant 0 : i32
    return %c0_i32, %c0_i32_0 : i32, i32
  }
  func.func @transform_4(%arg0: i32, %arg1: i32) -> (i32, i32) {
    %c0_i32 = arith.constant 0 : i32
    %c0_i32_0 = arith.constant 0 : i32
    %c0_i32_1 = arith.constant 0 : i32
    return %c0_i32, %c0_i32_0 : i32, i32
  }
  func.func @transform_5(%arg0: i32, %arg1: i32) -> (i32, i32, i32, i32) {
    %c0_i32 = arith.constant 0 : i32
    %c0_i32_0 = arith.constant 0 : i32
    %c0_i32_1 = arith.constant 0 : i32
    return %arg0, %arg1, %c0_i32, %c0_i32_0 : i32, i32, i32, i32
  }
}

</mosaic_0001>

<llo_original>
// kernel: tpu_custom_call.1
$region0: #{tpu_custom_call.1}
  #allocation0 [shape = 'u32[]', space=smem, size = 0x4, offset = 0x4, fixed_abs, tag = 'smem constant byte address 0x4 - core index']
  #allocation1 [shape = 'u32[144,128]{1,0:T(1,128)}', space=vmem, size = 0x12000, scoped, tag = 'internal scratch']
  #allocation2 [shape = 'bf16[8,20,512]{2,1,0:T(8,128)(2,1)}', space=vmem, size = 0x30000, scoped, tag = 'scratch operand']
  #allocation3 [shape = 'bf16[8,16,2560]{2,1,0:T(8,128)(2,1)}', space=vmem, size = 0xa0000, scoped, tag = 'scratch operand']
  #allocation4 [shape = 'bf16[8,20,128]{2,1,0:T(8,128)(2,1)}', space=vmem, size = 0xc000, scoped, tag = 'scratch operand']
  #allocation5 [shape = 'bf16[8,16,640]{2,1,0:T(8,128)(2,1)}', space=vmem, size = 0x28000, scoped, tag = 'scratch operand']
  %s0 = inlined_call_operand.hbm [shape: f32[2,16,16,128], index: 0, kind: input, shape index: {}]
  %s1 = inlined_call_operand.hbm [shape: bf16[2,16,16,384], index: 1, kind: input, shape index: {}]
  %s2 = inlined_call_operand.hbm [shape: bf16[2560,384], index: 2, kind: input, shape index: {}]
  %s3 = inlined_call_operand.hbm [shape: f32[1,384], index: 3, kind: input, shape index: {}]
  %s4 = inlined_call_operand.hbm [shape: bf16[640,128], index: 4, kind: input, shape index: {}]
  %s5 = inlined_call_operand.hbm [shape: f32[2,16,16,128], index: 5, kind: output, shape index: {}]
  %s6 = sld [smem:[#allocation0]]
  $region73: #{tpu_custom_call.1} parent=0
    _
  %s8 = ssub.s32 1, %s6
  %s9 = scalar_select 0, %s8, %s6
  $region1: #{tpu_custom_call.1} parent=0
    #allocation6 [shape = 'u8[131072]{0}', space=vmem, size = 0x20000, scoped, tag = 'input window, operand 0']
    #allocation7 [shape = 's32[2]{0}', space=sflag, size = 0x8, scoped, tag = 'scoped memory for tpu_custom_call.1']
    #allocation8 [shape = 's32[2]{0}', space=sflag, size = 0x8, scoped, tag = 'scoped memory for tpu_custom_call.1']
    #allocation9 [shape = 'u8[196608]{0}', space=vmem, size = 0x30000, scoped, tag = 'input window, operand 1']
    #allocation10 [shape = 's32[2]{0}', space=sflag, size = 0x8, scoped, tag = 'scoped memory for tpu_custom_call.1']
    #allocation11 [shape = 'u8[1966080]{0}', space=vmem, size = 0x1e0000, scoped, tag = 'input window, operand 2, single buffered']
    #allocation12 [shape = 'u8[1536]{0}', space=vmem, size = 0x800, scoped, tag = 'input window, operand 3, single buffered']
    #allocation13 [shape = 's32[1]{0}', space=sflag, size = 0x4, scoped, tag = 'scoped memory for tpu_custom_call.1']
    #allocation14 [shape = 'u8[163840]{0}', space=vmem, size = 0x28000, scoped, tag = 'input window, operand 4, single buffered']
    #allocation15 [shape = 'u8[131072]{0}', space=vmem, size = 0x20000, scoped, tag = 'output window, operand 0']
    %10 = vsyncpa [#allocation7], 0
    %s11 = scalar_lea.sflag [#allocation7], 1
    %12 = vsyncpa %s11, 0
    %13 = vsyncpa [#allocation10], 0
    %s14 = scalar_lea.sflag [#allocation10], 1
    %15 = vsyncpa %s14, 0
    %16 = vsyncpa [#allocation13], 0
    %17 = vsyncpa [#allocation8], 0
    %s18 = scalar_lea.sflag [#allocation8], 1
    %19 = vsyncpa %s18, 0
    loop: start=0, step=1, limit=6
    $region2: #{tpu_custom_call.1} parent=1 // loop_pre_header
      _
    $region3: #{tpu_custom_call.1} parent=1 // loop_header
      %s21 = sphi 0, %s25
      %p22 = scmp.ge.s32.totalorder %s21, 6
      %s28 = sphi 0, %s40
      %s29 = sphi 0, %s36
      %s30 = sphi 0, %s28
      %s31 = sphi 0, %s29
      %s32 = sphi 0, %s30
      %s33 = sphi 0, %s31
      %s45 = sphi 0, %s47
      %s48 = sphi 0, %s45
      %s49 = sphi 0, %s48
      %s65 = sphi 0, %s49
      %s73 = sphi 0, %s75
      %s76 = sphi 0, %s73
      %s77 = sphi 0, %s76
      %s93 = sphi 0, %s77
      %s97 = sphi 0, %s97
      %s99 = sphi 0, %s97
      %s100 = sphi 0, %s99
      %s114 = sphi 0, %s100
      %s118 = sphi 0, %s118
      %s120 = sphi 0, %s118
      %s121 = sphi 0, %s120
      %s135 = sphi 0, %s121
      %s139 = sphi 0, %s139
      %s141 = sphi 0, %s139
      %s142 = sphi 0, %s141
      %s156 = sphi 0, %s142
      %s164 = sphi 0, %s166
      %s167 = sphi 0, %s164
      %s168 = sphi 0, %s167
      %s184 = sphi 0, %s168
    $region4: #{tpu_custom_call.1} parent=1 // loop_header_branch
      %24 = sbr.rel (%p22) target = $region8
    $region5: #{tpu_custom_call.1} parent=1 // loop_body
      %s26 = ssub.s32 %s21, 1
      %s27 = ssub.s32 %s21, 2
      %s34 = sadd.s32 1, %s29
      %p35 = scmp.ge.s32.totalorder %s34, 2
      %s36 = scalar_select %p35, 0, %s34
      %s37 = sadd.s32 1, %s28
      %s38 = scalar_select %p35, %s37, %s28
      %p39 = scmp.ge.s32.totalorder %s38, 2
      %s40 = scalar_select %p39, 0, %s38
      %s41 = ssub.s32 %s28, %s40
      %s42 = ssub.s32 %s29, %s36
      %s43 = sor.u32 %s41, %s42
      %p44 = scmp.eq.s32.totalorder %s43, 0
      %s46 = sadd.s32 %s45, 1
      %s47 = scalar_select %p44, %s45, %s46
      %p50 = pneg %p44
      %p51 = scmp.eq.s32.totalorder %s21, 3
      %p52 = por %p50, %p51
      %p53 = scmp.ne.s32.totalorder %s45, %s48
      %p54 = scmp.eq.s32.totalorder %s21, 0
      %p55 = por %p53, %p54
      %p56 = scmp.ne.s32.totalorder %s45, %s48
      %p57 = scmp.eq.s32.totalorder %s26, 3
      %p58 = por %p56, %p57
      %p59 = scmp.ne.s32.totalorder %s48, %s49
      %p60 = scmp.eq.s32.totalorder %s26, 0
      %p61 = por %p59, %p60
      %p62 = scmp.ne.s32.totalorder %s48, %s49
      %p63 = scmp.eq.s32.totalorder %s27, 3
      %p64 = por %p62, %p63
      %p66 = scmp.ne.s32.totalorder %s49, %s65
      %p67 = scmp.eq.s32.totalorder %s27, 0
      %p68 = por %p66, %p67
      %s69 = ssub.s32 %s28, %s40
      %s70 = ssub.s32 %s29, %s36
      %s71 = sor.u32 %s69, %s70
      %p72 = scmp.eq.s32.totalorder %s71, 0
      %s74 = sadd.s32 %s73, 1
      %s75 = scalar_select %p72, %s73, %s74
      %p78 = pneg %p72
      %p79 = scmp.eq.s32.totalorder %s21, 3
      %p80 = por %p78, %p79
      %p81 = scmp.ne.s32.totalorder %s73, %s76
      %p82 = scmp.eq.s32.totalorder %s21, 0
      %p83 = por %p81, %p82
      %p84 = scmp.ne.s32.totalorder %s73, %s76
      %p85 = scmp.eq.s32.totalorder %s26, 3
      %p86 = por %p84, %p85
      %p87 = scmp.ne.s32.totalorder %s76, %s77
      %p88 = scmp.eq.s32.totalorder %s26, 0
      %p89 = por %p87, %p88
      %p90 = scmp.ne.s32.totalorder %s76, %s77
      %p91 = scmp.eq.s32.totalorder %s27, 3
      %p92 = por %p90, %p91
      %p94 = scmp.ne.s32.totalorder %s77, %s93
      %p95 = scmp.eq.s32.totalorder %s27, 0
      %p96 = por %p94, %p95
      %s98 = sadd.s32 %s97, 1
      %p101 = scmp.eq.s32.totalorder %s21, 3
      %p102 = scmp.ne.s32.totalorder %s97, %s99
      %p103 = scmp.eq.s32.totalorder %s21, 0
      %p104 = por %p102, %p103
      %p105 = scmp.ne.s32.totalorder %s97, %s99
      %p106 = scmp.eq.s32.totalorder %s26, 3
      %p107 = por %p105, %p106
      %p108 = scmp.ne.s32.totalorder %s99, %s100
      %p109 = scmp.eq.s32.totalorder %s26, 0
      %p110 = por %p108, %p109
      %p111 = scmp.ne.s32.totalorder %s99, %s100
      %p112 = scmp.eq.s32.totalorder %s27, 3
      %p113 = por %p111, %p112
      %p115 = scmp.ne.s32.totalorder %s100, %s114
      %p116 = scmp.eq.s32.totalorder %s27, 0
      %p117 = por %p115, %p116
      %s119 = sadd.s32 %s118, 1
      %p122 = scmp.eq.s32.totalorder %s21, 3
      %p123 = scmp.ne.s32.totalorder %s118, %s120
      %p124 = scmp.eq.s32.totalorder %s21, 0
      %p125 = por %p123, %p124
      %p126 = scmp.ne.s32.totalorder %s118, %s120
      %p127 = scmp.eq.s32.totalorder %s26, 3
      %p128 = por %p126, %p127
      %p129 = scmp.ne.s32.totalorder %s120, %s121
      %p130 = scmp.eq.s32.totalorder %s26, 0
      %p131 = por %p129, %p130
      %p132 = scmp.ne.s32.totalorder %s120, %s121
      %p133 = scmp.eq.s32.totalorder %s27, 3
      %p134 = por %p132, %p133
      %p136 = scmp.ne.s32.totalorder %s121, %s135
      %p137 = scmp.eq.s32.totalorder %s27, 0
      %p138 = por %p136, %p137
      %s140 = sadd.s32 %s139, 1
      %p143 = scmp.eq.s32.totalorder %s21, 3
      %p144 = scmp.ne.s32.totalorder %s139, %s141
      %p145 = scmp.eq.s32.totalorder %s21, 0
      %p146 = por %p144, %p145
      %p147 = scmp.ne.s32.totalorder %s139, %s141
      %p148 = scmp.eq.s32.totalorder %s26, 3
      %p149 = por %p147, %p148
      %p150 = scmp.ne.s32.totalorder %s141, %s142
      %p151 = scmp.eq.s32.totalorder %s26, 0
      %p152 = por %p150, %p151
      %p153 = scmp.ne.s32.totalorder %s141, %s142
      %p154 = scmp.eq.s32.totalorder %s27, 3
      %p155 = por %p153, %p154
      %p157 = scmp.ne.s32.totalorder %s142, %s156
      %p158 = scmp.eq.s32.totalorder %s27, 0
      %p159 = por %p157, %p158
      %s160 = ssub.s32 %s28, %s40
      %s161 = ssub.s32 %s29, %s36
      %s162 = sor.u32 %s160, %s161
      %p163 = scmp.eq.s32.totalorder %s162, 0
      %s165 = sadd.s32 %s164, 1
      %s166 = scalar_select %p163, %s164, %s165
      %p169 = pneg %p163
      %p170 = scmp.eq.s32.totalorder %s21, 3
      %p171 = por %p169, %p170
      %p172 = scmp.ne.s32.totalorder %s164, %s167
      %p173 = scmp.eq.s32.totalorder %s21, 0
      %p174 = por %p172, %p173
      %p175 = scmp.ne.s32.totalorder %s164, %s167
      %p176 = scmp.eq.s32.totalorder %s26, 3
      %p177 = por %p175, %p176
      %p178 = scmp.ne.s32.totalorder %s167, %s168
      %p179 = scmp.eq.s32.totalorder %s26, 0
      %p180 = por %p178, %p179
      %p181 = scmp.ne.s32.totalorder %s167, %s168
      %p182 = scmp.eq.s32.totalorder %s27, 3
      %p183 = por %p181, %p182
      %p185 = scmp.ne.s32.totalorder %s168, %s184
      %p186 = scmp.eq.s32.totalorder %s27, 0
      %p187 = por %p185, %p186
      %p188 = scmp.le.s32.totalorder 1, %s21
      %p189 = scmp.lt.s32.totalorder %s21, 5
      %p190 = pnand %p188, %p189
      %p191 = pneg %p190
      // Predicated region
      $region9: #{tpu_custom_call.1} parent=5 // pred_check
        _
      $region10: #{tpu_custom_call.1} parent=5 // pred_check_branch
        %193 = sbr.rel (%p190) target = $region12
      $region11: #{tpu_custom_call.1} parent=5 // pred_region
        %s194 = ssub.s32 %s21, 1
        // Predicated region
        $region13: #{tpu_custom_call.1} parent=11 // pred_check
          %p195 = pneg %p110
        $region14: #{tpu_custom_call.1} parent=11 // pred_check_branch
          %197 = sbr.rel (%p195) target = $region16
        $region15: #{tpu_custom_call.1} parent=11 // pred_region
          %s199 = ssub.s32 61440, 61440
          %200 = vsyncadd [#allocation10], %s199
          %s201 = sshll.u32 [#allocation11], 4
          %s202 = int_to_ptr.vmem [resolvable:$true] %s201
          %207 = dma.hbm_to_vmem [thread:$0]  %s2, 61440, %s202, [#allocation10], 192, 192, 12
        $region16: #{tpu_custom_call.1} parent=11 // pred_fallthru
          _
        // Predicated region
        $region17: #{tpu_custom_call.1} parent=11 // pred_check
          %p208 = pneg %p131
        $region18: #{tpu_custom_call.1} parent=11 // pred_check_branch
          %210 = sbr.rel (%p208) target = $region20
        $region19: #{tpu_custom_call.1} parent=11 // pred_region
          %s212 = ssub.s32 48, 48
          %213 = vsyncadd [#allocation13], %s212
          %s215 = sshll.u32 [#allocation12], 4
          %s216 = int_to_ptr.vmem [resolvable:$true] %s215
          %218 = dma.hbm_to_vmem [thread:$0]  %s3, 48, %s216, [#allocation13]
        $region20: #{tpu_custom_call.1} parent=11 // pred_fallthru
          _
        // Predicated region
        $region21: #{tpu_custom_call.1} parent=11 // pred_check
          %p219 = pneg %p152
        $region22: #{tpu_custom_call.1} parent=11 // pred_check_branch
          %221 = sbr.rel (%p219) target = $region24
        $region23: #{tpu_custom_call.1} parent=11 // pred_region
          %s223 = ssub.s32 5120, 5120
          %224 = vsyncadd [#allocation13], %s223
          %s225 = sshll.u32 [#allocation14], 4
          %s226 = int_to_ptr.vmem [resolvable:$true] %s225
          %231 = dma.hbm_to_vmem [thread:$0]  %s4, 5120, %s226, [#allocation13], 64, 64, 4
        $region24: #{tpu_custom_call.1} parent=11 // pred_fallthru
          _
      $region12: #{tpu_custom_call.1} parent=5 // pred_fallthru
        _
      %p232 = scmp.lt.s32.totalorder %s21, 4
      // Predicated region
      $region25: #{tpu_custom_call.1} parent=5 // pred_check
        %p233 = pneg %p232
      $region26: #{tpu_custom_call.1} parent=5 // pred_check_branch
        %235 = sbr.rel (%p233) target = $region28
      $region27: #{tpu_custom_call.1} parent=5 // pred_region
        // Predicated region
        $region29: #{tpu_custom_call.1} parent=27 // pred_check
          %p236 = pneg %p55
        $region30: #{tpu_custom_call.1} parent=27 // pred_check_branch
          %238 = sbr.rel (%p236) target = $region32
        $region31: #{tpu_custom_call.1} parent=27 // pred_region
          %s239 = sand.u32 %s45, 1
          %s240 = scalar_lea.sflag [#allocation7], %s239
          %s241 = sand.u32 %s45, 1
          %s242 = smul.addr %s241, 128
          %s243 = scalar_lea.vmem [#allocation6], %s242
          %s244 = smul.u32 8, %s29
          %s246 = ssub.s32 2048, 2048
          %247 = vsyncadd %s240, %s246
          %s248 = smul.addr %s244, 2
          %s249 = smul.addr %s28, 32
          %s250 = sadd.s32 %s248, %s249
          %s251 = smul.addr %s250, 128
          %s252 = scalar_lea.hbm %s0, %s251
          %s253 = sshll.u32 %s243, 4
          %s254 = int_to_ptr.vmem [resolvable:$true] %s253
          %259 = dma.hbm_to_vmem [thread:$0]  %s252, 2048, %s254, %s240, 128, 128, 8
        $region32: #{tpu_custom_call.1} parent=27 // pred_fallthru
          _
        // Predicated region
        $region33: #{tpu_custom_call.1} parent=27 // pred_check
          %p260 = pneg %p83
        $region34: #{tpu_custom_call.1} parent=27 // pred_check_branch
          %262 = sbr.rel (%p260) target = $region36
        $region35: #{tpu_custom_call.1} parent=27 // pred_region
          %s263 = sand.u32 %s21, 1
          %s264 = scalar_lea.sflag [#allocation10], %s263
          %s265 = sand.u32 %s73, 1
          %s266 = smul.addr %s265, 192
          %s267 = scalar_lea.vmem [#allocation9], %s266
          %s268 = smul.u32 8, %s29
          %s270 = ssub.s32 3072, 3072
          %271 = vsyncadd %s264, %s270
          %s272 = smul.addr %s268, 6
          %s273 = smul.addr %s28, 96
          %s274 = sadd.s32 %s272, %s273
          %s275 = smul.addr %s274, 64
          %s276 = scalar_lea.hbm %s1, %s275
          %s277 = sshll.u32 %s267, 4
          %s278 = int_to_ptr.vmem [resolvable:$true] %s277
          %283 = dma.hbm_to_vmem [thread:$0]  %s276, 3072, %s278, %s264, 192, 192, 12
        $region36: #{tpu_custom_call.1} parent=27 // pred_fallthru
          _
      $region28: #{tpu_custom_call.1} parent=5 // pred_fallthru
        _
      %p284 = scmp.le.s32.totalorder 1, %s21
      %p285 = scmp.lt.s32.totalorder %s21, 5
      %p286 = pnand %p284, %p285
      %p287 = pneg %p286
      // Predicated region
      $region37: #{tpu_custom_call.1} parent=5 // pred_check
        _
      $region38: #{tpu_custom_call.1} parent=5 // pred_check_branch
        %289 = sbr.rel (%p286) target = $region40
      $region39: #{tpu_custom_call.1} parent=5 // pred_region
        %s290 = ssub.s32 %s21, 1
        %s291 = sand.u32 %s48, 1
        %s292 = scalar_lea.sflag [#allocation7], %s291
        %s293 = sand.u32 %s48, 1
        %s294 = smul.addr %s293, 128
        %s295 = scalar_lea.vmem [#allocation6], %s294
        // Predicated region
        $region41: #{tpu_custom_call.1} parent=39 // pred_check
          %p296 = pneg %p61
        $region42: #{tpu_custom_call.1} parent=39 // pred_check_branch
          %298 = sbr.rel (%p296) target = $region44
        $region43: #{tpu_custom_call.1} parent=39 // pred_region
          %299 = dma.done %s292, 2048
        $region44: #{tpu_custom_call.1} parent=39 // pred_fallthru
          _
        %s300 = sand.u32 %s26, 1
        %s301 = scalar_lea.sflag [#allocation10], %s300
        %s302 = sand.u32 %s76, 1
        %s303 = smul.addr %s302, 192
        %s304 = scalar_lea.vmem [#allocation9], %s303
        // Predicated region
        $region45: #{tpu_custom_call.1} parent=39 // pred_check
          %p305 = pneg %p89
        $region46: #{tpu_custom_call.1} parent=39 // pred_check_branch
          %307 = sbr.rel (%p305) target = $region48
        $region47: #{tpu_custom_call.1} parent=39 // pred_region
          %308 = dma.done %s301, 3072
        $region48: #{tpu_custom_call.1} parent=39 // pred_fallthru
          _
        // Predicated region
        $region49: #{tpu_custom_call.1} parent=39 // pred_check
          %p309 = pneg %p110
        $region50: #{tpu_custom_call.1} parent=39 // pred_check_branch
          %311 = sbr.rel (%p309) target = $region52
        $region51: #{tpu_custom_call.1} parent=39 // pred_region
          %312 = dma.done [#allocation10], 61440
        $region52: #{tpu_custom_call.1} parent=39 // pred_fallthru
          _
        // Predicated region
        $region53: #{tpu_custom_call.1} parent=39 // pred_check
          %p313 = pneg %p131
        $region54: #{tpu_custom_call.1} parent=39 // pred_check_branch
          %315 = sbr.rel (%p313) target = $region56
        $region55: #{tpu_custom_call.1} parent=39 // pred_region
          %316 = dma.done [#allocation13], 48
        $region56: #{tpu_custom_call.1} parent=39 // pred_fallthru
          _
        // Predicated region
        $region57: #{tpu_custom_call.1} parent=39 // pred_check
          %p317 = pneg %p152
        $region58: #{tpu_custom_call.1} parent=39 // pred_check_branch
          %319 = sbr.rel (%p317) target = $region60
        $region59: #{tpu_custom_call.1} parent=39 // pred_region
          %320 = dma.done [#allocation13], 5120
        $region60: #{tpu_custom_call.1} parent=39 // pred_fallthru
          _
        %s321 = sand.u32 %s48, 1
        %s322 = scalar_lea.sflag [#allocation7], %s321
        %s323 = sand.u32 %s48, 1
        %s324 = smul.addr %s323, 128
        %s325 = scalar_lea.vmem [#allocation6], %s324
        %p326 = pneg %p61
        %p327 = pneg %p58
        %s328 = sand.u32 %s26, 1
        %s329 = scalar_lea.sflag [#allocation10], %s328
        %s330 = sand.u32 %s76, 1
        %s331 = smul.addr %s330, 192
        %s332 = scalar_lea.vmem [#allocation9], %s331
        %p333 = pneg %p89
        %p334 = pneg %p86
        %p335 = pneg %p110
        %p336 = pneg %p107
        %p337 = pneg %p131
        %p338 = pneg %p128
        %p339 = pneg %p152
        %p340 = pneg %p149
        %p341 = pneg %p180
        %p342 = pneg %p177
        %s343 = sand.u32 %s167, 1
        %s344 = scalar_lea.sflag [#allocation8], %s343
        %s345 = sand.u32 %s167, 1
        %s346 = smul.addr %s345, 128
        %s347 = scalar_lea.vmem [#allocation15], %s346
        %s348 = smul.u32 8, %s31
        %s349 = smul.u32 8, %s31
        %s350 = smul.u32 8, %s31
        %v352 = vld [vmem:[%s295] sm:$0xff]
        %v353 = vld [vmem:[%s295 + $0x8] sm:$0xff]
        %v354 = vld [vmem:[%s295 + $0x10] sm:$0xff]
        %v355 = vld [vmem:[%s295 + $0x18] sm:$0xff]
        %v356 = vld [vmem:[%s295 + $0x20] sm:$0xff]
        %v357 = vld [vmem:[%s295 + $0x28] sm:$0xff]
        %v358 = vld [vmem:[%s295 + $0x30] sm:$0xff]
        %v359 = vld [vmem:[%s295 + $0x38] sm:$0xff]
        %v360 = vld [vmem:[%s295 + $0x40] sm:$0xff]
        %v361 = vld [vmem:[%s295 + $0x48] sm:$0xff]
        %v362 = vld [vmem:[%s295 + $0x50] sm:$0xff]
        %v363 = vld [vmem:[%s295 + $0x58] sm:$0xff]
        %v364 = vld [vmem:[%s295 + $0x60] sm:$0xff]
        %v365 = vld [vmem:[%s295 + $0x68] sm:$0xff]
        %v366 = vld [vmem:[%s295 + $0x70] sm:$0xff]
        %v367 = vld [vmem:[%s295 + $0x78] sm:$0xff]
        %368 = vst [vmem:[#allocation2] sm:$0x11] 0
        %369 = vst [vmem:[#allocation2 + $0x8] sm:$0x11] 0
        %370 = vst [vmem:[#allocation2 + $0x30] sm:$0x11] 0
        %371 = vst [vmem:[#allocation2 + $0x38] sm:$0x11] 0
        %372 = vst [vmem:[#allocation2 + $0x60] sm:$0x11] 0
        %373 = vst [vmem:[#allocation2 + $0x68] sm:$0x11] 0
        %374 = vst [vmem:[#allocation2 + $0x90] sm:$0x11] 0
        %375 = vst [vmem:[#allocation2 + $0x98] sm:$0x11] 0
        %376 = vst [vmem:[#allocation2 + $0xc0] sm:$0x11] 0
        %377 = vst [vmem:[#allocation2 + $0xc8] sm:$0x11] 0
        %378 = vst [vmem:[#allocation2 + $0xf0] sm:$0x11] 0
        %379 = vst [vmem:[#allocation2 + $0xf8] sm:$0x11] 0
        %380 = vst [vmem:[#allocation2 + $0x120] sm:$0x11] 0
        %381 = vst [vmem:[#allocation2 + $0x128] sm:$0x11] 0
        %382 = vst [vmem:[#allocation2 + $0x150] sm:$0x11] 0
        %383 = vst [vmem:[#allocation2 + $0x158] sm:$0x11] 0
        %384 = vst [vmem:[#allocation2 + $0x20] sm:$0x22] 0
        %385 = vst [vmem:[#allocation2 + $0x28] sm:$0x22] 0
        %386 = vst [vmem:[#allocation2 + $0x50] sm:$0x22] 0
        %387 = vst [vmem:[#allocation2 + $0x58] sm:$0x22] 0
        %388 = vst [vmem:[#allocation2 + $0x80] sm:$0x22] 0
        %389 = vst [vmem:[#allocation2 + $0x88] sm:$0x22] 0
        %390 = vst [vmem:[#allocation2 + $0xb0] sm:$0x22] 0
        %391 = vst [vmem:[#allocation2 + $0xb8] sm:$0x22] 0
        %392 = vst [vmem:[#allocation2 + $0xe0] sm:$0x22] 0
        %393 = vst [vmem:[#allocation2 + $0xe8] sm:$0x22] 0
        %394 = vst [vmem:[#allocation2 + $0x110] sm:$0x22] 0
        %395 = vst [vmem:[#allocation2 + $0x118] sm:$0x22] 0
        %396 = vst [vmem:[#allocation2 + $0x140] sm:$0x22] 0
        %397 = vst [vmem:[#allocation2 + $0x148] sm:$0x22] 0
        %398 = vst [vmem:[#allocation2 + $0x170] sm:$0x22] 0
        %399 = vst [vmem:[#allocation2 + $0x178] sm:$0x22] 0
        %v400 = vpack.c.bf16 %v353, %v352
        %v401 = vpack.c.bf16 %v355, %v354
        %v402 = vpack.c.bf16 %v357, %v356
        %v403 = vpack.c.bf16 %v359, %v358
        %v404 = vpack.c.bf16 %v361, %v360
        %v405 = vpack.c.bf16 %v363, %v362
        %v406 = vpack.c.bf16 %v365, %v364
        %v407 = vpack.c.bf16 %v367, %v366
        %v416 = vunpack.c.l.b16 %v400
        %v417 = vunpack.c.h.b16 %v400
        %v418 = vunpack.c.l.b16 %v401
        %v419 = vunpack.c.h.b16 %v401
        %v420 = vunpack.c.l.b16 %v402
        %v421 = vunpack.c.h.b16 %v402
        %v422 = vunpack.c.l.b16 %v403
        %v423 = vunpack.c.h.b16 %v403
        %v424 = vunpack.c.l.b16 %v404
        %v425 = vunpack.c.h.b16 %v404
        %v426 = vunpack.c.l.b16 %v405
        %v427 = vunpack.c.h.b16 %v405
        %v428 = vunpack.c.l.b16 %v406
        %v429 = vunpack.c.h.b16 %v406
        %v430 = vunpack.c.l.b16 %v407
        %v431 = vunpack.c.h.b16 %v407
        %v432 = vpack.c.b16 %v416, %v416
        %v433 = vpack.c.b16 %v417, %v417
        %v434 = vpack.c.b16 %v418, %v418
        %v435 = vpack.c.b16 %v419, %v419
        %v436 = vpack.c.b16 %v420, %v420
        %v437 = vpack.c.b16 %v421, %v421
        %v438 = vpack.c.b16 %v422, %v422
        %v439 = vpack.c.b16 %v423, %v423
        %v440 = vpack.c.b16 %v424, %v424
        %v441 = vpack.c.b16 %v425, %v425
        %v442 = vpack.c.b16 %v426, %v426
        %v443 = vpack.c.b16 %v427, %v427
        %v444 = vpack.c.b16 %v428, %v428
        %v445 = vpack.c.b16 %v429, %v429
        %v446 = vpack.c.b16 %v430, %v430
        %v447 = vpack.c.b16 %v431, %v431
        %vm448 = vcmask 1040384
        %vm449 = vcmask 1044484
        %vm450 = vmor %vm448, %vm449
        %v451 = vrot.slane %v432, 7
        %v452 = vrot.slane %v451, 4
        %v453 = vrot.slane %v433, 7
        %v454 = vsel %vm450, %v452, %v453
        %v455 = vrot.slane %v453, 4
        %v456 = vrot.slane %v434, 7
        %v457 = vrot.slane %v456, 4
        %v458 = vrot.slane %v435, 7
        %v459 = vsel %vm450, %v457, %v458
        %v460 = vrot.slane %v458, 4
        %v461 = vrot.slane %v436, 7
        %v462 = vrot.slane %v461, 4
        %v463 = vrot.slane %v437, 7
        %v464 = vsel %vm450, %v462, %v463
        %v465 = vrot.slane %v463, 4
        %v466 = vrot.slane %v438, 7
        %v467 = vrot.slane %v466, 4
        %v468 = vrot.slane %v439, 7
        %v469 = vsel %vm450, %v467, %v468
        %v470 = vrot.slane %v468, 4
        %v471 = vrot.slane %v440, 7
        %v472 = vrot.slane %v471, 4
        %v473 = vrot.slane %v441, 7
        %v474 = vsel %vm450, %v472, %v473
        %v475 = vrot.slane %v473, 4
        %v476 = vrot.slane %v442, 7
        %v477 = vrot.slane %v476, 4
        %v478 = vrot.slane %v443, 7
        %v479 = vsel %vm450, %v477, %v478
        %v480 = vrot.slane %v478, 4
        %v481 = vrot.slane %v444, 7
        %v482 = vrot.slane %v481, 4
        %v483 = vrot.slane %v445, 7
        %v484 = vsel %vm450, %v482, %v483
        %v485 = vrot.slane %v483, 4
        %v486 = vrot.slane %v446, 7
        %v487 = vrot.slane %v486, 4
        %v488 = vrot.slane %v447, 7
        %v489 = vsel %vm450, %v487, %v488
        %v490 = vrot.slane %v488, 4
        %515 = vst [vmem:[#allocation2] sm:$0xe] %v451
        %516 = vst [vmem:[#allocation2 + $0x10] sm:$0xf] %v454
        %517 = vst [vmem:[#allocation2 + $0x20] sm:$0x1] %v455
        %518 = vst [vmem:[#allocation2 + $0x30] sm:$0xe] %v456
        %519 = vst [vmem:[#allocation2 + $0x40] sm:$0xf] %v459
        %520 = vst [vmem:[#allocation2 + $0x50] sm:$0x1] %v460
        %521 = vst [vmem:[#allocation2 + $0x60] sm:$0xe] %v461
        %522 = vst [vmem:[#allocation2 + $0x70] sm:$0xf] %v464
        %523 = vst [vmem:[#allocation2 + $0x80] sm:$0x1] %v465
        %524 = vst [vmem:[#allocation2 + $0x90] sm:$0xe] %v466
        %525 = vst [vmem:[#allocation2 + $0xa0] sm:$0xf] %v469
        %526 = vst [vmem:[#allocation2 + $0xb0] sm:$0x1] %v470
        %527 = vst [vmem:[#allocation2 + $0xc0] sm:$0xe] %v471
        %528 = vst [vmem:[#allocation2 + $0xd0] sm:$0xf] %v474
        %529 = vst [vmem:[#allocation2 + $0xe0] sm:$0x1] %v475
        %530 = vst [vmem:[#allocation2 + $0xf0] sm:$0xe] %v476
        %531 = vst [vmem:[#allocation2 + $0x100] sm:$0xf] %v479
        %532 = vst [vmem:[#allocation2 + $0x110] sm:$0x1] %v480
        %533 = vst [vmem:[#allocation2 + $0x120] sm:$0xe] %v481
        %534 = vst [vmem:[#allocation2 + $0x130] sm:$0xf] %v484
        %535 = vst [vmem:[#allocation2 + $0x140] sm:$0x1] %v485
        %536 = vst [vmem:[#allocation2 + $0x150] sm:$0xe] %v486
        %537 = vst [vmem:[#allocation2 + $0x160] sm:$0xf] %v489
        %538 = vst [vmem:[#allocation2 + $0x170] sm:$0x1] %v490
        %v539 = vld [vmem:[%s304] sm:$0xff]
        %v540 = vld [vmem:[%s304 + $0x8] sm:$0xf]
        %v541 = vld [vmem:[%s304 + $0xc] sm:$0xff]
        %v542 = vld [vmem:[%s304 + $0x14] sm:$0xf]
        %v543 = vld [vmem:[%s304 + $0x18] sm:$0xff]
        %v544 = vld [vmem:[%s304 + $0x20] sm:$0xf]
        %v545 = vld [vmem:[%s304 + $0x24] sm:$0xff]
        %v546 = vld [vmem:[%s304 + $0x2c] sm:$0xf]
        %v547 = vld [vmem:[%s304 + $0x30] sm:$0xff]
        %v548 = vld [vmem:[%s304 + $0x38] sm:$0xf]
        %v549 = vld [vmem:[%s304 + $0x3c] sm:$0xff]
        %v550 = vld [vmem:[%s304 + $0x44] sm:$0xf]
        %v551 = vld [vmem:[%s304 + $0x48] sm:$0xff]
        %v552 = vld [vmem:[%s304 + $0x50] sm:$0xf]
        %v553 = vld [vmem:[%s304 + $0x54] sm:$0xff]
        %v554 = vld [vmem:[%s304 + $0x5c] sm:$0xf]
        %v555 = vld [vmem:[%s304 + $0x60] sm:$0xff]
        %v556 = vld [vmem:[%s304 + $0x68] sm:$0xf]
        %v557 = vld [vmem:[%s304 + $0x6c] sm:$0xff]
        %v558 = vld [vmem:[%s304 + $0x74] sm:$0xf]
        %v559 = vld [vmem:[%s304 + $0x78] sm:$0xff]
        %v560 = vld [vmem:[%s304 + $0x80] sm:$0xf]
        %v561 = vld [vmem:[%s304 + $0x84] sm:$0xff]
        %v562 = vld [vmem:[%s304 + $0x8c] sm:$0xf]
        %v563 = vld [vmem:[%s304 + $0x90] sm:$0xff]
        %v564 = vld [vmem:[%s304 + $0x98] sm:$0xf]
        %v565 = vld [vmem:[%s304 + $0x9c] sm:$0xff]
        %v566 = vld [vmem:[%s304 + $0xa4] sm:$0xf]
        %v567 = vld [vmem:[%s304 + $0xa8] sm:$0xff]
        %v568 = vld [vmem:[%s304 + $0xb0] sm:$0xf]
        %v569 = vld [vmem:[%s304 + $0xb4] sm:$0xff]
        %v570 = vld [vmem:[%s304 + $0xbc] sm:$0xf]
        %v603 = vrot.slane %v539, 7
        %v604 = vrot.slane %v540, 7
        %v605 = vrot.slane %v603, 4
        %v606 = vrot.slane %v541, 7
        %v607 = vsel %vm450, %v605, %v606
        %v608 = vrot.slane %v604, 4
        %v609 = vrot.slane %v542, 7
        %v610 = vsel %vm450, %v608, %v609
        %v611 = vrot.slane %v606, 4
        %v612 = vrot.slane %v609, 4
        %v613 = vrot.slane %v543, 7
        %v614 = vrot.slane %v544, 7
        %v615 = vrot.slane %v613, 4
        %v616 = vrot.slane %v545, 7
        %v617 = vsel %vm450, %v615, %v616
        %v618 = vrot.slane %v614, 4
        %v619 = vrot.slane %v546, 7
        %v620 = vsel %vm450, %v618, %v619
        %v621 = vrot.slane %v616, 4
        %v622 = vrot.slane %v619, 4
        %v623 = vrot.slane %v547, 7
        %v624 = vrot.slane %v548, 7
        %v625 = vrot.slane %v623, 4
        %v626 = vrot.slane %v549, 7
        %v627 = vsel %vm450, %v625, %v626
        %v628 = vrot.slane %v624, 4
        %v629 = vrot.slane %v550, 7
        %v630 = vsel %vm450, %v628, %v629
        %v631 = vrot.slane %v626, 4
        %v632 = vrot.slane %v629, 4
        %v633 = vrot.slane %v551, 7
        %v634 = vrot.slane %v552, 7
        %v635 = vrot.slane %v633, 4
        %v636 = vrot.slane %v553, 7
        %v637 = vsel %vm450, %v635, %v636
        %v638 = vrot.slane %v634, 4
        %v639 = vrot.slane %v554, 7
        %v640 = vsel %vm450, %v638, %v639
        %v641 = vrot.slane %v636, 4
        %v642 = vrot.slane %v639, 4
        %v643 = vrot.slane %v555, 7
        %v644 = vrot.slane %v556, 7
        %v645 = vrot.slane %v643, 4
        %v646 = vrot.slane %v557, 7
        %v647 = vsel %vm450, %v645, %v646
        %v648 = vrot.slane %v644, 4
        %v649 = vrot.slane %v558, 7
        %v650 = vsel %vm450, %v648, %v649
        %v651 = vrot.slane %v646, 4
        %v652 = vrot.slane %v649, 4
        %v653 = vrot.slane %v559, 7
        %v654 = vrot.slane %v560, 7
        %v655 = vrot.slane %v653, 4
        %v656 = vrot.slane %v561, 7
        %v657 = vsel %vm450, %v655, %v656
        %v658 = vrot.slane %v654, 4
        %v659 = vrot.slane %v562, 7
        %v660 = vsel %vm450, %v658, %v659
        %v661 = vrot.slane %v656, 4
        %v662 = vrot.slane %v659, 4
        %v663 = vrot.slane %v563, 7
        %v664 = vrot.slane %v564, 7
        %v665 = vrot.slane %v663, 4
        %v666 = vrot.slane %v565, 7
        %v667 = vsel %vm450, %v665, %v666
        %v668 = vrot.slane %v664, 4
        %v669 = vrot.slane %v566, 7
        %v670 = vsel %vm450, %v668, %v669
        %v671 = vrot.slane %v666, 4
        %v672 = vrot.slane %v669, 4
        %v673 = vrot.slane %v567, 7
        %v674 = vrot.slane %v568, 7
        %v675 = vrot.slane %v673, 4
        %v676 = vrot.slane %v569, 7
        %v677 = vsel %vm450, %v675, %v676
        %v678 = vrot.slane %v674, 4
        %v679 = vrot.slane %v570, 7
        %v680 = vsel %vm450, %v678, %v679
        %v681 = vrot.slane %v676, 4
        %v682 = vrot.slane %v679, 4
        %731 = vst [vmem:[#allocation2 + $0x4] sm:$0xee] %v603
        %732 = vst [vmem:[#allocation2 + $0xc] sm:$0xe] %v604
        %733 = vst [vmem:[#allocation2 + $0x14] sm:$0xff] %v607
        %734 = vst [vmem:[#allocation2 + $0x1c] sm:$0xf] %v610
        %735 = vst [vmem:[#allocation2 + $0x24] sm:$0x11] %v611
        %736 = vst [vmem:[#allocation2 + $0x2c] sm:$0x1] %v612
        %737 = vst [vmem:[#allocation2 + $0x34] sm:$0xee] %v613
        %738 = vst [vmem:[#allocation2 + $0x3c] sm:$0xe] %v614
        %739 = vst [vmem:[#allocation2 + $0x44] sm:$0xff] %v617
        %740 = vst [vmem:[#allocation2 + $0x4c] sm:$0xf] %v620
        %741 = vst [vmem:[#allocation2 + $0x54] sm:$0x11] %v621
        %742 = vst [vmem:[#allocation2 + $0x5c] sm:$0x1] %v622
        %743 = vst [vmem:[#allocation2 + $0x64] sm:$0xee] %v623
        %744 = vst [vmem:[#allocation2 + $0x6c] sm:$0xe] %v624
        %745 = vst [vmem:[#allocation2 + $0x74] sm:$0xff] %v627
        %746 = vst [vmem:[#allocation2 + $0x7c] sm:$0xf] %v630
        %747 = vst [vmem:[#allocation2 + $0x84] sm:$0x11] %v631
        %748 = vst [vmem:[#allocation2 + $0x8c] sm:$0x1] %v632
        %749 = vst [vmem:[#allocation2 + $0x94] sm:$0xee] %v633
        %750 = vst [vmem:[#allocation2 + $0x9c] sm:$0xe] %v634
        %751 = vst [vmem:[#allocation2 + $0xa4] sm:$0xff] %v637
        %752 = vst [vmem:[#allocation2 + $0xac] sm:$0xf] %v640
        %753 = vst [vmem:[#allocation2 + $0xb4] sm:$0x11] %v641
        %754 = vst [vmem:[#allocation2 + $0xbc] sm:$0x1] %v642
        %755 = vst [vmem:[#allocation2 + $0xc4] sm:$0xee] %v643
        %756 = vst [vmem:[#allocation2 + $0xcc] sm:$0xe] %v644
        %757 = vst [vmem:[#allocation2 + $0xd4] sm:$0xff] %v647
        %758 = vst [vmem:[#allocation2 + $0xdc] sm:$0xf] %v650
        %759 = vst [vmem:[#allocation2 + $0xe4] sm:$0x11] %v651
        %760 = vst [vmem:[#allocation2 + $0xec] sm:$0x1] %v652
        %761 = vst [vmem:[#allocation2 + $0xf4] sm:$0xee] %v653
        %762 = vst [vmem:[#allocation2 + $0xfc] sm:$0xe] %v654
        %763 = vst [vmem:[#allocation2 + $0x104] sm:$0xff] %v657
        %764 = vst [vmem:[#allocation2 + $0x10c] sm:$0xf] %v660
        %765 = vst [vmem:[#allocation2 + $0x114] sm:$0x11] %v661
        %766 = vst [vmem:[#allocation2 + $0x11c] sm:$0x1] %v662
        %767 = vst [vmem:[#allocation2 + $0x124] sm:$0xee] %v663
        %768 = vst [vmem:[#allocation2 + $0x12c] sm:$0xe] %v664
        %769 = vst [vmem:[#allocation2 + $0x134] sm:$0xff] %v667
        %770 = vst [vmem:[#allocation2 + $0x13c] sm:$0xf] %v670
        %771 = vst [vmem:[#allocation2 + $0x144] sm:$0x11] %v671
        %772 = vst [vmem:[#allocation2 + $0x14c] sm:$0x1] %v672
        %773 = vst [vmem:[#allocation2 + $0x154] sm:$0xee] %v673
        %774 = vst [vmem:[#allocation2 + $0x15c] sm:$0xe] %v674
        %775 = vst [vmem:[#allocation2 + $0x164] sm:$0xff] %v677
        %776 = vst [vmem:[#allocation2 + $0x16c] sm:$0xf] %v680
        %777 = vst [vmem:[#allocation2 + $0x174] sm:$0x11] %v681
        %778 = vst [vmem:[#allocation2 + $0x17c] sm:$0x1] %v682
        %v779 = vld [vmem:[#allocation2] sm:$0xff]
        %v780 = vld [vmem:[#allocation2 + $0x8] sm:$0xff]
        %v781 = vld [vmem:[#allocation2 + $0x10] sm:$0xff]
        %v782 = vld [vmem:[#allocation2 + $0x18] sm:$0xff]
        %v783 = vld [vmem:[#allocation2 + $0x30] sm:$0xff]
        %v784 = vld [vmem:[#allocation2 + $0x38] sm:$0xff]
        %v785 = vld [vmem:[#allocation2 + $0x40] sm:$0xff]
        %v786 = vld [vmem:[#allocation2 + $0x48] sm:$0xff]
        %v787 = vld [vmem:[#allocation2 + $0x60] sm:$0xff]
        %v788 = vld [vmem:[#allocation2 + $0x68] sm:$0xff]
        %v789 = vld [vmem:[#allocation2 + $0x70] sm:$0xff]
        %v790 = vld [vmem:[#allocation2 + $0x78] sm:$0xff]
        %v791 = vld [vmem:[#allocation2 + $0x90] sm:$0xff]
        %v792 = vld [vmem:[#allocation2 + $0x98] sm:$0xff]
        %v793 = vld [vmem:[#allocation2 + $0xa0] sm:$0xff]
        %v794 = vld [vmem:[#allocation2 + $0xa8] sm:$0xff]
        %v795 = vld [vmem:[#allocation2 + $0xc0] sm:$0xff]
        %v796 = vld [vmem:[#allocation2 + $0xc8] sm:$0xff]
        %v797 = vld [vmem:[#allocation2 + $0xd0] sm:$0xff]
        %v798 = vld [vmem:[#allocation2 + $0xd8] sm:$0xff]
        %v799 = vld [vmem:[#allocation2 + $0xf0] sm:$0xff]
        %v800 = vld [vmem:[#allocation2 + $0xf8] sm:$0xff]
        %v801 = vld [vmem:[#allocation2 + $0x100] sm:$0xff]
        %v802 = vld [vmem:[#allocation2 + $0x108] sm:$0xff]
        %v803 = vld [vmem:[#allocation2 + $0x120] sm:$0xff]
        %v804 = vld [vmem:[#allocation2 + $0x128] sm:$0xff]
        %v805 = vld [vmem:[#allocation2 + $0x130] sm:$0xff]
        %v806 = vld [vmem:[#allocation2 + $0x138] sm:$0xff]
        %v807 = vld [vmem:[#allocation2 + $0x150] sm:$0xff]
        %v808 = vld [vmem:[#allocation2 + $0x158] sm:$0xff]
        %v809 = vld [vmem:[#allocation2 + $0x160] sm:$0xff]
        %v810 = vld [vmem:[#allocation2 + $0x168] sm:$0xff]
        %811 = vst [vmem:[#allocation3] sm:$0xff] %v779
        %812 = vst [vmem:[#allocation3 + $0x8] sm:$0xff] %v780
        %813 = vst [vmem:[#allocation3 + $0x50] sm:$0xff] %v781
        %814 = vst [vmem:[#allocation3 + $0x58] sm:$0xff] %v782
        %815 = vst [vmem:[#allocation3 + $0xa0] sm:$0xff] %v783
        %816 = vst [vmem:[#allocation3 + $0xa8] sm:$0xff] %v784
        %817 = vst [vmem:[#allocation3 + $0xf0] sm:$0xff] %v785
        %818 = vst [vmem:[#allocation3 + $0xf8] sm:$0xff] %v786
        %819 = vst [vmem:[#allocation3 + $0x140] sm:$0xff] %v787
        %820 = vst [vmem:[#allocation3 + $0x148] sm:$0xff] %v788
        %821 = vst [vmem:[#allocation3 + $0x190] sm:$0xff] %v789
        %822 = vst [vmem:[#allocation3 + $0x198] sm:$0xff] %v790
        %823 = vst [vmem:[#allocation3 + $0x1e0] sm:$0xff] %v791
        %824 = vst [vmem:[#allocation3 + $0x1e8] sm:$0xff] %v792
        %825 = vst [vmem:[#allocation3 + $0x230] sm:$0xff] %v793
        %826 = vst [vmem:[#allocation3 + $0x238] sm:$0xff] %v794
        %827 = vst [vmem:[#allocation3 + $0x280] sm:$0xff] %v795
        %828 = vst [vmem:[#allocation3 + $0x288] sm:$0xff] %v796
        %829 = vst [vmem:[#allocation3 + $0x2d0] sm:$0xff] %v797
        %830 = vst [vmem:[#allocation3 + $0x2d8] sm:$0xff] %v798
        %831 = vst [vmem:[#allocation3 + $0x320] sm:$0xff] %v799
        %832 = vst [vmem:[#allocation3 + $0x328] sm:$0xff] %v800
        %833 = vst [vmem:[#allocation3 + $0x370] sm:$0xff] %v801
        %834 = vst [vmem:[#allocation3 + $0x378] sm:$0xff] %v802
        %835 = vst [vmem:[#allocation3 + $0x3c0] sm:$0xff] %v803
        %836 = vst [vmem:[#allocation3 + $0x3c8] sm:$0xff] %v804
        %837 = vst [vmem:[#allocation3 + $0x410] sm:$0xff] %v805
        %838 = vst [vmem:[#allocation3 + $0x418] sm:$0xff] %v806
        %839 = vst [vmem:[#allocation3 + $0x460] sm:$0xff] %v807
        %840 = vst [vmem:[#allocation3 + $0x468] sm:$0xff] %v808
        %841 = vst [vmem:[#allocation3 + $0x4b0] sm:$0xff] %v809
        %842 = vst [vmem:[#allocation3 + $0x4b8] sm:$0xff] %v810
        %v843 = vld [vmem:[#allocation2] sm:$0xff]
        %v844 = vld [vmem:[#allocation2 + $0x8] sm:$0xff]
        %v845 = vld [vmem:[#allocation2 + $0x10] sm:$0xff]
        %v846 = vld [vmem:[#allocation2 + $0x18] sm:$0xff]
        %v847 = vld [vmem:[#allocation2 + $0x20] sm:$0x11]
        %v848 = vld [vmem:[#allocation2 + $0x28] sm:$0x11]
        %v849 = vld [vmem:[#allocation2 + $0x30] sm:$0xff]
        %v850 = vld [vmem:[#allocation2 + $0x38] sm:$0xff]
        %v851 = vld [vmem:[#allocation2 + $0x40] sm:$0xff]
        %v852 = vld [vmem:[#allocation2 + $0x48] sm:$0xff]
        %v853 = vld [vmem:[#allocation2 + $0x50] sm:$0x11]
        %v854 = vld [vmem:[#allocation2 + $0x58] sm:$0x11]
        %v855 = vld [vmem:[#allocation2 + $0x60] sm:$0xff]
        %v856 = vld [vmem:[#allocation2 + $0x68] sm:$0xff]
        %v857 = vld [vmem:[#allocation2 + $0x70] sm:$0xff]
        %v858 = vld [vmem:[#allocation2 + $0x78] sm:$0xff]
        %v859 = vld [vmem:[#allocation2 + $0x80] sm:$0x11]
        %v860 = vld [vmem:[#allocation2 + $0x88] sm:$0x11]
        %v861 = vld [vmem:[#allocation2 + $0x90] sm:$0xff]
        %v862 = vld [vmem:[#allocation2 + $0x98] sm:$0xff]
        %v863 = vld [vmem:[#allocation2 + $0xa0] sm:$0xff]
        %v864 = vld [vmem:[#allocation2 + $0xa8] sm:$0xff]
        %v865 = vld [vmem:[#allocation2 + $0xb0] sm:$0x11]
        %v866 = vld [vmem:[#allocation2 + $0xb8] sm:$0x11]
        %v867 = vld [vmem:[#allocation2 + $0xc0] sm:$0xff]
        %v868 = vld [vmem:[#allocation2 + $0xc8] sm:$0xff]
        %v869 = vld [vmem:[#allocation2 + $0xd0] sm:$0xff]
        %v870 = vld [vmem:[#allocation2 + $0xd8] sm:$0xff]
        %v871 = vld [vmem:[#allocation2 + $0xe0] sm:$0x11]
        %v872 = vld [vmem:[#allocation2 + $0xe8] sm:$0x11]
        %v873 = vld [vmem:[#allocation2 + $0xf0] sm:$0xff]
        %v874 = vld [vmem:[#allocation2 + $0xf8] sm:$0xff]
        %v875 = vld [vmem:[#allocation2 + $0x100] sm:$0xff]
        %v876 = vld [vmem:[#allocation2 + $0x108] sm:$0xff]
        %v877 = vld [vmem:[#allocation2 + $0x110] sm:$0x11]
        %v878 = vld [vmem:[#allocation2 + $0x118] sm:$0x11]
        %v879 = vld [vmem:[#allocation2 + $0x120] sm:$0xff]
        %v880 = vld [vmem:[#allocation2 + $0x128] sm:$0xff]
        %v881 = vld [vmem:[#allocation2 + $0x130] sm:$0xff]
        %v882 = vld [vmem:[#allocation2 + $0x138] sm:$0xff]
        %v883 = vld [vmem:[#allocation2 + $0x140] sm:$0x11]
        %v884 = vld [vmem:[#allocation2 + $0x148] sm:$0x11]
        %v885 = vld [vmem:[#allocation2 + $0x150] sm:$0xff]
        %v886 = vld [vmem:[#allocation2 + $0x158] sm:$0xff]
        %v887 = vld [vmem:[#allocation2 + $0x160] sm:$0xff]
        %v888 = vld [vmem:[#allocation2 + $0x168] sm:$0xff]
        %v889 = vld [vmem:[#allocation2 + $0x170] sm:$0x11]
        %v890 = vld [vmem:[#allocation2 + $0x178] sm:$0x11]
        %vm891 = vsmask.f32 3328
        %vm892 = vsmask.f32 7440
        %vm893 = vmor %vm891, %vm892
        %v895 = vshrl.u32 %v843, 16
        %v897 = vrot.slane %v895, 4
        %v898 = vshll.u32 %v843, 16
        %v900 = vrot.slane %v898, 5
        %v901 = vor.u32 %v897, %v900
        %v902 = vrot.slane %v901, 4
        %v904 = vshll.u32 %v845, 16
        %v906 = vrot.slane %v904, 5
        %v907 = vsel %vm893, %v902, %v906
        %v909 = vshrl.u32 %v844, 16
        %v911 = vrot.slane %v909, 4
        %v912 = vshll.u32 %v844, 16
        %v914 = vrot.slane %v912, 5
        %v915 = vor.u32 %v911, %v914
        %v916 = vrot.slane %v915, 4
        %v918 = vshll.u32 %v846, 16
        %v920 = vrot.slane %v918, 5
        %v921 = vsel %vm893, %v916, %v920
        %v922 = vshrl.u32 %v845, 16
        %v924 = vrot.slane %v922, 4
        %v925 = vor.u32 %v924, %v906
        %v926 = vrot.slane %v925, 4
        %v928 = vshll.u32 %v847, 16
        %v930 = vrot.slane %v928, 5
        %v931 = vsel %vm893, %v926, %v930
        %v932 = vshrl.u32 %v846, 16
        %v934 = vrot.slane %v932, 4
        %v935 = vor.u32 %v934, %v920
        %v936 = vrot.slane %v935, 4
        %v938 = vshll.u32 %v848, 16
        %v940 = vrot.slane %v938, 5
        %v941 = vsel %vm893, %v936, %v940
        %v943 = vshrl.u32 %v849, 16
        %v945 = vrot.slane %v943, 4
        %v946 = vshll.u32 %v849, 16
        %v948 = vrot.slane %v946, 5
        %v949 = vor.u32 %v945, %v948
        %v950 = vrot.slane %v949, 4
        %v952 = vshll.u32 %v851, 16
        %v954 = vrot.slane %v952, 5
        %v955 = vsel %vm893, %v950, %v954
        %v957 = vshrl.u32 %v850, 16
        %v959 = vrot.slane %v957, 4
        %v960 = vshll.u32 %v850, 16
        %v962 = vrot.slane %v960, 5
        %v963 = vor.u32 %v959, %v962
        %v964 = vrot.slane %v963, 4
        %v966 = vshll.u32 %v852, 16
        %v968 = vrot.slane %v966, 5
        %v969 = vsel %vm893, %v964, %v968
        %v970 = vshrl.u32 %v851, 16
        %v972 = vrot.slane %v970, 4
        %v973 = vor.u32 %v972, %v954
        %v974 = vrot.slane %v973, 4
        %v976 = vshll.u32 %v853, 16
        %v978 = vrot.slane %v976, 5
        %v979 = vsel %vm893, %v974, %v978
        %v980 = vshrl.u32 %v852, 16
        %v982 = vrot.slane %v980, 4
        %v983 = vor.u32 %v982, %v968
        %v984 = vrot.slane %v983, 4
        %v986 = vshll.u32 %v854, 16
        %v988 = vrot.slane %v986, 5
        %v989 = vsel %vm893, %v984, %v988
        %v991 = vshrl.u32 %v855, 16
        %v993 = vrot.slane %v991, 4
        %v994 = vshll.u32 %v855, 16
        %v996 = vrot.slane %v994, 5
        %v997 = vor.u32 %v993, %v996
        %v998 = vrot.slane %v997, 4
        %v1000 = vshll.u32 %v857, 16
        %v1002 = vrot.slane %v1000, 5
        %v1003 = vsel %vm893, %v998, %v1002
        %v1005 = vshrl.u32 %v856, 16
        %v1007 = vrot.slane %v1005, 4
        %v1008 = vshll.u32 %v856, 16
        %v1010 = vrot.slane %v1008, 5
        %v1011 = vor.u32 %v1007, %v1010
        %v1012 = vrot.slane %v1011, 4
        %v1014 = vshll.u32 %v858, 16
        %v1016 = vrot.slane %v1014, 5
        %v1017 = vsel %vm893, %v1012, %v1016
        %v1018 = vshrl.u32 %v857, 16
        %v1020 = vrot.slane %v1018, 4
        %v1021 = vor.u32 %v1020, %v1002
        %v1022 = vrot.slane %v1021, 4
        %v1024 = vshll.u32 %v859, 16
        %v1026 = vrot.slane %v1024, 5
        %v1027 = vsel %vm893, %v1022, %v1026
        %v1028 = vshrl.u32 %v858, 16
        %v1030 = vrot.slane %v1028, 4
        %v1031 = vor.u32 %v1030, %v1016
        %v1032 = vrot.slane %v1031, 4
        %v1034 = vshll.u32 %v860, 16
        %v1036 = vrot.slane %v1034, 5
        %v1037 = vsel %vm893, %v1032, %v1036
        %v1039 = vshrl.u32 %v861, 16
        %v1041 = vrot.slane %v1039, 4
        %v1042 = vshll.u32 %v861, 16
        %v1044 = vrot.slane %v1042, 5
        %v1045 = vor.u32 %v1041, %v1044
        %v1046 = vrot.slane %v1045, 4
        %v1048 = vshll.u32 %v863, 16
        %v1050 = vrot.slane %v1048, 5
        %v1051 = vsel %vm893, %v1046, %v1050
        %v1053 = vshrl.u32 %v862, 16
        %v1055 = vrot.slane %v1053, 4
        %v1056 = vshll.u32 %v862, 16
        %v1058 = vrot.slane %v1056, 5
        %v1059 = vor.u32 %v1055, %v1058
        %v1060 = vrot.slane %v1059, 4
        %v1062 = vshll.u32 %v864, 16
        %v1064 = vrot.slane %v1062, 5
        %v1065 = vsel %vm893, %v1060, %v1064
        %v1066 = vshrl.u32 %v863, 16
        %v1068 = vrot.slane %v1066, 4
        %v1069 = vor.u32 %v1068, %v1050
        %v1070 = vrot.slane %v1069, 4
        %v1072 = vshll.u32 %v865, 16
        %v1074 = vrot.slane %v1072, 5
        %v1075 = vsel %vm893, %v1070, %v1074
        %v1076 = vshrl.u32 %v864, 16
        %v1078 = vrot.slane %v1076, 4
        %v1079 = vor.u32 %v1078, %v1064
        %v1080 = vrot.slane %v1079, 4
        %v1082 = vshll.u32 %v866, 16
        %v1084 = vrot.slane %v1082, 5
        %v1085 = vsel %vm893, %v1080, %v1084
        %v1087 = vshrl.u32 %v867, 16
        %v1089 = vrot.slane %v1087, 4
        %v1090 = vshll.u32 %v867, 16
        %v1092 = vrot.slane %v1090, 5
        %v1093 = vor.u32 %v1089, %v1092
        %v1094 = vrot.slane %v1093, 4
        %v1096 = vshll.u32 %v869, 16
        %v1098 = vrot.slane %v1096, 5
        %v1099 = vsel %vm893, %v1094, %v1098
        %v1101 = vshrl.u32 %v868, 16
        %v1103 = vrot.slane %v1101, 4
        %v1104 = vshll.u32 %v868, 16
        %v1106 = vrot.slane %v1104, 5
        %v1107 = vor.u32 %v1103, %v1106
        %v1108 = vrot.slane %v1107, 4
        %v1110 = vshll.u32 %v870, 16
        %v1112 = vrot.slane %v1110, 5
        %v1113 = vsel %vm893, %v1108, %v1112
        %v1114 = vshrl.u32 %v869, 16
        %v1116 = vrot.slane %v1114, 4
        %v1117 = vor.u32 %v1116, %v1098
        %v1118 = vrot.slane %v1117, 4
        %v1120 = vshll.u32 %v871, 16
        %v1122 = vrot.slane %v1120, 5
        %v1123 = vsel %vm893, %v1118, %v1122
        %v1124 = vshrl.u32 %v870, 16
        %v1126 = vrot.slane %v1124, 4
        %v1127 = vor.u32 %v1126, %v1112
        %v1128 = vrot.slane %v1127, 4
        %v1130 = vshll.u32 %v872, 16
        %v1132 = vrot.slane %v1130, 5
        %v1133 = vsel %vm893, %v1128, %v1132
        %v1135 = vshrl.u32 %v873, 16
        %v1137 = vrot.slane %v1135, 4
        %v1138 = vshll.u32 %v873, 16
        %v1140 = vrot.slane %v1138, 5
        %v1141 = vor.u32 %v1137, %v1140
        %v1142 = vrot.slane %v1141, 4
        %v1144 = vshll.u32 %v875, 16
        %v1146 = vrot.slane %v1144, 5
        %v1147 = vsel %vm893, %v1142, %v1146
        %v1149 = vshrl.u32 %v874, 16
        %v1151 = vrot.slane %v1149, 4
        %v1152 = vshll.u32 %v874, 16
        %v1154 = vrot.slane %v1152, 5
        %v1155 = vor.u32 %v1151, %v1154
        %v1156 = vrot.slane %v1155, 4
        %v1158 = vshll.u32 %v876, 16
        %v1160 = vrot.slane %v1158, 5
        %v1161 = vsel %vm893, %v1156, %v1160
        %v1162 = vshrl.u32 %v875, 16
        %v1164 = vrot.slane %v1162, 4
        %v1165 = vor.u32 %v1164, %v1146
        %v1166 = vrot.slane %v1165, 4
        %v1168 = vshll.u32 %v877, 16
        %v1170 = vrot.slane %v1168, 5
        %v1171 = vsel %vm893, %v1166, %v1170
        %v1172 = vshrl.u32 %v876, 16
        %v1174 = vrot.slane %v1172, 4
        %v1175 = vor.u32 %v1174, %v1160
        %v1176 = vrot.slane %v1175, 4
        %v1178 = vshll.u32 %v878, 16
        %v1180 = vrot.slane %v1178, 5
        %v1181 = vsel %vm893, %v1176, %v1180
        %v1183 = vshrl.u32 %v879, 16
        %v1185 = vrot.slane %v1183, 4
        %v1186 = vshll.u32 %v879, 16
        %v1188 = vrot.slane %v1186, 5
        %v1189 = vor.u32 %v1185, %v1188
        %v1190 = vrot.slane %v1189, 4
        %v1192 = vshll.u32 %v881, 16
        %v1194 = vrot.slane %v1192, 5
        %v1195 = vsel %vm893, %v1190, %v1194
        %v1197 = vshrl.u32 %v880, 16
        %v1199 = vrot.slane %v1197, 4
        %v1200 = vshll.u32 %v880, 16
        %v1202 = vrot.slane %v1200, 5
        %v1203 = vor.u32 %v1199, %v1202
        %v1204 = vrot.slane %v1203, 4
        %v1206 = vshll.u32 %v882, 16
        %v1208 = vrot.slane %v1206, 5
        %v1209 = vsel %vm893, %v1204, %v1208
        %v1210 = vshrl.u32 %v881, 16
        %v1212 = vrot.slane %v1210, 4
        %v1213 = vor.u32 %v1212, %v1194
        %v1214 = vrot.slane %v1213, 4
        %v1216 = vshll.u32 %v883, 16
        %v1218 = vrot.slane %v1216, 5
        %v1219 = vsel %vm893, %v1214, %v1218
        %v1220 = vshrl.u32 %v882, 16
        %v1222 = vrot.slane %v1220, 4
        %v1223 = vor.u32 %v1222, %v1208
        %v1224 = vrot.slane %v1223, 4
        %v1226 = vshll.u32 %v884, 16
        %v1228 = vrot.slane %v1226, 5
        %v1229 = vsel %vm893, %v1224, %v1228
        %v1231 = vshrl.u32 %v885, 16
        %v1233 = vrot.slane %v1231, 4
        %v1234 = vshll.u32 %v885, 16
        %v1236 = vrot.slane %v1234, 5
        %v1237 = vor.u32 %v1233, %v1236
        %v1238 = vrot.slane %v1237, 4
        %v1240 = vshll.u32 %v887, 16
        %v1242 = vrot.slane %v1240, 5
        %v1243 = vsel %vm893, %v1238, %v1242
        %v1245 = vshrl.u32 %v886, 16
        %v1247 = vrot.slane %v1245, 4
        %v1248 = vshll.u32 %v886, 16
        %v1250 = vrot.slane %v1248, 5
        %v1251 = vor.u32 %v1247, %v1250
        %v1252 = vrot.slane %v1251, 4
        %v1254 = vshll.u32 %v888, 16
        %v1256 = vrot.slane %v1254, 5
        %v1257 = vsel %vm893, %v1252, %v1256
        %v1258 = vshrl.u32 %v887, 16
        %v1260 = vrot.slane %v1258, 4
        %v1261 = vor.u32 %v1260, %v1242
        %v1262 = vrot.slane %v1261, 4
        %v1264 = vshll.u32 %v889, 16
        %v1266 = vrot.slane %v1264, 5
        %v1267 = vsel %vm893, %v1262, %v1266
        %v1268 = vshrl.u32 %v888, 16
        %v1270 = vrot.slane %v1268, 4
        %v1271 = vor.u32 %v1270, %v1256
        %v1272 = vrot.slane %v1271, 4
        %v1274 = vshll.u32 %v890, 16
        %v1276 = vrot.slane %v1274, 5
        %v1277 = vsel %vm893, %v1272, %v1276
        %1310 = vst [vmem:[#allocation3 + $0x10] sm:$0xff] %v907
        %1311 = vst [vmem:[#allocation3 + $0x18] sm:$0xff] %v921
        %1312 = vst [vmem:[#allocation3 + $0x60] sm:$0xff] %v931
        %1313 = vst [vmem:[#allocation3 + $0x68] sm:$0xff] %v941
        %1314 = vst [vmem:[#allocation3 + $0xb0] sm:$0xff] %v955
        %1315 = vst [vmem:[#allocation3 + $0xb8] sm:$0xff] %v969
        %1316 = vst [vmem:[#allocation3 + $0x100] sm:$0xff] %v979
        %1317 = vst [vmem:[#allocation3 + $0x108] sm:$0xff] %v989
        %1318 = vst [vmem:[#allocation3 + $0x150] sm:$0xff] %v1003
        %1319 = vst [vmem:[#allocation3 + $0x158] sm:$0xff] %v1017
        %1320 = vst [vmem:[#allocation3 + $0x1a0] sm:$0xff] %v1027
        %1321 = vst [vmem:[#allocation3 + $0x1a8] sm:$0xff] %v1037
        %1322 = vst [vmem:[#allocation3 + $0x1f0] sm:$0xff] %v1051
        %1323 = vst [vmem:[#allocation3 + $0x1f8] sm:$0xff] %v1065
        %1324 = vst [vmem:[#allocation3 + $0x240] sm:$0xff] %v1075
        %1325 = vst [vmem:[#allocation3 + $0x248] sm:$0xff] %v1085
        %1326 = vst [vmem:[#allocation3 + $0x290] sm:$0xff] %v1099
        %1327 = vst [vmem:[#allocation3 + $0x298] sm:$0xff] %v1113
        %1328 = vst [vmem:[#allocation3 + $0x2e0] sm:$0xff] %v1123
        %1329 = vst [vmem:[#allocation3 + $0x2e8] sm:$0xff] %v1133
        %1330 = vst [vmem:[#allocation3 + $0x330] sm:$0xff] %v1147
        %1331 = vst [vmem:[#allocation3 + $0x338] sm:$0xff] %v1161
        %1332 = vst [vmem:[#allocation3 + $0x380] sm:$0xff] %v1171
        %1333 = vst [vmem:[#allocation3 + $0x388] sm:$0xff] %v1181
        %1334 = vst [vmem:[#allocation3 + $0x3d0] sm:$0xff] %v1195
        %1335 = vst [vmem:[#allocation3 + $0x3d8] sm:$0xff] %v1209
        %1336 = vst [vmem:[#allocation3 + $0x420] sm:$0xff] %v1219
        %1337 = vst [vmem:[#allocation3 + $0x428] sm:$0xff] %v1229
        %1338 = vst [vmem:[#allocation3 + $0x470] sm:$0xff] %v1243
        %1339 = vst [vmem:[#allocation3 + $0x478] sm:$0xff] %v1257
        %1340 = vst [vmem:[#allocation3 + $0x4c0] sm:$0xff] %v1267
        %1341 = vst [vmem:[#allocation3 + $0x4c8] sm:$0xff] %v1277
        %v1342 = vld [vmem:[#allocation2] sm:$0xee]
        %v1343 = vld [vmem:[#allocation2 + $0x8] sm:$0xee]
        %v1344 = vld [vmem:[#allocation2 + $0x10] sm:$0xff]
        %v1345 = vld [vmem:[#allocation2 + $0x18] sm:$0xff]
        %v1346 = vld [vmem:[#allocation2 + $0x20] sm:$0x11]
        %v1347 = vld [vmem:[#allocation2 + $0x28] sm:$0x11]
        %v1348 = vld [vmem:[#allocation2 + $0x30] sm:$0xee]
        %v1349 = vld [vmem:[#allocation2 + $0x38] sm:$0xee]
        %v1350 = vld [vmem:[#allocation2 + $0x40] sm:$0xff]
        %v1351 = vld [vmem:[#allocation2 + $0x48] sm:$0xff]
        %v1352 = vld [vmem:[#allocation2 + $0x50] sm:$0x11]
        %v1353 = vld [vmem:[#allocation2 + $0x58] sm:$0x11]
        %v1354 = vld [vmem:[#allocation2 + $0x60] sm:$0xee]
        %v1355 = vld [vmem:[#allocation2 + $0x68] sm:$0xee]
        %v1356 = vld [vmem:[#allocation2 + $0x70] sm:$0xff]
        %v1357 = vld [vmem:[#allocation2 + $0x78] sm:$0xff]
        %v1358 = vld [vmem:[#allocation2 + $0x80] sm:$0x11]
        %v1359 = vld [vmem:[#allocation2 + $0x88] sm:$0x11]
        %v1360 = vld [vmem:[#allocation2 + $0x90] sm:$0xee]
        %v1361 = vld [vmem:[#allocation2 + $0x98] sm:$0xee]
        %v1362 = vld [vmem:[#allocation2 + $0xa0] sm:$0xff]
        %v1363 = vld [vmem:[#allocation2 + $0xa8] sm:$0xff]
        %v1364 = vld [vmem:[#allocation2 + $0xb0] sm:$0x11]
        %v1365 = vld [vmem:[#allocation2 + $0xb8] sm:$0x11]
        %v1366 = vld [vmem:[#allocation2 + $0xc0] sm:$0xee]
        %v1367 = vld [vmem:[#allocation2 + $0xc8] sm:$0xee]
        %v1368 = vld [vmem:[#allocation2 + $0xd0] sm:$0xff]
        %v1369 = vld [vmem:[#allocation2 + $0xd8] sm:$0xff]
        %v1370 = vld [vmem:[#allocation2 + $0xe0] sm:$0x11]
        %v1371 = vld [vmem:[#allocation2 + $0xe8] sm:$0x11]
        %v1372 = vld [vmem:[#allocation2 + $0xf0] sm:$0xee]
        %v1373 = vld [vmem:[#allocation2 + $0xf8] sm:$0xee]
        %v1374 = vld [vmem:[#allocation2 + $0x100] sm:$0xff]
        %v1375 = vld [vmem:[#allocation2 + $0x108] sm:$0xff]
        %v1376 = vld [vmem:[#allocation2 + $0x110] sm:$0x11]
        %v1377 = vld [vmem:[#allocation2 + $0x118] sm:$0x11]
        %v1378 = vld [vmem:[#allocation2 + $0x120] sm:$0xee]
        %v1379 = vld [vmem:[#allocation2 + $0x128] sm:$0xee]
        %v1380 = vld [vmem:[#allocation2 + $0x130] sm:$0xff]
        %v1381 = vld [vmem:[#allocation2 + $0x138] sm:$0xff]
        %v1382 = vld [vmem:[#allocation2 + $0x140] sm:$0x11]
        %v1383 = vld [vmem:[#allocation2 + $0x148] sm:$0x11]
        %v1384 = vld [vmem:[#allocation2 + $0x150] sm:$0xee]
        %v1385 = vld [vmem:[#allocation2 + $0x158] sm:$0xee]
        %v1386 = vld [vmem:[#allocation2 + $0x160] sm:$0xff]
        %v1387 = vld [vmem:[#allocation2 + $0x168] sm:$0xff]
        %v1388 = vld [vmem:[#allocation2 + $0x170] sm:$0x11]
        %v1389 = vld [vmem:[#allocation2 + $0x178] sm:$0x11]
        %vm1438 = vcmask 1042432
        %vm1439 = vcmask 1046532
        %vm1440 = vmor %vm1438, %vm1439
        %v1441 = vrot.slane %v1342, 5
        %v1442 = vrot.slane %v1441, 4
        %v1443 = vrot.slane %v1344, 5
        %v1444 = vsel %vm1440, %v1442, %v1443
        %v1445 = vrot.slane %v1343, 5
        %v1446 = vrot.slane %v1445, 4
        %v1447 = vrot.slane %v1345, 5
        %v1448 = vsel %vm1440, %v1446, %v1447
        %v1449 = vrot.slane %v1443, 4
        %v1450 = vrot.slane %v1346, 5
        %v1451 = vsel %vm1440, %v1449, %v1450
        %v1452 = vrot.slane %v1447, 4
        %v1453 = vrot.slane %v1347, 5
        %v1454 = vsel %vm1440, %v1452, %v1453
        %v1455 = vrot.slane %v1348, 5
        %v1456 = vrot.slane %v1455, 4
        %v1457 = vrot.slane %v1350, 5
        %v1458 = vsel %vm1440, %v1456, %v1457
        %v1459 = vrot.slane %v1349, 5
        %v1460 = vrot.slane %v1459, 4
        %v1461 = vrot.slane %v1351, 5
        %v1462 = vsel %vm1440, %v1460, %v1461
        %v1463 = vrot.slane %v1457, 4
        %v1464 = vrot.slane %v1352, 5
        %v1465 = vsel %vm1440, %v1463, %v1464
        %v1466 = vrot.slane %v1461, 4
        %v1467 = vrot.slane %v1353, 5
        %v1468 = vsel %vm1440, %v1466, %v1467
        %v1469 = vrot.slane %v1354, 5
        %v1470 = vrot.slane %v1469, 4
        %v1471 = vrot.slane %v1356, 5
        %v1472 = vsel %vm1440, %v1470, %v1471
        %v1473 = vrot.slane %v1355, 5
        %v1474 = vrot.slane %v1473, 4
        %v1475 = vrot.slane %v1357, 5
        %v1476 = vsel %vm1440, %v1474, %v1475
        %v1477 = vrot.slane %v1471, 4
        %v1478 = vrot.slane %v1358, 5
        %v1479 = vsel %vm1440, %v1477, %v1478
        %v1480 = vrot.slane %v1475, 4
        %v1481 = vrot.slane %v1359, 5
        %v1482 = vsel %vm1440, %v1480, %v1481
        %v1483 = vrot.slane %v1360, 5
        %v1484 = vrot.slane %v1483, 4
        %v1485 = vrot.slane %v1362, 5
        %v1486 = vsel %vm1440, %v1484, %v1485
        %v1487 = vrot.slane %v1361, 5
        %v1488 = vrot.slane %v1487, 4
        %v1489 = vrot.slane %v1363, 5
        %v1490 = vsel %vm1440, %v1488, %v1489
        %v1491 = vrot.slane %v1485, 4
        %v1492 = vrot.slane %v1364, 5
        %v1493 = vsel %vm1440, %v1491, %v1492
        %v1494 = vrot.slane %v1489, 4
        %v1495 = vrot.slane %v1365, 5
        %v1496 = vsel %vm1440, %v1494, %v1495
        %v1497 = vrot.slane %v1366, 5
        %v1498 = vrot.slane %v1497, 4
        %v1499 = vrot.slane %v1368, 5
        %v1500 = vsel %vm1440, %v1498, %v1499
        %v1501 = vrot.slane %v1367, 5
        %v1502 = vrot.slane %v1501, 4
        %v1503 = vrot.slane %v1369, 5
        %v1504 = vsel %vm1440, %v1502, %v1503
        %v1505 = vrot.slane %v1499, 4
        %v1506 = vrot.slane %v1370, 5
        %v1507 = vsel %vm1440, %v1505, %v1506
        %v1508 = vrot.slane %v1503, 4
        %v1509 = vrot.slane %v1371, 5
        %v1510 = vsel %vm1440, %v1508, %v1509
        %v1511 = vrot.slane %v1372, 5
        %v1512 = vrot.slane %v1511, 4
        %v1513 = vrot.slane %v1374, 5
        %v1514 = vsel %vm1440, %v1512, %v1513
        %v1515 = vrot.slane %v1373, 5
        %v1516 = vrot.slane %v1515, 4
        %v1517 = vrot.slane %v1375, 5
        %v1518 = vsel %vm1440, %v1516, %v1517
        %v1519 = vrot.slane %v1513, 4
        %v1520 = vrot.slane %v1376, 5
        %v1521 = vsel %vm1440, %v1519, %v1520
        %v1522 = vrot.slane %v1517, 4
        %v1523 = vrot.slane %v1377, 5
        %v1524 = vsel %vm1440, %v1522, %v1523
        %v1525 = vrot.slane %v1378, 5
        %v1526 = vrot.slane %v1525, 4
        %v1527 = vrot.slane %v1380, 5
        %v1528 = vsel %vm1440, %v1526, %v1527
        %v1529 = vrot.slane %v1379, 5
        %v1530 = vrot.slane %v1529, 4
        %v1531 = vrot.slane %v1381, 5
        %v1532 = vsel %vm1440, %v1530, %v1531
        %v1533 = vrot.slane %v1527, 4
        %v1534 = vrot.slane %v1382, 5
        %v1535 = vsel %vm1440, %v1533, %v1534
        %v1536 = vrot.slane %v1531, 4
        %v1537 = vrot.slane %v1383, 5
        %v1538 = vsel %vm1440, %v1536, %v1537
        %v1539 = vrot.slane %v1384, 5
        %v1540 = vrot.slane %v1539, 4
        %v1541 = vrot.slane %v1386, 5
        %v1542 = vsel %vm1440, %v1540, %v1541
        %v1543 = vrot.slane %v1385, 5
        %v1544 = vrot.slane %v1543, 4
        %v1545 = vrot.slane %v1387, 5
        %v1546 = vsel %vm1440, %v1544, %v1545
        %v1547 = vrot.slane %v1541, 4
        %v1548 = vrot.slane %v1388, 5
        %v1549 = vsel %vm1440, %v1547, %v1548
        %v1550 = vrot.slane %v1545, 4
        %v1551 = vrot.slane %v1389, 5
        %v1552 = vsel %vm1440, %v1550, %v1551
        %1585 = vst [vmem:[#allocation3 + $0x20] sm:$0xff] %v1444
        %1586 = vst [vmem:[#allocation3 + $0x28] sm:$0xff] %v1448
        %1587 = vst [vmem:[#allocation3 + $0x70] sm:$0xff] %v1451
        %1588 = vst [vmem:[#allocation3 + $0x78] sm:$0xff] %v1454
        %1589 = vst [vmem:[#allocation3 + $0xc0] sm:$0xff] %v1458
        %1590 = vst [vmem:[#allocation3 + $0xc8] sm:$0xff] %v1462
        %1591 = vst [vmem:[#allocation3 + $0x110] sm:$0xff] %v1465
        %1592 = vst [vmem:[#allocation3 + $0x118] sm:$0xff] %v1468
        %1593 = vst [vmem:[#allocation3 + $0x160] sm:$0xff] %v1472
        %1594 = vst [vmem:[#allocation3 + $0x168] sm:$0xff] %v1476
        %1595 = vst [vmem:[#allocation3 + $0x1b0] sm:$0xff] %v1479
        %1596 = vst [vmem:[#allocation3 + $0x1b8] sm:$0xff] %v1482
        %1597 = vst [vmem:[#allocation3 + $0x200] sm:$0xff] %v1486
        %1598 = vst [vmem:[#allocation3 + $0x208] sm:$0xff] %v1490
        %1599 = vst [vmem:[#allocation3 + $0x250] sm:$0xff] %v1493
        %1600 = vst [vmem:[#allocation3 + $0x258] sm:$0xff] %v1496
        %1601 = vst [vmem:[#allocation3 + $0x2a0] sm:$0xff] %v1500
        %1602 = vst [vmem:[#allocation3 + $0x2a8] sm:$0xff] %v1504
        %1603 = vst [vmem:[#allocation3 + $0x2f0] sm:$0xff] %v1507
        %1604 = vst [vmem:[#allocation3 + $0x2f8] sm:$0xff] %v1510
        %1605 = vst [vmem:[#allocation3 + $0x340] sm:$0xff] %v1514
        %1606 = vst [vmem:[#allocation3 + $0x348] sm:$0xff] %v1518
        %1607 = vst [vmem:[#allocation3 + $0x390] sm:$0xff] %v1521
        %1608 = vst [vmem:[#allocation3 + $0x398] sm:$0xff] %v1524
        %1609 = vst [vmem:[#allocation3 + $0x3e0] sm:$0xff] %v1528
        %1610 = vst [vmem:[#allocation3 + $0x3e8] sm:$0xff] %v1532
        %1611 = vst [vmem:[#allocation3 + $0x430] sm:$0xff] %v1535
        %1612 = vst [vmem:[#allocation3 + $0x438] sm:$0xff] %v1538
        %1613 = vst [vmem:[#allocation3 + $0x480] sm:$0xff] %v1542
        %1614 = vst [vmem:[#allocation3 + $0x488] sm:$0xff] %v1546
        %1615 = vst [vmem:[#allocation3 + $0x4d0] sm:$0xff] %v1549
        %1616 = vst [vmem:[#allocation3 + $0x4d8] sm:$0xff] %v1552
        %v1617 = vld [vmem:[#allocation2] sm:$0xee]
        %v1618 = vld [vmem:[#allocation2 + $0x8] sm:$0xee]
        %v1619 = vld [vmem:[#allocation2 + $0x10] sm:$0xff]
        %v1620 = vld [vmem:[#allocation2 + $0x18] sm:$0xff]
        %v1621 = vld [vmem:[#allocation2 + $0x20] sm:$0x33]
        %v1622 = vld [vmem:[#allocation2 + $0x28] sm:$0x33]
        %v1623 = vld [vmem:[#allocation2 + $0x30] sm:$0xee]
        %v1624 = vld [vmem:[#allocation2 + $0x38] sm:$0xee]
        %v1625 = vld [vmem:[#allocation2 + $0x40] sm:$0xff]
        %v1626 = vld [vmem:[#allocation2 + $0x48] sm:$0xff]
        %v1627 = vld [vmem:[#allocation2 + $0x50] sm:$0x33]
        %v1628 = vld [vmem:[#allocation2 + $0x58] sm:$0x33]
        %v1629 = vld [vmem:[#allocation2 + $0x60] sm:$0xee]
        %v1630 = vld [vmem:[#allocation2 + $0x68] sm:$0xee]
        %v1631 = vld [vmem:[#allocation2 + $0x70] sm:$0xff]
        %v1632 = vld [vmem:[#allocation2 + $0x78] sm:$0xff]
        %v1633 = vld [vmem:[#allocation2 + $0x80] sm:$0x33]
        %v1634 = vld [vmem:[#allocation2 + $0x88] sm:$0x33]
        %v1635 = vld [vmem:[#allocation2 + $0x90] sm:$0xee]
        %v1636 = vld [vmem:[#allocation2 + $0x98] sm:$0xee]
        %v1637 = vld [vmem:[#allocation2 + $0xa0] sm:$0xff]
        %v1638 = vld [vmem:[#allocation2 + $0xa8] sm:$0xff]
        %v1639 = vld [vmem:[#allocation2 + $0xb0] sm:$0x33]
        %v1640 = vld [vmem:[#allocation2 + $0xb8] sm:$0x33]
        %v1641 = vld [vmem:[#allocation2 + $0xc0] sm:$0xee]
        %v1642 = vld [vmem:[#allocation2 + $0xc8] sm:$0xee]
        %v1643 = vld [vmem:[#allocation2 + $0xd0] sm:$0xff]
        %v1644 = vld [vmem:[#allocation2 + $0xd8] sm:$0xff]
        %v1645 = vld [vmem:[#allocation2 + $0xe0] sm:$0x33]
        %v1646 = vld [vmem:[#allocation2 + $0xe8] sm:$0x33]
        %v1647 = vld [vmem:[#allocation2 + $0xf0] sm:$0xee]
        %v1648 = vld [vmem:[#allocation2 + $0xf8] sm:$0xee]
        %v1649 = vld [vmem:[#allocation2 + $0x100] sm:$0xff]
        %v1650 = vld [vmem:[#allocation2 + $0x108] sm:$0xff]
        %v1651 = vld [vmem:[#allocation2 + $0x110] sm:$0x33]
        %v1652 = vld [vmem:[#allocation2 + $0x118] sm:$0x33]
        %v1653 = vld [vmem:[#allocation2 + $0x120] sm:$0xee]
        %v1654 = vld [vmem:[#allocation2 + $0x128] sm:$0xee]
        %v1655 = vld [vmem:[#allocation2 + $0x130] sm:$0xff]
        %v1656 = vld [vmem:[#allocation2 + $0x138] sm:$0xff]
        %v1657 = vld [vmem:[#allocation2 + $0x140] sm:$0x33]
        %v1658 = vld [vmem:[#allocation2 + $0x148] sm:$0x33]
        %v1659 = vld [vmem:[#allocation2 + $0x150] sm:$0xee]
        %v1660 = vld [vmem:[#allocation2 + $0x158] sm:$0xee]
        %v1661 = vld [vmem:[#allocation2 + $0x160] sm:$0xff]
        %v1662 = vld [vmem:[#allocation2 + $0x168] sm:$0xff]
        %v1663 = vld [vmem:[#allocation2 + $0x170] sm:$0x33]
        %v1664 = vld [vmem:[#allocation2 + $0x178] sm:$0x33]
        %vm1665 = vsmask.f32 2304
        %vm1666 = vsmask.f32 6416
        %vm1667 = vmor %vm1665, %vm1666
        %v1669 = vshrl.u32 %v1617, 16
        %v1671 = vrot.slane %v1669, 5
        %v1672 = vshll.u32 %v1617, 16
        %v1674 = vrot.slane %v1672, 6
        %v1675 = vor.u32 %v1671, %v1674
        %v1676 = vrot.slane %v1675, 4
        %v1678 = vshrl.u32 %v1619, 16
        %v1680 = vrot.slane %v1678, 5
        %v1681 = vshll.u32 %v1619, 16
        %v1683 = vrot.slane %v1681, 6
        %v1684 = vor.u32 %v1680, %v1683
        %v1685 = vsel %vm1667, %v1676, %v1684
        %v1687 = vshrl.u32 %v1618, 16
        %v1689 = vrot.slane %v1687, 5
        %v1690 = vshll.u32 %v1618, 16
        %v1692 = vrot.slane %v1690, 6
        %v1693 = vor.u32 %v1689, %v1692
        %v1694 = vrot.slane %v1693, 4
        %v1696 = vshrl.u32 %v1620, 16
        %v1698 = vrot.slane %v1696, 5
        %v1699 = vshll.u32 %v1620, 16
        %v1701 = vrot.slane %v1699, 6
        %v1702 = vor.u32 %v1698, %v1701
        %v1703 = vsel %vm1667, %v1694, %v1702
        %v1704 = vrot.slane %v1684, 4
        %v1706 = vshrl.u32 %v1621, 16
        %v1708 = vrot.slane %v1706, 5
        %v1709 = vshll.u32 %v1621, 16
        %v1711 = vrot.slane %v1709, 6
        %v1712 = vor.u32 %v1708, %v1711
        %v1713 = vsel %vm1667, %v1704, %v1712
        %v1714 = vrot.slane %v1702, 4
        %v1716 = vshrl.u32 %v1622, 16
        %v1718 = vrot.slane %v1716, 5
        %v1719 = vshll.u32 %v1622, 16
        %v1721 = vrot.slane %v1719, 6
        %v1722 = vor.u32 %v1718, %v1721
        %v1723 = vsel %vm1667, %v1714, %v1722
        %v1725 = vshrl.u32 %v1623, 16
        %v1727 = vrot.slane %v1725, 5
        %v1728 = vshll.u32 %v1623, 16
        %v1730 = vrot.slane %v1728, 6
        %v1731 = vor.u32 %v1727, %v1730
        %v1732 = vrot.slane %v1731, 4
        %v1734 = vshrl.u32 %v1625, 16
        %v1736 = vrot.slane %v1734, 5
        %v1737 = vshll.u32 %v1625, 16
        %v1739 = vrot.slane %v1737, 6
        %v1740 = vor.u32 %v1736, %v1739
        %v1741 = vsel %vm1667, %v1732, %v1740
        %v1743 = vshrl.u32 %v1624, 16
        %v1745 = vrot.slane %v1743, 5
        %v1746 = vshll.u32 %v1624, 16
        %v1748 = vrot.slane %v1746, 6
        %v1749 = vor.u32 %v1745, %v1748
        %v1750 = vrot.slane %v1749, 4
        %v1752 = vshrl.u32 %v1626, 16
        %v1754 = vrot.slane %v1752, 5
        %v1755 = vshll.u32 %v1626, 16
        %v1757 = vrot.slane %v1755, 6
        %v1758 = vor.u32 %v1754, %v1757
        %v1759 = vsel %vm1667, %v1750, %v1758
        %v1760 = vrot.slane %v1740, 4
        %v1762 = vshrl.u32 %v1627, 16
        %v1764 = vrot.slane %v1762, 5
        %v1765 = vshll.u32 %v1627, 16
        %v1767 = vrot.slane %v1765, 6
        %v1768 = vor.u32 %v1764, %v1767
        %v1769 = vsel %vm1667, %v1760, %v1768
        %v1770 = vrot.slane %v1758, 4
        %v1772 = vshrl.u32 %v1628, 16
        %v1774 = vrot.slane %v1772, 5
        %v1775 = vshll.u32 %v1628, 16
        %v1777 = vrot.slane %v1775, 6
        %v1778 = vor.u32 %v1774, %v1777
        %v1779 = vsel %vm1667, %v1770, %v1778
        %v1781 = vshrl.u32 %v1629, 16
        %v1783 = vrot.slane %v1781, 5
        %v1784 = vshll.u32 %v1629, 16
        %v1786 = vrot.slane %v1784, 6
        %v1787 = vor.u32 %v1783, %v1786
        %v1788 = vrot.slane %v1787, 4
        %v1790 = vshrl.u32 %v1631, 16
        %v1792 = vrot.slane %v1790, 5
        %v1793 = vshll.u32 %v1631, 16
        %v1795 = vrot.slane %v1793, 6
        %v1796 = vor.u32 %v1792, %v1795
        %v1797 = vsel %vm1667, %v1788, %v1796
        %v1799 = vshrl.u32 %v1630, 16
        %v1801 = vrot.slane %v1799, 5
        %v1802 = vshll.u32 %v1630, 16
        %v1804 = vrot.slane %v1802, 6
        %v1805 = vor.u32 %v1801, %v1804
        %v1806 = vrot.slane %v1805, 4
        %v1808 = vshrl.u32 %v1632, 16
        %v1810 = vrot.slane %v1808, 5
        %v1811 = vshll.u32 %v1632, 16
        %v1813 = vrot.slane %v1811, 6
        %v1814 = vor.u32 %v1810, %v1813
        %v1815 = vsel %vm1667, %v1806, %v1814
        %v1816 = vrot.slane %v1796, 4
        %v1818 = vshrl.u32 %v1633, 16
        %v1820 = vrot.slane %v1818, 5
        %v1821 = vshll.u32 %v1633, 16
        %v1823 = vrot.slane %v1821, 6
        %v1824 = vor.u32 %v1820, %v1823
        %v1825 = vsel %vm1667, %v1816, %v1824
        %v1826 = vrot.slane %v1814, 4
        %v1828 = vshrl.u32 %v1634, 16
        %v1830 = vrot.slane %v1828, 5
        %v1831 = vshll.u32 %v1634, 16
        %v1833 = vrot.slane %v1831, 6
        %v1834 = vor.u32 %v1830, %v1833
        %v1835 = vsel %vm1667, %v1826, %v1834
        %v1837 = vshrl.u32 %v1635, 16
        %v1839 = vrot.slane %v1837, 5
        %v1840 = vshll.u32 %v1635, 16
        %v1842 = vrot.slane %v1840, 6
        %v1843 = vor.u32 %v1839, %v1842
        %v1844 = vrot.slane %v1843, 4
        %v1846 = vshrl.u32 %v1637, 16
        %v1848 = vrot.slane %v1846, 5
        %v1849 = vshll.u32 %v1637, 16
        %v1851 = vrot.slane %v1849, 6
        %v1852 = vor.u32 %v1848, %v1851
        %v1853 = vsel %vm1667, %v1844, %v1852
        %v1855 = vshrl.u32 %v1636, 16
        %v1857 = vrot.slane %v1855, 5
        %v1858 = vshll.u32 %v1636, 16
        %v1860 = vrot.slane %v1858, 6
        %v1861 = vor.u32 %v1857, %v1860
        %v1862 = vrot.slane %v1861, 4
        %v1864 = vshrl.u32 %v1638, 16
        %v1866 = vrot.slane %v1864, 5
        %v1867 = vshll.u32 %v1638, 16
        %v1869 = vrot.slane %v1867, 6
        %v1870 = vor.u32 %v1866, %v1869
        %v1871 = vsel %vm1667, %v1862, %v1870
        %v1872 = vrot.slane %v1852, 4
        %v1874 = vshrl.u32 %v1639, 16
        %v1876 = vrot.slane %v1874, 5
        %v1877 = vshll.u32 %v1639, 16
        %v1879 = vrot.slane %v1877, 6
        %v1880 = vor.u32 %v1876, %v1879
        %v1881 = vsel %vm1667, %v1872, %v1880
        %v1882 = vrot.slane %v1870, 4
        %v1884 = vshrl.u32 %v1640, 16
        %v1886 = vrot.slane %v1884, 5
        %v1887 = vshll.u32 %v1640, 16
        %v1889 = vrot.slane %v1887, 6
        %v1890 = vor.u32 %v1886, %v1889
        %v1891 = vsel %vm1667, %v1882, %v1890
        %v1893 = vshrl.u32 %v1641, 16
        %v1895 = vrot.slane %v1893, 5
        %v1896 = vshll.u32 %v1641, 16
        %v1898 = vrot.slane %v1896, 6
        %v1899 = vor.u32 %v1895, %v1898
        %v1900 = vrot.slane %v1899, 4
        %v1902 = vshrl.u32 %v1643, 16
        %v1904 = vrot.slane %v1902, 5
        %v1905 = vshll.u32 %v1643, 16
        %v1907 = vrot.slane %v1905, 6
        %v1908 = vor.u32 %v1904, %v1907
        %v1909 = vsel %vm1667, %v1900, %v1908
        %v1911 = vshrl.u32 %v1642, 16
        %v1913 = vrot.slane %v1911, 5
        %v1914 = vshll.u32 %v1642, 16
        %v1916 = vrot.slane %v1914, 6
        %v1917 = vor.u32 %v1913, %v1916
        %v1918 = vrot.slane %v1917, 4
        %v1920 = vshrl.u32 %v1644, 16
        %v1922 = vrot.slane %v1920, 5
        %v1923 = vshll.u32 %v1644, 16
        %v1925 = vrot.slane %v1923, 6
        %v1926 = vor.u32 %v1922, %v1925
        %v1927 = vsel %vm1667, %v1918, %v1926
        %v1928 = vrot.slane %v1908, 4
        %v1930 = vshrl.u32 %v1645, 16
        %v1932 = vrot.slane %v1930, 5
        %v1933 = vshll.u32 %v1645, 16
        %v1935 = vrot.slane %v1933, 6
        %v1936 = vor.u32 %v1932, %v1935
        %v1937 = vsel %vm1667, %v1928, %v1936
        %v1938 = vrot.slane %v1926, 4
        %v1940 = vshrl.u32 %v1646, 16
        %v1942 = vrot.slane %v1940, 5
        %v1943 = vshll.u32 %v1646, 16
        %v1945 = vrot.slane %v1943, 6
        %v1946 = vor.u32 %v1942, %v1945
        %v1947 = vsel %vm1667, %v1938, %v1946
        %v1949 = vshrl.u32 %v1647, 16
        %v1951 = vrot.slane %v1949, 5
        %v1952 = vshll.u32 %v1647, 16
        %v1954 = vrot.slane %v1952, 6
        %v1955 = vor.u32 %v1951, %v1954
        %v1956 = vrot.slane %v1955, 4
        %v1958 = vshrl.u32 %v1649, 16
        %v1960 = vrot.slane %v1958, 5
        %v1961 = vshll.u32 %v1649, 16
        %v1963 = vrot.slane %v1961, 6
        %v1964 = vor.u32 %v1960, %v1963
        %v1965 = vsel %vm1667, %v1956, %v1964
        %v1967 = vshrl.u32 %v1648, 16
        %v1969 = vrot.slane %v1967, 5
        %v1970 = vshll.u32 %v1648, 16
        %v1972 = vrot.slane %v1970, 6
        %v1973 = vor.u32 %v1969, %v1972
        %v1974 = vrot.slane %v1973, 4
        %v1976 = vshrl.u32 %v1650, 16
        %v1978 = vrot.slane %v1976, 5
        %v1979 = vshll.u32 %v1650, 16
        %v1981 = vrot.slane %v1979, 6
        %v1982 = vor.u32 %v1978, %v1981
        %v1983 = vsel %vm1667, %v1974, %v1982
        %v1984 = vrot.slane %v1964, 4
        %v1986 = vshrl.u32 %v1651, 16
        %v1988 = vrot.slane %v1986, 5
        %v1989 = vshll.u32 %v1651, 16
        %v1991 = vrot.slane %v1989, 6
        %v1992 = vor.u32 %v1988, %v1991
        %v1993 = vsel %vm1667, %v1984, %v1992
        %v1994 = vrot.slane %v1982, 4
        %v1996 = vshrl.u32 %v1652, 16
        %v1998 = vrot.slane %v1996, 5
        %v1999 = vshll.u32 %v1652, 16
        %v2001 = vrot.slane %v1999, 6
        %v2002 = vor.u32 %v1998, %v2001
        %v2003 = vsel %vm1667, %v1994, %v2002
        %v2005 = vshrl.u32 %v1653, 16
        %v2007 = vrot.slane %v2005, 5
        %v2008 = vshll.u32 %v1653, 16
        %v2010 = vrot.slane %v2008, 6
        %v2011 = vor.u32 %v2007, %v2010
        %v2012 = vrot.slane %v2011, 4
        %v2014 = vshrl.u32 %v1655, 16
        %v2016 = vrot.slane %v2014, 5
        %v2017 = vshll.u32 %v1655, 16
        %v2019 = vrot.slane %v2017, 6
        %v2020 = vor.u32 %v2016, %v2019
        %v2021 = vsel %vm1667, %v2012, %v2020
        %v2023 = vshrl.u32 %v1654, 16
        %v2025 = vrot.slane %v2023, 5
        %v2026 = vshll.u32 %v1654, 16
        %v2028 = vrot.slane %v2026, 6
        %v2029 = vor.u32 %v2025, %v2028
        %v2030 = vrot.slane %v2029, 4
        %v2032 = vshrl.u32 %v1656, 16
        %v2034 = vrot.slane %v2032, 5
        %v2035 = vshll.u32 %v1656, 16
        %v2037 = vrot.slane %v2035, 6
        %v2038 = vor.u32 %v2034, %v2037
        %v2039 = vsel %vm1667, %v2030, %v2038
        %v2040 = vrot.slane %v2020, 4
        %v2042 = vshrl.u32 %v1657, 16
        %v2044 = vrot.slane %v2042, 5
        %v2045 = vshll.u32 %v1657, 16
        %v2047 = vrot.slane %v2045, 6
        %v2048 = vor.u32 %v2044, %v2047
        %v2049 = vsel %vm1667, %v2040, %v2048
        %v2050 = vrot.slane %v2038, 4
        %v2052 = vshrl.u32 %v1658, 16
        %v2054 = vrot.slane %v2052, 5
        %v2055 = vshll.u32 %v1658, 16
        %v2057 = vrot.slane %v2055, 6
        %v2058 = vor.u32 %v2054, %v2057
        %v2059 = vsel %vm1667, %v2050, %v2058
        %v2061 = vshrl.u32 %v1659, 16
        %v2063 = vrot.slane %v2061, 5
        %v2064 = vshll.u32 %v1659, 16
        %v2066 = vrot.slane %v2064, 6
        %v2067 = vor.u32 %v2063, %v2066
        %v2068 = vrot.slane %v2067, 4
        %v2070 = vshrl.u32 %v1661, 16
        %v2072 = vrot.slane %v2070, 5
        %v2073 = vshll.u32 %v1661, 16
        %v2075 = vrot.slane %v2073, 6
        %v2076 = vor.u32 %v2072, %v2075
        %v2077 = vsel %vm1667, %v2068, %v2076
        %v2079 = vshrl.u32 %v1660, 16
        %v2081 = vrot.slane %v2079, 5
        %v2082 = vshll.u32 %v1660, 16
        %v2084 = vrot.slane %v2082, 6
        %v2085 = vor.u32 %v2081, %v2084
        %v2086 = vrot.slane %v2085, 4
        %v2088 = vshrl.u32 %v1662, 16
        %v2090 = vrot.slane %v2088, 5
        %v2091 = vshll.u32 %v1662, 16
        %v2093 = vrot.slane %v2091, 6
        %v2094 = vor.u32 %v2090, %v2093
        %v2095 = vsel %vm1667, %v2086, %v2094
        %v2096 = vrot.slane %v2076, 4
        %v2098 = vshrl.u32 %v1663, 16
        %v2100 = vrot.slane %v2098, 5
        %v2101 = vshll.u32 %v1663, 16
        %v2103 = vrot.slane %v2101, 6
        %v2104 = vor.u32 %v2100, %v2103
        %v2105 = vsel %vm1667, %v2096, %v2104
        %v2106 = vrot.slane %v2094, 4
        %v2108 = vshrl.u32 %v1664, 16
        %v2110 = vrot.slane %v2108, 5
        %v2111 = vshll.u32 %v1664, 16
        %v2113 = vrot.slane %v2111, 6
        %v2114 = vor.u32 %v2110, %v2113
        %v2115 = vsel %vm1667, %v2106, %v2114
        %2148 = vst [vmem:[#allocation3 + $0x30] sm:$0xff] %v1685
        %2149 = vst [vmem:[#allocation3 + $0x38] sm:$0xff] %v1703
        %2150 = vst [vmem:[#allocation3 + $0x80] sm:$0xff] %v1713
        %2151 = vst [vmem:[#allocation3 + $0x88] sm:$0xff] %v1723
        %2152 = vst [vmem:[#allocation3 + $0xd0] sm:$0xff] %v1741
        %2153 = vst [vmem:[#allocation3 + $0xd8] sm:$0xff] %v1759
        %2154 = vst [vmem:[#allocation3 + $0x120] sm:$0xff] %v1769
        %2155 = vst [vmem:[#allocation3 + $0x128] sm:$0xff] %v1779
        %2156 = vst [vmem:[#allocation3 + $0x170] sm:$0xff] %v1797
        %2157 = vst [vmem:[#allocation3 + $0x178] sm:$0xff] %v1815
        %2158 = vst [vmem:[#allocation3 + $0x1c0] sm:$0xff] %v1825
        %2159 = vst [vmem:[#allocation3 + $0x1c8] sm:$0xff] %v1835
        %2160 = vst [vmem:[#allocation3 + $0x210] sm:$0xff] %v1853
        %2161 = vst [vmem:[#allocation3 + $0x218] sm:$0xff] %v1871
        %2162 = vst [vmem:[#allocation3 + $0x260] sm:$0xff] %v1881
        %2163 = vst [vmem:[#allocation3 + $0x268] sm:$0xff] %v1891
        %2164 = vst [vmem:[#allocation3 + $0x2b0] sm:$0xff] %v1909
        %2165 = vst [vmem:[#allocation3 + $0x2b8] sm:$0xff] %v1927
        %2166 = vst [vmem:[#allocation3 + $0x300] sm:$0xff] %v1937
        %2167 = vst [vmem:[#allocation3 + $0x308] sm:$0xff] %v1947
        %2168 = vst [vmem:[#allocation3 + $0x350] sm:$0xff] %v1965
        %2169 = vst [vmem:[#allocation3 + $0x358] sm:$0xff] %v1983
        %2170 = vst [vmem:[#allocation3 + $0x3a0] sm:$0xff] %v1993
        %2171 = vst [vmem:[#allocation3 + $0x3a8] sm:$0xff] %v2003
        %2172 = vst [vmem:[#allocation3 + $0x3f0] sm:$0xff] %v2021
        %2173 = vst [vmem:[#allocation3 + $0x3f8] sm:$0xff] %v2039
        %2174 = vst [vmem:[#allocation3 + $0x440] sm:$0xff] %v2049
        %2175 = vst [vmem:[#allocation3 + $0x448] sm:$0xff] %v2059
        %2176 = vst [vmem:[#allocation3 + $0x490] sm:$0xff] %v2077
        %2177 = vst [vmem:[#allocation3 + $0x498] sm:$0xff] %v2095
        %2178 = vst [vmem:[#allocation3 + $0x4e0] sm:$0xff] %v2105
        %2179 = vst [vmem:[#allocation3 + $0x4e8] sm:$0xff] %v2115
        %v2180 = vld [vmem:[#allocation2] sm:$0xcc]
        %v2181 = vld [vmem:[#allocation2 + $0x8] sm:$0xcc]
        %v2182 = vld [vmem:[#allocation2 + $0x10] sm:$0xff]
        %v2183 = vld [vmem:[#allocation2 + $0x18] sm:$0xff]
        %v2184 = vld [vmem:[#allocation2 + $0x20] sm:$0x33]
        %v2185 = vld [vmem:[#allocation2 + $0x28] sm:$0x33]
        %v2186 = vld [vmem:[#allocation2 + $0x30] sm:$0xcc]
        %v2187 = vld [vmem:[#allocation2 + $0x38] sm:$0xcc]
        %v2188 = vld [vmem:[#allocation2 + $0x40] sm:$0xff]
        %v2189 = vld [vmem:[#allocation2 + $0x48] sm:$0xff]
        %v2190 = vld [vmem:[#allocation2 + $0x50] sm:$0x33]
        %v2191 = vld [vmem:[#allocation2 + $0x58] sm:$0x33]
        %v2192 = vld [vmem:[#allocation2 + $0x60] sm:$0xcc]
        %v2193 = vld [vmem:[#allocation2 + $0x68] sm:$0xcc]
        %v2194 = vld [vmem:[#allocation2 + $0x70] sm:$0xff]
        %v2195 = vld [vmem:[#allocation2 + $0x78] sm:$0xff]
        %v2196 = vld [vmem:[#allocation2 + $0x80] sm:$0x33]
        %v2197 = vld [vmem:[#allocation2 + $0x88] sm:$0x33]
        %v2198 = vld [vmem:[#allocation2 + $0x90] sm:$0xcc]
        %v2199 = vld [vmem:[#allocation2 + $0x98] sm:$0xcc]
        %v2200 = vld [vmem:[#allocation2 + $0xa0] sm:$0xff]
        %v2201 = vld [vmem:[#allocation2 + $0xa8] sm:$0xff]
        %v2202 = vld [vmem:[#allocation2 + $0xb0] sm:$0x33]
        %v2203 = vld [vmem:[#allocation2 + $0xb8] sm:$0x33]
        %v2204 = vld [vmem:[#allocation2 + $0xc0] sm:$0xcc]
        %v2205 = vld [vmem:[#allocation2 + $0xc8] sm:$0xcc]
        %v2206 = vld [vmem:[#allocation2 + $0xd0] sm:$0xff]
        %v2207 = vld [vmem:[#allocation2 + $0xd8] sm:$0xff]
        %v2208 = vld [vmem:[#allocation2 + $0xe0] sm:$0x33]
        %v2209 = vld [vmem:[#allocation2 + $0xe8] sm:$0x33]
        %v2210 = vld [vmem:[#allocation2 + $0xf0] sm:$0xcc]
        %v2211 = vld [vmem:[#allocation2 + $0xf8] sm:$0xcc]
        %v2212 = vld [vmem:[#allocation2 + $0x100] sm:$0xff]
        %v2213 = vld [vmem:[#allocation2 + $0x108] sm:$0xff]
        %v2214 = vld [vmem:[#allocation2 + $0x110] sm:$0x33]
        %v2215 = vld [vmem:[#allocation2 + $0x118] sm:$0x33]
        %v2216 = vld [vmem:[#allocation2 + $0x120] sm:$0xcc]
        %v2217 = vld [vmem:[#allocation2 + $0x128] sm:$0xcc]
        %v2218 = vld [vmem:[#allocation2 + $0x130] sm:$0xff]
        %v2219 = vld [vmem:[#allocation2 + $0x138] sm:$0xff]
        %v2220 = vld [vmem:[#allocation2 + $0x140] sm:$0x33]
        %v2221 = vld [vmem:[#allocation2 + $0x148] sm:$0x33]
        %v2222 = vld [vmem:[#allocation2 + $0x150] sm:$0xcc]
        %v2223 = vld [vmem:[#allocation2 + $0x158] sm:$0xcc]
        %v2224 = vld [vmem:[#allocation2 + $0x160] sm:$0xff]
        %v2225 = vld [vmem:[#allocation2 + $0x168] sm:$0xff]
        %v2226 = vld [vmem:[#allocation2 + $0x170] sm:$0x33]
        %v2227 = vld [vmem:[#allocation2 + $0x178] sm:$0x33]
        %vm2276 = vcmask 1041408
        %vm2277 = vcmask 1045508
        %vm2278 = vmor %vm2276, %vm2277
        %v2279 = vrot.slane %v2180, 6
        %v2280 = vrot.slane %v2279, 4
        %v2281 = vrot.slane %v2182, 6
        %v2282 = vsel %vm2278, %v2280, %v2281
        %v2283 = vrot.slane %v2181, 6
        %v2284 = vrot.slane %v2283, 4
        %v2285 = vrot.slane %v2183, 6
        %v2286 = vsel %vm2278, %v2284, %v2285
        %v2287 = vrot.slane %v2281, 4
        %v2288 = vrot.slane %v2184, 6
        %v2289 = vsel %vm2278, %v2287, %v2288
        %v2290 = vrot.slane %v2285, 4
        %v2291 = vrot.slane %v2185, 6
        %v2292 = vsel %vm2278, %v2290, %v2291
        %v2293 = vrot.slane %v2186, 6
        %v2294 = vrot.slane %v2293, 4
        %v2295 = vrot.slane %v2188, 6
        %v2296 = vsel %vm2278, %v2294, %v2295
        %v2297 = vrot.slane %v2187, 6
        %v2298 = vrot.slane %v2297, 4
        %v2299 = vrot.slane %v2189, 6
        %v2300 = vsel %vm2278, %v2298, %v2299
        %v2301 = vrot.slane %v2295, 4
        %v2302 = vrot.slane %v2190, 6
        %v2303 = vsel %vm2278, %v2301, %v2302
        %v2304 = vrot.slane %v2299, 4
        %v2305 = vrot.slane %v2191, 6
        %v2306 = vsel %vm2278, %v2304, %v2305
        %v2307 = vrot.slane %v2192, 6
        %v2308 = vrot.slane %v2307, 4
        %v2309 = vrot.slane %v2194, 6
        %v2310 = vsel %vm2278, %v2308, %v2309
        %v2311 = vrot.slane %v2193, 6
        %v2312 = vrot.slane %v2311, 4
        %v2313 = vrot.slane %v2195, 6
        %v2314 = vsel %vm2278, %v2312, %v2313
        %v2315 = vrot.slane %v2309, 4
        %v2316 = vrot.slane %v2196, 6
        %v2317 = vsel %vm2278, %v2315, %v2316
        %v2318 = vrot.slane %v2313, 4
        %v2319 = vrot.slane %v2197, 6
        %v2320 = vsel %vm2278, %v2318, %v2319
        %v2321 = vrot.slane %v2198, 6
        %v2322 = vrot.slane %v2321, 4
        %v2323 = vrot.slane %v2200, 6
        %v2324 = vsel %vm2278, %v2322, %v2323
        %v2325 = vrot.slane %v2199, 6
        %v2326 = vrot.slane %v2325, 4
        %v2327 = vrot.slane %v2201, 6
        %v2328 = vsel %vm2278, %v2326, %v2327
        %v2329 = vrot.slane %v2323, 4
        %v2330 = vrot.slane %v2202, 6
        %v2331 = vsel %vm2278, %v2329, %v2330
        %v2332 = vrot.slane %v2327, 4
        %v2333 = vrot.slane %v2203, 6
        %v2334 = vsel %vm2278, %v2332, %v2333
        %v2335 = vrot.slane %v2204, 6
        %v2336 = vrot.slane %v2335, 4
        %v2337 = vrot.slane %v2206, 6
        %v2338 = vsel %vm2278, %v2336, %v2337
        %v2339 = vrot.slane %v2205, 6
        %v2340 = vrot.slane %v2339, 4
        %v2341 = vrot.slane %v2207, 6
        %v2342 = vsel %vm2278, %v2340, %v2341
        %v2343 = vrot.slane %v2337, 4
        %v2344 = vrot.slane %v2208, 6
        %v2345 = vsel %vm2278, %v2343, %v2344
        %v2346 = vrot.slane %v2341, 4
        %v2347 = vrot.slane %v2209, 6
        %v2348 = vsel %vm2278, %v2346, %v2347
        %v2349 = vrot.slane %v2210, 6
        %v2350 = vrot.slane %v2349, 4
        %v2351 = vrot.slane %v2212, 6
        %v2352 = vsel %vm2278, %v2350, %v2351
        %v2353 = vrot.slane %v2211, 6
        %v2354 = vrot.slane %v2353, 4
        %v2355 = vrot.slane %v2213, 6
        %v2356 = vsel %vm2278, %v2354, %v2355
        %v2357 = vrot.slane %v2351, 4
        %v2358 = vrot.slane %v2214, 6
        %v2359 = vsel %vm2278, %v2357, %v2358
        %v2360 = vrot.slane %v2355, 4
        %v2361 = vrot.slane %v2215, 6
        %v2362 = vsel %vm2278, %v2360, %v2361
        %v2363 = vrot.slane %v2216, 6
        %v2364 = vrot.slane %v2363, 4
        %v2365 = vrot.slane %v2218, 6
        %v2366 = vsel %vm2278, %v2364, %v2365
        %v2367 = vrot.slane %v2217, 6
        %v2368 = vrot.slane %v2367, 4
        %v2369 = vrot.slane %v2219, 6
        %v2370 = vsel %vm2278, %v2368, %v2369
        %v2371 = vrot.slane %v2365, 4
        %v2372 = vrot.slane %v2220, 6
        %v2373 = vsel %vm2278, %v2371, %v2372
        %v2374 = vrot.slane %v2369, 4
        %v2375 = vrot.slane %v2221, 6
        %v2376 = vsel %vm2278, %v2374, %v2375
        %v2377 = vrot.slane %v2222, 6
        %v2378 = vrot.slane %v2377, 4
        %v2379 = vrot.slane %v2224, 6
        %v2380 = vsel %vm2278, %v2378, %v2379
        %v2381 = vrot.slane %v2223, 6
        %v2382 = vrot.slane %v2381, 4
        %v2383 = vrot.slane %v2225, 6
        %v2384 = vsel %vm2278, %v2382, %v2383
        %v2385 = vrot.slane %v2379, 4
        %v2386 = vrot.slane %v2226, 6
        %v2387 = vsel %vm2278, %v2385, %v2386
        %v2388 = vrot.slane %v2383, 4
        %v2389 = vrot.slane %v2227, 6
        %v2390 = vsel %vm2278, %v2388, %v2389
        %2423 = vst [vmem:[#allocation3 + $0x40] sm:$0xff] %v2282
        %2424 = vst [vmem:[#allocation3 + $0x48] sm:$0xff] %v2286
        %2425 = vst [vmem:[#allocation3 + $0x90] sm:$0xff] %v2289
        %2426 = vst [vmem:[#allocation3 + $0x98] sm:$0xff] %v2292
        %2427 = vst [vmem:[#allocation3 + $0xe0] sm:$0xff] %v2296
        %2428 = vst [vmem:[#allocation3 + $0xe8] sm:$0xff] %v2300
        %2429 = vst [vmem:[#allocation3 + $0x130] sm:$0xff] %v2303
        %2430 = vst [vmem:[#allocation3 + $0x138] sm:$0xff] %v2306
        %2431 = vst [vmem:[#allocation3 + $0x180] sm:$0xff] %v2310
        %2432 = vst [vmem:[#allocation3 + $0x188] sm:$0xff] %v2314
        %2433 = vst [vmem:[#allocation3 + $0x1d0] sm:$0xff] %v2317
        %2434 = vst [vmem:[#allocation3 + $0x1d8] sm:$0xff] %v2320
        %2435 = vst [vmem:[#allocation3 + $0x220] sm:$0xff] %v2324
        %2436 = vst [vmem:[#allocation3 + $0x228] sm:$0xff] %v2328
        %2437 = vst [vmem:[#allocation3 + $0x270] sm:$0xff] %v2331
        %2438 = vst [vmem:[#allocation3 + $0x278] sm:$0xff] %v2334
        %2439 = vst [vmem:[#allocation3 + $0x2c0] sm:$0xff] %v2338
        %2440 = vst [vmem:[#allocation3 + $0x2c8] sm:$0xff] %v2342
        %2441 = vst [vmem:[#allocation3 + $0x310] sm:$0xff] %v2345
        %2442 = vst [vmem:[#allocation3 + $0x318] sm:$0xff] %v2348
        %2443 = vst [vmem:[#allocation3 + $0x360] sm:$0xff] %v2352
        %2444 = vst [vmem:[#allocation3 + $0x368] sm:$0xff] %v2356
        %2445 = vst [vmem:[#allocation3 + $0x3b0] sm:$0xff] %v2359
        %2446 = vst [vmem:[#allocation3 + $0x3b8] sm:$0xff] %v2362
        %2447 = vst [vmem:[#allocation3 + $0x400] sm:$0xff] %v2366
        %2448 = vst [vmem:[#allocation3 + $0x408] sm:$0xff] %v2370
        %2449 = vst [vmem:[#allocation3 + $0x450] sm:$0xff] %v2373
        %2450 = vst [vmem:[#allocation3 + $0x458] sm:$0xff] %v2376
        %2451 = vst [vmem:[#allocation3 + $0x4a0] sm:$0xff] %v2380
        %2452 = vst [vmem:[#allocation3 + $0x4a8] sm:$0xff] %v2384
        %2453 = vst [vmem:[#allocation3 + $0x4f0] sm:$0xff] %v2387
        %2454 = vst [vmem:[#allocation3 + $0x4f8] sm:$0xff] %v2390
        %v2455 = vld [vmem:[#allocation3] sm:$0xff]
        %v2456 = vld [vmem:[#allocation3 + $0x8] sm:$0xff]
        %v2457 = vld [vmem:[#allocation3 + $0x10] sm:$0xff]
        %v2458 = vld [vmem:[#allocation3 + $0x18] sm:$0xff]
        %v2459 = vld [vmem:[#allocation3 + $0x20] sm:$0xff]
        %v2460 = vld [vmem:[#allocation3 + $0x28] sm:$0xff]
        %v2461 = vld [vmem:[#allocation3 + $0x30] sm:$0xff]
        %v2462 = vld [vmem:[#allocation3 + $0x38] sm:$0xff]
        %v2463 = vld [vmem:[#allocation3 + $0x40] sm:$0xff]
        %v2464 = vld [vmem:[#allocation3 + $0x48] sm:$0xff]
        %v2465 = vld [vmem:[#allocation3 + $0x50] sm:$0xff]
        %v2466 = vld [vmem:[#allocation3 + $0x58] sm:$0xff]
        %v2467 = vld [vmem:[#allocation3 + $0x60] sm:$0xff]
        %v2468 = vld [vmem:[#allocation3 + $0x68] sm:$0xff]
        %v2469 = vld [vmem:[#allocation3 + $0x70] sm:$0xff]
        %v2470 = vld [vmem:[#allocation3 + $0x78] sm:$0xff]
        %v2471 = vld [vmem:[#allocation3 + $0x80] sm:$0xff]
        %v2472 = vld [vmem:[#allocation3 + $0x88] sm:$0xff]
        %v2473 = vld [vmem:[#allocation3 + $0x90] sm:$0xff]
        %v2474 = vld [vmem:[#allocation3 + $0x98] sm:$0xff]
        %v2475 = vld [vmem:[#allocation3 + $0xa0] sm:$0xff]
        %v2476 = vld [vmem:[#allocation3 + $0xa8] sm:$0xff]
        %v2477 = vld [vmem:[#allocation3 + $0xb0] sm:$0xff]
        %v2478 = vld [vmem:[#allocation3 + $0xb8] sm:$0xff]
        %v2479 = vld [vmem:[#allocation3 + $0xc0] sm:$0xff]
        %v2480 = vld [vmem:[#allocation3 + $0xc8] sm:$0xff]
        %v2481 = vld [vmem:[#allocation3 + $0xd0] sm:$0xff]
        %v2482 = vld [vmem:[#allocation3 + $0xd8] sm:$0xff]
        %v2483 = vld [vmem:[#allocation3 + $0xe0] sm:$0xff]
        %v2484 = vld [vmem:[#allocation3 + $0xe8] sm:$0xff]
        %v2485 = vld [vmem:[#allocation3 + $0xf0] sm:$0xff]
        %v2486 = vld [vmem:[#allocation3 + $0xf8] sm:$0xff]
        %v2487 = vld [vmem:[#allocation3 + $0x100] sm:$0xff]
        %v2488 = vld [vmem:[#allocation3 + $0x108] sm:$0xff]
        %v2489 = vld [vmem:[#allocation3 + $0x110] sm:$0xff]
        %v2490 = vld [vmem:[#allocation3 + $0x118] sm:$0xff]
        %v2491 = vld [vmem:[#allocation3 + $0x120] sm:$0xff]
        %v2492 = vld [vmem:[#allocation3 + $0x128] sm:$0xff]
        %v2493 = vld [vmem:[#allocation3 + $0x130] sm:$0xff]
        %v2494 = vld [vmem:[#allocation3 + $0x138] sm:$0xff]
        %v2495 = vld [vmem:[#allocation3 + $0x140] sm:$0xff]
        %v2496 = vld [vmem:[#allocation3 + $0x148] sm:$0xff]
        %v2497 = vld [vmem:[#allocation3 + $0x150] sm:$0xff]
        %v2498 = vld [vmem:[#allocation3 + $0x158] sm:$0xff]
        %v2499 = vld [vmem:[#allocation3 + $0x160] sm:$0xff]
        %v2500 = vld [vmem:[#allocation3 + $0x168] sm:$0xff]
        %v2501 = vld [vmem:[#allocation3 + $0x170] sm:$0xff]
        %v2502 = vld [vmem:[#allocation3 + $0x178] sm:$0xff]
        %v2503 = vld [vmem:[#allocation3 + $0x180] sm:$0xff]
        %v2504 = vld [vmem:[#allocation3 + $0x188] sm:$0xff]
        %v2505 = vld [vmem:[#allocation3 + $0x190] sm:$0xff]
        %v2506 = vld [vmem:[#allocation3 + $0x198] sm:$0xff]
        %v2507 = vld [vmem:[#allocation3 + $0x1a0] sm:$0xff]
        %v2508 = vld [vmem:[#allocation3 + $0x1a8] sm:$0xff]
        %v2509 = vld [vmem:[#allocation3 + $0x1b0] sm:$0xff]
        %v2510 = vld [vmem:[#allocation3 + $0x1b8] sm:$0xff]
        %v2511 = vld [vmem:[#allocation3 + $0x1c0] sm:$0xff]
        %v2512 = vld [vmem:[#allocation3 + $0x1c8] sm:$0xff]
        %v2513 = vld [vmem:[#allocation3 + $0x1d0] sm:$0xff]
        %v2514 = vld [vmem:[#allocation3 + $0x1d8] sm:$0xff]
        %v2515 = vld [vmem:[#allocation3 + $0x1e0] sm:$0xff]
        %v2516 = vld [vmem:[#allocation3 + $0x1e8] sm:$0xff]
        %v2517 = vld [vmem:[#allocation3 + $0x1f0] sm:$0xff]
        %v2518 = vld [vmem:[#allocation3 + $0x1f8] sm:$0xff]
        %v2519 = vld [vmem:[#allocation3 + $0x200] sm:$0xff]
        %v2520 = vld [vmem:[#allocation3 + $0x208] sm:$0xff]
        %v2521 = vld [vmem:[#allocation3 + $0x210] sm:$0xff]
        %v2522 = vld [vmem:[#allocation3 + $0x218] sm:$0xff]
        %v2523 = vld [vmem:[#allocation3 + $0x220] sm:$0xff]
        %v2524 = vld [vmem:[#allocation3 + $0x228] sm:$0xff]
        %v2525 = vld [vmem:[#allocation3 + $0x230] sm:$0xff]
        %v2526 = vld [vmem:[#allocation3 + $0x238] sm:$0xff]
        %v2527 = vld [vmem:[#allocation3 + $0x240] sm:$0xff]
        %v2528 = vld [vmem:[#allocation3 + $0x248] sm:$0xff]
        %v2529 = vld [vmem:[#allocation3 + $0x250] sm:$0xff]
        %v2530 = vld [vmem:[#allocation3 + $0x258] sm:$0xff]
        %v2531 = vld [vmem:[#allocation3 + $0x260] sm:$0xff]
        %v2532 = vld [vmem:[#allocation3 + $0x268] sm:$0xff]
        %v2533 = vld [vmem:[#allocation3 + $0x270] sm:$0xff]
        %v2534 = vld [vmem:[#allocation3 + $0x278] sm:$0xff]
        %v2535 = vld [vmem:[#allocation3 + $0x280] sm:$0xff]
        %v2536 = vld [vmem:[#allocation3 + $0x288] sm:$0xff]
        %v2537 = vld [vmem:[#allocation3 + $0x290] sm:$0xff]
        %v2538 = vld [vmem:[#allocation3 + $0x298] sm:$0xff]
        %v2539 = vld [vmem:[#allocation3 + $0x2a0] sm:$0xff]
        %v2540 = vld [vmem:[#allocation3 + $0x2a8] sm:$0xff]
        %v2541 = vld [vmem:[#allocation3 + $0x2b0] sm:$0xff]
        %v2542 = vld [vmem:[#allocation3 + $0x2b8] sm:$0xff]
        %v2543 = vld [vmem:[#allocation3 + $0x2c0] sm:$0xff]
        %v2544 = vld [vmem:[#allocation3 + $0x2c8] sm:$0xff]
        %v2545 = vld [vmem:[#allocation3 + $0x2d0] sm:$0xff]
        %v2546 = vld [vmem:[#allocation3 + $0x2d8] sm:$0xff]
        %v2547 = vld [vmem:[#allocation3 + $0x2e0] sm:$0xff]
        %v2548 = vld [vmem:[#allocation3 + $0x2e8] sm:$0xff]
        %v2549 = vld [vmem:[#allocation3 + $0x2f0] sm:$0xff]
        %v2550 = vld [vmem:[#allocation3 + $0x2f8] sm:$0xff]
        %v2551 = vld [vmem:[#allocation3 + $0x300] sm:$0xff]
        %v2552 = vld [vmem:[#allocation3 + $0x308] sm:$0xff]
        %v2553 = vld [vmem:[#allocation3 + $0x310] sm:$0xff]
        %v2554 = vld [vmem:[#allocation3 + $0x318] sm:$0xff]
        %v2555 = vld [vmem:[#allocation3 + $0x320] sm:$0xff]
        %v2556 = vld [vmem:[#allocation3 + $0x328] sm:$0xff]
        %v2557 = vld [vmem:[#allocation3 + $0x330] sm:$0xff]
        %v2558 = vld [vmem:[#allocation3 + $0x338] sm:$0xff]
        %v2559 = vld [vmem:[#allocation3 + $0x340] sm:$0xff]
        %v2560 = vld [vmem:[#allocation3 + $0x348] sm:$0xff]
        %v2561 = vld [vmem:[#allocation3 + $0x350] sm:$0xff]
        %v2562 = vld [vmem:[#allocation3 + $0x358] sm:$0xff]
        %v2563 = vld [vmem:[#allocation3 + $0x360] sm:$0xff]
        %v2564 = vld [vmem:[#allocation3 + $0x368] sm:$0xff]
        %v2565 = vld [vmem:[#allocation3 + $0x370] sm:$0xff]
        %v2566 = vld [vmem:[#allocation3 + $0x378] sm:$0xff]
        %v2567 = vld [vmem:[#allocation3 + $0x380] sm:$0xff]
        %v2568 = vld [vmem:[#allocation3 + $0x388] sm:$0xff]
        %v2569 = vld [vmem:[#allocation3 + $0x390] sm:$0xff]
        %v2570 = vld [vmem:[#allocation3 + $0x398] sm:$0xff]
        %v2571 = vld [vmem:[#allocation3 + $0x3a0] sm:$0xff]
        %v2572 = vld [vmem:[#allocation3 + $0x3a8] sm:$0xff]
        %v2573 = vld [vmem:[#allocation3 + $0x3b0] sm:$0xff]
        %v2574 = vld [vmem:[#allocation3 + $0x3b8] sm:$0xff]
        %v2575 = vld [vmem:[#allocation3 + $0x3c0] sm:$0xff]
        %v2576 = vld [vmem:[#allocation3 + $0x3c8] sm:$0xff]
        %v2577 = vld [vmem:[#allocation3 + $0x3d0] sm:$0xff]
        %v2578 = vld [vmem:[#allocation3 + $0x3d8] sm:$0xff]
        %v2579 = vld [vmem:[#allocation3 + $0x3e0] sm:$0xff]
        %v2580 = vld [vmem:[#allocation3 + $0x3e8] sm:$0xff]
        %v2581 = vld [vmem:[#allocation3 + $0x3f0] sm:$0xff]
        %v2582 = vld [vmem:[#allocation3 + $0x3f8] sm:$0xff]
        %v2583 = vld [vmem:[#allocation3 + $0x400] sm:$0xff]
        %v2584 = vld [vmem:[#allocation3 + $0x408] sm:$0xff]
        %v2585 = vld [vmem:[#allocation3 + $0x410] sm:$0xff]
        %v2586 = vld [vmem:[#allocation3 + $0x418] sm:$0xff]
        %v2587 = vld [vmem:[#allocation3 + $0x420] sm:$0xff]
        %v2588 = vld [vmem:[#allocation3 + $0x428] sm:$0xff]
        %v2589 = vld [vmem:[#allocation3 + $0x430] sm:$0xff]
        %v2590 = vld [vmem:[#allocation3 + $0x438] sm:$0xff]
        %v2591 = vld [vmem:[#allocation3 + $0x440] sm:$0xff]
        %v2592 = vld [vmem:[#allocation3 + $0x448] sm:$0xff]
        %v2593 = vld [vmem:[#allocation3 + $0x450] sm:$0xff]
        %v2594 = vld [vmem:[#allocation3 + $0x458] sm:$0xff]
        %v2595 = vld [vmem:[#allocation3 + $0x460] sm:$0xff]
        %v2596 = vld [vmem:[#allocation3 + $0x468] sm:$0xff]
        %v2597 = vld [vmem:[#allocation3 + $0x470] sm:$0xff]
        %v2598 = vld [vmem:[#allocation3 + $0x478] sm:$0xff]
        %v2599 = vld [vmem:[#allocation3 + $0x480] sm:$0xff]
        %v2600 = vld [vmem:[#allocation3 + $0x488] sm:$0xff]
        %v2601 = vld [vmem:[#allocation3 + $0x490] sm:$0xff]
        %v2602 = vld [vmem:[#allocation3 + $0x498] sm:$0xff]
        %v2603 = vld [vmem:[#allocation3 + $0x4a0] sm:$0xff]
        %v2604 = vld [vmem:[#allocation3 + $0x4a8] sm:$0xff]
        %v2605 = vld [vmem:[#allocation3 + $0x4b0] sm:$0xff]
        %v2606 = vld [vmem:[#allocation3 + $0x4b8] sm:$0xff]
        %v2607 = vld [vmem:[#allocation3 + $0x4c0] sm:$0xff]
        %v2608 = vld [vmem:[#allocation3 + $0x4c8] sm:$0xff]
        %v2609 = vld [vmem:[#allocation3 + $0x4d0] sm:$0xff]
        %v2610 = vld [vmem:[#allocation3 + $0x4d8] sm:$0xff]
        %v2611 = vld [vmem:[#allocation3 + $0x4e0] sm:$0xff]
        %v2612 = vld [vmem:[#allocation3 + $0x4e8] sm:$0xff]
        %v2613 = vld [vmem:[#allocation3 + $0x4f0] sm:$0xff]
        %v2614 = vld [vmem:[#allocation3 + $0x4f8] sm:$0xff]
        %v2615 = vld [vmem:[#allocation11] sm:$0xff]
        %v2616 = vld [vmem:[#allocation11 + $0x8] sm:$0xf]
        %v2617 = vld [vmem:[#allocation11 + $0xc] sm:$0xff]
        %v2618 = vld [vmem:[#allocation11 + $0x14] sm:$0xf]
        %v2619 = vld [vmem:[#allocation11 + $0x18] sm:$0xff]
        %v2620 = vld [vmem:[#allocation11 + $0x20] sm:$0xf]
        %v2621 = vld [vmem:[#allocation11 + $0x24] sm:$0xff]
        %v2622 = vld [vmem:[#allocation11 + $0x2c] sm:$0xf]
        %v2623 = vld [vmem:[#allocation11 + $0x30] sm:$0xff]
        %v2624 = vld [vmem:[#allocation11 + $0x38] sm:$0xf]
        %v2625 = vld [vmem:[#allocation11 + $0x3c] sm:$0xff]
        %v2626 = vld [vmem:[#allocation11 + $0x44] sm:$0xf]
        %v2627 = vld [vmem:[#allocation11 + $0x48] sm:$0xff]
        %v2628 = vld [vmem:[#allocation11 + $0x50] sm:$0xf]
        %v2629 = vld [vmem:[#allocation11 + $0x54] sm:$0xff]
        %v2630 = vld [vmem:[#allocation11 + $0x5c] sm:$0xf]
        %v2631 = vld [vmem:[#allocation11 + $0x60] sm:$0xff]
        %v2632 = vld [vmem:[#allocation11 + $0x68] sm:$0xf]
        %v2633 = vld [vmem:[#allocation11 + $0x6c] sm:$0xff]
        %v2634 = vld [vmem:[#allocation11 + $0x74] sm:$0xf]
        %v2635 = vld [vmem:[#allocation11 + $0x78] sm:$0xff]
        %v2636 = vld [vmem:[#allocation11 + $0x80] sm:$0xf]
        %v2637 = vld [vmem:[#allocation11 + $0x84] sm:$0xff]
        %v2638 = vld [vmem:[#allocation11 + $0x8c] sm:$0xf]
        %v2639 = vld [vmem:[#allocation11 + $0x90] sm:$0xff]
        %v2640 = vld [vmem:[#allocation11 + $0x98] sm:$0xf]
        %v2641 = vld [vmem:[#allocation11 + $0x9c] sm:$0xff]
        %v2642 = vld [vmem:[#allocation11 + $0xa4] sm:$0xf]
        %v2643 = vld [vmem:[#allocation11 + $0xa8] sm:$0xff]
        %v2644 = vld [vmem:[#allocation11 + $0xb0] sm:$0xf]
        %v2645 = vld [vmem:[#allocation11 + $0xb4] sm:$0xff]
        %v2646 = vld [vmem:[#allocation11 + $0xbc] sm:$0xf]
        %v2647 = vld [vmem:[#allocation11 + $0xc0] sm:$0xff]
        %v2648 = vld [vmem:[#allocation11 + $0xc8] sm:$0xf]
        %v2649 = vld [vmem:[#allocation11 + $0xcc] sm:$0xff]
        %v2650 = vld [vmem:[#allocation11 + $0xd4] sm:$0xf]
        %v2651 = vld [vmem:[#allocation11 + $0xd8] sm:$0xff]
        %v2652 = vld [vmem:[#allocation11 + $0xe0] sm:$0xf]
        %v2653 = vld [vmem:[#allocation11 + $0xe4] sm:$0xff]
        %v2654 = vld [vmem:[#allocation11 + $0xec] sm:$0xf]
        %v2655 = vld [vmem:[#allocation11 + $0xf0] sm:$0xff]
        %v2656 = vld [vmem:[#allocation11 + $0xf8] sm:$0xf]
        %v2657 = vld [vmem:[#allocation11 + $0xfc] sm:$0xff]
        %v2658 = vld [vmem:[#allocation11 + $0x104] sm:$0xf]
        %v2659 = vld [vmem:[#allocation11 + $0x108] sm:$0xff]
        %v2660 = vld [vmem:[#allocation11 + $0x110] sm:$0xf]
        %v2661 = vld [vmem:[#allocation11 + $0x114] sm:$0xff]
        %v2662 = vld [vmem:[#allocation11 + $0x11c] sm:$0xf]
        %v2663 = vld [vmem:[#allocation11 + $0x120] sm:$0xff]
        %v2664 = vld [vmem:[#allocation11 + $0x128] sm:$0xf]
        %v2665 = vld [vmem:[#allocation11 + $0x12c] sm:$0xff]
        %v2666 = vld [vmem:[#allocation11 + $0x134] sm:$0xf]
        %v2667 = vld [vmem:[#allocation11 + $0x138] sm:$0xff]
        %v2668 = vld [vmem:[#allocation11 + $0x140] sm:$0xf]
        %v2669 = vld [vmem:[#allocation11 + $0x144] sm:$0xff]
        %v2670 = vld [vmem:[#allocation11 + $0x14c] sm:$0xf]
        %v2671 = vld [vmem:[#allocation11 + $0x150] sm:$0xff]
        %v2672 = vld [vmem:[#allocation11 + $0x158] sm:$0xf]
        %v2673 = vld [vmem:[#allocation11 + $0x15c] sm:$0xff]
        %v2674 = vld [vmem:[#allocation11 + $0x164] sm:$0xf]
        %v2675 = vld [vmem:[#allocation11 + $0x168] sm:$0xff]
        %v2676 = vld [vmem:[#allocation11 + $0x170] sm:$0xf]
        %v2677 = vld [vmem:[#allocation11 + $0x174] sm:$0xff]
        %v2678 = vld [vmem:[#allocation11 + $0x17c] sm:$0xf]
        %v2679 = vld [vmem:[#allocation11 + $0x180] sm:$0xff]
        %v2680 = vld [vmem:[#allocation11 + $0x188] sm:$0xf]
        %v2681 = vld [vmem:[#allocation11 + $0x18c] sm:$0xff]
        %v2682 = vld [vmem:[#allocation11 + $0x194] sm:$0xf]
        %v2683 = vld [vmem:[#allocation11 + $0x198] sm:$0xff]
        %v2684 = vld [vmem:[#allocation11 + $0x1a0] sm:$0xf]
        %v2685 = vld [vmem:[#allocation11 + $0x1a4] sm:$0xff]
        %v2686 = vld [vmem:[#allocation11 + $0x1ac] sm:$0xf]
        %v2687 = vld [vmem:[#allocation11 + $0x1b0] sm:$0xff]
        %v2688 = vld [vmem:[#allocation11 + $0x1b8] sm:$0xf]
        %v2689 = vld [vmem:[#allocation11 + $0x1bc] sm:$0xff]
        %v2690 = vld [vmem:[#allocation11 + $0x1c4] sm:$0xf]
        %v2691 = vld [vmem:[#allocation11 + $0x1c8] sm:$0xff]
        %v2692 = vld [vmem:[#allocation11 + $0x1d0] sm:$0xf]
        %v2693 = vld [vmem:[#allocation11 + $0x1d4] sm:$0xff]
        %v2694 = vld [vmem:[#allocation11 + $0x1dc] sm:$0xf]
        %v2695 = vld [vmem:[#allocation11 + $0x1e0] sm:$0xff]
        %v2696 = vld [vmem:[#allocation11 + $0x1e8] sm:$0xf]
        %v2697 = vld [vmem:[#allocation11 + $0x1ec] sm:$0xff]
        %v2698 = vld [vmem:[#allocation11 + $0x1f4] sm:$0xf]
        %v2699 = vld [vmem:[#allocation11 + $0x1f8] sm:$0xff]
        %v2700 = vld [vmem:[#allocation11 + $0x200] sm:$0xf]
        %v2701 = vld [vmem:[#allocation11 + $0x204] sm:$0xff]
        %v2702 = vld [vmem:[#allocation11 + $0x20c] sm:$0xf]
        %v2703 = vld [vmem:[#allocation11 + $0x210] sm:$0xff]
        %v2704 = vld [vmem:[#allocation11 + $0x218] sm:$0xf]
        %v2705 = vld [vmem:[#allocation11 + $0x21c] sm:$0xff]
        %v2706 = vld [vmem:[#allocation11 + $0x224] sm:$0xf]
        %v2707 = vld [vmem:[#allocation11 + $0x228] sm:$0xff]
        %v2708 = vld [vmem:[#allocation11 + $0x230] sm:$0xf]
        %v2709 = vld [vmem:[#allocation11 + $0x234] sm:$0xff]
        %v2710 = vld [vmem:[#allocation11 + $0x23c] sm:$0xf]
        %v2711 = vld [vmem:[#allocation11 + $0x240] sm:$0xff]
        %v2712 = vld [vmem:[#allocation11 + $0x248] sm:$0xf]
        %v2713 = vld [vmem:[#allocation11 + $0x24c] sm:$0xff]
        %v2714 = vld [vmem:[#allocation11 + $0x254] sm:$0xf]
        %v2715 = vld [vmem:[#allocation11 + $0x258] sm:$0xff]
        %v2716 = vld [vmem:[#allocation11 + $0x260] sm:$0xf]
        %v2717 = vld [vmem:[#allocation11 + $0x264] sm:$0xff]
        %v2718 = vld [vmem:[#allocation11 + $0x26c] sm:$0xf]
        %v2719 = vld [vmem:[#allocation11 + $0x270] sm:$0xff]
        %v2720 = vld [vmem:[#allocation11 + $0x278] sm:$0xf]
        %v2721 = vld [vmem:[#allocation11 + $0x27c] sm:$0xff]
        %v2722 = vld [vmem:[#allocation11 + $0x284] sm:$0xf]
        %v2723 = vld [vmem:[#allocation11 + $0x288] sm:$0xff]
        %v2724 = vld [vmem:[#allocation11 + $0x290] sm:$0xf]
        %v2725 = vld [vmem:[#allocation11 + $0x294] sm:$0xff]
        %v2726 = vld [vmem:[#allocation11 + $0x29c] sm:$0xf]
        %v2727 = vld [vmem:[#allocation11 + $0x2a0] sm:$0xff]
        %v2728 = vld [vmem:[#allocation11 + $0x2a8] sm:$0xf]
        %v2729 = vld [vmem:[#allocation11 + $0x2ac] sm:$0xff]
        %v2730 = vld [vmem:[#allocation11 + $0x2b4] sm:$0xf]
        %v2731 = vld [vmem:[#allocation11 + $0x2b8] sm:$0xff]
        %v2732 = vld [vmem:[#allocation11 + $0x2c0] sm:$0xf]
        %v2733 = vld [vmem:[#allocation11 + $0x2c4] sm:$0xff]
        %v2734 = vld [vmem:[#allocation11 + $0x2cc] sm:$0xf]
        %v2735 = vld [vmem:[#allocation11 + $0x2d0] sm:$0xff]
        %v2736 = vld [vmem:[#allocation11 + $0x2d8] sm:$0xf]
        %v2737 = vld [vmem:[#allocation11 + $0x2dc] sm:$0xff]
        %v2738 = vld [vmem:[#allocation11 + $0x2e4] sm:$0xf]
        %v2739 = vld [vmem:[#allocation11 + $0x2e8] sm:$0xff]
        %v2740 = vld [vmem:[#allocation11 + $0x2f0] sm:$0xf]
        %v2741 = vld [vmem:[#allocation11 + $0x2f4] sm:$0xff]
        %v2742 = vld [vmem:[#allocation11 + $0x2fc] sm:$0xf]
        %v2743 = vld [vmem:[#allocation11 + $0x300] sm:$0xff]
        %v2744 = vld [vmem:[#allocation11 + $0x308] sm:$0xf]
        %v2745 = vld [vmem:[#allocation11 + $0x30c] sm:$0xff]
        %v2746 = vld [vmem:[#allocation11 + $0x314] sm:$0xf]
        %v2747 = vld [vmem:[#allocation11 + $0x318] sm:$0xff]
        %v2748 = vld [vmem:[#allocation11 + $0x320] sm:$0xf]
        %v2749 = vld [vmem:[#allocation11 + $0x324] sm:$0xff]
        %v2750 = vld [vmem:[#allocation11 + $0x32c] sm:$0xf]
        %v2751 = vld [vmem:[#allocation11 + $0x330] sm:$0xff]
        %v2752 = vld [vmem:[#allocation11 + $0x338] sm:$0xf]
        %v2753 = vld [vmem:[#allocation11 + $0x33c] sm:$0xff]
        %v2754 = vld [vmem:[#allocation11 + $0x344] sm:$0xf]
        %v2755 = vld [vmem:[#allocation11 + $0x348] sm:$0xff]
        %v2756 = vld [vmem:[#allocation11 + $0x350] sm:$0xf]
        %v2757 = vld [vmem:[#allocation11 + $0x354] sm:$0xff]
        %v2758 = vld [vmem:[#allocation11 + $0x35c] sm:$0xf]
        %v2759 = vld [vmem:[#allocation11 + $0x360] sm:$0xff]
        %v2760 = vld [vmem:[#allocation11 + $0x368] sm:$0xf]
        %v2761 = vld [vmem:[#allocation11 + $0x36c] sm:$0xff]
        %v2762 = vld [vmem:[#allocation11 + $0x374] sm:$0xf]
        %v2763 = vld [vmem:[#allocation11 + $0x378] sm:$0xff]
        %v2764 = vld [vmem:[#allocation11 + $0x380] sm:$0xf]
        %v2765 = vld [vmem:[#allocation11 + $0x384] sm:$0xff]
        %v2766 = vld [vmem:[#allocation11 + $0x38c] sm:$0xf]
        %v2767 = vld [vmem:[#allocation11 + $0x390] sm:$0xff]
        %v2768 = vld [vmem:[#allocation11 + $0x398] sm:$0xf]
        %v2769 = vld [vmem:[#allocation11 + $0x39c] sm:$0xff]
        %v2770 = vld [vmem:[#allocation11 + $0x3a4] sm:$0xf]
        %v2771 = vld [vmem:[#allocation11 + $0x3a8] sm:$0xff]
        %v2772 = vld [vmem:[#allocation11 + $0x3b0] sm:$0xf]
        %v2773 = vld [vmem:[#allocation11 + $0x3b4] sm:$0xff]
        %v2774 = vld [vmem:[#allocation11 + $0x3bc] sm:$0xf]
        %v2775 = vld [vmem:[#allocation11 + $0x3c0] sm:$0xff]
        %v2776 = vld [vmem:[#allocation11 + $0x3c8] sm:$0xf]
        %v2777 = vld [vmem:[#allocation11 + $0x3cc] sm:$0xff]
        %v2778 = vld [vmem:[#allocation11 + $0x3d4] sm:$0xf]
        %v2779 = vld [vmem:[#allocation11 + $0x3d8] sm:$0xff]
        %v2780 = vld [vmem:[#allocation11 + $0x3e0] sm:$0xf]
        %v2781 = vld [vmem:[#allocation11 + $0x3e4] sm:$0xff]
        %v2782 = vld [vmem:[#allocation11 + $0x3ec] sm:$0xf]
        %v2783 = vld [vmem:[#allocation11 + $0x3f0] sm:$0xff]
        %v2784 = vld [vmem:[#allocation11 + $0x3f8] sm:$0xf]
        %v2785 = vld [vmem:[#allocation11 + $0x3fc] sm:$0xff]
        %v2786 = vld [vmem:[#allocation11 + $0x404] sm:$0xf]
        %v2787 = vld [vmem:[#allocation11 + $0x408] sm:$0xff]
        %v2788 = vld [vmem:[#allocation11 + $0x410] sm:$0xf]
        %v2789 = vld [vmem:[#allocation11 + $0x414] sm:$0xff]
        %v2790 = vld [vmem:[#allocation11 + $0x41c] sm:$0xf]
        %v2791 = vld [vmem:[#allocation11 + $0x420] sm:$0xff]
        %v2792 = vld [vmem:[#allocation11 + $0x428] sm:$0xf]
        %v2793 = vld [vmem:[#allocation11 + $0x42c] sm:$0xff]
        %v2794 = vld [vmem:[#allocation11 + $0x434] sm:$0xf]
        %v2795 = vld [vmem:[#allocation11 + $0x438] sm:$0xff]
        %v2796 = vld [vmem:[#allocation11 + $0x440] sm:$0xf]
        %v2797 = vld [vmem:[#allocation11 + $0x444] sm:$0xff]
        %v2798 = vld [vmem:[#allocation11 + $0x44c] sm:$0xf]
        %v2799 = vld [vmem:[#allocation11 + $0x450] sm:$0xff]
        %v2800 = vld [vmem:[#allocation11 + $0x458] sm:$0xf]
        %v2801 = vld [vmem:[#allocation11 + $0x45c] sm:$0xff]
        %v2802 = vld [vmem:[#allocation11 + $0x464] sm:$0xf]
        %v2803 = vld [vmem:[#allocation11 + $0x468] sm:$0xff]
        %v2804 = vld [vmem:[#allocation11 + $0x470] sm:$0xf]
        %v2805 = vld [vmem:[#allocation11 + $0x474] sm:$0xff]
        %v2806 = vld [vmem:[#allocation11 + $0x47c] sm:$0xf]
        %v2807 = vld [vmem:[#allocation11 + $0x480] sm:$0xff]
        %v2808 = vld [vmem:[#allocation11 + $0x488] sm:$0xf]
        %v2809 = vld [vmem:[#allocation11 + $0x48c] sm:$0xff]
        %v2810 = vld [vmem:[#allocation11 + $0x494] sm:$0xf]
        %v2811 = vld [vmem:[#allocation11 + $0x498] sm:$0xff]
        %v2812 = vld [vmem:[#allocation11 + $0x4a0] sm:$0xf]
        %v2813 = vld [vmem:[#allocation11 + $0x4a4] sm:$0xff]
        %v2814 = vld [vmem:[#allocation11 + $0x4ac] sm:$0xf]
        %v2815 = vld [vmem:[#allocation11 + $0x4b0] sm:$0xff]
        %v2816 = vld [vmem:[#allocation11 + $0x4b8] sm:$0xf]
        %v2817 = vld [vmem:[#allocation11 + $0x4bc] sm:$0xff]
        %v2818 = vld [vmem:[#allocation11 + $0x4c4] sm:$0xf]
        %v2819 = vld [vmem:[#allocation11 + $0x4c8] sm:$0xff]
        %v2820 = vld [vmem:[#allocation11 + $0x4d0] sm:$0xf]
        %v2821 = vld [vmem:[#allocation11 + $0x4d4] sm:$0xff]
        %v2822 = vld [vmem:[#allocation11 + $0x4dc] sm:$0xf]
        %v2823 = vld [vmem:[#allocation11 + $0x4e0] sm:$0xff]
        %v2824 = vld [vmem:[#allocation11 + $0x4e8] sm:$0xf]
        %v2825 = vld [vmem:[#allocation11 + $0x4ec] sm:$0xff]
        %v2826 = vld [vmem:[#allocation11 + $0x4f4] sm:$0xf]
        %v2827 = vld [vmem:[#allocation11 + $0x4f8] sm:$0xff]
        %v2828 = vld [vmem:[#allocation11 + $0x500] sm:$0xf]
        %v2829 = vld [vmem:[#allocation11 + $0x504] sm:$0xff]
        %v2830 = vld [vmem:[#allocation11 + $0x50c] sm:$0xf]
        %v2831 = vld [vmem:[#allocation11 + $0x510] sm:$0xff]
        %v2832 = vld [vmem:[#allocation11 + $0x518] sm:$0xf]
        %v2833 = vld [vmem:[#allocation11 + $0x51c] sm:$0xff]
        %v2834 = vld [vmem:[#allocation11 + $0x524] sm:$0xf]
        %v2835 = vld [vmem:[#allocation11 + $0x528] sm:$0xff]
        %v2836 = vld [vmem:[#allocation11 + $0x530] sm:$0xf]
        %v2837 = vld [vmem:[#allocation11 + $0x534] sm:$0xff]
        %v2838 = vld [vmem:[#allocation11 + $0x53c] sm:$0xf]
        %v2839 = vld [vmem:[#allocation11 + $0x540] sm:$0xff]
        %v2840 = vld [vmem:[#allocation11 + $0x548] sm:$0xf]
        %v2841 = vld [vmem:[#allocation11 + $0x54c] sm:$0xff]
        %v2842 = vld [vmem:[#allocation11 + $0x554] sm:$0xf]
        %v2843 = vld [vmem:[#allocation11 + $0x558] sm:$0xff]
        %v2844 = vld [vmem:[#allocation11 + $0x560] sm:$0xf]
        %v2845 = vld [vmem:[#allocation11 + $0x564] sm:$0xff]
        %v2846 = vld [vmem:[#allocation11 + $0x56c] sm:$0xf]
        %v2847 = vld [vmem:[#allocation11 + $0x570] sm:$0xff]
        %v2848 = vld [vmem:[#allocation11 + $0x578] sm:$0xf]
        %v2849 = vld [vmem:[#allocation11 + $0x57c] sm:$0xff]
        %v2850 = vld [vmem:[#allocation11 + $0x584] sm:$0xf]
        %v2851 = vld [vmem:[#allocation11 + $0x588] sm:$0xff]
        %v2852 = vld [vmem:[#allocation11 + $0x590] sm:$0xf]
        %v2853 = vld [vmem:[#allocation11 + $0x594] sm:$0xff]
        %v2854 = vld [vmem:[#allocation11 + $0x59c] sm:$0xf]
        %v2855 = vld [vmem:[#allocation11 + $0x5a0] sm:$0xff]
        %v2856 = vld [vmem:[#allocation11 + $0x5a8] sm:$0xf]
        %v2857 = vld [vmem:[#allocation11 + $0x5ac] sm:$0xff]
        %v2858 = vld [vmem:[#allocation11 + $0x5b4] sm:$0xf]
        %v2859 = vld [vmem:[#allocation11 + $0x5b8] sm:$0xff]
        %v2860 = vld [vmem:[#allocation11 + $0x5c0] sm:$0xf]
        %v2861 = vld [vmem:[#allocation11 + $0x5c4] sm:$0xff]
        %v2862 = vld [vmem:[#allocation11 + $0x5cc] sm:$0xf]
        %v2863 = vld [vmem:[#allocation11 + $0x5d0] sm:$0xff]
        %v2864 = vld [vmem:[#allocation11 + $0x5d8] sm:$0xf]
        %v2865 = vld [vmem:[#allocation11 + $0x5dc] sm:$0xff]
        %v2866 = vld [vmem:[#allocation11 + $0x5e4] sm:$0xf]
        %v2867 = vld [vmem:[#allocation11 + $0x5e8] sm:$0xff]
        %v2868 = vld [vmem:[#allocation11 + $0x5f0] sm:$0xf]
        %v2869 = vld [vmem:[#allocation11 + $0x5f4] sm:$0xff]
        %v2870 = vld [vmem:[#allocation11 + $0x5fc] sm:$0xf]
        %v2871 = vld [vmem:[#allocation11 + $0x600] sm:$0xff]
        %v2872 = vld [vmem:[#allocation11 + $0x608] sm:$0xf]
        %v2873 = vld [vmem:[#allocation11 + $0x60c] sm:$0xff]
        %v2874 = vld [vmem:[#allocation11 + $0x614] sm:$0xf]
        %v2875 = vld [vmem:[#allocation11 + $0x618] sm:$0xff]
        %v2876 = vld [vmem:[#allocation11 + $0x620] sm:$0xf]
        %v2877 = vld [vmem:[#allocation11 + $0x624] sm:$0xff]
        %v2878 = vld [vmem:[#allocation11 + $0x62c] sm:$0xf]
        %v2879 = vld [vmem:[#allocation11 + $0x630] sm:$0xff]
        %v2880 = vld [vmem:[#allocation11 + $0x638] sm:$0xf]
        %v2881 = vld [vmem:[#allocation11 + $0x63c] sm:$0xff]
        %v2882 = vld [vmem:[#allocation11 + $0x644] sm:$0xf]
        %v2883 = vld [vmem:[#allocation11 + $0x648] sm:$0xff]
        %v2884 = vld [vmem:[#allocation11 + $0x650] sm:$0xf]
        %v2885 = vld [vmem:[#allocation11 + $0x654] sm:$0xff]
        %v2886 = vld [vmem:[#allocation11 + $0x65c] sm:$0xf]
        %v2887 = vld [vmem:[#allocation11 + $0x660] sm:$0xff]
        %v2888 = vld [vmem:[#allocation11 + $0x668] sm:$0xf]
        %v2889 = vld [vmem:[#allocation11 + $0x66c] sm:$0xff]
        %v2890 = vld [vmem:[#allocation11 + $0x674] sm:$0xf]
        %v2891 = vld [vmem:[#allocation11 + $0x678] sm:$0xff]
        %v2892 = vld [vmem:[#allocation11 + $0x680] sm:$0xf]
        %v2893 = vld [vmem:[#allocation11 + $0x684] sm:$0xff]
        %v2894 = vld [vmem:[#allocation11 + $0x68c] sm:$0xf]
        %v2895 = vld [vmem:[#allocation11 + $0x690] sm:$0xff]
        %v2896 = vld [vmem:[#allocation11 + $0x698] sm:$0xf]
        %v2897 = vld [vmem:[#allocation11 + $0x69c] sm:$0xff]
        %v2898 = vld [vmem:[#allocation11 + $0x6a4] sm:$0xf]
        %v2899 = vld [vmem:[#allocation11 + $0x6a8] sm:$0xff]
        %v2900 = vld [vmem:[#allocation11 + $0x6b0] sm:$0xf]
        %v2901 = vld [vmem:[#allocation11 + $0x6b4] sm:$0xff]
        %v2902 = vld [vmem:[#allocation11 + $0x6bc] sm:$0xf]
        %v2903 = vld [vmem:[#allocation11 + $0x6c0] sm:$0xff]
        %v2904 = vld [vmem:[#allocation11 + $0x6c8] sm:$0xf]
        %v2905 = vld [vmem:[#allocation11 + $0x6cc] sm:$0xff]
        %v2906 = vld [vmem:[#allocation11 + $0x6d4] sm:$0xf]
        %v2907 = vld [vmem:[#allocation11 + $0x6d8] sm:$0xff]
        %v2908 = vld [vmem:[#allocation11 + $0x6e0] sm:$0xf]
        %v2909 = vld [vmem:[#allocation11 + $0x6e4] sm:$0xff]
        %v2910 = vld [vmem:[#allocation11 + $0x6ec] sm:$0xf]
        %v2911 = vld [vmem:[#allocation11 + $0x6f0] sm:$0xff]
        %v2912 = vld [vmem:[#allocation11 + $0x6f8] sm:$0xf]
        %v2913 = vld [vmem:[#allocation11 + $0x6fc] sm:$0xff]
        %v2914 = vld [vmem:[#allocation11 + $0x704] sm:$0xf]
        %v2915 = vld [vmem:[#allocation11 + $0x708] sm:$0xff]
        %v2916 = vld [vmem:[#allocation11 + $0x710] sm:$0xf]
        %v2917 = vld [vmem:[#allocation11 + $0x714] sm:$0xff]
        %v2918 = vld [vmem:[#allocation11 + $0x71c] sm:$0xf]
        %v2919 = vld [vmem:[#allocation11 + $0x720] sm:$0xff]
        %v2920 = vld [vmem:[#allocation11 + $0x728] sm:$0xf]
        %v2921 = vld [vmem:[#allocation11 + $0x72c] sm:$0xff]
        %v2922 = vld [vmem:[#allocation11 + $0x734] sm:$0xf]
        %v2923 = vld [vmem:[#allocation11 + $0x738] sm:$0xff]
        %v2924 = vld [vmem:[#allocation11 + $0x740] sm:$0xf]
        %v2925 = vld [vmem:[#allocation11 + $0x744] sm:$0xff]
        %v2926 = vld [vmem:[#allocation11 + $0x74c] sm:$0xf]
        %v2927 = vld [vmem:[#allocation11 + $0x750] sm:$0xff]
        %v2928 = vld [vmem:[#allocation11 + $0x758] sm:$0xf]
        %v2929 = vld [vmem:[#allocation11 + $0x75c] sm:$0xff]
        %v2930 = vld [vmem:[#allocation11 + $0x764] sm:$0xf]
        %v2931 = vld [vmem:[#allocation11 + $0x768] sm:$0xff]
        %v2932 = vld [vmem:[#allocation11 + $0x770] sm:$0xf]
        %v2933 = vld [vmem:[#allocation11 + $0x774] sm:$0xff]
        %v2934 = vld [vmem:[#allocation11 + $0x77c] sm:$0xf]
        %v2935 = vld [vmem:[#allocation11 + $0x780] sm:$0xff]
        %v2936 = vld [vmem:[#allocation11 + $0x788] sm:$0xf]
        %v2937 = vld [vmem:[#allocation11 + $0x78c] sm:$0xff]
        %v2938 = vld [vmem:[#allocation11 + $0x794] sm:$0xf]
        %v2939 = vld [vmem:[#allocation11 + $0x798] sm:$0xff]
        %v2940 = vld [vmem:[#allocation11 + $0x7a0] sm:$0xf]
        %v2941 = vld [vmem:[#allocation11 + $0x7a4] sm:$0xff]
        %v2942 = vld [vmem:[#allocation11 + $0x7ac] sm:$0xf]
        %v2943 = vld [vmem:[#allocation11 + $0x7b0] sm:$0xff]
        %v2944 = vld [vmem:[#allocation11 + $0x7b8] sm:$0xf]
        %v2945 = vld [vmem:[#allocation11 + $0x7bc] sm:$0xff]
        %v2946 = vld [vmem:[#allocation11 + $0x7c4] sm:$0xf]
        %v2947 = vld [vmem:[#allocation11 + $0x7c8] sm:$0xff]
        %v2948 = vld [vmem:[#allocation11 + $0x7d0] sm:$0xf]
        %v2949 = vld [vmem:[#allocation11 + $0x7d4] sm:$0xff]
        %v2950 = vld [vmem:[#allocation11 + $0x7dc] sm:$0xf]
        %v2951 = vld [vmem:[#allocation11 + $0x7e0] sm:$0xff]
        %v2952 = vld [vmem:[#allocation11 + $0x7e8] sm:$0xf]
        %v2953 = vld [vmem:[#allocation11 + $0x7ec] sm:$0xff]
        %v2954 = vld [vmem:[#allocation11 + $0x7f4] sm:$0xf]
        %v2955 = vld [vmem:[#allocation11 + $0x7f8] sm:$0xff]
        %v2956 = vld [vmem:[#allocation11 + $0x800] sm:$0xf]
        %v2957 = vld [vmem:[#allocation11 + $0x804] sm:$0xff]
        %v2958 = vld [vmem:[#allocation11 + $0x80c] sm:$0xf]
        %v2959 = vld [vmem:[#allocation11 + $0x810] sm:$0xff]
        %v2960 = vld [vmem:[#allocation11 + $0x818] sm:$0xf]
        %v2961 = vld [vmem:[#allocation11 + $0x81c] sm:$0xff]
        %v2962 = vld [vmem:[#allocation11 + $0x824] sm:$0xf]
        %v2963 = vld [vmem:[#allocation11 + $0x828] sm:$0xff]
        %v2964 = vld [vmem:[#allocation11 + $0x830] sm:$0xf]
        %v2965 = vld [vmem:[#allocation11 + $0x834] sm:$0xff]
        %v2966 = vld [vmem:[#allocation11 + $0x83c] sm:$0xf]
        %v2967 = vld [vmem:[#allocation11 + $0x840] sm:$0xff]
        %v2968 = vld [vmem:[#allocation11 + $0x848] sm:$0xf]
        %v2969 = vld [vmem:[#allocation11 + $0x84c] sm:$0xff]
        %v2970 = vld [vmem:[#allocation11 + $0x854] sm:$0xf]
        %v2971 = vld [vmem:[#allocation11 + $0x858] sm:$0xff]
        %v2972 = vld [vmem:[#allocation11 + $0x860] sm:$0xf]
        %v2973 = vld [vmem:[#allocation11 + $0x864] sm:$0xff]
        %v2974 = vld [vmem:[#allocation11 + $0x86c] sm:$0xf]
        %v2975 = vld [vmem:[#allocation11 + $0x870] sm:$0xff]
        %v2976 = vld [vmem:[#allocation11 + $0x878] sm:$0xf]
        %v2977 = vld [vmem:[#allocation11 + $0x87c] sm:$0xff]
        %v2978 = vld [vmem:[#allocation11 + $0x884] sm:$0xf]
        %v2979 = vld [vmem:[#allocation11 + $0x888] sm:$0xff]
        %v2980 = vld [vmem:[#allocation11 + $0x890] sm:$0xf]
        %v2981 = vld [vmem:[#allocation11 + $0x894] sm:$0xff]
        %v2982 = vld [vmem:[#allocation11 + $0x89c] sm:$0xf]
        %v2983 = vld [vmem:[#allocation11 + $0x8a0] sm:$0xff]
        %v2984 = vld [vmem:[#allocation11 + $0x8a8] sm:$0xf]
        %v2985 = vld [vmem:[#allocation11 + $0x8ac] sm:$0xff]
        %v2986 = vld [vmem:[#allocation11 + $0x8b4] sm:$0xf]
        %v2987 = vld [vmem:[#allocation11 + $0x8b8] sm:$0xff]
        %v2988 = vld [vmem:[#allocation11 + $0x8c0] sm:$0xf]
        %v2989 = vld [vmem:[#allocation11 + $0x8c4] sm:$0xff]
        %v2990 = vld [vmem:[#allocation11 + $0x8cc] sm:$0xf]
        %v2991 = vld [vmem:[#allocation11 + $0x8d0] sm:$0xff]
        %v2992 = vld [vmem:[#allocation11 + $0x8d8] sm:$0xf]
        %v2993 = vld [vmem:[#allocation11 + $0x8dc] sm:$0xff]
        %v2994 = vld [vmem:[#allocation11 + $0x8e4] sm:$0xf]
        %v2995 = vld [vmem:[#allocation11 + $0x8e8] sm:$0xff]
        %v2996 = vld [vmem:[#allocation11 + $0x8f0] sm:$0xf]
        %v2997 = vld [vmem:[#allocation11 + $0x8f4] sm:$0xff]
        %v2998 = vld [vmem:[#allocation11 + $0x8fc] sm:$0xf]
        %v2999 = vld [vmem:[#allocation11 + $0x900] sm:$0xff]
        %v3000 = vld [vmem:[#allocation11 + $0x908] sm:$0xf]
        %v3001 = vld [vmem:[#allocation11 + $0x90c] sm:$0xff]
        %v3002 = vld [vmem:[#allocation11 + $0x914] sm:$0xf]
        %v3003 = vld [vmem:[#allocation11 + $0x918] sm:$0xff]
        %v3004 = vld [vmem:[#allocation11 + $0x920] sm:$0xf]
        %v3005 = vld [vmem:[#allocation11 + $0x924] sm:$0xff]
        %v3006 = vld [vmem:[#allocation11 + $0x92c] sm:$0xf]
        %v3007 = vld [vmem:[#allocation11 + $0x930] sm:$0xff]
        %v3008 = vld [vmem:[#allocation11 + $0x938] sm:$0xf]
        %v3009 = vld [vmem:[#allocation11 + $0x93c] sm:$0xff]
        %v3010 = vld [vmem:[#allocation11 + $0x944] sm:$0xf]
        %v3011 = vld [vmem:[#allocation11 + $0x948] sm:$0xff]
        %v3012 = vld [vmem:[#allocation11 + $0x950] sm:$0xf]
        %v3013 = vld [vmem:[#allocation11 + $0x954] sm:$0xff]
        %v3014 = vld [vmem:[#allocation11 + $0x95c] sm:$0xf]
        %v3015 = vld [vmem:[#allocation11 + $0x960] sm:$0xff]
        %v3016 = vld [vmem:[#allocation11 + $0x968] sm:$0xf]
        %v3017 = vld [vmem:[#allocation11 + $0x96c] sm:$0xff]
        %v3018 = vld [vmem:[#allocation11 + $0x974] sm:$0xf]
        %v3019 = vld [vmem:[#allocation11 + $0x978] sm:$0xff]
        %v3020 = vld [vmem:[#allocation11 + $0x980] sm:$0xf]
        %v3021 = vld [vmem:[#allocation11 + $0x984] sm:$0xff]
        %v3022 = vld [vmem:[#allocation11 + $0x98c] sm:$0xf]
        %v3023 = vld [vmem:[#allocation11 + $0x990] sm:$0xff]
        %v3024 = vld [vmem:[#allocation11 + $0x998] sm:$0xf]
        %v3025 = vld [vmem:[#allocation11 + $0x99c] sm:$0xff]
        %v3026 = vld [vmem:[#allocation11 + $0x9a4] sm:$0xf]
        %v3027 = vld [vmem:[#allocation11 + $0x9a8] sm:$0xff]
        %v3028 = vld [vmem:[#allocation11 + $0x9b0] sm:$0xf]
        %v3029 = vld [vmem:[#allocation11 + $0x9b4] sm:$0xff]
        %v3030 = vld [vmem:[#allocation11 + $0x9bc] sm:$0xf]
        %v3031 = vld [vmem:[#allocation11 + $0x9c0] sm:$0xff]
        %v3032 = vld [vmem:[#allocation11 + $0x9c8] sm:$0xf]
        %v3033 = vld [vmem:[#allocation11 + $0x9cc] sm:$0xff]
        %v3034 = vld [vmem:[#allocation11 + $0x9d4] sm:$0xf]
        %v3035 = vld [vmem:[#allocation11 + $0x9d8] sm:$0xff]
        %v3036 = vld [vmem:[#allocation11 + $0x9e0] sm:$0xf]
        %v3037 = vld [vmem:[#allocation11 + $0x9e4] sm:$0xff]
        %v3038 = vld [vmem:[#allocation11 + $0x9ec] sm:$0xf]
        %v3039 = vld [vmem:[#allocation11 + $0x9f0] sm:$0xff]
        %v3040 = vld [vmem:[#allocation11 + $0x9f8] sm:$0xf]
        %v3041 = vld [vmem:[#allocation11 + $0x9fc] sm:$0xff]
        %v3042 = vld [vmem:[#allocation11 + $0xa04] sm:$0xf]
        %v3043 = vld [vmem:[#allocation11 + $0xa08] sm:$0xff]
        %v3044 = vld [vmem:[#allocation11 + $0xa10] sm:$0xf]
        %v3045 = vld [vmem:[#allocation11 + $0xa14] sm:$0xff]
        %v3046 = vld [vmem:[#allocation11 + $0xa1c] sm:$0xf]
        %v3047 = vld [vmem:[#allocation11 + $0xa20] sm:$0xff]
        %v3048 = vld [vmem:[#allocation11 + $0xa28] sm:$0xf]
        %v3049 = vld [vmem:[#allocation11 + $0xa2c] sm:$0xff]
        %v3050 = vld [vmem:[#allocation11 + $0xa34] sm:$0xf]
        %v3051 = vld [vmem:[#allocation11 + $0xa38] sm:$0xff]
        %v3052 = vld [vmem:[#allocation11 + $0xa40] sm:$0xf]
        %v3053 = vld [vmem:[#allocation11 + $0xa44] sm:$0xff]
        %v3054 = vld [vmem:[#allocation11 + $0xa4c] sm:$0xf]
        %v3055 = vld [vmem:[#allocation11 + $0xa50] sm:$0xff]
        %v3056 = vld [vmem:[#allocation11 + $0xa58] sm:$0xf]
        %v3057 = vld [vmem:[#allocation11 + $0xa5c] sm:$0xff]
        %v3058 = vld [vmem:[#allocation11 + $0xa64] sm:$0xf]
        %v3059 = vld [vmem:[#allocation11 + $0xa68] sm:$0xff]
        %v3060 = vld [vmem:[#allocation11 + $0xa70] sm:$0xf]
        %v3061 = vld [vmem:[#allocation11 + $0xa74] sm:$0xff]
        %v3062 = vld [vmem:[#allocation11 + $0xa7c] sm:$0xf]
        %v3063 = vld [vmem:[#allocation11 + $0xa80] sm:$0xff]
        %v3064 = vld [vmem:[#allocation11 + $0xa88] sm:$0xf]
        %v3065 = vld [vmem:[#allocation11 + $0xa8c] sm:$0xff]
        %v3066 = vld [vmem:[#allocation11 + $0xa94] sm:$0xf]
        %v3067 = vld [vmem:[#allocation11 + $0xa98] sm:$0xff]
        %v3068 = vld [vmem:[#allocation11 + $0xaa0] sm:$0xf]
        %v3069 = vld [vmem:[#allocation11 + $0xaa4] sm:$0xff]
        %v3070 = vld [vmem:[#allocation11 + $0xaac] sm:$0xf]
        %v3071 = vld [vmem:[#allocation11 + $0xab0] sm:$0xff]
        %v3072 = vld [vmem:[#allocation11 + $0xab8] sm:$0xf]
        %v3073 = vld [vmem:[#allocation11 + $0xabc] sm:$0xff]
        %v3074 = vld [vmem:[#allocation11 + $0xac4] sm:$0xf]
        %v3075 = vld [vmem:[#allocation11 + $0xac8] sm:$0xff]
        %v3076 = vld [vmem:[#allocation11 + $0xad0] sm:$0xf]
        %v3077 = vld [vmem:[#allocation11 + $0xad4] sm:$0xff]
        %v3078 = vld [vmem:[#allocation11 + $0xadc] sm:$0xf]
        %v3079 = vld [vmem:[#allocation11 + $0xae0] sm:$0xff]
        %v3080 = vld [vmem:[#allocation11 + $0xae8] sm:$0xf]
        %v3081 = vld [vmem:[#allocation11 + $0xaec] sm:$0xff]
        %v3082 = vld [vmem:[#allocation11 + $0xaf4] sm:$0xf]
        %v3083 = vld [vmem:[#allocation11 + $0xaf8] sm:$0xff]
        %v3084 = vld [vmem:[#allocation11 + $0xb00] sm:$0xf]
        %v3085 = vld [vmem:[#allocation11 + $0xb04] sm:$0xff]
        %v3086 = vld [vmem:[#allocation11 + $0xb0c] sm:$0xf]
        %v3087 = vld [vmem:[#allocation11 + $0xb10] sm:$0xff]
        %v3088 = vld [vmem:[#allocation11 + $0xb18] sm:$0xf]
        %v3089 = vld [vmem:[#allocation11 + $0xb1c] sm:$0xff]
        %v3090 = vld [vmem:[#allocation11 + $0xb24] sm:$0xf]
        %v3091 = vld [vmem:[#allocation11 + $0xb28] sm:$0xff]
        %v3092 = vld [vmem:[#allocation11 + $0xb30] sm:$0xf]
        %v3093 = vld [vmem:[#allocation11 + $0xb34] sm:$0xff]
        %v3094 = vld [vmem:[#allocation11 + $0xb3c] sm:$0xf]
        %v3095 = vld [vmem:[#allocation11 + $0xb40] sm:$0xff]
        %v3096 = vld [vmem:[#allocation11 + $0xb48] sm:$0xf]
        %v3097 = vld [vmem:[#allocation11 + $0xb4c] sm:$0xff]
        %v3098 = vld [vmem:[#allocation11 + $0xb54] sm:$0xf]
        %v3099 = vld [vmem:[#allocation11 + $0xb58] sm:$0xff]
        %v3100 = vld [vmem:[#allocation11 + $0xb60] sm:$0xf]
        %v3101 = vld [vmem:[#allocation11 + $0xb64] sm:$0xff]
        %v3102 = vld [vmem:[#allocation11 + $0xb6c] sm:$0xf]
        %v3103 = vld [vmem:[#allocation11 + $0xb70] sm:$0xff]
        %v3104 = vld [vmem:[#allocation11 + $0xb78] sm:$0xf]
        %v3105 = vld [vmem:[#allocation11 + $0xb7c] sm:$0xff]
        %v3106 = vld [vmem:[#allocation11 + $0xb84] sm:$0xf]
        %v3107 = vld [vmem:[#allocation11 + $0xb88] sm:$0xff]
        %v3108 = vld [vmem:[#allocation11 + $0xb90] sm:$0xf]
        %v3109 = vld [vmem:[#allocation11 + $0xb94] sm:$0xff]
        %v3110 = vld [vmem:[#allocation11 + $0xb9c] sm:$0xf]
        %v3111 = vld [vmem:[#allocation11 + $0xba0] sm:$0xff]
        %v3112 = vld [vmem:[#allocation11 + $0xba8] sm:$0xf]
        %v3113 = vld [vmem:[#allocation11 + $0xbac] sm:$0xff]
        %v3114 = vld [vmem:[#allocation11 + $0xbb4] sm:$0xf]
        %v3115 = vld [vmem:[#allocation11 + $0xbb8] sm:$0xff]
        %v3116 = vld [vmem:[#allocation11 + $0xbc0] sm:$0xf]
        %v3117 = vld [vmem:[#allocation11 + $0xbc4] sm:$0xff]
        %v3118 = vld [vmem:[#allocation11 + $0xbcc] sm:$0xf]
        %v3119 = vld [vmem:[#allocation11 + $0xbd0] sm:$0xff]
        %v3120 = vld [vmem:[#allocation11 + $0xbd8] sm:$0xf]
        %v3121 = vld [vmem:[#allocation11 + $0xbdc] sm:$0xff]
        %v3122 = vld [vmem:[#allocation11 + $0xbe4] sm:$0xf]
        %v3123 = vld [vmem:[#allocation11 + $0xbe8] sm:$0xff]
        %v3124 = vld [vmem:[#allocation11 + $0xbf0] sm:$0xf]
        %v3125 = vld [vmem:[#allocation11 + $0xbf4] sm:$0xff]
        %v3126 = vld [vmem:[#allocation11 + $0xbfc] sm:$0xf]
        %v3127 = vld [vmem:[#allocation11 + $0xc00] sm:$0xff]
        %v3128 = vld [vmem:[#allocation11 + $0xc08] sm:$0xf]
        %v3129 = vld [vmem:[#allocation11 + $0xc0c] sm:$0xff]
        %v3130 = vld [vmem:[#allocation11 + $0xc14] sm:$0xf]
        %v3131 = vld [vmem:[#allocation11 + $0xc18] sm:$0xff]
        %v3132 = vld [vmem:[#allocation11 + $0xc20] sm:$0xf]
        %v3133 = vld [vmem:[#allocation11 + $0xc24] sm:$0xff]
        %v3134 = vld [vmem:[#allocation11 + $0xc2c] sm:$0xf]
        %v3135 = vld [vmem:[#allocation11 + $0xc30] sm:$0xff]
        %v3136 = vld [vmem:[#allocation11 + $0xc38] sm:$0xf]
        %v3137 = vld [vmem:[#allocation11 + $0xc3c] sm:$0xff]
        %v3138 = vld [vmem:[#allocation11 + $0xc44] sm:$0xf]
        %v3139 = vld [vmem:[#allocation11 + $0xc48] sm:$0xff]
        %v3140 = vld [vmem:[#allocation11 + $0xc50] sm:$0xf]
        %v3141 = vld [vmem:[#allocation11 + $0xc54] sm:$0xff]
        %v3142 = vld [vmem:[#allocation11 + $0xc5c] sm:$0xf]
        %v3143 = vld [vmem:[#allocation11 + $0xc60] sm:$0xff]
        %v3144 = vld [vmem:[#allocation11 + $0xc68] sm:$0xf]
        %v3145 = vld [vmem:[#allocation11 + $0xc6c] sm:$0xff]
        %v3146 = vld [vmem:[#allocation11 + $0xc74] sm:$0xf]
        %v3147 = vld [vmem:[#allocation11 + $0xc78] sm:$0xff]
        %v3148 = vld [vmem:[#allocation11 + $0xc80] sm:$0xf]
        %v3149 = vld [vmem:[#allocation11 + $0xc84] sm:$0xff]
        %v3150 = vld [vmem:[#allocation11 + $0xc8c] sm:$0xf]
        %v3151 = vld [vmem:[#allocation11 + $0xc90] sm:$0xff]
        %v3152 = vld [vmem:[#allocation11 + $0xc98] sm:$0xf]
        %v3153 = vld [vmem:[#allocation11 + $0xc9c] sm:$0xff]
        %v3154 = vld [vmem:[#allocation11 + $0xca4] sm:$0xf]
        %v3155 = vld [vmem:[#allocation11 + $0xca8] sm:$0xff]
        %v3156 = vld [vmem:[#allocation11 + $0xcb0] sm:$0xf]
        %v3157 = vld [vmem:[#allocation11 + $0xcb4] sm:$0xff]
        %v3158 = vld [vmem:[#allocation11 + $0xcbc] sm:$0xf]
        %v3159 = vld [vmem:[#allocation11 + $0xcc0] sm:$0xff]
        %v3160 = vld [vmem:[#allocation11 + $0xcc8] sm:$0xf]
        %v3161 = vld [vmem:[#allocation11 + $0xccc] sm:$0xff]
        %v3162 = vld [vmem:[#allocation11 + $0xcd4] sm:$0xf]
        %v3163 = vld [vmem:[#allocation11 + $0xcd8] sm:$0xff]
        %v3164 = vld [vmem:[#allocation11 + $0xce0] sm:$0xf]
        %v3165 = vld [vmem:[#allocation11 + $0xce4] sm:$0xff]
        %v3166 = vld [vmem:[#allocation11 + $0xcec] sm:$0xf]
        %v3167 = vld [vmem:[#allocation11 + $0xcf0] sm:$0xff]
        %v3168 = vld [vmem:[#allocation11 + $0xcf8] sm:$0xf]
        %v3169 = vld [vmem:[#allocation11 + $0xcfc] sm:$0xff]
        %v3170 = vld [vmem:[#allocation11 + $0xd04] sm:$0xf]
        %v3171 = vld [vmem:[#allocation11 + $0xd08] sm:$0xff]
        %v3172 = vld [vmem:[#allocation11 + $0xd10] sm:$0xf]
        %v3173 = vld [vmem:[#allocation11 + $0xd14] sm:$0xff]
        %v3174 = vld [vmem:[#allocation11 + $0xd1c] sm:$0xf]
        %v3175 = vld [vmem:[#allocation11 + $0xd20] sm:$0xff]
        %v3176 = vld [vmem:[#allocation11 + $0xd28] sm:$0xf]
        %v3177 = vld [vmem:[#allocation11 + $0xd2c] sm:$0xff]
        %v3178 = vld [vmem:[#allocation11 + $0xd34] sm:$0xf]
        %v3179 = vld [vmem:[#allocation11 + $0xd38] sm:$0xff]
        %v3180 = vld [vmem:[#allocation11 + $0xd40] sm:$0xf]
        %v3181 = vld [vmem:[#allocation11 + $0xd44] sm:$0xff]
        %v3182 = vld [vmem:[#allocation11 + $0xd4c] sm:$0xf]
        %v3183 = vld [vmem:[#allocation11 + $0xd50] sm:$0xff]
        %v3184 = vld [vmem:[#allocation11 + $0xd58] sm:$0xf]
        %v3185 = vld [vmem:[#allocation11 + $0xd5c] sm:$0xff]
        %v3186 = vld [vmem:[#allocation11 + $0xd64] sm:$0xf]
        %v3187 = vld [vmem:[#allocation11 + $0xd68] sm:$0xff]
        %v3188 = vld [vmem:[#allocation11 + $0xd70] sm:$0xf]
        %v3189 = vld [vmem:[#allocation11 + $0xd74] sm:$0xff]
        %v3190 = vld [vmem:[#allocation11 + $0xd7c] sm:$0xf]
        %v3191 = vld [vmem:[#allocation11 + $0xd80] sm:$0xff]
        %v3192 = vld [vmem:[#allocation11 + $0xd88] sm:$0xf]
        %v3193 = vld [vmem:[#allocation11 + $0xd8c] sm:$0xff]
        %v3194 = vld [vmem:[#allocation11 + $0xd94] sm:$0xf]
        %v3195 = vld [vmem:[#allocation11 + $0xd98] sm:$0xff]
        %v3196 = vld [vmem:[#allocation11 + $0xda0] sm:$0xf]
        %v3197 = vld [vmem:[#allocation11 + $0xda4] sm:$0xff]
        %v3198 = vld [vmem:[#allocation11 + $0xdac] sm:$0xf]
        %v3199 = vld [vmem:[#allocation11 + $0xdb0] sm:$0xff]
        %v3200 = vld [vmem:[#allocation11 + $0xdb8] sm:$0xf]
        %v3201 = vld [vmem:[#allocation11 + $0xdbc] sm:$0xff]
        %v3202 = vld [vmem:[#allocation11 + $0xdc4] sm:$0xf]
        %v3203 = vld [vmem:[#allocation11 + $0xdc8] sm:$0xff]
        %v3204 = vld [vmem:[#allocation11 + $0xdd0] sm:$0xf]
        %v3205 = vld [vmem:[#allocation11 + $0xdd4] sm:$0xff]
        %v3206 = vld [vmem:[#allocation11 + $0xddc] sm:$0xf]
        %v3207 = vld [vmem:[#allocation11 + $0xde0] sm:$0xff]
        %v3208 = vld [vmem:[#allocation11 + $0xde8] sm:$0xf]
        %v3209 = vld [vmem:[#allocation11 + $0xdec] sm:$0xff]
        %v3210 = vld [vmem:[#allocation11 + $0xdf4] sm:$0xf]
        %v3211 = vld [vmem:[#allocation11 + $0xdf8] sm:$0xff]
        %v3212 = vld [vmem:[#allocation11 + $0xe00] sm:$0xf]
        %v3213 = vld [vmem:[#allocation11 + $0xe04] sm:$0xff]
        %v3214 = vld [vmem:[#allocation11 + $0xe0c] sm:$0xf]
        %v3215 = vld [vmem:[#allocation11 + $0xe10] sm:$0xff]
        %v3216 = vld [vmem:[#allocation11 + $0xe18] sm:$0xf]
        %v3217 = vld [vmem:[#allocation11 + $0xe1c] sm:$0xff]
        %v3218 = vld [vmem:[#allocation11 + $0xe24] sm:$0xf]
        %v3219 = vld [vmem:[#allocation11 + $0xe28] sm:$0xff]
        %v3220 = vld [vmem:[#allocation11 + $0xe30] sm:$0xf]
        %v3221 = vld [vmem:[#allocation11 + $0xe34] sm:$0xff]
        %v3222 = vld [vmem:[#allocation11 + $0xe3c] sm:$0xf]
        %v3223 = vld [vmem:[#allocation11 + $0xe40] sm:$0xff]
        %v3224 = vld [vmem:[#allocation11 + $0xe48] sm:$0xf]
        %v3225 = vld [vmem:[#allocation11 + $0xe4c] sm:$0xff]
        %v3226 = vld [vmem:[#allocation11 + $0xe54] sm:$0xf]
        %v3227 = vld [vmem:[#allocation11 + $0xe58] sm:$0xff]
        %v3228 = vld [vmem:[#allocation11 + $0xe60] sm:$0xf]
        %v3229 = vld [vmem:[#allocation11 + $0xe64] sm:$0xff]
        %v3230 = vld [vmem:[#allocation11 + $0xe6c] sm:$0xf]
        %v3231 = vld [vmem:[#allocation11 + $0xe70] sm:$0xff]
        %v3232 = vld [vmem:[#allocation11 + $0xe78] sm:$0xf]
        %v3233 = vld [vmem:[#allocation11 + $0xe7c] sm:$0xff]
        %v3234 = vld [vmem:[#allocation11 + $0xe84] sm:$0xf]
        %v3235 = vld [vmem:[#allocation11 + $0xe88] sm:$0xff]
        %v3236 = vld [vmem:[#allocation11 + $0xe90] sm:$0xf]
        %v3237 = vld [vmem:[#allocation11 + $0xe94] sm:$0xff]
        %v3238 = vld [vmem:[#allocation11 + $0xe9c] sm:$0xf]
        %v3239 = vld [vmem:[#allocation11 + $0xea0] sm:$0xff]
        %v3240 = vld [vmem:[#allocation11 + $0xea8] sm:$0xf]
        %v3241 = vld [vmem:[#allocation11 + $0xeac] sm:$0xff]
        %v3242 = vld [vmem:[#allocation11 + $0xeb4] sm:$0xf]
        %v3243 = vld [vmem:[#allocation11 + $0xeb8] sm:$0xff]
        %v3244 = vld [vmem:[#allocation11 + $0xec0] sm:$0xf]
        %v3245 = vld [vmem:[#allocation11 + $0xec4] sm:$0xff]
        %v3246 = vld [vmem:[#allocation11 + $0xecc] sm:$0xf]
        %v3247 = vld [vmem:[#allocation11 + $0xed0] sm:$0xff]
        %v3248 = vld [vmem:[#allocation11 + $0xed8] sm:$0xf]
        %v3249 = vld [vmem:[#allocation11 + $0xedc] sm:$0xff]
        %v3250 = vld [vmem:[#allocation11 + $0xee4] sm:$0xf]
        %v3251 = vld [vmem:[#allocation11 + $0xee8] sm:$0xff]
        %v3252 = vld [vmem:[#allocation11 + $0xef0] sm:$0xf]
        %v3253 = vld [vmem:[#allocation11 + $0xef4] sm:$0xff]
        %v3254 = vld [vmem:[#allocation11 + $0xefc] sm:$0xf]
        %v3255 = vld [vmem:[#allocation12] sm:$0x7]
        %v3257 = vlaneseq
        %v3258 = vshrl.u32 %v3257, 7
        %v3259 = vsub.s32 0, %v3258
        %v3260 = vrot.slane %v3255, %v3259
        %v3261 = vlaneseq
        %v3262 = vshrl.u32 %v3261, 7
        %v3263 = vsub.s32 1, %v3262
        %v3264 = vrot.slane %v3255, %v3263
        %v3265 = vlaneseq
        %v3266 = vshrl.u32 %v3265, 7
        %v3267 = vsub.s32 2, %v3266
        %v3268 = vrot.slane %v3255, %v3267
        %v3432 = vunpack.c.l.b16 %v2455
        %v3433 = vunpack.c.h.b16 %v2455
        %v3434 = vunpack.c.l.b16 %v2456
        %v3435 = vunpack.c.h.b16 %v2456
        %v3436 = vunpack.c.l.b16 %v2457
        %v3437 = vunpack.c.h.b16 %v2457
        %v3438 = vunpack.c.l.b16 %v2458
        %v3439 = vunpack.c.h.b16 %v2458
        %v3440 = vunpack.c.l.b16 %v2459
        %v3441 = vunpack.c.h.b16 %v2459
        %v3442 = vunpack.c.l.b16 %v2460
        %v3443 = vunpack.c.h.b16 %v2460
        %v3444 = vunpack.c.l.b16 %v2461
        %v3445 = vunpack.c.h.b16 %v2461
        %v3446 = vunpack.c.l.b16 %v2462
        %v3447 = vunpack.c.h.b16 %v2462
        %v3448 = vunpack.c.l.b16 %v2463
        %v3449 = vunpack.c.h.b16 %v2463
        %v3450 = vunpack.c.l.b16 %v2464
        %v3451 = vunpack.c.h.b16 %v2464
        %v3452 = vunpack.c.l.b16 %v2465
        %v3453 = vunpack.c.h.b16 %v2465
        %v3454 = vunpack.c.l.b16 %v2466
        %v3455 = vunpack.c.h.b16 %v2466
        %v3456 = vunpack.c.l.b16 %v2467
        %v3457 = vunpack.c.h.b16 %v2467
        %v3458 = vunpack.c.l.b16 %v2468
        %v3459 = vunpack.c.h.b16 %v2468
        %v3460 = vunpack.c.l.b16 %v2469
        %v3461 = vunpack.c.h.b16 %v2469
        %v3462 = vunpack.c.l.b16 %v2470
        %v3463 = vunpack.c.h.b16 %v2470
        %v3464 = vunpack.c.l.b16 %v2471
        %v3465 = vunpack.c.h.b16 %v2471
        %v3466 = vunpack.c.l.b16 %v2472
        %v3467 = vunpack.c.h.b16 %v2472
        %v3468 = vunpack.c.l.b16 %v2473
        %v3469 = vunpack.c.h.b16 %v2473
        %v3470 = vunpack.c.l.b16 %v2474
        %v3471 = vunpack.c.h.b16 %v2474
        %v3472 = vunpack.c.l.b16 %v2475
        %v3473 = vunpack.c.h.b16 %v2475
        %v3474 = vunpack.c.l.b16 %v2476
        %v3475 = vunpack.c.h.b16 %v2476
        %v3476 = vunpack.c.l.b16 %v2477
        %v3477 = vunpack.c.h.b16 %v2477
        %v3478 = vunpack.c.l.b16 %v2478
        %v3479 = vunpack.c.h.b16 %v2478
        %v3480 = vunpack.c.l.b16 %v2479
        %v3481 = vunpack.c.h.b16 %v2479
        %v3482 = vunpack.c.l.b16 %v2480
        %v3483 = vunpack.c.h.b16 %v2480
        %v3484 = vunpack.c.l.b16 %v2481
        %v3485 = vunpack.c.h.b16 %v2481
        %v3486 = vunpack.c.l.b16 %v2482
        %v3487 = vunpack.c.h.b16 %v2482
        %v3488 = vunpack.c.l.b16 %v2483
        %v3489 = vunpack.c.h.b16 %v2483
        %v3490 = vunpack.c.l.b16 %v2484
        %v3491 = vunpack.c.h.b16 %v2484
        %v3492 = vunpack.c.l.b16 %v2485
        %v3493 = vunpack.c.h.b16 %v2485
        %v3494 = vunpack.c.l.b16 %v2486
        %v3495 = vunpack.c.h.b16 %v2486
        %v3496 = vunpack.c.l.b16 %v2487
        %v3497 = vunpack.c.h.b16 %v2487
        %v3498 = vunpack.c.l.b16 %v2488
        %v3499 = vunpack.c.h.b16 %v2488
        %v3500 = vunpack.c.l.b16 %v2489
        %v3501 = vunpack.c.h.b16 %v2489
        %v3502 = vunpack.c.l.b16 %v2490
        %v3503 = vunpack.c.h.b16 %v2490
        %v3504 = vunpack.c.l.b16 %v2491
        %v3505 = vunpack.c.h.b16 %v2491
        %v3506 = vunpack.c.l.b16 %v2492
        %v3507 = vunpack.c.h.b16 %v2492
        %v3508 = vunpack.c.l.b16 %v2493
        %v3509 = vunpack.c.h.b16 %v2493
        %v3510 = vunpack.c.l.b16 %v2494
        %v3511 = vunpack.c.h.b16 %v2494
        %v3512 = vunpack.c.l.b16 %v2495
        %v3513 = vunpack.c.h.b16 %v2495
        %v3514 = vunpack.c.l.b16 %v2496
        %v3515 = vunpack.c.h.b16 %v2496
        %v3516 = vunpack.c.l.b16 %v2497
        %v3517 = vunpack.c.h.b16 %v2497
        %v3518 = vunpack.c.l.b16 %v2498
        %v3519 = vunpack.c.h.b16 %v2498
        %v3520 = vunpack.c.l.b16 %v2499
        %v3521 = vunpack.c.h.b16 %v2499
        %v3522 = vunpack.c.l.b16 %v2500
        %v3523 = vunpack.c.h.b16 %v2500
        %v3524 = vunpack.c.l.b16 %v2501
        %v3525 = vunpack.c.h.b16 %v2501
        %v3526 = vunpack.c.l.b16 %v2502
        %v3527 = vunpack.c.h.b16 %v2502
        %v3528 = vunpack.c.l.b16 %v2503
        %v3529 = vunpack.c.h.b16 %v2503
        %v3530 = vunpack.c.l.b16 %v2504
        %v3531 = vunpack.c.h.b16 %v2504
        %v3532 = vunpack.c.l.b16 %v2505
        %v3533 = vunpack.c.h.b16 %v2505
        %v3534 = vunpack.c.l.b16 %v2506
        %v3535 = vunpack.c.h.b16 %v2506
        %v3536 = vunpack.c.l.b16 %v2507
        %v3537 = vunpack.c.h.b16 %v2507
        %v3538 = vunpack.c.l.b16 %v2508
        %v3539 = vunpack.c.h.b16 %v2508
        %v3540 = vunpack.c.l.b16 %v2509
        %v3541 = vunpack.c.h.b16 %v2509
        %v3542 = vunpack.c.l.b16 %v2510
        %v3543 = vunpack.c.h.b16 %v2510
        %v3544 = vunpack.c.l.b16 %v2511
        %v3545 = vunpack.c.h.b16 %v2511
        %v3546 = vunpack.c.l.b16 %v2512
        %v3547 = vunpack.c.h.b16 %v2512
        %v3548 = vunpack.c.l.b16 %v2513
        %v3549 = vunpack.c.h.b16 %v2513
        %v3550 = vunpack.c.l.b16 %v2514
        %v3551 = vunpack.c.h.b16 %v2514
        %v3552 = vunpack.c.l.b16 %v2515
        %v3553 = vunpack.c.h.b16 %v2515
        %v3554 = vunpack.c.l.b16 %v2516
        %v3555 = vunpack.c.h.b16 %v2516
        %v3556 = vunpack.c.l.b16 %v2517
        %v3557 = vunpack.c.h.b16 %v2517
        %v3558 = vunpack.c.l.b16 %v2518
        %v3559 = vunpack.c.h.b16 %v2518
        %v3560 = vunpack.c.l.b16 %v2519
        %v3561 = vunpack.c.h.b16 %v2519
        %v3562 = vunpack.c.l.b16 %v2520
        %v3563 = vunpack.c.h.b16 %v2520
        %v3564 = vunpack.c.l.b16 %v2521
        %v3565 = vunpack.c.h.b16 %v2521
        %v3566 = vunpack.c.l.b16 %v2522
        %v3567 = vunpack.c.h.b16 %v2522
        %v3568 = vunpack.c.l.b16 %v2523
        %v3569 = vunpack.c.h.b16 %v2523
        %v3570 = vunpack.c.l.b16 %v2524
        %v3571 = vunpack.c.h.b16 %v2524
        %v3572 = vunpack.c.l.b16 %v2525
        %v3573 = vunpack.c.h.b16 %v2525
        %v3574 = vunpack.c.l.b16 %v2526
        %v3575 = vunpack.c.h.b16 %v2526
        %v3576 = vunpack.c.l.b16 %v2527
        %v3577 = vunpack.c.h.b16 %v2527
        %v3578 = vunpack.c.l.b16 %v2528
        %v3579 = vunpack.c.h.b16 %v2528
        %v3580 = vunpack.c.l.b16 %v2529
        %v3581 = vunpack.c.h.b16 %v2529
        %v3582 = vunpack.c.l.b16 %v2530
        %v3583 = vunpack.c.h.b16 %v2530
        %v3584 = vunpack.c.l.b16 %v2531
        %v3585 = vunpack.c.h.b16 %v2531
        %v3586 = vunpack.c.l.b16 %v2532
        %v3587 = vunpack.c.h.b16 %v2532
        %v3588 = vunpack.c.l.b16 %v2533
        %v3589 = vunpack.c.h.b16 %v2533
        %v3590 = vunpack.c.l.b16 %v2534
        %v3591 = vunpack.c.h.b16 %v2534
        %v3592 = vunpack.c.l.b16 %v2535
        %v3593 = vunpack.c.h.b16 %v2535
        %v3594 = vunpack.c.l.b16 %v2536
        %v3595 = vunpack.c.h.b16 %v2536
        %v3596 = vunpack.c.l.b16 %v2537
        %v3597 = vunpack.c.h.b16 %v2537
        %v3598 = vunpack.c.l.b16 %v2538
        %v3599 = vunpack.c.h.b16 %v2538
        %v3600 = vunpack.c.l.b16 %v2539
        %v3601 = vunpack.c.h.b16 %v2539
        %v3602 = vunpack.c.l.b16 %v2540
        %v3603 = vunpack.c.h.b16 %v2540
        %v3604 = vunpack.c.l.b16 %v2541
        %v3605 = vunpack.c.h.b16 %v2541
        %v3606 = vunpack.c.l.b16 %v2542
        %v3607 = vunpack.c.h.b16 %v2542
        %v3608 = vunpack.c.l.b16 %v2543
        %v3609 = vunpack.c.h.b16 %v2543
        %v3610 = vunpack.c.l.b16 %v2544
        %v3611 = vunpack.c.h.b16 %v2544
        %v3612 = vunpack.c.l.b16 %v2545
        %v3613 = vunpack.c.h.b16 %v2545
        %v3614 = vunpack.c.l.b16 %v2546
        %v3615 = vunpack.c.h.b16 %v2546
        %v3616 = vunpack.c.l.b16 %v2547
        %v3617 = vunpack.c.h.b16 %v2547
        %v3618 = vunpack.c.l.b16 %v2548
        %v3619 = vunpack.c.h.b16 %v2548
        %v3620 = vunpack.c.l.b16 %v2549
        %v3621 = vunpack.c.h.b16 %v2549
        %v3622 = vunpack.c.l.b16 %v2550
        %v3623 = vunpack.c.h.b16 %v2550
        %v3624 = vunpack.c.l.b16 %v2551
        %v3625 = vunpack.c.h.b16 %v2551
        %v3626 = vunpack.c.l.b16 %v2552
        %v3627 = vunpack.c.h.b16 %v2552
        %v3628 = vunpack.c.l.b16 %v2553
        %v3629 = vunpack.c.h.b16 %v2553
        %v3630 = vunpack.c.l.b16 %v2554
        %v3631 = vunpack.c.h.b16 %v2554
        %v3632 = vunpack.c.l.b16 %v2555
        %v3633 = vunpack.c.h.b16 %v2555
        %v3634 = vunpack.c.l.b16 %v2556
        %v3635 = vunpack.c.h.b16 %v2556
        %v3636 = vunpack.c.l.b16 %v2557
        %v3637 = vunpack.c.h.b16 %v2557
        %v3638 = vunpack.c.l.b16 %v2558
        %v3639 = vunpack.c.h.b16 %v2558
        %v3640 = vunpack.c.l.b16 %v2559
        %v3641 = vunpack.c.h.b16 %v2559
        %v3642 = vunpack.c.l.b16 %v2560
        %v3643 = vunpack.c.h.b16 %v2560
        %v3644 = vunpack.c.l.b16 %v2561
        %v3645 = vunpack.c.h.b16 %v2561
        %v3646 = vunpack.c.l.b16 %v2562
        %v3647 = vunpack.c.h.b16 %v2562
        %v3648 = vunpack.c.l.b16 %v2563
        %v3649 = vunpack.c.h.b16 %v2563
        %v3650 = vunpack.c.l.b16 %v2564
        %v3651 = vunpack.c.h.b16 %v2564
        %v3652 = vunpack.c.l.b16 %v2565
        %v3653 = vunpack.c.h.b16 %v2565
        %v3654 = vunpack.c.l.b16 %v2566
        %v3655 = vunpack.c.h.b16 %v2566
        %v3656 = vunpack.c.l.b16 %v2567
        %v3657 = vunpack.c.h.b16 %v2567
        %v3658 = vunpack.c.l.b16 %v2568
        %v3659 = vunpack.c.h.b16 %v2568
        %v3660 = vunpack.c.l.b16 %v2569
        %v3661 = vunpack.c.h.b16 %v2569
        %v3662 = vunpack.c.l.b16 %v2570
        %v3663 = vunpack.c.h.b16 %v2570
        %v3664 = vunpack.c.l.b16 %v2571
        %v3665 = vunpack.c.h.b16 %v2571
        %v3666 = vunpack.c.l.b16 %v2572
        %v3667 = vunpack.c.h.b16 %v2572
        %v3668 = vunpack.c.l.b16 %v2573
        %v3669 = vunpack.c.h.b16 %v2573
        %v3670 = vunpack.c.l.b16 %v2574
        %v3671 = vunpack.c.h.b16 %v2574
        %v3672 = vunpack.c.l.b16 %v2575
        %v3673 = vunpack.c.h.b16 %v2575
        %v3674 = vunpack.c.l.b16 %v2576
        %v3675 = vunpack.c.h.b16 %v2576
        %v3676 = vunpack.c.l.b16 %v2577
        %v3677 = vunpack.c.h.b16 %v2577
        %v3678 = vunpack.c.l.b16 %v2578
        %v3679 = vunpack.c.h.b16 %v2578
        %v3680 = vunpack.c.l.b16 %v2579
        %v3681 = vunpack.c.h.b16 %v2579
        %v3682 = vunpack.c.l.b16 %v2580
        %v3683 = vunpack.c.h.b16 %v2580
        %v3684 = vunpack.c.l.b16 %v2581
        %v3685 = vunpack.c.h.b16 %v2581
        %v3686 = vunpack.c.l.b16 %v2582
        %v3687 = vunpack.c.h.b16 %v2582
        %v3688 = vunpack.c.l.b16 %v2583
        %v3689 = vunpack.c.h.b16 %v2583
        %v3690 = vunpack.c.l.b16 %v2584
        %v3691 = vunpack.c.h.b16 %v2584
        %v3692 = vunpack.c.l.b16 %v2585
        %v3693 = vunpack.c.h.b16 %v2585
        %v3694 = vunpack.c.l.b16 %v2586
        %v3695 = vunpack.c.h.b16 %v2586
        %v3696 = vunpack.c.l.b16 %v2587
        %v3697 = vunpack.c.h.b16 %v2587
        %v3698 = vunpack.c.l.b16 %v2588
        %v3699 = vunpack.c.h.b16 %v2588
        %v3700 = vunpack.c.l.b16 %v2589
        %v3701 = vunpack.c.h.b16 %v2589
        %v3702 = vunpack.c.l.b16 %v2590
        %v3703 = vunpack.c.h.b16 %v2590
        %v3704 = vunpack.c.l.b16 %v2591
        %v3705 = vunpack.c.h.b16 %v2591
        %v3706 = vunpack.c.l.b16 %v2592
        %v3707 = vunpack.c.h.b16 %v2592
        %v3708 = vunpack.c.l.b16 %v2593
        %v3709 = vunpack.c.h.b16 %v2593
        %v3710 = vunpack.c.l.b16 %v2594
        %v3711 = vunpack.c.h.b16 %v2594
        %v3712 = vunpack.c.l.b16 %v2595
        %v3713 = vunpack.c.h.b16 %v2595
        %v3714 = vunpack.c.l.b16 %v2596
        %v3715 = vunpack.c.h.b16 %v2596
        %v3716 = vunpack.c.l.b16 %v2597
        %v3717 = vunpack.c.h.b16 %v2597
        %v3718 = vunpack.c.l.b16 %v2598
        %v3719 = vunpack.c.h.b16 %v2598
        %v3720 = vunpack.c.l.b16 %v2599
        %v3721 = vunpack.c.h.b16 %v2599
        %v3722 = vunpack.c.l.b16 %v2600
        %v3723 = vunpack.c.h.b16 %v2600
        %v3724 = vunpack.c.l.b16 %v2601
        %v3725 = vunpack.c.h.b16 %v2601
        %v3726 = vunpack.c.l.b16 %v2602
        %v3727 = vunpack.c.h.b16 %v2602
        %v3728 = vunpack.c.l.b16 %v2603
        %v3729 = vunpack.c.h.b16 %v2603
        %v3730 = vunpack.c.l.b16 %v2604
        %v3731 = vunpack.c.h.b16 %v2604
        %v3732 = vunpack.c.l.b16 %v2605
        %v3733 = vunpack.c.h.b16 %v2605
        %v3734 = vunpack.c.l.b16 %v2606
        %v3735 = vunpack.c.h.b16 %v2606
        %v3736 = vunpack.c.l.b16 %v2607
        %v3737 = vunpack.c.h.b16 %v2607
        %v3738 = vunpack.c.l.b16 %v2608
        %v3739 = vunpack.c.h.b16 %v2608
        %v3740 = vunpack.c.l.b16 %v2609
        %v3741 = vunpack.c.h.b16 %v2609
        %v3742 = vunpack.c.l.b16 %v2610
        %v3743 = vunpack.c.h.b16 %v2610
        %v3744 = vunpack.c.l.b16 %v2611
        %v3745 = vunpack.c.h.b16 %v2611
        %v3746 = vunpack.c.l.b16 %v2612
        %v3747 = vunpack.c.h.b16 %v2612
        %v3748 = vunpack.c.l.b16 %v2613
        %v3749 = vunpack.c.h.b16 %v2613
        %v3750 = vunpack.c.l.b16 %v2614
        %v3751 = vunpack.c.h.b16 %v2614
        %v3752 = vpack.c.b16 %v3452, %v3432
        %v3753 = vpack.c.b16 %v3453, %v3433
        %v3754 = vpack.c.b16 %v3454, %v3434
        %v3755 = vpack.c.b16 %v3455, %v3435
        %v3756 = vpack.c.b16 %v3456, %v3436
        %v3757 = vpack.c.b16 %v3457, %v3437
        %v3758 = vpack.c.b16 %v3458, %v3438
        %v3759 = vpack.c.b16 %v3459, %v3439
        %v3760 = vpack.c.b16 %v3460, %v3440
        %v3761 = vpack.c.b16 %v3461, %v3441
        %v3762 = vpack.c.b16 %v3462, %v3442
        %v3763 = vpack.c.b16 %v3463, %v3443
        %v3764 = vpack.c.b16 %v3464, %v3444
        %v3765 = vpack.c.b16 %v3465, %v3445
        %v3766 = vpack.c.b16 %v3466, %v3446
        %v3767 = vpack.c.b16 %v3467, %v3447
        %v3768 = vpack.c.b16 %v3468, %v3448
        %v3769 = vpack.c.b16 %v3469, %v3449
        %v3770 = vpack.c.b16 %v3470, %v3450
        %v3771 = vpack.c.b16 %v3471, %v3451
        %v3772 = vpack.c.b16 %v3492, %v3472
        %v3773 = vpack.c.b16 %v3493, %v3473
        %v3774 = vpack.c.b16 %v3494, %v3474
        %v3775 = vpack.c.b16 %v3495, %v3475
        %v3776 = vpack.c.b16 %v3496, %v3476
        %v3777 = vpack.c.b16 %v3497, %v3477
        %v3778 = vpack.c.b16 %v3498, %v3478
        %v3779 = vpack.c.b16 %v3499, %v3479
        %v3780 = vpack.c.b16 %v3500, %v3480
        %v3781 = vpack.c.b16 %v3501, %v3481
        %v3782 = vpack.c.b16 %v3502, %v3482
        %v3783 = vpack.c.b16 %v3503, %v3483
        %v3784 = vpack.c.b16 %v3504, %v3484
        %v3785 = vpack.c.b16 %v3505, %v3485
        %v3786 = vpack.c.b16 %v3506, %v3486
        %v3787 = vpack.c.b16 %v3507, %v3487
        %v3788 = vpack.c.b16 %v3508, %v3488
        %v3789 = vpack.c.b16 %v3509, %v3489
        %v3790 = vpack.c.b16 %v3510, %v3490
        %v3791 = vpack.c.b16 %v3511, %v3491
        %v3792 = vpack.c.b16 %v3532, %v3512
        %v3793 = vpack.c.b16 %v3533, %v3513
        %v3794 = vpack.c.b16 %v3534, %v3514
        %v3795 = vpack.c.b16 %v3535, %v3515
        %v3796 = vpack.c.b16 %v3536, %v3516
        %v3797 = vpack.c.b16 %v3537, %v3517
        %v3798 = vpack.c.b16 %v3538, %v3518
        %v3799 = vpack.c.b16 %v3539, %v3519
        %v3800 = vpack.c.b16 %v3540, %v3520
        %v3801 = vpack.c.b16 %v3541, %v3521
        %v3802 = vpack.c.b16 %v3542, %v3522
        %v3803 = vpack.c.b16 %v3543, %v3523
        %v3804 = vpack.c.b16 %v3544, %v3524
        %v3805 = vpack.c.b16 %v3545, %v3525
        %v3806 = vpack.c.b16 %v3546, %v3526
        %v3807 = vpack.c.b16 %v3547, %v3527
        %v3808 = vpack.c.b16 %v3548, %v3528
        %v3809 = vpack.c.b16 %v3549, %v3529
        %v3810 = vpack.c.b16 %v3550, %v3530
        %v3811 = vpack.c.b16 %v3551, %v3531
        %v3812 = vpack.c.b16 %v3572, %v3552
        %v3813 = vpack.c.b16 %v3573, %v3553
        %v3814 = vpack.c.b16 %v3574, %v3554
        %v3815 = vpack.c.b16 %v3575, %v3555
        %v3816 = vpack.c.b16 %v3576, %v3556
        %v3817 = vpack.c.b16 %v3577, %v3557
        %v3818 = vpack.c.b16 %v3578, %v3558
        %v3819 = vpack.c.b16 %v3579, %v3559
        %v3820 = vpack.c.b16 %v3580, %v3560
        %v3821 = vpack.c.b16 %v3581, %v3561
        %v3822 = vpack.c.b16 %v3582, %v3562
        %v3823 = vpack.c.b16 %v3583, %v3563
        %v3824 = vpack.c.b16 %v3584, %v3564
        %v3825 = vpack.c.b16 %v3585, %v3565
        %v3826 = vpack.c.b16 %v3586, %v3566
        %v3827 = vpack.c.b16 %v3587, %v3567
        %v3828 = vpack.c.b16 %v3588, %v3568
        %v3829 = vpack.c.b16 %v3589, %v3569
        %v3830 = vpack.c.b16 %v3590, %v3570
        %v3831 = vpack.c.b16 %v3591, %v3571
        %v3832 = vpack.c.b16 %v3612, %v3592
        %v3833 = vpack.c.b16 %v3613, %v3593
        %v3834 = vpack.c.b16 %v3614, %v3594
        %v3835 = vpack.c.b16 %v3615, %v3595
        %v3836 = vpack.c.b16 %v3616, %v3596
        %v3837 = vpack.c.b16 %v3617, %v3597
        %v3838 = vpack.c.b16 %v3618, %v3598
        %v3839 = vpack.c.b16 %v3619, %v3599
        %v3840 = vpack.c.b16 %v3620, %v3600
        %v3841 = vpack.c.b16 %v3621, %v3601
        %v3842 = vpack.c.b16 %v3622, %v3602
        %v3843 = vpack.c.b16 %v3623, %v3603
        %v3844 = vpack.c.b16 %v3624, %v3604
        %v3845 = vpack.c.b16 %v3625, %v3605
        %v3846 = vpack.c.b16 %v3626, %v3606
        %v3847 = vpack.c.b16 %v3627, %v3607
        %v3848 = vpack.c.b16 %v3628, %v3608
        %v3849 = vpack.c.b16 %v3629, %v3609
        %v3850 = vpack.c.b16 %v3630, %v3610
        %v3851 = vpack.c.b16 %v3631, %v3611
        %v3852 = vpack.c.b16 %v3652, %v3632
        %v3853 = vpack.c.b16 %v3653, %v3633
        %v3854 = vpack.c.b16 %v3654, %v3634
        %v3855 = vpack.c.b16 %v3655, %v3635
        %v3856 = vpack.c.b16 %v3656, %v3636
        %v3857 = vpack.c.b16 %v3657, %v3637
        %v3858 = vpack.c.b16 %v3658, %v3638
        %v3859 = vpack.c.b16 %v3659, %v3639
        %v3860 = vpack.c.b16 %v3660, %v3640
        %v3861 = vpack.c.b16 %v3661, %v3641
        %v3862 = vpack.c.b16 %v3662, %v3642
        %v3863 = vpack.c.b16 %v3663, %v3643
        %v3864 = vpack.c.b16 %v3664, %v3644
        %v3865 = vpack.c.b16 %v3665, %v3645
        %v3866 = vpack.c.b16 %v3666, %v3646
        %v3867 = vpack.c.b16 %v3667, %v3647
        %v3868 = vpack.c.b16 %v3668, %v3648
        %v3869 = vpack.c.b16 %v3669, %v3649
        %v3870 = vpack.c.b16 %v3670, %v3650
        %v3871 = vpack.c.b16 %v3671, %v3651
        %v3872 = vpack.c.b16 %v3692, %v3672
        %v3873 = vpack.c.b16 %v3693, %v3673
        %v3874 = vpack.c.b16 %v3694, %v3674
        %v3875 = vpack.c.b16 %v3695, %v3675
        %v3876 = vpack.c.b16 %v3696, %v3676
        %v3877 = vpack.c.b16 %v3697, %v3677
        %v3878 = vpack.c.b16 %v3698, %v3678
        %v3879 = vpack.c.b16 %v3699, %v3679
        %v3880 = vpack.c.b16 %v3700, %v3680
        %v3881 = vpack.c.b16 %v3701, %v3681
        %v3882 = vpack.c.b16 %v3702, %v3682
        %v3883 = vpack.c.b16 %v3703, %v3683
        %v3884 = vpack.c.b16 %v3704, %v3684
        %v3885 = vpack.c.b16 %v3705, %v3685
        %v3886 = vpack.c.b16 %v3706, %v3686
        %v3887 = vpack.c.b16 %v3707, %v3687
        %v3888 = vpack.c.b16 %v3708, %v3688
        %v3889 = vpack.c.b16 %v3709, %v3689
        %v3890 = vpack.c.b16 %v3710, %v3690
        %v3891 = vpack.c.b16 %v3711, %v3691
        %v3892 = vpack.c.b16 %v3732, %v3712
        %v3893 = vpack.c.b16 %v3733, %v3713
        %v3894 = vpack.c.b16 %v3734, %v3714
        %v3895 = vpack.c.b16 %v3735, %v3715
        %v3896 = vpack.c.b16 %v3736, %v3716
        %v3897 = vpack.c.b16 %v3737, %v3717
        %v3898 = vpack.c.b16 %v3738, %v3718
        %v3899 = vpack.c.b16 %v3739, %v3719
        %v3900 = vpack.c.b16 %v3740, %v3720
        %v3901 = vpack.c.b16 %v3741, %v3721
        %v3902 = vpack.c.b16 %v3742, %v3722
        %v3903 = vpack.c.b16 %v3743, %v3723
        %v3904 = vpack.c.b16 %v3744, %v3724
        %v3905 = vpack.c.b16 %v3745, %v3725
        %v3906 = vpack.c.b16 %v3746, %v3726
        %v3907 = vpack.c.b16 %v3747, %v3727
        %v3908 = vpack.c.b16 %v3748, %v3728
        %v3909 = vpack.c.b16 %v3749, %v3729
        %v3910 = vpack.c.b16 %v3750, %v3730
        %v3911 = vpack.c.b16 %v3751, %v3731
        %v4712 = vunpack.c.l.b16 %v2615
        %v4713 = vunpack.c.h.b16 %v2615
        %v4714 = vunpack.c.l.b16 %v2616
        %v4715 = vunpack.c.l.b16 %v2617
        %v4716 = vunpack.c.h.b16 %v2617
        %v4717 = vunpack.c.l.b16 %v2618
        %v4718 = vunpack.c.l.b16 %v2619
        %v4719 = vunpack.c.h.b16 %v2619
        %v4720 = vunpack.c.l.b16 %v2620
        %v4721 = vunpack.c.l.b16 %v2621
        %v4722 = vunpack.c.h.b16 %v2621
        %v4723 = vunpack.c.l.b16 %v2622
        %v4724 = vunpack.c.l.b16 %v2623
        %v4725 = vunpack.c.h.b16 %v2623
        %v4726 = vunpack.c.l.b16 %v2624
        %v4727 = vunpack.c.l.b16 %v2625
        %v4728 = vunpack.c.h.b16 %v2625
        %v4729 = vunpack.c.l.b16 %v2626
        %v4730 = vunpack.c.l.b16 %v2627
        %v4731 = vunpack.c.h.b16 %v2627
        %v4732 = vunpack.c.l.b16 %v2628
        %v4733 = vunpack.c.l.b16 %v2629
        %v4734 = vunpack.c.h.b16 %v2629
        %v4735 = vunpack.c.l.b16 %v2630
        %v4736 = vunpack.c.l.b16 %v2631
        %v4737 = vunpack.c.h.b16 %v2631
        %v4738 = vunpack.c.l.b16 %v2632
        %v4739 = vunpack.c.l.b16 %v2633
        %v4740 = vunpack.c.h.b16 %v2633
        %v4741 = vunpack.c.l.b16 %v2634
        %v4742 = vunpack.c.l.b16 %v2635
        %v4743 = vunpack.c.h.b16 %v2635
        %v4744 = vunpack.c.l.b16 %v2636
        %v4745 = vunpack.c.l.b16 %v2637
        %v4746 = vunpack.c.h.b16 %v2637
        %v4747 = vunpack.c.l.b16 %v2638
        %v4748 = vunpack.c.l.b16 %v2639
        %v4749 = vunpack.c.h.b16 %v2639
        %v4750 = vunpack.c.l.b16 %v2640
        %v4751 = vunpack.c.l.b16 %v2641
        %v4752 = vunpack.c.h.b16 %v2641
        %v4753 = vunpack.c.l.b16 %v2642
        %v4754 = vunpack.c.l.b16 %v2643
        %v4755 = vunpack.c.h.b16 %v2643
        %v4756 = vunpack.c.l.b16 %v2644
        %v4757 = vunpack.c.l.b16 %v2645
        %v4758 = vunpack.c.h.b16 %v2645
        %v4759 = vunpack.c.l.b16 %v2646
        %v4760 = vunpack.c.l.b16 %v2647
        %v4761 = vunpack.c.h.b16 %v2647
        %v4762 = vunpack.c.l.b16 %v2648
        %v4763 = vunpack.c.l.b16 %v2649
        %v4764 = vunpack.c.h.b16 %v2649
        %v4765 = vunpack.c.l.b16 %v2650
        %v4766 = vunpack.c.l.b16 %v2651
        %v4767 = vunpack.c.h.b16 %v2651
        %v4768 = vunpack.c.l.b16 %v2652
        %v4769 = vunpack.c.l.b16 %v2653
        %v4770 = vunpack.c.h.b16 %v2653
        %v4771 = vunpack.c.l.b16 %v2654
        %v4772 = vunpack.c.l.b16 %v2655
        %v4773 = vunpack.c.h.b16 %v2655
        %v4774 = vunpack.c.l.b16 %v2656
        %v4775 = vunpack.c.l.b16 %v2657
        %v4776 = vunpack.c.h.b16 %v2657
        %v4777 = vunpack.c.l.b16 %v2658
        %v4778 = vunpack.c.l.b16 %v2659
        %v4779 = vunpack.c.h.b16 %v2659
        %v4780 = vunpack.c.l.b16 %v2660
        %v4781 = vunpack.c.l.b16 %v2661
        %v4782 = vunpack.c.h.b16 %v2661
        %v4783 = vunpack.c.l.b16 %v2662
        %v4784 = vunpack.c.l.b16 %v2663
        %v4785 = vunpack.c.h.b16 %v2663
        %v4786 = vunpack.c.l.b16 %v2664
        %v4787 = vunpack.c.l.b16 %v2665
        %v4788 = vunpack.c.h.b16 %v2665
        %v4789 = vunpack.c.l.b16 %v2666
        %v4790 = vunpack.c.l.b16 %v2667
        %v4791 = vunpack.c.h.b16 %v2667
        %v4792 = vunpack.c.l.b16 %v2668
        %v4793 = vunpack.c.l.b16 %v2669
        %v4794 = vunpack.c.h.b16 %v2669
        %v4795 = vunpack.c.l.b16 %v2670
        %v4796 = vunpack.c.l.b16 %v2671
        %v4797 = vunpack.c.h.b16 %v2671
        %v4798 = vunpack.c.l.b16 %v2672
        %v4799 = vunpack.c.l.b16 %v2673
        %v4800 = vunpack.c.h.b16 %v2673
        %v4801 = vunpack.c.l.b16 %v2674
        %v4802 = vunpack.c.l.b16 %v2675
        %v4803 = vunpack.c.h.b16 %v2675
        %v4804 = vunpack.c.l.b16 %v2676
        %v4805 = vunpack.c.l.b16 %v2677
        %v4806 = vunpack.c.h.b16 %v2677
        %v4807 = vunpack.c.l.b16 %v2678
        %v4808 = vunpack.c.l.b16 %v2679
        %v4809 = vunpack.c.h.b16 %v2679
        %v4810 = vunpack.c.l.b16 %v2680
        %v4811 = vunpack.c.l.b16 %v2681
        %v4812 = vunpack.c.h.b16 %v2681
        %v4813 = vunpack.c.l.b16 %v2682
        %v4814 = vunpack.c.l.b16 %v2683
        %v4815 = vunpack.c.h.b16 %v2683
        %v4816 = vunpack.c.l.b16 %v2684
        %v4817 = vunpack.c.l.b16 %v2685
        %v4818 = vunpack.c.h.b16 %v2685
        %v4819 = vunpack.c.l.b16 %v2686
        %v4820 = vunpack.c.l.b16 %v2687
        %v4821 = vunpack.c.h.b16 %v2687
        %v4822 = vunpack.c.l.b16 %v2688
        %v4823 = vunpack.c.l.b16 %v2689
        %v4824 = vunpack.c.h.b16 %v2689
        %v4825 = vunpack.c.l.b16 %v2690
        %v4826 = vunpack.c.l.b16 %v2691
        %v4827 = vunpack.c.h.b16 %v2691
        %v4828 = vunpack.c.l.b16 %v2692
        %v4829 = vunpack.c.l.b16 %v2693
        %v4830 = vunpack.c.h.b16 %v2693
        %v4831 = vunpack.c.l.b16 %v2694
        %v4832 = vunpack.c.l.b16 %v2695
        %v4833 = vunpack.c.h.b16 %v2695
        %v4834 = vunpack.c.l.b16 %v2696
        %v4835 = vunpack.c.l.b16 %v2697
        %v4836 = vunpack.c.h.b16 %v2697
        %v4837 = vunpack.c.l.b16 %v2698
        %v4838 = vunpack.c.l.b16 %v2699
        %v4839 = vunpack.c.h.b16 %v2699
        %v4840 = vunpack.c.l.b16 %v2700
        %v4841 = vunpack.c.l.b16 %v2701
        %v4842 = vunpack.c.h.b16 %v2701
        %v4843 = vunpack.c.l.b16 %v2702
        %v4844 = vunpack.c.l.b16 %v2703
        %v4845 = vunpack.c.h.b16 %v2703
        %v4846 = vunpack.c.l.b16 %v2704
        %v4847 = vunpack.c.l.b16 %v2705
        %v4848 = vunpack.c.h.b16 %v2705
        %v4849 = vunpack.c.l.b16 %v2706
        %v4850 = vunpack.c.l.b16 %v2707
        %v4851 = vunpack.c.h.b16 %v2707
        %v4852 = vunpack.c.l.b16 %v2708
        %v4853 = vunpack.c.l.b16 %v2709
        %v4854 = vunpack.c.h.b16 %v2709
        %v4855 = vunpack.c.l.b16 %v2710
        %v4856 = vunpack.c.l.b16 %v2711
        %v4857 = vunpack.c.h.b16 %v2711
        %v4858 = vunpack.c.l.b16 %v2712
        %v4859 = vunpack.c.l.b16 %v2713
        %v4860 = vunpack.c.h.b16 %v2713
        %v4861 = vunpack.c.l.b16 %v2714
        %v4862 = vunpack.c.l.b16 %v2715
        %v4863 = vunpack.c.h.b16 %v2715
        %v4864 = vunpack.c.l.b16 %v2716
        %v4865 = vunpack.c.l.b16 %v2717
        %v4866 = vunpack.c.h.b16 %v2717
        %v4867 = vunpack.c.l.b16 %v2718
        %v4868 = vunpack.c.l.b16 %v2719
        %v4869 = vunpack.c.h.b16 %v2719
        %v4870 = vunpack.c.l.b16 %v2720
        %v4871 = vunpack.c.l.b16 %v2721
        %v4872 = vunpack.c.h.b16 %v2721
        %v4873 = vunpack.c.l.b16 %v2722
        %v4874 = vunpack.c.l.b16 %v2723
        %v4875 = vunpack.c.h.b16 %v2723
        %v4876 = vunpack.c.l.b16 %v2724
        %v4877 = vunpack.c.l.b16 %v2725
        %v4878 = vunpack.c.h.b16 %v2725
        %v4879 = vunpack.c.l.b16 %v2726
        %v4880 = vunpack.c.l.b16 %v2727
        %v4881 = vunpack.c.h.b16 %v2727
        %v4882 = vunpack.c.l.b16 %v2728
        %v4883 = vunpack.c.l.b16 %v2729
        %v4884 = vunpack.c.h.b16 %v2729
        %v4885 = vunpack.c.l.b16 %v2730
        %v4886 = vunpack.c.l.b16 %v2731
        %v4887 = vunpack.c.h.b16 %v2731
        %v4888 = vunpack.c.l.b16 %v2732
        %v4889 = vunpack.c.l.b16 %v2733
        %v4890 = vunpack.c.h.b16 %v2733
        %v4891 = vunpack.c.l.b16 %v2734
        %v4892 = vunpack.c.l.b16 %v2735
        %v4893 = vunpack.c.h.b16 %v2735
        %v4894 = vunpack.c.l.b16 %v2736
        %v4895 = vunpack.c.l.b16 %v2737
        %v4896 = vunpack.c.h.b16 %v2737
        %v4897 = vunpack.c.l.b16 %v2738
        %v4898 = vunpack.c.l.b16 %v2739
        %v4899 = vunpack.c.h.b16 %v2739
        %v4900 = vunpack.c.l.b16 %v2740
        %v4901 = vunpack.c.l.b16 %v2741
        %v4902 = vunpack.c.h.b16 %v2741
        %v4903 = vunpack.c.l.b16 %v2742
        %v4904 = vunpack.c.l.b16 %v2743
        %v4905 = vunpack.c.h.b16 %v2743
        %v4906 = vunpack.c.l.b16 %v2744
        %v4907 = vunpack.c.l.b16 %v2745
        %v4908 = vunpack.c.h.b16 %v2745
        %v4909 = vunpack.c.l.b16 %v2746
        %v4910 = vunpack.c.l.b16 %v2747
        %v4911 = vunpack.c.h.b16 %v2747
        %v4912 = vunpack.c.l.b16 %v2748
        %v4913 = vunpack.c.l.b16 %v2749
        %v4914 = vunpack.c.h.b16 %v2749
        %v4915 = vunpack.c.l.b16 %v2750
        %v4916 = vunpack.c.l.b16 %v2751
        %v4917 = vunpack.c.h.b16 %v2751
        %v4918 = vunpack.c.l.b16 %v2752
        %v4919 = vunpack.c.l.b16 %v2753
        %v4920 = vunpack.c.h.b16 %v2753
        %v4921 = vunpack.c.l.b16 %v2754
        %v4922 = vunpack.c.l.b16 %v2755
        %v4923 = vunpack.c.h.b16 %v2755
        %v4924 = vunpack.c.l.b16 %v2756
        %v4925 = vunpack.c.l.b16 %v2757
        %v4926 = vunpack.c.h.b16 %v2757
        %v4927 = vunpack.c.l.b16 %v2758
        %v4928 = vunpack.c.l.b16 %v2759
        %v4929 = vunpack.c.h.b16 %v2759
        %v4930 = vunpack.c.l.b16 %v2760
        %v4931 = vunpack.c.l.b16 %v2761
        %v4932 = vunpack.c.h.b16 %v2761
        %v4933 = vunpack.c.l.b16 %v2762
        %v4934 = vunpack.c.l.b16 %v2763
        %v4935 = vunpack.c.h.b16 %v2763
        %v4936 = vunpack.c.l.b16 %v2764
        %v4937 = vunpack.c.l.b16 %v2765
        %v4938 = vunpack.c.h.b16 %v2765
        %v4939 = vunpack.c.l.b16 %v2766
        %v4940 = vunpack.c.l.b16 %v2767
        %v4941 = vunpack.c.h.b16 %v2767
        %v4942 = vunpack.c.l.b16 %v2768
        %v4943 = vunpack.c.l.b16 %v2769
        %v4944 = vunpack.c.h.b16 %v2769
        %v4945 = vunpack.c.l.b16 %v2770
        %v4946 = vunpack.c.l.b16 %v2771
        %v4947 = vunpack.c.h.b16 %v2771
        %v4948 = vunpack.c.l.b16 %v2772
        %v4949 = vunpack.c.l.b16 %v2773
        %v4950 = vunpack.c.h.b16 %v2773
        %v4951 = vunpack.c.l.b16 %v2774
        %v4952 = vunpack.c.l.b16 %v2775
        %v4953 = vunpack.c.h.b16 %v2775
        %v4954 = vunpack.c.l.b16 %v2776
        %v4955 = vunpack.c.l.b16 %v2777
        %v4956 = vunpack.c.h.b16 %v2777
        %v4957 = vunpack.c.l.b16 %v2778
        %v4958 = vunpack.c.l.b16 %v2779
        %v4959 = vunpack.c.h.b16 %v2779
        %v4960 = vunpack.c.l.b16 %v2780
        %v4961 = vunpack.c.l.b16 %v2781
        %v4962 = vunpack.c.h.b16 %v2781
        %v4963 = vunpack.c.l.b16 %v2782
        %v4964 = vunpack.c.l.b16 %v2783
        %v4965 = vunpack.c.h.b16 %v2783
        %v4966 = vunpack.c.l.b16 %v2784
        %v4967 = vunpack.c.l.b16 %v2785
        %v4968 = vunpack.c.h.b16 %v2785
        %v4969 = vunpack.c.l.b16 %v2786
        %v4970 = vunpack.c.l.b16 %v2787
        %v4971 = vunpack.c.h.b16 %v2787
        %v4972 = vunpack.c.l.b16 %v2788
        %v4973 = vunpack.c.l.b16 %v2789
        %v4974 = vunpack.c.h.b16 %v2789
        %v4975 = vunpack.c.l.b16 %v2790
        %v4976 = vunpack.c.l.b16 %v2791
        %v4977 = vunpack.c.h.b16 %v2791
        %v4978 = vunpack.c.l.b16 %v2792
        %v4979 = vunpack.c.l.b16 %v2793
        %v4980 = vunpack.c.h.b16 %v2793
        %v4981 = vunpack.c.l.b16 %v2794
        %v4982 = vunpack.c.l.b16 %v2795
        %v4983 = vunpack.c.h.b16 %v2795
        %v4984 = vunpack.c.l.b16 %v2796
        %v4985 = vunpack.c.l.b16 %v2797
        %v4986 = vunpack.c.h.b16 %v2797
        %v4987 = vunpack.c.l.b16 %v2798
        %v4988 = vunpack.c.l.b16 %v2799
        %v4989 = vunpack.c.h.b16 %v2799
        %v4990 = vunpack.c.l.b16 %v2800
        %v4991 = vunpack.c.l.b16 %v2801
        %v4992 = vunpack.c.h.b16 %v2801
        %v4993 = vunpack.c.l.b16 %v2802
        %v4994 = vunpack.c.l.b16 %v2803
        %v4995 = vunpack.c.h.b16 %v2803
        %v4996 = vunpack.c.l.b16 %v2804
        %v4997 = vunpack.c.l.b16 %v2805
        %v4998 = vunpack.c.h.b16 %v2805
        %v4999 = vunpack.c.l.b16 %v2806
        %v5000 = vunpack.c.l.b16 %v2807
        %v5001 = vunpack.c.h.b16 %v2807
        %v5002 = vunpack.c.l.b16 %v2808
        %v5003 = vunpack.c.l.b16 %v2809
        %v5004 = vunpack.c.h.b16 %v2809
        %v5005 = vunpack.c.l.b16 %v2810
        %v5006 = vunpack.c.l.b16 %v2811
        %v5007 = vunpack.c.h.b16 %v2811
        %v5008 = vunpack.c.l.b16 %v2812
        %v5009 = vunpack.c.l.b16 %v2813
        %v5010 = vunpack.c.h.b16 %v2813
        %v5011 = vunpack.c.l.b16 %v2814
        %v5012 = vunpack.c.l.b16 %v2815
        %v5013 = vunpack.c.h.b16 %v2815
        %v5014 = vunpack.c.l.b16 %v2816
        %v5015 = vunpack.c.l.b16 %v2817
        %v5016 = vunpack.c.h.b16 %v2817
        %v5017 = vunpack.c.l.b16 %v2818
        %v5018 = vunpack.c.l.b16 %v2819
        %v5019 = vunpack.c.h.b16 %v2819
        %v5020 = vunpack.c.l.b16 %v2820
        %v5021 = vunpack.c.l.b16 %v2821
        %v5022 = vunpack.c.h.b16 %v2821
        %v5023 = vunpack.c.l.b16 %v2822
        %v5024 = vunpack.c.l.b16 %v2823
        %v5025 = vunpack.c.h.b16 %v2823
        %v5026 = vunpack.c.l.b16 %v2824
        %v5027 = vunpack.c.l.b16 %v2825
        %v5028 = vunpack.c.h.b16 %v2825
        %v5029 = vunpack.c.l.b16 %v2826
        %v5030 = vunpack.c.l.b16 %v2827
        %v5031 = vunpack.c.h.b16 %v2827
        %v5032 = vunpack.c.l.b16 %v2828
        %v5033 = vunpack.c.l.b16 %v2829
        %v5034 = vunpack.c.h.b16 %v2829
        %v5035 = vunpack.c.l.b16 %v2830
        %v5036 = vunpack.c.l.b16 %v2831
        %v5037 = vunpack.c.h.b16 %v2831
        %v5038 = vunpack.c.l.b16 %v2832
        %v5039 = vunpack.c.l.b16 %v2833
        %v5040 = vunpack.c.h.b16 %v2833
        %v5041 = vunpack.c.l.b16 %v2834
        %v5042 = vunpack.c.l.b16 %v2835
        %v5043 = vunpack.c.h.b16 %v2835
        %v5044 = vunpack.c.l.b16 %v2836
        %v5045 = vunpack.c.l.b16 %v2837
        %v5046 = vunpack.c.h.b16 %v2837
        %v5047 = vunpack.c.l.b16 %v2838
        %v5048 = vunpack.c.l.b16 %v2839
        %v5049 = vunpack.c.h.b16 %v2839
        %v5050 = vunpack.c.l.b16 %v2840
        %v5051 = vunpack.c.l.b16 %v2841
        %v5052 = vunpack.c.h.b16 %v2841
        %v5053 = vunpack.c.l.b16 %v2842
        %v5054 = vunpack.c.l.b16 %v2843
        %v5055 = vunpack.c.h.b16 %v2843
        %v5056 = vunpack.c.l.b16 %v2844
        %v5057 = vunpack.c.l.b16 %v2845
        %v5058 = vunpack.c.h.b16 %v2845
        %v5059 = vunpack.c.l.b16 %v2846
        %v5060 = vunpack.c.l.b16 %v2847
        %v5061 = vunpack.c.h.b16 %v2847
        %v5062 = vunpack.c.l.b16 %v2848
        %v5063 = vunpack.c.l.b16 %v2849
        %v5064 = vunpack.c.h.b16 %v2849
        %v5065 = vunpack.c.l.b16 %v2850
        %v5066 = vunpack.c.l.b16 %v2851
        %v5067 = vunpack.c.h.b16 %v2851
        %v5068 = vunpack.c.l.b16 %v2852
        %v5069 = vunpack.c.l.b16 %v2853
        %v5070 = vunpack.c.h.b16 %v2853
        %v5071 = vunpack.c.l.b16 %v2854
        %v5072 = vunpack.c.l.b16 %v2855
        %v5073 = vunpack.c.h.b16 %v2855
        %v5074 = vunpack.c.l.b16 %v2856
        %v5075 = vunpack.c.l.b16 %v2857
        %v5076 = vunpack.c.h.b16 %v2857
        %v5077 = vunpack.c.l.b16 %v2858
        %v5078 = vunpack.c.l.b16 %v2859
        %v5079 = vunpack.c.h.b16 %v2859
        %v5080 = vunpack.c.l.b16 %v2860
        %v5081 = vunpack.c.l.b16 %v2861
        %v5082 = vunpack.c.h.b16 %v2861
        %v5083 = vunpack.c.l.b16 %v2862
        %v5084 = vunpack.c.l.b16 %v2863
        %v5085 = vunpack.c.h.b16 %v2863
        %v5086 = vunpack.c.l.b16 %v2864
        %v5087 = vunpack.c.l.b16 %v2865
        %v5088 = vunpack.c.h.b16 %v2865
        %v5089 = vunpack.c.l.b16 %v2866
        %v5090 = vunpack.c.l.b16 %v2867
        %v5091 = vunpack.c.h.b16 %v2867
        %v5092 = vunpack.c.l.b16 %v2868
        %v5093 = vunpack.c.l.b16 %v2869
        %v5094 = vunpack.c.h.b16 %v2869
        %v5095 = vunpack.c.l.b16 %v2870
        %v5096 = vunpack.c.l.b16 %v2871
        %v5097 = vunpack.c.h.b16 %v2871
        %v5098 = vunpack.c.l.b16 %v2872
        %v5099 = vunpack.c.l.b16 %v2873
        %v5100 = vunpack.c.h.b16 %v2873
        %v5101 = vunpack.c.l.b16 %v2874
        %v5102 = vunpack.c.l.b16 %v2875
        %v5103 = vunpack.c.h.b16 %v2875
        %v5104 = vunpack.c.l.b16 %v2876
        %v5105 = vunpack.c.l.b16 %v2877
        %v5106 = vunpack.c.h.b16 %v2877
        %v5107 = vunpack.c.l.b16 %v2878
        %v5108 = vunpack.c.l.b16 %v2879
        %v5109 = vunpack.c.h.b16 %v2879
        %v5110 = vunpack.c.l.b16 %v2880
        %v5111 = vunpack.c.l.b16 %v2881
        %v5112 = vunpack.c.h.b16 %v2881
        %v5113 = vunpack.c.l.b16 %v2882
        %v5114 = vunpack.c.l.b16 %v2883
        %v5115 = vunpack.c.h.b16 %v2883
        %v5116 = vunpack.c.l.b16 %v2884
        %v5117 = vunpack.c.l.b16 %v2885
        %v5118 = vunpack.c.h.b16 %v2885
        %v5119 = vunpack.c.l.b16 %v2886
        %v5120 = vunpack.c.l.b16 %v2887
        %v5121 = vunpack.c.h.b16 %v2887
        %v5122 = vunpack.c.l.b16 %v2888
        %v5123 = vunpack.c.l.b16 %v2889
        %v5124 = vunpack.c.h.b16 %v2889
        %v5125 = vunpack.c.l.b16 %v2890
        %v5126 = vunpack.c.l.b16 %v2891
        %v5127 = vunpack.c.h.b16 %v2891
        %v5128 = vunpack.c.l.b16 %v2892
        %v5129 = vunpack.c.l.b16 %v2893
        %v5130 = vunpack.c.h.b16 %v2893
        %v5131 = vunpack.c.l.b16 %v2894
        %v5132 = vunpack.c.l.b16 %v2895
        %v5133 = vunpack.c.h.b16 %v2895
        %v5134 = vunpack.c.l.b16 %v2896
        %v5135 = vunpack.c.l.b16 %v2897
        %v5136 = vunpack.c.h.b16 %v2897
        %v5137 = vunpack.c.l.b16 %v2898
        %v5138 = vunpack.c.l.b16 %v2899
        %v5139 = vunpack.c.h.b16 %v2899
        %v5140 = vunpack.c.l.b16 %v2900
        %v5141 = vunpack.c.l.b16 %v2901
        %v5142 = vunpack.c.h.b16 %v2901
        %v5143 = vunpack.c.l.b16 %v2902
        %v5144 = vunpack.c.l.b16 %v2903
        %v5145 = vunpack.c.h.b16 %v2903
        %v5146 = vunpack.c.l.b16 %v2904
        %v5147 = vunpack.c.l.b16 %v2905
        %v5148 = vunpack.c.h.b16 %v2905
        %v5149 = vunpack.c.l.b16 %v2906
        %v5150 = vunpack.c.l.b16 %v2907
        %v5151 = vunpack.c.h.b16 %v2907
        %v5152 = vunpack.c.l.b16 %v2908
        %v5153 = vunpack.c.l.b16 %v2909
        %v5154 = vunpack.c.h.b16 %v2909
        %v5155 = vunpack.c.l.b16 %v2910
        %v5156 = vunpack.c.l.b16 %v2911
        %v5157 = vunpack.c.h.b16 %v2911
        %v5158 = vunpack.c.l.b16 %v2912
        %v5159 = vunpack.c.l.b16 %v2913
        %v5160 = vunpack.c.h.b16 %v2913
        %v5161 = vunpack.c.l.b16 %v2914
        %v5162 = vunpack.c.l.b16 %v2915
        %v5163 = vunpack.c.h.b16 %v2915
        %v5164 = vunpack.c.l.b16 %v2916
        %v5165 = vunpack.c.l.b16 %v2917
        %v5166 = vunpack.c.h.b16 %v2917
        %v5167 = vunpack.c.l.b16 %v2918
        %v5168 = vunpack.c.l.b16 %v2919
        %v5169 = vunpack.c.h.b16 %v2919
        %v5170 = vunpack.c.l.b16 %v2920
        %v5171 = vunpack.c.l.b16 %v2921
        %v5172 = vunpack.c.h.b16 %v2921
        %v5173 = vunpack.c.l.b16 %v2922
        %v5174 = vunpack.c.l.b16 %v2923
        %v5175 = vunpack.c.h.b16 %v2923
        %v5176 = vunpack.c.l.b16 %v2924
        %v5177 = vunpack.c.l.b16 %v2925
        %v5178 = vunpack.c.h.b16 %v2925
        %v5179 = vunpack.c.l.b16 %v2926
        %v5180 = vunpack.c.l.b16 %v2927
        %v5181 = vunpack.c.h.b16 %v2927
        %v5182 = vunpack.c.l.b16 %v2928
        %v5183 = vunpack.c.l.b16 %v2929
        %v5184 = vunpack.c.h.b16 %v2929
        %v5185 = vunpack.c.l.b16 %v2930
        %v5186 = vunpack.c.l.b16 %v2931
        %v5187 = vunpack.c.h.b16 %v2931
        %v5188 = vunpack.c.l.b16 %v2932
        %v5189 = vunpack.c.l.b16 %v2933
        %v5190 = vunpack.c.h.b16 %v2933
        %v5191 = vunpack.c.l.b16 %v2934
        %v5192 = vunpack.c.l.b16 %v2935
        %v5193 = vunpack.c.h.b16 %v2935
        %v5194 = vunpack.c.l.b16 %v2936
        %v5195 = vunpack.c.l.b16 %v2937
        %v5196 = vunpack.c.h.b16 %v2937
        %v5197 = vunpack.c.l.b16 %v2938
        %v5198 = vunpack.c.l.b16 %v2939
        %v5199 = vunpack.c.h.b16 %v2939
        %v5200 = vunpack.c.l.b16 %v2940
        %v5201 = vunpack.c.l.b16 %v2941
        %v5202 = vunpack.c.h.b16 %v2941
        %v5203 = vunpack.c.l.b16 %v2942
        %v5204 = vunpack.c.l.b16 %v2943
        %v5205 = vunpack.c.h.b16 %v2943
        %v5206 = vunpack.c.l.b16 %v2944
        %v5207 = vunpack.c.l.b16 %v2945
        %v5208 = vunpack.c.h.b16 %v2945
        %v5209 = vunpack.c.l.b16 %v2946
        %v5210 = vunpack.c.l.b16 %v2947
        %v5211 = vunpack.c.h.b16 %v2947
        %v5212 = vunpack.c.l.b16 %v2948
        %v5213 = vunpack.c.l.b16 %v2949
        %v5214 = vunpack.c.h.b16 %v2949
        %v5215 = vunpack.c.l.b16 %v2950
        %v5216 = vunpack.c.l.b16 %v2951
        %v5217 = vunpack.c.h.b16 %v2951
        %v5218 = vunpack.c.l.b16 %v2952
        %v5219 = vunpack.c.l.b16 %v2953
        %v5220 = vunpack.c.h.b16 %v2953
        %v5221 = vunpack.c.l.b16 %v2954
        %v5222 = vunpack.c.l.b16 %v2955
        %v5223 = vunpack.c.h.b16 %v2955
        %v5224 = vunpack.c.l.b16 %v2956
        %v5225 = vunpack.c.l.b16 %v2957
        %v5226 = vunpack.c.h.b16 %v2957
        %v5227 = vunpack.c.l.b16 %v2958
        %v5228 = vunpack.c.l.b16 %v2959
        %v5229 = vunpack.c.h.b16 %v2959
        %v5230 = vunpack.c.l.b16 %v2960
        %v5231 = vunpack.c.l.b16 %v2961
        %v5232 = vunpack.c.h.b16 %v2961
        %v5233 = vunpack.c.l.b16 %v2962
        %v5234 = vunpack.c.l.b16 %v2963
        %v5235 = vunpack.c.h.b16 %v2963
        %v5236 = vunpack.c.l.b16 %v2964
        %v5237 = vunpack.c.l.b16 %v2965
        %v5238 = vunpack.c.h.b16 %v2965
        %v5239 = vunpack.c.l.b16 %v2966
        %v5240 = vunpack.c.l.b16 %v2967
        %v5241 = vunpack.c.h.b16 %v2967
        %v5242 = vunpack.c.l.b16 %v2968
        %v5243 = vunpack.c.l.b16 %v2969
        %v5244 = vunpack.c.h.b16 %v2969
        %v5245 = vunpack.c.l.b16 %v2970
        %v5246 = vunpack.c.l.b16 %v2971
        %v5247 = vunpack.c.h.b16 %v2971
        %v5248 = vunpack.c.l.b16 %v2972
        %v5249 = vunpack.c.l.b16 %v2973
        %v5250 = vunpack.c.h.b16 %v2973
        %v5251 = vunpack.c.l.b16 %v2974
        %v5252 = vunpack.c.l.b16 %v2975
        %v5253 = vunpack.c.h.b16 %v2975
        %v5254 = vunpack.c.l.b16 %v2976
        %v5255 = vunpack.c.l.b16 %v2977
        %v5256 = vunpack.c.h.b16 %v2977
        %v5257 = vunpack.c.l.b16 %v2978
        %v5258 = vunpack.c.l.b16 %v2979
        %v5259 = vunpack.c.h.b16 %v2979
        %v5260 = vunpack.c.l.b16 %v2980
        %v5261 = vunpack.c.l.b16 %v2981
        %v5262 = vunpack.c.h.b16 %v2981
        %v5263 = vunpack.c.l.b16 %v2982
        %v5264 = vunpack.c.l.b16 %v2983
        %v5265 = vunpack.c.h.b16 %v2983
        %v5266 = vunpack.c.l.b16 %v2984
        %v5267 = vunpack.c.l.b16 %v2985
        %v5268 = vunpack.c.h.b16 %v2985
        %v5269 = vunpack.c.l.b16 %v2986
        %v5270 = vunpack.c.l.b16 %v2987
        %v5271 = vunpack.c.h.b16 %v2987
        %v5272 = vunpack.c.l.b16 %v2988
        %v5273 = vunpack.c.l.b16 %v2989
        %v5274 = vunpack.c.h.b16 %v2989
        %v5275 = vunpack.c.l.b16 %v2990
        %v5276 = vunpack.c.l.b16 %v2991
        %v5277 = vunpack.c.h.b16 %v2991
        %v5278 = vunpack.c.l.b16 %v2992
        %v5279 = vunpack.c.l.b16 %v2993
        %v5280 = vunpack.c.h.b16 %v2993
        %v5281 = vunpack.c.l.b16 %v2994
        %v5282 = vunpack.c.l.b16 %v2995
        %v5283 = vunpack.c.h.b16 %v2995
        %v5284 = vunpack.c.l.b16 %v2996
        %v5285 = vunpack.c.l.b16 %v2997
        %v5286 = vunpack.c.h.b16 %v2997
        %v5287 = vunpack.c.l.b16 %v2998
        %v5288 = vunpack.c.l.b16 %v2999
        %v5289 = vunpack.c.h.b16 %v2999
        %v5290 = vunpack.c.l.b16 %v3000
        %v5291 = vunpack.c.l.b16 %v3001
        %v5292 = vunpack.c.h.b16 %v3001
        %v5293 = vunpack.c.l.b16 %v3002
        %v5294 = vunpack.c.l.b16 %v3003
        %v5295 = vunpack.c.h.b16 %v3003
        %v5296 = vunpack.c.l.b16 %v3004
        %v5297 = vunpack.c.l.b16 %v3005
        %v5298 = vunpack.c.h.b16 %v3005
        %v5299 = vunpack.c.l.b16 %v3006
        %v5300 = vunpack.c.l.b16 %v3007
        %v5301 = vunpack.c.h.b16 %v3007
        %v5302 = vunpack.c.l.b16 %v3008
        %v5303 = vunpack.c.l.b16 %v3009
        %v5304 = vunpack.c.h.b16 %v3009
        %v5305 = vunpack.c.l.b16 %v3010
        %v5306 = vunpack.c.l.b16 %v3011
        %v5307 = vunpack.c.h.b16 %v3011
        %v5308 = vunpack.c.l.b16 %v3012
        %v5309 = vunpack.c.l.b16 %v3013
        %v5310 = vunpack.c.h.b16 %v3013
        %v5311 = vunpack.c.l.b16 %v3014
        %v5312 = vunpack.c.l.b16 %v3015
        %v5313 = vunpack.c.h.b16 %v3015
        %v5314 = vunpack.c.l.b16 %v3016
        %v5315 = vunpack.c.l.b16 %v3017
        %v5316 = vunpack.c.h.b16 %v3017
        %v5317 = vunpack.c.l.b16 %v3018
        %v5318 = vunpack.c.l.b16 %v3019
        %v5319 = vunpack.c.h.b16 %v3019
        %v5320 = vunpack.c.l.b16 %v3020
        %v5321 = vunpack.c.l.b16 %v3021
        %v5322 = vunpack.c.h.b16 %v3021
        %v5323 = vunpack.c.l.b16 %v3022
        %v5324 = vunpack.c.l.b16 %v3023
        %v5325 = vunpack.c.h.b16 %v3023
        %v5326 = vunpack.c.l.b16 %v3024
        %v5327 = vunpack.c.l.b16 %v3025
        %v5328 = vunpack.c.h.b16 %v3025
        %v5329 = vunpack.c.l.b16 %v3026
        %v5330 = vunpack.c.l.b16 %v3027
        %v5331 = vunpack.c.h.b16 %v3027
        %v5332 = vunpack.c.l.b16 %v3028
        %v5333 = vunpack.c.l.b16 %v3029
        %v5334 = vunpack.c.h.b16 %v3029
        %v5335 = vunpack.c.l.b16 %v3030
        %v5336 = vunpack.c.l.b16 %v3031
        %v5337 = vunpack.c.h.b16 %v3031
        %v5338 = vunpack.c.l.b16 %v3032
        %v5339 = vunpack.c.l.b16 %v3033
        %v5340 = vunpack.c.h.b16 %v3033
        %v5341 = vunpack.c.l.b16 %v3034
        %v5342 = vunpack.c.l.b16 %v3035
        %v5343 = vunpack.c.h.b16 %v3035
        %v5344 = vunpack.c.l.b16 %v3036
        %v5345 = vunpack.c.l.b16 %v3037
        %v5346 = vunpack.c.h.b16 %v3037
        %v5347 = vunpack.c.l.b16 %v3038
        %v5348 = vunpack.c.l.b16 %v3039
        %v5349 = vunpack.c.h.b16 %v3039
        %v5350 = vunpack.c.l.b16 %v3040
        %v5351 = vunpack.c.l.b16 %v3041
        %v5352 = vunpack.c.h.b16 %v3041
        %v5353 = vunpack.c.l.b16 %v3042
        %v5354 = vunpack.c.l.b16 %v3043
        %v5355 = vunpack.c.h.b16 %v3043
        %v5356 = vunpack.c.l.b16 %v3044
        %v5357 = vunpack.c.l.b16 %v3045
        %v5358 = vunpack.c.h.b16 %v3045
        %v5359 = vunpack.c.l.b16 %v3046
        %v5360 = vunpack.c.l.b16 %v3047
        %v5361 = vunpack.c.h.b16 %v3047
        %v5362 = vunpack.c.l.b16 %v3048
        %v5363 = vunpack.c.l.b16 %v3049
        %v5364 = vunpack.c.h.b16 %v3049
        %v5365 = vunpack.c.l.b16 %v3050
        %v5366 = vunpack.c.l.b16 %v3051
        %v5367 = vunpack.c.h.b16 %v3051
        %v5368 = vunpack.c.l.b16 %v3052
        %v5369 = vunpack.c.l.b16 %v3053
        %v5370 = vunpack.c.h.b16 %v3053
        %v5371 = vunpack.c.l.b16 %v3054
        %v5372 = vunpack.c.l.b16 %v3055
        %v5373 = vunpack.c.h.b16 %v3055
        %v5374 = vunpack.c.l.b16 %v3056
        %v5375 = vunpack.c.l.b16 %v3057
        %v5376 = vunpack.c.h.b16 %v3057
        %v5377 = vunpack.c.l.b16 %v3058
        %v5378 = vunpack.c.l.b16 %v3059
        %v5379 = vunpack.c.h.b16 %v3059
        %v5380 = vunpack.c.l.b16 %v3060
        %v5381 = vunpack.c.l.b16 %v3061
        %v5382 = vunpack.c.h.b16 %v3061
        %v5383 = vunpack.c.l.b16 %v3062
        %v5384 = vunpack.c.l.b16 %v3063
        %v5385 = vunpack.c.h.b16 %v3063
        %v5386 = vunpack.c.l.b16 %v3064
        %v5387 = vunpack.c.l.b16 %v3065
        %v5388 = vunpack.c.h.b16 %v3065
        %v5389 = vunpack.c.l.b16 %v3066
        %v5390 = vunpack.c.l.b16 %v3067
        %v5391 = vunpack.c.h.b16 %v3067
        %v5392 = vunpack.c.l.b16 %v3068
        %v5393 = vunpack.c.l.b16 %v3069
        %v5394 = vunpack.c.h.b16 %v3069
        %v5395 = vunpack.c.l.b16 %v3070
        %v5396 = vunpack.c.l.b16 %v3071
        %v5397 = vunpack.c.h.b16 %v3071
        %v5398 = vunpack.c.l.b16 %v3072
        %v5399 = vunpack.c.l.b16 %v3073
        %v5400 = vunpack.c.h.b16 %v3073
        %v5401 = vunpack.c.l.b16 %v3074
        %v5402 = vunpack.c.l.b16 %v3075
        %v5403 = vunpack.c.h.b16 %v3075
        %v5404 = vunpack.c.l.b16 %v3076
        %v5405 = vunpack.c.l.b16 %v3077
        %v5406 = vunpack.c.h.b16 %v3077
        %v5407 = vunpack.c.l.b16 %v3078
        %v5408 = vunpack.c.l.b16 %v3079
        %v5409 = vunpack.c.h.b16 %v3079
        %v5410 = vunpack.c.l.b16 %v3080
        %v5411 = vunpack.c.l.b16 %v3081
        %v5412 = vunpack.c.h.b16 %v3081
        %v5413 = vunpack.c.l.b16 %v3082
        %v5414 = vunpack.c.l.b16 %v3083
        %v5415 = vunpack.c.h.b16 %v3083
        %v5416 = vunpack.c.l.b16 %v3084
        %v5417 = vunpack.c.l.b16 %v3085
        %v5418 = vunpack.c.h.b16 %v3085
        %v5419 = vunpack.c.l.b16 %v3086
        %v5420 = vunpack.c.l.b16 %v3087
        %v5421 = vunpack.c.h.b16 %v3087
        %v5422 = vunpack.c.l.b16 %v3088
        %v5423 = vunpack.c.l.b16 %v3089
        %v5424 = vunpack.c.h.b16 %v3089
        %v5425 = vunpack.c.l.b16 %v3090
        %v5426 = vunpack.c.l.b16 %v3091
        %v5427 = vunpack.c.h.b16 %v3091
        %v5428 = vunpack.c.l.b16 %v3092
        %v5429 = vunpack.c.l.b16 %v3093
        %v5430 = vunpack.c.h.b16 %v3093
        %v5431 = vunpack.c.l.b16 %v3094
        %v5432 = vunpack.c.l.b16 %v3095
        %v5433 = vunpack.c.h.b16 %v3095
        %v5434 = vunpack.c.l.b16 %v3096
        %v5435 = vunpack.c.l.b16 %v3097
        %v5436 = vunpack.c.h.b16 %v3097
        %v5437 = vunpack.c.l.b16 %v3098
        %v5438 = vunpack.c.l.b16 %v3099
        %v5439 = vunpack.c.h.b16 %v3099
        %v5440 = vunpack.c.l.b16 %v3100
        %v5441 = vunpack.c.l.b16 %v3101
        %v5442 = vunpack.c.h.b16 %v3101
        %v5443 = vunpack.c.l.b16 %v3102
        %v5444 = vunpack.c.l.b16 %v3103
        %v5445 = vunpack.c.h.b16 %v3103
        %v5446 = vunpack.c.l.b16 %v3104
        %v5447 = vunpack.c.l.b16 %v3105
        %v5448 = vunpack.c.h.b16 %v3105
        %v5449 = vunpack.c.l.b16 %v3106
        %v5450 = vunpack.c.l.b16 %v3107
        %v5451 = vunpack.c.h.b16 %v3107
        %v5452 = vunpack.c.l.b16 %v3108
        %v5453 = vunpack.c.l.b16 %v3109
        %v5454 = vunpack.c.h.b16 %v3109
        %v5455 = vunpack.c.l.b16 %v3110
        %v5456 = vunpack.c.l.b16 %v3111
        %v5457 = vunpack.c.h.b16 %v3111
        %v5458 = vunpack.c.l.b16 %v3112
        %v5459 = vunpack.c.l.b16 %v3113
        %v5460 = vunpack.c.h.b16 %v3113
        %v5461 = vunpack.c.l.b16 %v3114
        %v5462 = vunpack.c.l.b16 %v3115
        %v5463 = vunpack.c.h.b16 %v3115
        %v5464 = vunpack.c.l.b16 %v3116
        %v5465 = vunpack.c.l.b16 %v3117
        %v5466 = vunpack.c.h.b16 %v3117
        %v5467 = vunpack.c.l.b16 %v3118
        %v5468 = vunpack.c.l.b16 %v3119
        %v5469 = vunpack.c.h.b16 %v3119
        %v5470 = vunpack.c.l.b16 %v3120
        %v5471 = vunpack.c.l.b16 %v3121
        %v5472 = vunpack.c.h.b16 %v3121
        %v5473 = vunpack.c.l.b16 %v3122
        %v5474 = vunpack.c.l.b16 %v3123
        %v5475 = vunpack.c.h.b16 %v3123
        %v5476 = vunpack.c.l.b16 %v3124
        %v5477 = vunpack.c.l.b16 %v3125
        %v5478 = vunpack.c.h.b16 %v3125
        %v5479 = vunpack.c.l.b16 %v3126
        %v5480 = vunpack.c.l.b16 %v3127
        %v5481 = vunpack.c.h.b16 %v3127
        %v5482 = vunpack.c.l.b16 %v3128
        %v5483 = vunpack.c.l.b16 %v3129
        %v5484 = vunpack.c.h.b16 %v3129
        %v5485 = vunpack.c.l.b16 %v3130
        %v5486 = vunpack.c.l.b16 %v3131
        %v5487 = vunpack.c.h.b16 %v3131
        %v5488 = vunpack.c.l.b16 %v3132
        %v5489 = vunpack.c.l.b16 %v3133
        %v5490 = vunpack.c.h.b16 %v3133
        %v5491 = vunpack.c.l.b16 %v3134
        %v5492 = vunpack.c.l.b16 %v3135
        %v5493 = vunpack.c.h.b16 %v3135
        %v5494 = vunpack.c.l.b16 %v3136
        %v5495 = vunpack.c.l.b16 %v3137
        %v5496 = vunpack.c.h.b16 %v3137
        %v5497 = vunpack.c.l.b16 %v3138
        %v5498 = vunpack.c.l.b16 %v3139
        %v5499 = vunpack.c.h.b16 %v3139
        %v5500 = vunpack.c.l.b16 %v3140
        %v5501 = vunpack.c.l.b16 %v3141
        %v5502 = vunpack.c.h.b16 %v3141
        %v5503 = vunpack.c.l.b16 %v3142
        %v5504 = vunpack.c.l.b16 %v3143
        %v5505 = vunpack.c.h.b16 %v3143
        %v5506 = vunpack.c.l.b16 %v3144
        %v5507 = vunpack.c.l.b16 %v3145
        %v5508 = vunpack.c.h.b16 %v3145
        %v5509 = vunpack.c.l.b16 %v3146
        %v5510 = vunpack.c.l.b16 %v3147
        %v5511 = vunpack.c.h.b16 %v3147
        %v5512 = vunpack.c.l.b16 %v3148
        %v5513 = vunpack.c.l.b16 %v3149
        %v5514 = vunpack.c.h.b16 %v3149
        %v5515 = vunpack.c.l.b16 %v3150
        %v5516 = vunpack.c.l.b16 %v3151
        %v5517 = vunpack.c.h.b16 %v3151
        %v5518 = vunpack.c.l.b16 %v3152
        %v5519 = vunpack.c.l.b16 %v3153
        %v5520 = vunpack.c.h.b16 %v3153
        %v5521 = vunpack.c.l.b16 %v3154
        %v5522 = vunpack.c.l.b16 %v3155
        %v5523 = vunpack.c.h.b16 %v3155
        %v5524 = vunpack.c.l.b16 %v3156
        %v5525 = vunpack.c.l.b16 %v3157
        %v5526 = vunpack.c.h.b16 %v3157
        %v5527 = vunpack.c.l.b16 %v3158
        %v5528 = vunpack.c.l.b16 %v3159
        %v5529 = vunpack.c.h.b16 %v3159
        %v5530 = vunpack.c.l.b16 %v3160
        %v5531 = vunpack.c.l.b16 %v3161
        %v5532 = vunpack.c.h.b16 %v3161
        %v5533 = vunpack.c.l.b16 %v3162
        %v5534 = vunpack.c.l.b16 %v3163
        %v5535 = vunpack.c.h.b16 %v3163
        %v5536 = vunpack.c.l.b16 %v3164
        %v5537 = vunpack.c.l.b16 %v3165
        %v5538 = vunpack.c.h.b16 %v3165
        %v5539 = vunpack.c.l.b16 %v3166
        %v5540 = vunpack.c.l.b16 %v3167
        %v5541 = vunpack.c.h.b16 %v3167
        %v5542 = vunpack.c.l.b16 %v3168
        %v5543 = vunpack.c.l.b16 %v3169
        %v5544 = vunpack.c.h.b16 %v3169
        %v5545 = vunpack.c.l.b16 %v3170
        %v5546 = vunpack.c.l.b16 %v3171
        %v5547 = vunpack.c.h.b16 %v3171
        %v5548 = vunpack.c.l.b16 %v3172
        %v5549 = vunpack.c.l.b16 %v3173
        %v5550 = vunpack.c.h.b16 %v3173
        %v5551 = vunpack.c.l.b16 %v3174
        %v5552 = vunpack.c.l.b16 %v3175
        %v5553 = vunpack.c.h.b16 %v3175
        %v5554 = vunpack.c.l.b16 %v3176
        %v5555 = vunpack.c.l.b16 %v3177
        %v5556 = vunpack.c.h.b16 %v3177
        %v5557 = vunpack.c.l.b16 %v3178
        %v5558 = vunpack.c.l.b16 %v3179
        %v5559 = vunpack.c.h.b16 %v3179
        %v5560 = vunpack.c.l.b16 %v3180
        %v5561 = vunpack.c.l.b16 %v3181
        %v5562 = vunpack.c.h.b16 %v3181
        %v5563 = vunpack.c.l.b16 %v3182
        %v5564 = vunpack.c.l.b16 %v3183
        %v5565 = vunpack.c.h.b16 %v3183
        %v5566 = vunpack.c.l.b16 %v3184
        %v5567 = vunpack.c.l.b16 %v3185
        %v5568 = vunpack.c.h.b16 %v3185
        %v5569 = vunpack.c.l.b16 %v3186
        %v5570 = vunpack.c.l.b16 %v3187
        %v5571 = vunpack.c.h.b16 %v3187
        %v5572 = vunpack.c.l.b16 %v3188
        %v5573 = vunpack.c.l.b16 %v3189
        %v5574 = vunpack.c.h.b16 %v3189
        %v5575 = vunpack.c.l.b16 %v3190
        %v5576 = vunpack.c.l.b16 %v3191
        %v5577 = vunpack.c.h.b16 %v3191
        %v5578 = vunpack.c.l.b16 %v3192
        %v5579 = vunpack.c.l.b16 %v3193
        %v5580 = vunpack.c.h.b16 %v3193
        %v5581 = vunpack.c.l.b16 %v3194
        %v5582 = vunpack.c.l.b16 %v3195
        %v5583 = vunpack.c.h.b16 %v3195
        %v5584 = vunpack.c.l.b16 %v3196
        %v5585 = vunpack.c.l.b16 %v3197
        %v5586 = vunpack.c.h.b16 %v3197
        %v5587 = vunpack.c.l.b16 %v3198
        %v5588 = vunpack.c.l.b16 %v3199
        %v5589 = vunpack.c.h.b16 %v3199
        %v5590 = vunpack.c.l.b16 %v3200
        %v5591 = vunpack.c.l.b16 %v3201
        %v5592 = vunpack.c.h.b16 %v3201
        %v5593 = vunpack.c.l.b16 %v3202
        %v5594 = vunpack.c.l.b16 %v3203
        %v5595 = vunpack.c.h.b16 %v3203
        %v5596 = vunpack.c.l.b16 %v3204
        %v5597 = vunpack.c.l.b16 %v3205
        %v5598 = vunpack.c.h.b16 %v3205
        %v5599 = vunpack.c.l.b16 %v3206
        %v5600 = vunpack.c.l.b16 %v3207
        %v5601 = vunpack.c.h.b16 %v3207
        %v5602 = vunpack.c.l.b16 %v3208
        %v5603 = vunpack.c.l.b16 %v3209
        %v5604 = vunpack.c.h.b16 %v3209
        %v5605 = vunpack.c.l.b16 %v3210
        %v5606 = vunpack.c.l.b16 %v3211
        %v5607 = vunpack.c.h.b16 %v3211
        %v5608 = vunpack.c.l.b16 %v3212
        %v5609 = vunpack.c.l.b16 %v3213
        %v5610 = vunpack.c.h.b16 %v3213
        %v5611 = vunpack.c.l.b16 %v3214
        %v5612 = vunpack.c.l.b16 %v3215
        %v5613 = vunpack.c.h.b16 %v3215
        %v5614 = vunpack.c.l.b16 %v3216
        %v5615 = vunpack.c.l.b16 %v3217
        %v5616 = vunpack.c.h.b16 %v3217
        %v5617 = vunpack.c.l.b16 %v3218
        %v5618 = vunpack.c.l.b16 %v3219
        %v5619 = vunpack.c.h.b16 %v3219
        %v5620 = vunpack.c.l.b16 %v3220
        %v5621 = vunpack.c.l.b16 %v3221
        %v5622 = vunpack.c.h.b16 %v3221
        %v5623 = vunpack.c.l.b16 %v3222
        %v5624 = vunpack.c.l.b16 %v3223
        %v5625 = vunpack.c.h.b16 %v3223
        %v5626 = vunpack.c.l.b16 %v3224
        %v5627 = vunpack.c.l.b16 %v3225
        %v5628 = vunpack.c.h.b16 %v3225
        %v5629 = vunpack.c.l.b16 %v3226
        %v5630 = vunpack.c.l.b16 %v3227
        %v5631 = vunpack.c.h.b16 %v3227
        %v5632 = vunpack.c.l.b16 %v3228
        %v5633 = vunpack.c.l.b16 %v3229
        %v5634 = vunpack.c.h.b16 %v3229
        %v5635 = vunpack.c.l.b16 %v3230
        %v5636 = vunpack.c.l.b16 %v3231
        %v5637 = vunpack.c.h.b16 %v3231
        %v5638 = vunpack.c.l.b16 %v3232
        %v5639 = vunpack.c.l.b16 %v3233
        %v5640 = vunpack.c.h.b16 %v3233
        %v5641 = vunpack.c.l.b16 %v3234
        %v5642 = vunpack.c.l.b16 %v3235
        %v5643 = vunpack.c.h.b16 %v3235
        %v5644 = vunpack.c.l.b16 %v3236
        %v5645 = vunpack.c.l.b16 %v3237
        %v5646 = vunpack.c.h.b16 %v3237
        %v5647 = vunpack.c.l.b16 %v3238
        %v5648 = vunpack.c.l.b16 %v3239
        %v5649 = vunpack.c.h.b16 %v3239
        %v5650 = vunpack.c.l.b16 %v3240
        %v5651 = vunpack.c.l.b16 %v3241
        %v5652 = vunpack.c.h.b16 %v3241
        %v5653 = vunpack.c.l.b16 %v3242
        %v5654 = vunpack.c.l.b16 %v3243
        %v5655 = vunpack.c.h.b16 %v3243
        %v5656 = vunpack.c.l.b16 %v3244
        %v5657 = vunpack.c.l.b16 %v3245
        %v5658 = vunpack.c.h.b16 %v3245
        %v5659 = vunpack.c.l.b16 %v3246
        %v5660 = vunpack.c.l.b16 %v3247
        %v5661 = vunpack.c.h.b16 %v3247
        %v5662 = vunpack.c.l.b16 %v3248
        %v5663 = vunpack.c.l.b16 %v3249
        %v5664 = vunpack.c.h.b16 %v3249
        %v5665 = vunpack.c.l.b16 %v3250
        %v5666 = vunpack.c.l.b16 %v3251
        %v5667 = vunpack.c.h.b16 %v3251
        %v5668 = vunpack.c.l.b16 %v3252
        %v5669 = vunpack.c.l.b16 %v3253
        %v5670 = vunpack.c.h.b16 %v3253
        %v5671 = vunpack.c.l.b16 %v3254
        %v5672 = vpack.c.b16 %v4715, %v4712
        %v5673 = vpack.c.b16 %v4716, %v4713
        %v5674 = vpack.c.b16 %v4717, %v4714
        %v5675 = vpack.c.b16 %v4721, %v4718
        %v5676 = vpack.c.b16 %v4722, %v4719
        %v5677 = vpack.c.b16 %v4723, %v4720
        %v5678 = vpack.c.b16 %v4727, %v4724
        %v5679 = vpack.c.b16 %v4728, %v4725
        %v5680 = vpack.c.b16 %v4729, %v4726
        %v5681 = vpack.c.b16 %v4733, %v4730
        %v5682 = vpack.c.b16 %v4734, %v4731
        %v5683 = vpack.c.b16 %v4735, %v4732
        %v5684 = vpack.c.b16 %v4739, %v4736
        %v5685 = vpack.c.b16 %v4740, %v4737
        %v5686 = vpack.c.b16 %v4741, %v4738
        %v5687 = vpack.c.b16 %v4745, %v4742
        %v5688 = vpack.c.b16 %v4746, %v4743
        %v5689 = vpack.c.b16 %v4747, %v4744
        %v5690 = vpack.c.b16 %v4751, %v4748
        %v5691 = vpack.c.b16 %v4752, %v4749
        %v5692 = vpack.c.b16 %v4753, %v4750
        %v5693 = vpack.c.b16 %v4757, %v4754
        %v5694 = vpack.c.b16 %v4758, %v4755
        %v5695 = vpack.c.b16 %v4759, %v4756
        %v5696 = vpack.c.b16 %v4763, %v4760
        %v5697 = vpack.c.b16 %v4764, %v4761
        %v5698 = vpack.c.b16 %v4765, %v4762
        %v5699 = vpack.c.b16 %v4769, %v4766
        %v5700 = vpack.c.b16 %v4770, %v4767
        %v5701 = vpack.c.b16 %v4771, %v4768
        %v5702 = vpack.c.b16 %v4775, %v4772
        %v5703 = vpack.c.b16 %v4776, %v4773
        %v5704 = vpack.c.b16 %v4777, %v4774
        %v5705 = vpack.c.b16 %v4781, %v4778
        %v5706 = vpack.c.b16 %v4782, %v4779
        %v5707 = vpack.c.b16 %v4783, %v4780
        %v5708 = vpack.c.b16 %v4787, %v4784
        %v5709 = vpack.c.b16 %v4788, %v4785
        %v5710 = vpack.c.b16 %v4789, %v4786
        %v5711 = vpack.c.b16 %v4793, %v4790
        %v5712 = vpack.c.b16 %v4794, %v4791
        %v5713 = vpack.c.b16 %v4795, %v4792
        %v5714 = vpack.c.b16 %v4799, %v4796
        %v5715 = vpack.c.b16 %v4800, %v4797
        %v5716 = vpack.c.b16 %v4801, %v4798
        %v5717 = vpack.c.b16 %v4805, %v4802
        %v5718 = vpack.c.b16 %v4806, %v4803
        %v5719 = vpack.c.b16 %v4807, %v4804
        %v5720 = vpack.c.b16 %v4811, %v4808
        %v5721 = vpack.c.b16 %v4812, %v4809
        %v5722 = vpack.c.b16 %v4813, %v4810
        %v5723 = vpack.c.b16 %v4817, %v4814
        %v5724 = vpack.c.b16 %v4818, %v4815
        %v5725 = vpack.c.b16 %v4819, %v4816
        %v5726 = vpack.c.b16 %v4823, %v4820
        %v5727 = vpack.c.b16 %v4824, %v4821
        %v5728 = vpack.c.b16 %v4825, %v4822
        %v5729 = vpack.c.b16 %v4829, %v4826
        %v5730 = vpack.c.b16 %v4830, %v4827
        %v5731 = vpack.c.b16 %v4831, %v4828
        %v5732 = vpack.c.b16 %v4835, %v4832
        %v5733 = vpack.c.b16 %v4836, %v4833
        %v5734 = vpack.c.b16 %v4837, %v4834
        %v5735 = vpack.c.b16 %v4841, %v4838
        %v5736 = vpack.c.b16 %v4842, %v4839
        %v5737 = vpack.c.b16 %v4843, %v4840
        %v5738 = vpack.c.b16 %v4847, %v4844
        %v5739 = vpack.c.b16 %v4848, %v4845
        %v5740 = vpack.c.b16 %v4849, %v4846
        %v5741 = vpack.c.b16 %v4853, %v4850
        %v5742 = vpack.c.b16 %v4854, %v4851
        %v5743 = vpack.c.b16 %v4855, %v4852
        %v5744 = vpack.c.b16 %v4859, %v4856
        %v5745 = vpack.c.b16 %v4860, %v4857
        %v5746 = vpack.c.b16 %v4861, %v4858
        %v5747 = vpack.c.b16 %v4865, %v4862
        %v5748 = vpack.c.b16 %v4866, %v4863
        %v5749 = vpack.c.b16 %v4867, %v4864
        %v5750 = vpack.c.b16 %v4871, %v4868
        %v5751 = vpack.c.b16 %v4872, %v4869
        %v5752 = vpack.c.b16 %v4873, %v4870
        %v5753 = vpack.c.b16 %v4877, %v4874
        %v5754 = vpack.c.b16 %v4878, %v4875
        %v5755 = vpack.c.b16 %v4879, %v4876
        %v5756 = vpack.c.b16 %v4883, %v4880
        %v5757 = vpack.c.b16 %v4884, %v4881
        %v5758 = vpack.c.b16 %v4885, %v4882
        %v5759 = vpack.c.b16 %v4889, %v4886
        %v5760 = vpack.c.b16 %v4890, %v4887
        %v5761 = vpack.c.b16 %v4891, %v4888
        %v5762 = vpack.c.b16 %v4895, %v4892
        %v5763 = vpack.c.b16 %v4896, %v4893
        %v5764 = vpack.c.b16 %v4897, %v4894
        %v5765 = vpack.c.b16 %v4901, %v4898
        %v5766 = vpack.c.b16 %v4902, %v4899
        %v5767 = vpack.c.b16 %v4903, %v4900
        %v5768 = vpack.c.b16 %v4907, %v4904
        %v5769 = vpack.c.b16 %v4908, %v4905
        %v5770 = vpack.c.b16 %v4909, %v4906
        %v5771 = vpack.c.b16 %v4913, %v4910
        %v5772 = vpack.c.b16 %v4914, %v4911
        %v5773 = vpack.c.b16 %v4915, %v4912
        %v5774 = vpack.c.b16 %v4919, %v4916
        %v5775 = vpack.c.b16 %v4920, %v4917
        %v5776 = vpack.c.b16 %v4921, %v4918
        %v5777 = vpack.c.b16 %v4925, %v4922
        %v5778 = vpack.c.b16 %v4926, %v4923
        %v5779 = vpack.c.b16 %v4927, %v4924
        %v5780 = vpack.c.b16 %v4931, %v4928
        %v5781 = vpack.c.b16 %v4932, %v4929
        %v5782 = vpack.c.b16 %v4933, %v4930
        %v5783 = vpack.c.b16 %v4937, %v4934
        %v5784 = vpack.c.b16 %v4938, %v4935
        %v5785 = vpack.c.b16 %v4939, %v4936
        %v5786 = vpack.c.b16 %v4943, %v4940
        %v5787 = vpack.c.b16 %v4944, %v4941
        %v5788 = vpack.c.b16 %v4945, %v4942
        %v5789 = vpack.c.b16 %v4949, %v4946
        %v5790 = vpack.c.b16 %v4950, %v4947
        %v5791 = vpack.c.b16 %v4951, %v4948
        %v5792 = vpack.c.b16 %v4955, %v4952
        %v5793 = vpack.c.b16 %v4956, %v4953
        %v5794 = vpack.c.b16 %v4957, %v4954
        %v5795 = vpack.c.b16 %v4961, %v4958
        %v5796 = vpack.c.b16 %v4962, %v4959
        %v5797 = vpack.c.b16 %v4963, %v4960
        %v5798 = vpack.c.b16 %v4967, %v4964
        %v5799 = vpack.c.b16 %v4968, %v4965
        %v5800 = vpack.c.b16 %v4969, %v4966
        %v5801 = vpack.c.b16 %v4973, %v4970
        %v5802 = vpack.c.b16 %v4974, %v4971
        %v5803 = vpack.c.b16 %v4975, %v4972
        %v5804 = vpack.c.b16 %v4979, %v4976
        %v5805 = vpack.c.b16 %v4980, %v4977
        %v5806 = vpack.c.b16 %v4981, %v4978
        %v5807 = vpack.c.b16 %v4985, %v4982
        %v5808 = vpack.c.b16 %v4986, %v4983
        %v5809 = vpack.c.b16 %v4987, %v4984
        %v5810 = vpack.c.b16 %v4991, %v4988
        %v5811 = vpack.c.b16 %v4992, %v4989
        %v5812 = vpack.c.b16 %v4993, %v4990
        %v5813 = vpack.c.b16 %v4997, %v4994
        %v5814 = vpack.c.b16 %v4998, %v4995
        %v5815 = vpack.c.b16 %v4999, %v4996
        %v5816 = vpack.c.b16 %v5003, %v5000
        %v5817 = vpack.c.b16 %v5004, %v5001
        %v5818 = vpack.c.b16 %v5005, %v5002
        %v5819 = vpack.c.b16 %v5009, %v5006
        %v5820 = vpack.c.b16 %v5010, %v5007
        %v5821 = vpack.c.b16 %v5011, %v5008
        %v5822 = vpack.c.b16 %v5015, %v5012
        %v5823 = vpack.c.b16 %v5016, %v5013
        %v5824 = vpack.c.b16 %v5017, %v5014
        %v5825 = vpack.c.b16 %v5021, %v5018
        %v5826 = vpack.c.b16 %v5022, %v5019
        %v5827 = vpack.c.b16 %v5023, %v5020
        %v5828 = vpack.c.b16 %v5027, %v5024
        %v5829 = vpack.c.b16 %v5028, %v5025
        %v5830 = vpack.c.b16 %v5029, %v5026
        %v5831 = vpack.c.b16 %v5033, %v5030
        %v5832 = vpack.c.b16 %v5034, %v5031
        %v5833 = vpack.c.b16 %v5035, %v5032
        %v5834 = vpack.c.b16 %v5039, %v5036
        %v5835 = vpack.c.b16 %v5040, %v5037
        %v5836 = vpack.c.b16 %v5041, %v5038
        %v5837 = vpack.c.b16 %v5045, %v5042
        %v5838 = vpack.c.b16 %v5046, %v5043
        %v5839 = vpack.c.b16 %v5047, %v5044
        %v5840 = vpack.c.b16 %v5051, %v5048
        %v5841 = vpack.c.b16 %v5052, %v5049
        %v5842 = vpack.c.b16 %v5053, %v5050
        %v5843 = vpack.c.b16 %v5057, %v5054
        %v5844 = vpack.c.b16 %v5058, %v5055
        %v5845 = vpack.c.b16 %v5059, %v5056
        %v5846 = vpack.c.b16 %v5063, %v5060
        %v5847 = vpack.c.b16 %v5064, %v5061
        %v5848 = vpack.c.b16 %v5065, %v5062
        %v5849 = vpack.c.b16 %v5069, %v5066
        %v5850 = vpack.c.b16 %v5070, %v5067
        %v5851 = vpack.c.b16 %v5071, %v5068
        %v5852 = vpack.c.b16 %v5075, %v5072
        %v5853 = vpack.c.b16 %v5076, %v5073
        %v5854 = vpack.c.b16 %v5077, %v5074
        %v5855 = vpack.c.b16 %v5081, %v5078
        %v5856 = vpack.c.b16 %v5082, %v5079
        %v5857 = vpack.c.b16 %v5083, %v5080
        %v5858 = vpack.c.b16 %v5087, %v5084
        %v5859 = vpack.c.b16 %v5088, %v5085
        %v5860 = vpack.c.b16 %v5089, %v5086
        %v5861 = vpack.c.b16 %v5093, %v5090
        %v5862 = vpack.c.b16 %v5094, %v5091
        %v5863 = vpack.c.b16 %v5095, %v5092
        %v5864 = vpack.c.b16 %v5099, %v5096
        %v5865 = vpack.c.b16 %v5100, %v5097
        %v5866 = vpack.c.b16 %v5101, %v5098
        %v5867 = vpack.c.b16 %v5105, %v5102
        %v5868 = vpack.c.b16 %v5106, %v5103
        %v5869 = vpack.c.b16 %v5107, %v5104
        %v5870 = vpack.c.b16 %v5111, %v5108
        %v5871 = vpack.c.b16 %v5112, %v5109
        %v5872 = vpack.c.b16 %v5113, %v5110
        %v5873 = vpack.c.b16 %v5117, %v5114
        %v5874 = vpack.c.b16 %v5118, %v5115
        %v5875 = vpack.c.b16 %v5119, %v5116
        %v5876 = vpack.c.b16 %v5123, %v5120
        %v5877 = vpack.c.b16 %v5124, %v5121
        %v5878 = vpack.c.b16 %v5125, %v5122
        %v5879 = vpack.c.b16 %v5129, %v5126
        %v5880 = vpack.c.b16 %v5130, %v5127
        %v5881 = vpack.c.b16 %v5131, %v5128
        %v5882 = vpack.c.b16 %v5135, %v5132
        %v5883 = vpack.c.b16 %v5136, %v5133
        %v5884 = vpack.c.b16 %v5137, %v5134
        %v5885 = vpack.c.b16 %v5141, %v5138
        %v5886 = vpack.c.b16 %v5142, %v5139
        %v5887 = vpack.c.b16 %v5143, %v5140
        %v5888 = vpack.c.b16 %v5147, %v5144
        %v5889 = vpack.c.b16 %v5148, %v5145
        %v5890 = vpack.c.b16 %v5149, %v5146
        %v5891 = vpack.c.b16 %v5153, %v5150
        %v5892 = vpack.c.b16 %v5154, %v5151
        %v5893 = vpack.c.b16 %v5155, %v5152
        %v5894 = vpack.c.b16 %v5159, %v5156
        %v5895 = vpack.c.b16 %v5160, %v5157
        %v5896 = vpack.c.b16 %v5161, %v5158
        %v5897 = vpack.c.b16 %v5165, %v5162
        %v5898 = vpack.c.b16 %v5166, %v5163
        %v5899 = vpack.c.b16 %v5167, %v5164
        %v5900 = vpack.c.b16 %v5171, %v5168
        %v5901 = vpack.c.b16 %v5172, %v5169
        %v5902 = vpack.c.b16 %v5173, %v5170
        %v5903 = vpack.c.b16 %v5177, %v5174
        %v5904 = vpack.c.b16 %v5178, %v5175
        %v5905 = vpack.c.b16 %v5179, %v5176
        %v5906 = vpack.c.b16 %v5183, %v5180
        %v5907 = vpack.c.b16 %v5184, %v5181
        %v5908 = vpack.c.b16 %v5185, %v5182
        %v5909 = vpack.c.b16 %v5189, %v5186
        %v5910 = vpack.c.b16 %v5190, %v5187
        %v5911 = vpack.c.b16 %v5191, %v5188
        %v5912 = vpack.c.b16 %v5195, %v5192
        %v5913 = vpack.c.b16 %v5196, %v5193
        %v5914 = vpack.c.b16 %v5197, %v5194
        %v5915 = vpack.c.b16 %v5201, %v5198
        %v5916 = vpack.c.b16 %v5202, %v5199
        %v5917 = vpack.c.b16 %v5203, %v5200
        %v5918 = vpack.c.b16 %v5207, %v5204
        %v5919 = vpack.c.b16 %v5208, %v5205
        %v5920 = vpack.c.b16 %v5209, %v5206
        %v5921 = vpack.c.b16 %v5213, %v5210
        %v5922 = vpack.c.b16 %v5214, %v5211
        %v5923 = vpack.c.b16 %v5215, %v5212
        %v5924 = vpack.c.b16 %v5219, %v5216
        %v5925 = vpack.c.b16 %v5220, %v5217
        %v5926 = vpack.c.b16 %v5221, %v5218
        %v5927 = vpack.c.b16 %v5225, %v5222
        %v5928 = vpack.c.b16 %v5226, %v5223
        %v5929 = vpack.c.b16 %v5227, %v5224
        %v5930 = vpack.c.b16 %v5231, %v5228
        %v5931 = vpack.c.b16 %v5232, %v5229
        %v5932 = vpack.c.b16 %v5233, %v5230
        %v5933 = vpack.c.b16 %v5237, %v5234
        %v5934 = vpack.c.b16 %v5238, %v5235
        %v5935 = vpack.c.b16 %v5239, %v5236
        %v5936 = vpack.c.b16 %v5243, %v5240
        %v5937 = vpack.c.b16 %v5244, %v5241
        %v5938 = vpack.c.b16 %v5245, %v5242
        %v5939 = vpack.c.b16 %v5249, %v5246
        %v5940 = vpack.c.b16 %v5250, %v5247
        %v5941 = vpack.c.b16 %v5251, %v5248
        %v5942 = vpack.c.b16 %v5255, %v5252
        %v5943 = vpack.c.b16 %v5256, %v5253
        %v5944 = vpack.c.b16 %v5257, %v5254
        %v5945 = vpack.c.b16 %v5261, %v5258
        %v5946 = vpack.c.b16 %v5262, %v5259
        %v5947 = vpack.c.b16 %v5263, %v5260
        %v5948 = vpack.c.b16 %v5267, %v5264
        %v5949 = vpack.c.b16 %v5268, %v5265
        %v5950 = vpack.c.b16 %v5269, %v5266
        %v5951 = vpack.c.b16 %v5273, %v5270
        %v5952 = vpack.c.b16 %v5274, %v5271
        %v5953 = vpack.c.b16 %v5275, %v5272
        %v5954 = vpack.c.b16 %v5279, %v5276
        %v5955 = vpack.c.b16 %v5280, %v5277
        %v5956 = vpack.c.b16 %v5281, %v5278
        %v5957 = vpack.c.b16 %v5285, %v5282
        %v5958 = vpack.c.b16 %v5286, %v5283
        %v5959 = vpack.c.b16 %v5287, %v5284
        %v5960 = vpack.c.b16 %v5291, %v5288
        %v5961 = vpack.c.b16 %v5292, %v5289
        %v5962 = vpack.c.b16 %v5293, %v5290
        %v5963 = vpack.c.b16 %v5297, %v5294
        %v5964 = vpack.c.b16 %v5298, %v5295
        %v5965 = vpack.c.b16 %v5299, %v5296
        %v5966 = vpack.c.b16 %v5303, %v5300
        %v5967 = vpack.c.b16 %v5304, %v5301
        %v5968 = vpack.c.b16 %v5305, %v5302
        %v5969 = vpack.c.b16 %v5309, %v5306
        %v5970 = vpack.c.b16 %v5310, %v5307
        %v5971 = vpack.c.b16 %v5311, %v5308
        %v5972 = vpack.c.b16 %v5315, %v5312
        %v5973 = vpack.c.b16 %v5316, %v5313
        %v5974 = vpack.c.b16 %v5317, %v5314
        %v5975 = vpack.c.b16 %v5321, %v5318
        %v5976 = vpack.c.b16 %v5322, %v5319
        %v5977 = vpack.c.b16 %v5323, %v5320
        %v5978 = vpack.c.b16 %v5327, %v5324
        %v5979 = vpack.c.b16 %v5328, %v5325
        %v5980 = vpack.c.b16 %v5329, %v5326
        %v5981 = vpack.c.b16 %v5333, %v5330
        %v5982 = vpack.c.b16 %v5334, %v5331
        %v5983 = vpack.c.b16 %v5335, %v5332
        %v5984 = vpack.c.b16 %v5339, %v5336
        %v5985 = vpack.c.b16 %v5340, %v5337
        %v5986 = vpack.c.b16 %v5341, %v5338
        %v5987 = vpack.c.b16 %v5345, %v5342
        %v5988 = vpack.c.b16 %v5346, %v5343
        %v5989 = vpack.c.b16 %v5347, %v5344
        %v5990 = vpack.c.b16 %v5351, %v5348
        %v5991 = vpack.c.b16 %v5352, %v5349
        %v5992 = vpack.c.b16 %v5353, %v5350
        %v5993 = vpack.c.b16 %v5357, %v5354
        %v5994 = vpack.c.b16 %v5358, %v5355
        %v5995 = vpack.c.b16 %v5359, %v5356
        %v5996 = vpack.c.b16 %v5363, %v5360
        %v5997 = vpack.c.b16 %v5364, %v5361
        %v5998 = vpack.c.b16 %v5365, %v5362
        %v5999 = vpack.c.b16 %v5369, %v5366
        %v6000 = vpack.c.b16 %v5370, %v5367
        %v6001 = vpack.c.b16 %v5371, %v5368
        %v6002 = vpack.c.b16 %v5375, %v5372
        %v6003 = vpack.c.b16 %v5376, %v5373
        %v6004 = vpack.c.b16 %v5377, %v5374
        %v6005 = vpack.c.b16 %v5381, %v5378
        %v6006 = vpack.c.b16 %v5382, %v5379
        %v6007 = vpack.c.b16 %v5383, %v5380
        %v6008 = vpack.c.b16 %v5387, %v5384
        %v6009 = vpack.c.b16 %v5388, %v5385
        %v6010 = vpack.c.b16 %v5389, %v5386
        %v6011 = vpack.c.b16 %v5393, %v5390
        %v6012 = vpack.c.b16 %v5394, %v5391
        %v6013 = vpack.c.b16 %v5395, %v5392
        %v6014 = vpack.c.b16 %v5399, %v5396
        %v6015 = vpack.c.b16 %v5400, %v5397
        %v6016 = vpack.c.b16 %v5401, %v5398
        %v6017 = vpack.c.b16 %v5405, %v5402
        %v6018 = vpack.c.b16 %v5406, %v5403
        %v6019 = vpack.c.b16 %v5407, %v5404
        %v6020 = vpack.c.b16 %v5411, %v5408
        %v6021 = vpack.c.b16 %v5412, %v5409
        %v6022 = vpack.c.b16 %v5413, %v5410
        %v6023 = vpack.c.b16 %v5417, %v5414
        %v6024 = vpack.c.b16 %v5418, %v5415
        %v6025 = vpack.c.b16 %v5419, %v5416
        %v6026 = vpack.c.b16 %v5423, %v5420
        %v6027 = vpack.c.b16 %v5424, %v5421
        %v6028 = vpack.c.b16 %v5425, %v5422
        %v6029 = vpack.c.b16 %v5429, %v5426
        %v6030 = vpack.c.b16 %v5430, %v5427
        %v6031 = vpack.c.b16 %v5431, %v5428
        %v6032 = vpack.c.b16 %v5435, %v5432
        %v6033 = vpack.c.b16 %v5436, %v5433
        %v6034 = vpack.c.b16 %v5437, %v5434
        %v6035 = vpack.c.b16 %v5441, %v5438
        %v6036 = vpack.c.b16 %v5442, %v5439
        %v6037 = vpack.c.b16 %v5443, %v5440
        %v6038 = vpack.c.b16 %v5447, %v5444
        %v6039 = vpack.c.b16 %v5448, %v5445
        %v6040 = vpack.c.b16 %v5449, %v5446
        %v6041 = vpack.c.b16 %v5453, %v5450
        %v6042 = vpack.c.b16 %v5454, %v5451
        %v6043 = vpack.c.b16 %v5455, %v5452
        %v6044 = vpack.c.b16 %v5459, %v5456
        %v6045 = vpack.c.b16 %v5460, %v5457
        %v6046 = vpack.c.b16 %v5461, %v5458
        %v6047 = vpack.c.b16 %v5465, %v5462
        %v6048 = vpack.c.b16 %v5466, %v5463
        %v6049 = vpack.c.b16 %v5467, %v5464
        %v6050 = vpack.c.b16 %v5471, %v5468
        %v6051 = vpack.c.b16 %v5472, %v5469
        %v6052 = vpack.c.b16 %v5473, %v5470
        %v6053 = vpack.c.b16 %v5477, %v5474
        %v6054 = vpack.c.b16 %v5478, %v5475
        %v6055 = vpack.c.b16 %v5479, %v5476
        %v6056 = vpack.c.b16 %v5483, %v5480
        %v6057 = vpack.c.b16 %v5484, %v5481
        %v6058 = vpack.c.b16 %v5485, %v5482
        %v6059 = vpack.c.b16 %v5489, %v5486
        %v6060 = vpack.c.b16 %v5490, %v5487
        %v6061 = vpack.c.b16 %v5491, %v5488
        %v6062 = vpack.c.b16 %v5495, %v5492
        %v6063 = vpack.c.b16 %v5496, %v5493
        %v6064 = vpack.c.b16 %v5497, %v5494
        %v6065 = vpack.c.b16 %v5501, %v5498
        %v6066 = vpack.c.b16 %v5502, %v5499
        %v6067 = vpack.c.b16 %v5503, %v5500
        %v6068 = vpack.c.b16 %v5507, %v5504
        %v6069 = vpack.c.b16 %v5508, %v5505
        %v6070 = vpack.c.b16 %v5509, %v5506
        %v6071 = vpack.c.b16 %v5513, %v5510
        %v6072 = vpack.c.b16 %v5514, %v5511
        %v6073 = vpack.c.b16 %v5515, %v5512
        %v6074 = vpack.c.b16 %v5519, %v5516
        %v6075 = vpack.c.b16 %v5520, %v5517
        %v6076 = vpack.c.b16 %v5521, %v5518
        %v6077 = vpack.c.b16 %v5525, %v5522
        %v6078 = vpack.c.b16 %v5526, %v5523
        %v6079 = vpack.c.b16 %v5527, %v5524
        %v6080 = vpack.c.b16 %v5531, %v5528
        %v6081 = vpack.c.b16 %v5532, %v5529
        %v6082 = vpack.c.b16 %v5533, %v5530
        %v6083 = vpack.c.b16 %v5537, %v5534
        %v6084 = vpack.c.b16 %v5538, %v5535
        %v6085 = vpack.c.b16 %v5539, %v5536
        %v6086 = vpack.c.b16 %v5543, %v5540
        %v6087 = vpack.c.b16 %v5544, %v5541
        %v6088 = vpack.c.b16 %v5545, %v5542
        %v6089 = vpack.c.b16 %v5549, %v5546
        %v6090 = vpack.c.b16 %v5550, %v5547
        %v6091 = vpack.c.b16 %v5551, %v5548
        %v6092 = vpack.c.b16 %v5555, %v5552
        %v6093 = vpack.c.b16 %v5556, %v5553
        %v6094 = vpack.c.b16 %v5557, %v5554
        %v6095 = vpack.c.b16 %v5561, %v5558
        %v6096 = vpack.c.b16 %v5562, %v5559
        %v6097 = vpack.c.b16 %v5563, %v5560
        %v6098 = vpack.c.b16 %v5567, %v5564
        %v6099 = vpack.c.b16 %v5568, %v5565
        %v6100 = vpack.c.b16 %v5569, %v5566
        %v6101 = vpack.c.b16 %v5573, %v5570
        %v6102 = vpack.c.b16 %v5574, %v5571
        %v6103 = vpack.c.b16 %v5575, %v5572
        %v6104 = vpack.c.b16 %v5579, %v5576
        %v6105 = vpack.c.b16 %v5580, %v5577
        %v6106 = vpack.c.b16 %v5581, %v5578
        %v6107 = vpack.c.b16 %v5585, %v5582
        %v6108 = vpack.c.b16 %v5586, %v5583
        %v6109 = vpack.c.b16 %v5587, %v5584
        %v6110 = vpack.c.b16 %v5591, %v5588
        %v6111 = vpack.c.b16 %v5592, %v5589
        %v6112 = vpack.c.b16 %v5593, %v5590
        %v6113 = vpack.c.b16 %v5597, %v5594
        %v6114 = vpack.c.b16 %v5598, %v5595
        %v6115 = vpack.c.b16 %v5599, %v5596
        %v6116 = vpack.c.b16 %v5603, %v5600
        %v6117 = vpack.c.b16 %v5604, %v5601
        %v6118 = vpack.c.b16 %v5605, %v5602
        %v6119 = vpack.c.b16 %v5609, %v5606
        %v6120 = vpack.c.b16 %v5610, %v5607
        %v6121 = vpack.c.b16 %v5611, %v5608
        %v6122 = vpack.c.b16 %v5615, %v5612
        %v6123 = vpack.c.b16 %v5616, %v5613
        %v6124 = vpack.c.b16 %v5617, %v5614
        %v6125 = vpack.c.b16 %v5621, %v5618
        %v6126 = vpack.c.b16 %v5622, %v5619
        %v6127 = vpack.c.b16 %v5623, %v5620
        %v6128 = vpack.c.b16 %v5627, %v5624
        %v6129 = vpack.c.b16 %v5628, %v5625
        %v6130 = vpack.c.b16 %v5629, %v5626
        %v6131 = vpack.c.b16 %v5633, %v5630
        %v6132 = vpack.c.b16 %v5634, %v5631
        %v6133 = vpack.c.b16 %v5635, %v5632
        %v6134 = vpack.c.b16 %v5639, %v5636
        %v6135 = vpack.c.b16 %v5640, %v5637
        %v6136 = vpack.c.b16 %v5641, %v5638
        %v6137 = vpack.c.b16 %v5645, %v5642
        %v6138 = vpack.c.b16 %v5646, %v5643
        %v6139 = vpack.c.b16 %v5647, %v5644
        %v6140 = vpack.c.b16 %v5651, %v5648
        %v6141 = vpack.c.b16 %v5652, %v5649
        %v6142 = vpack.c.b16 %v5653, %v5650
        %v6143 = vpack.c.b16 %v5657, %v5654
        %v6144 = vpack.c.b16 %v5658, %v5655
        %v6145 = vpack.c.b16 %v5659, %v5656
        %v6146 = vpack.c.b16 %v5663, %v5660
        %v6147 = vpack.c.b16 %v5664, %v5661
        %v6148 = vpack.c.b16 %v5665, %v5662
        %v6149 = vpack.c.b16 %v5669, %v5666
        %v6150 = vpack.c.b16 %v5670, %v5667
        %v6151 = vpack.c.b16 %v5671, %v5668
        %6632 = vmatprep.subr.bf16.mxu0 %v5694
        %6633 = vmatpush1.bf16.msra.mxu0 %v5693
        %6634 = vmatprep.subr.bf16.mxu0 %v5691
        %6635 = vmatpush1.bf16.msra.mxu0 %v5690
        %6636 = vmatprep.subr.bf16.mxu0 %v5688
        %6637 = vmatpush1.bf16.msra.mxu0 %v5687
        %6638 = vmatprep.subr.bf16.mxu0 %v5685
        %6639 = vmatpush1.bf16.msra.mxu0 %v5684
        %6640 = vmatprep.subr.bf16.mxu0 %v5682
        %6641 = vmatpush1.bf16.msra.mxu0 %v5681
        %6642 = vmatprep.subr.bf16.mxu0 %v5679
        %6643 = vmatpush1.bf16.msra.mxu0 %v5678
        %6644 = vmatprep.subr.bf16.mxu0 %v5676
        %6645 = vmatpush1.bf16.msra.mxu0 %v5675
        %6646 = vmatprep.subr.bf16.mxu0 %v5673
        %6647 = vmatpush1.bf16.msra.mxu0 %v5672
        %6648 = vmatprep.subr.bf16.mxu0 %v5718
        %6649 = vmatpush2.bf16.msra.mxu0 %v5717
        %6650 = vmatprep.subr.bf16.mxu0 %v5715
        %6651 = vmatpush2.bf16.msra.mxu0 %v5714
        %6652 = vmatprep.subr.bf16.mxu0 %v5712
        %6653 = vmatpush2.bf16.msra.mxu0 %v5711
        %6654 = vmatprep.subr.bf16.mxu0 %v5709
        %6655 = vmatpush2.bf16.msra.mxu0 %v5708
        %6656 = vmatprep.subr.bf16.mxu0 %v5706
        %6657 = vmatpush2.bf16.msra.mxu0 %v5705
        %6658 = vmatprep.subr.bf16.mxu0 %v5703
        %6659 = vmatpush2.bf16.msra.mxu0 %v5702
        %6660 = vmatprep.subr.bf16.mxu0 %v5700
        %6661 = vmatpush2.bf16.msra.mxu0 %v5699
        %6662 = vmatprep.subr.bf16.mxu0 %v5697
        %6663 = vmatpush2.bf16.msra.mxu0 %v5696
        %6664 = vmatprep.mubr.bf16.mxu0 %v3753
        %6665 = vmatmul.mubr.bf16.gmra.mxu0 %v3752
        %v6666 = vpop.f32.mrf.mxu0
        %v6667 = vadd.f32 %v3260, %v6666
        %v6668 = vpop.f32.mrf.mxu0
        %v6669 = vadd.f32 %v3264, %v6668
        %v6670 = vpop.f32.mrf.mxu0
        %v6671 = vadd.f32 %v3260, %v6670
        %v6672 = vpop.f32.mrf.mxu0
        %v6673 = vadd.f32 %v3264, %v6672
        %6674 = vmatprep.mubr.bf16.mxu0 %v3773
        %6675 = vmatmul.mubr.bf16.gmra.mxu0 %v3772
        %v6676 = vpop.f32.mrf.mxu0
        %v6677 = vadd.f32 %v3260, %v6676
        %v6678 = vpop.f32.mrf.mxu0
        %v6679 = vadd.f32 %v3264, %v6678
        %v6680 = vpop.f32.mrf.mxu0
        %v6681 = vadd.f32 %v3260, %v6680
        %v6682 = vpop.f32.mrf.mxu0
        %v6683 = vadd.f32 %v3264, %v6682
        %6684 = vmatprep.mubr.bf16.mxu0 %v3793
        %6685 = vmatmul.mubr.bf16.gmra.mxu0 %v3792
        %v6686 = vpop.f32.mrf.mxu0
        %v6687 = vadd.f32 %v3260, %v6686
        %v6688 = vpop.f32.mrf.mxu0
        %v6689 = vadd.f32 %v3264, %v6688
        %v6690 = vpop.f32.mrf.mxu0
        %v6691 = vadd.f32 %v3260, %v6690
        %v6692 = vpop.f32.mrf.mxu0
        %v6693 = vadd.f32 %v3264, %v6692
        %6694 = vmatprep.mubr.bf16.mxu0 %v3813
        %6695 = vmatmul.mubr.bf16.gmra.mxu0 %v3812
        %v6696 = vpop.f32.mrf.mxu0
        %v6697 = vadd.f32 %v3260, %v6696
        %v6698 = vpop.f32.mrf.mxu0
        %v6699 = vadd.f32 %v3264, %v6698
        %v6700 = vpop.f32.mrf.mxu0
        %v6701 = vadd.f32 %v3260, %v6700
        %v6702 = vpop.f32.mrf.mxu0
        %v6703 = vadd.f32 %v3264, %v6702
        %6704 = vmatprep.mubr.bf16.mxu0 %v3833
        %6705 = vmatmul.mubr.bf16.gmra.mxu0 %v3832
        %v6706 = vpop.f32.mrf.mxu0
        %v6707 = vadd.f32 %v3260, %v6706
        %v6708 = vpop.f32.mrf.mxu0
        %v6709 = vadd.f32 %v3264, %v6708
        %v6710 = vpop.f32.mrf.mxu0
        %v6711 = vadd.f32 %v3260, %v6710
        %v6712 = vpop.f32.mrf.mxu0
        %v6713 = vadd.f32 %v3264, %v6712
        %6714 = vmatprep.mubr.bf16.mxu0 %v3853
        %6715 = vmatmul.mubr.bf16.gmra.mxu0 %v3852
        %v6716 = vpop.f32.mrf.mxu0
        %v6717 = vadd.f32 %v3260, %v6716
        %v6718 = vpop.f32.mrf.mxu0
        %v6719 = vadd.f32 %v3264, %v6718
        %v6720 = vpop.f32.mrf.mxu0
        %v6721 = vadd.f32 %v3260, %v6720
        %v6722 = vpop.f32.mrf.mxu0
        %v6723 = vadd.f32 %v3264, %v6722
        %6724 = vmatprep.mubr.bf16.mxu0 %v3873
        %6725 = vmatmul.mubr.bf16.gmra.mxu0 %v3872
        %v6726 = vpop.f32.mrf.mxu0
        %v6727 = vadd.f32 %v3260, %v6726
        %v6728 = vpop.f32.mrf.mxu0
        %v6729 = vadd.f32 %v3264, %v6728
        %v6730 = vpop.f32.mrf.mxu0
        %v6731 = vadd.f32 %v3260, %v6730
        %v6732 = vpop.f32.mrf.mxu0
        %v6733 = vadd.f32 %v3264, %v6732
        %6734 = vmatprep.mubr.bf16.mxu0 %v3893
        %6735 = vmatmul.mubr.bf16.gmra.mxu0 %v3892
        %v6736 = vpop.f32.mrf.mxu0
        %v6737 = vadd.f32 %v3260, %v6736
        %v6738 = vpop.f32.mrf.mxu0
        %v6739 = vadd.f32 %v3264, %v6738
        %v6740 = vpop.f32.mrf.mxu0
        %v6741 = vadd.f32 %v3260, %v6740
        %v6742 = vpop.f32.mrf.mxu0
        %v6743 = vadd.f32 %v3264, %v6742
        %6744 = vdwg.mxu0
        %6745 = vmatprep.subr.bf16.mxu0 %v5742
        %6746 = vmatpush1.bf16.msra.mxu0 %v5741
        %6747 = vmatprep.subr.bf16.mxu0 %v5739
        %6748 = vmatpush1.bf16.msra.mxu0 %v5738
        %6749 = vmatprep.subr.bf16.mxu0 %v5736
        %6750 = vmatpush1.bf16.msra.mxu0 %v5735
        %6751 = vmatprep.subr.bf16.mxu0 %v5733
        %6752 = vmatpush1.bf16.msra.mxu0 %v5732
        %6753 = vmatprep.subr.bf16.mxu0 %v5730
        %6754 = vmatpush1.bf16.msra.mxu0 %v5729
        %6755 = vmatprep.subr.bf16.mxu0 %v5727
        %6756 = vmatpush1.bf16.msra.mxu0 %v5726
        %6757 = vmatprep.subr.bf16.mxu0 %v5724
        %6758 = vmatpush1.bf16.msra.mxu0 %v5723
        %6759 = vmatprep.subr.bf16.mxu0 %v5721
        %6760 = vmatpush1.bf16.msra.mxu0 %v5720
        %6761 = vmatprep.subr.bf16.mxu0 %v5766
        %6762 = vmatpush2.bf16.msra.mxu0 %v5765
        %6763 = vmatprep.subr.bf16.mxu0 %v5763
        %6764 = vmatpush2.bf16.msra.mxu0 %v5762
        %6765 = vmatprep.subr.bf16.mxu0 %v5760
        %6766 = vmatpush2.bf16.msra.mxu0 %v5759
        %6767 = vmatprep.subr.bf16.mxu0 %v5757
        %6768 = vmatpush2.bf16.msra.mxu0 %v5756
        %6769 = vmatprep.subr.bf16.mxu0 %v5754
        %6770 = vmatpush2.bf16.msra.mxu0 %v5753
        %6771 = vmatprep.subr.bf16.mxu0 %v5751
        %6772 = vmatpush2.bf16.msra.mxu0 %v5750
        %6773 = vmatprep.subr.bf16.mxu0 %v5748
        %6774 = vmatpush2.bf16.msra.mxu0 %v5747
        %6775 = vmatprep.subr.bf16.mxu0 %v5745
        %6776 = vmatpush2.bf16.msra.mxu0 %v5744
        %6777 = vmatprep.mubr.bf16.mxu0 %v3755
        %6778 = vmatmul.mubr.bf16.gmra.mxu0 %v3754
        %v6779 = vpop.f32.mrf.mxu0
        %v6780 = vadd.f32 %v6667, %v6779
        %v6781 = vpop.f32.mrf.mxu0
        %v6782 = vadd.f32 %v6669, %v6781
        %v6783 = vpop.f32.mrf.mxu0
        %v6784 = vadd.f32 %v6671, %v6783
        %v6785 = vpop.f32.mrf.mxu0
        %v6786 = vadd.f32 %v6673, %v6785
        %6787 = vmatprep.mubr.bf16.mxu0 %v3775
        %6788 = vmatmul.mubr.bf16.gmra.mxu0 %v3774
        %v6789 = vpop.f32.mrf.mxu0
        %v6790 = vadd.f32 %v6677, %v6789
        %v6791 = vpop.f32.mrf.mxu0
        %v6792 = vadd.f32 %v6679, %v6791
        %v6793 = vpop.f32.mrf.mxu0
        %v6794 = vadd.f32 %v6681, %v6793
        %v6795 = vpop.f32.mrf.mxu0
        %v6796 = vadd.f32 %v6683, %v6795
        %6797 = vmatprep.mubr.bf16.mxu0 %v3795
        %6798 = vmatmul.mubr.bf16.gmra.mxu0 %v3794
        %v6799 = vpop.f32.mrf.mxu0
        %v6800 = vadd.f32 %v6687, %v6799
        %v6801 = vpop.f32.mrf.mxu0
        %v6802 = vadd.f32 %v6689, %v6801
        %v6803 = vpop.f32.mrf.mxu0
        %v6804 = vadd.f32 %v6691, %v6803
        %v6805 = vpop.f32.mrf.mxu0
        %v6806 = vadd.f32 %v6693, %v6805
        %6807 = vmatprep.mubr.bf16.mxu0 %v3815
        %6808 = vmatmul.mubr.bf16.gmra.mxu0 %v3814
        %v6809 = vpop.f32.mrf.mxu0
        %v6810 = vadd.f32 %v6697, %v6809
        %v6811 = vpop.f32.mrf.mxu0
        %v6812 = vadd.f32 %v6699, %v6811
        %v6813 = vpop.f32.mrf.mxu0
        %v6814 = vadd.f32 %v6701, %v6813
        %v6815 = vpop.f32.mrf.mxu0
        %v6816 = vadd.f32 %v6703, %v6815
        %6817 = vmatprep.mubr.bf16.mxu0 %v3835
        %6818 = vmatmul.mubr.bf16.gmra.mxu0 %v3834
        %v6819 = vpop.f32.mrf.mxu0
        %v6820 = vadd.f32 %v6707, %v6819
        %v6821 = vpop.f32.mrf.mxu0
        %v6822 = vadd.f32 %v6709, %v6821
        %v6823 = vpop.f32.mrf.mxu0
        %v6824 = vadd.f32 %v6711, %v6823
        %v6825 = vpop.f32.mrf.mxu0
        %v6826 = vadd.f32 %v6713, %v6825
        %6827 = vmatprep.mubr.bf16.mxu0 %v3855
        %6828 = vmatmul.mubr.bf16.gmra.mxu0 %v3854
        %v6829 = vpop.f32.mrf.mxu0
        %v6830 = vadd.f32 %v6717, %v6829
        %v6831 = vpop.f32.mrf.mxu0
        %v6832 = vadd.f32 %v6719, %v6831
        %v6833 = vpop.f32.mrf.mxu0
        %v6834 = vadd.f32 %v6721, %v6833
        %v6835 = vpop.f32.mrf.mxu0
        %v6836 = vadd.f32 %v6723, %v6835
        %6837 = vmatprep.mubr.bf16.mxu0 %v3875
        %6838 = vmatmul.mubr.bf16.gmra.mxu0 %v3874
        %v6839 = vpop.f32.mrf.mxu0
        %v6840 = vadd.f32 %v6727, %v6839
        %v6841 = vpop.f32.mrf.mxu0
        %v6842 = vadd.f32 %v6729, %v6841
        %v6843 = vpop.f32.mrf.mxu0
        %v6844 = vadd.f32 %v6731, %v6843
        %v6845 = vpop.f32.mrf.mxu0
        %v6846 = vadd.f32 %v6733, %v6845
        %6847 = vmatprep.mubr.bf16.mxu0 %v3895
        %6848 = vmatmul.mubr.bf16.gmra.mxu0 %v3894
        %v6849 = vpop.f32.mrf.mxu0
        %v6850 = vadd.f32 %v6737, %v6849
        %v6851 = vpop.f32.mrf.mxu0
        %v6852 = vadd.f32 %v6739, %v6851
        %v6853 = vpop.f32.mrf.mxu0
        %v6854 = vadd.f32 %v6741, %v6853
        %v6855 = vpop.f32.mrf.mxu0
        %v6856 = vadd.f32 %v6743, %v6855
        %6857 = vdwg.mxu0
        %6858 = vmatprep.subr.bf16.mxu0 %v5790
        %6859 = vmatpush1.bf16.msra.mxu0 %v5789
        %6860 = vmatprep.subr.bf16.mxu0 %v5787
        %6861 = vmatpush1.bf16.msra.mxu0 %v5786
        %6862 = vmatprep.subr.bf16.mxu0 %v5784
        %6863 = vmatpush1.bf16.msra.mxu0 %v5783
        %6864 = vmatprep.subr.bf16.mxu0 %v5781
        %6865 = vmatpush1.bf16.msra.mxu0 %v5780
        %6866 = vmatprep.subr.bf16.mxu0 %v5778
        %6867 = vmatpush1.bf16.msra.mxu0 %v5777
        %6868 = vmatprep.subr.bf16.mxu0 %v5775
        %6869 = vmatpush1.bf16.msra.mxu0 %v5774
        %6870 = vmatprep.subr.bf16.mxu0 %v5772
        %6871 = vmatpush1.bf16.msra.mxu0 %v5771
        %6872 = vmatprep.subr.bf16.mxu0 %v5769
        %6873 = vmatpush1.bf16.msra.mxu0 %v5768
        %6874 = vmatprep.subr.bf16.mxu0 %v5814
        %6875 = vmatpush2.bf16.msra.mxu0 %v5813
        %6876 = vmatprep.subr.bf16.mxu0 %v5811
        %6877 = vmatpush2.bf16.msra.mxu0 %v5810
        %6878 = vmatprep.subr.bf16.mxu0 %v5808
        %6879 = vmatpush2.bf16.msra.mxu0 %v5807
        %6880 = vmatprep.subr.bf16.mxu0 %v5805
        %6881 = vmatpush2.bf16.msra.mxu0 %v5804
        %6882 = vmatprep.subr.bf16.mxu0 %v5802
        %6883 = vmatpush2.bf16.msra.mxu0 %v5801
        %6884 = vmatprep.subr.bf16.mxu0 %v5799
        %6885 = vmatpush2.bf16.msra.mxu0 %v5798
        %6886 = vmatprep.subr.bf16.mxu0 %v5796
        %6887 = vmatpush2.bf16.msra.mxu0 %v5795
        %6888 = vmatprep.subr.bf16.mxu0 %v5793
        %6889 = vmatpush2.bf16.msra.mxu0 %v5792
        %6890 = vmatprep.mubr.bf16.mxu0 %v3757
        %6891 = vmatmul.mubr.bf16.gmra.mxu0 %v3756
        %v6892 = vpop.f32.mrf.mxu0
        %v6893 = vadd.f32 %v6780, %v6892
        %v6894 = vpop.f32.mrf.mxu0
        %v6895 = vadd.f32 %v6782, %v6894
        %v6896 = vpop.f32.mrf.mxu0
        %v6897 = vadd.f32 %v6784, %v6896
        %v6898 = vpop.f32.mrf.mxu0
        %v6899 = vadd.f32 %v6786, %v6898
        %6900 = vmatprep.mubr.bf16.mxu0 %v3777
        %6901 = vmatmul.mubr.bf16.gmra.mxu0 %v3776
        %v6902 = vpop.f32.mrf.mxu0
        %v6903 = vadd.f32 %v6790, %v6902
        %v6904 = vpop.f32.mrf.mxu0
        %v6905 = vadd.f32 %v6792, %v6904
        %v6906 = vpop.f32.mrf.mxu0
        %v6907 = vadd.f32 %v6794, %v6906
        %v6908 = vpop.f32.mrf.mxu0
        %v6909 = vadd.f32 %v6796, %v6908
        %6910 = vmatprep.mubr.bf16.mxu0 %v3797
        %6911 = vmatmul.mubr.bf16.gmra.mxu0 %v3796
        %v6912 = vpop.f32.mrf.mxu0
        %v6913 = vadd.f32 %v6800, %v6912
        %v6914 = vpop.f32.mrf.mxu0
        %v6915 = vadd.f32 %v6802, %v6914
        %v6916 = vpop.f32.mrf.mxu0
        %v6917 = vadd.f32 %v6804, %v6916
        %v6918 = vpop.f32.mrf.mxu0
        %v6919 = vadd.f32 %v6806, %v6918
        %6920 = vmatprep.mubr.bf16.mxu0 %v3817
        %6921 = vmatmul.mubr.bf16.gmra.mxu0 %v3816
        %v6922 = vpop.f32.mrf.mxu0
        %v6923 = vadd.f32 %v6810, %v6922
        %v6924 = vpop.f32.mrf.mxu0
        %v6925 = vadd.f32 %v6812, %v6924
        %v6926 = vpop.f32.mrf.mxu0
        %v6927 = vadd.f32 %v6814, %v6926
        %v6928 = vpop.f32.mrf.mxu0
        %v6929 = vadd.f32 %v6816, %v6928
        %6930 = vmatprep.mubr.bf16.mxu0 %v3837
        %6931 = vmatmul.mubr.bf16.gmra.mxu0 %v3836
        %v6932 = vpop.f32.mrf.mxu0
        %v6933 = vadd.f32 %v6820, %v6932
        %v6934 = vpop.f32.mrf.mxu0
        %v6935 = vadd.f32 %v6822, %v6934
        %v6936 = vpop.f32.mrf.mxu0
        %v6937 = vadd.f32 %v6824, %v6936
        %v6938 = vpop.f32.mrf.mxu0
        %v6939 = vadd.f32 %v6826, %v6938
        %6940 = vmatprep.mubr.bf16.mxu0 %v3857
        %6941 = vmatmul.mubr.bf16.gmra.mxu0 %v3856
        %v6942 = vpop.f32.mrf.mxu0
        %v6943 = vadd.f32 %v6830, %v6942
        %v6944 = vpop.f32.mrf.mxu0
        %v6945 = vadd.f32 %v6832, %v6944
        %v6946 = vpop.f32.mrf.mxu0
        %v6947 = vadd.f32 %v6834, %v6946
        %v6948 = vpop.f32.mrf.mxu0
        %v6949 = vadd.f32 %v6836, %v6948
        %6950 = vmatprep.mubr.bf16.mxu0 %v3877
        %6951 = vmatmul.mubr.bf16.gmra.mxu0 %v3876
        %v6952 = vpop.f32.mrf.mxu0
        %v6953 = vadd.f32 %v6840, %v6952
        %v6954 = vpop.f32.mrf.mxu0
        %v6955 = vadd.f32 %v6842, %v6954
        %v6956 = vpop.f32.mrf.mxu0
        %v6957 = vadd.f32 %v6844, %v6956
        %v6958 = vpop.f32.mrf.mxu0
        %v6959 = vadd.f32 %v6846, %v6958
        %6960 = vmatprep.mubr.bf16.mxu0 %v3897
        %6961 = vmatmul.mubr.bf16.gmra.mxu0 %v3896
        %v6962 = vpop.f32.mrf.mxu0
        %v6963 = vadd.f32 %v6850, %v6962
        %v6964 = vpop.f32.mrf.mxu0
        %v6965 = vadd.f32 %v6852, %v6964
        %v6966 = vpop.f32.mrf.mxu0
        %v6967 = vadd.f32 %v6854, %v6966
        %v6968 = vpop.f32.mrf.mxu0
        %v6969 = vadd.f32 %v6856, %v6968
        %6970 = vdwg.mxu0
        %6971 = vmatprep.subr.bf16.mxu0 %v5838
        %6972 = vmatpush1.bf16.msra.mxu0 %v5837
        %6973 = vmatprep.subr.bf16.mxu0 %v5835
        %6974 = vmatpush1.bf16.msra.mxu0 %v5834
        %6975 = vmatprep.subr.bf16.mxu0 %v5832
        %6976 = vmatpush1.bf16.msra.mxu0 %v5831
        %6977 = vmatprep.subr.bf16.mxu0 %v5829
        %6978 = vmatpush1.bf16.msra.mxu0 %v5828
        %6979 = vmatprep.subr.bf16.mxu0 %v5826
        %6980 = vmatpush1.bf16.msra.mxu0 %v5825
        %6981 = vmatprep.subr.bf16.mxu0 %v5823
        %6982 = vmatpush1.bf16.msra.mxu0 %v5822
        %6983 = vmatprep.subr.bf16.mxu0 %v5820
        %6984 = vmatpush1.bf16.msra.mxu0 %v5819
        %6985 = vmatprep.subr.bf16.mxu0 %v5817
        %6986 = vmatpush1.bf16.msra.mxu0 %v5816
        %6987 = vmatprep.subr.bf16.mxu0 %v5862
        %6988 = vmatpush2.bf16.msra.mxu0 %v5861
        %6989 = vmatprep.subr.bf16.mxu0 %v5859
        %6990 = vmatpush2.bf16.msra.mxu0 %v5858
        %6991 = vmatprep.subr.bf16.mxu0 %v5856
        %6992 = vmatpush2.bf16.msra.mxu0 %v5855
        %6993 = vmatprep.subr.bf16.mxu0 %v5853
        %6994 = vmatpush2.bf16.msra.mxu0 %v5852
        %6995 = vmatprep.subr.bf16.mxu0 %v5850
        %6996 = vmatpush2.bf16.msra.mxu0 %v5849
        %6997 = vmatprep.subr.bf16.mxu0 %v5847
        %6998 = vmatpush2.bf16.msra.mxu0 %v5846
        %6999 = vmatprep.subr.bf16.mxu0 %v5844
        %7000 = vmatpush2.bf16.msra.mxu0 %v5843
        %7001 = vmatprep.subr.bf16.mxu0 %v5841
        %7002 = vmatpush2.bf16.msra.mxu0 %v5840
        %7003 = vmatprep.mubr.bf16.mxu0 %v3759
        %7004 = vmatmul.mubr.bf16.gmra.mxu0 %v3758
        %v7005 = vpop.f32.mrf.mxu0
        %v7006 = vadd.f32 %v6893, %v7005
        %v7007 = vpop.f32.mrf.mxu0
        %v7008 = vadd.f32 %v6895, %v7007
        %v7009 = vpop.f32.mrf.mxu0
        %v7010 = vadd.f32 %v6897, %v7009
        %v7011 = vpop.f32.mrf.mxu0
        %v7012 = vadd.f32 %v6899, %v7011
        %7013 = vmatprep.mubr.bf16.mxu0 %v3779
        %7014 = vmatmul.mubr.bf16.gmra.mxu0 %v3778
        %v7015 = vpop.f32.mrf.mxu0
        %v7016 = vadd.f32 %v6903, %v7015
        %v7017 = vpop.f32.mrf.mxu0
        %v7018 = vadd.f32 %v6905, %v7017
        %v7019 = vpop.f32.mrf.mxu0
        %v7020 = vadd.f32 %v6907, %v7019
        %v7021 = vpop.f32.mrf.mxu0
        %v7022 = vadd.f32 %v6909, %v7021
        %7023 = vmatprep.mubr.bf16.mxu0 %v3799
        %7024 = vmatmul.mubr.bf16.gmra.mxu0 %v3798
        %v7025 = vpop.f32.mrf.mxu0
        %v7026 = vadd.f32 %v6913, %v7025
        %v7027 = vpop.f32.mrf.mxu0
        %v7028 = vadd.f32 %v6915, %v7027
        %v7029 = vpop.f32.mrf.mxu0
        %v7030 = vadd.f32 %v6917, %v7029
        %v7031 = vpop.f32.mrf.mxu0
        %v7032 = vadd.f32 %v6919, %v7031
        %7033 = vmatprep.mubr.bf16.mxu0 %v3819
        %7034 = vmatmul.mubr.bf16.gmra.mxu0 %v3818
        %v7035 = vpop.f32.mrf.mxu0
        %v7036 = vadd.f32 %v6923, %v7035
        %v7037 = vpop.f32.mrf.mxu0
        %v7038 = vadd.f32 %v6925, %v7037
        %v7039 = vpop.f32.mrf.mxu0
        %v7040 = vadd.f32 %v6927, %v7039
        %v7041 = vpop.f32.mrf.mxu0
        %v7042 = vadd.f32 %v6929, %v7041
        %7043 = vmatprep.mubr.bf16.mxu0 %v3839
        %7044 = vmatmul.mubr.bf16.gmra.mxu0 %v3838
        %v7045 = vpop.f32.mrf.mxu0
        %v7046 = vadd.f32 %v6933, %v7045
        %v7047 = vpop.f32.mrf.mxu0
        %v7048 = vadd.f32 %v6935, %v7047
        %v7049 = vpop.f32.mrf.mxu0
        %v7050 = vadd.f32 %v6937, %v7049
        %v7051 = vpop.f32.mrf.mxu0
        %v7052 = vadd.f32 %v6939, %v7051
        %7053 = vmatprep.mubr.bf16.mxu0 %v3859
        %7054 = vmatmul.mubr.bf16.gmra.mxu0 %v3858
        %v7055 = vpop.f32.mrf.mxu0
        %v7056 = vadd.f32 %v6943, %v7055
        %v7057 = vpop.f32.mrf.mxu0
        %v7058 = vadd.f32 %v6945, %v7057
        %v7059 = vpop.f32.mrf.mxu0
        %v7060 = vadd.f32 %v6947, %v7059
        %v7061 = vpop.f32.mrf.mxu0
        %v7062 = vadd.f32 %v6949, %v7061
        %7063 = vmatprep.mubr.bf16.mxu0 %v3879
        %7064 = vmatmul.mubr.bf16.gmra.mxu0 %v3878
        %v7065 = vpop.f32.mrf.mxu0
        %v7066 = vadd.f32 %v6953, %v7065
        %v7067 = vpop.f32.mrf.mxu0
        %v7068 = vadd.f32 %v6955, %v7067
        %v7069 = vpop.f32.mrf.mxu0
        %v7070 = vadd.f32 %v6957, %v7069
        %v7071 = vpop.f32.mrf.mxu0
        %v7072 = vadd.f32 %v6959, %v7071
        %7073 = vmatprep.mubr.bf16.mxu0 %v3899
        %7074 = vmatmul.mubr.bf16.gmra.mxu0 %v3898
        %v7075 = vpop.f32.mrf.mxu0
        %v7076 = vadd.f32 %v6963, %v7075
        %v7077 = vpop.f32.mrf.mxu0
        %v7078 = vadd.f32 %v6965, %v7077
        %v7079 = vpop.f32.mrf.mxu0
        %v7080 = vadd.f32 %v6967, %v7079
        %v7081 = vpop.f32.mrf.mxu0
        %v7082 = vadd.f32 %v6969, %v7081
        %7083 = vdwg.mxu0
        %7084 = vmatprep.subr.bf16.mxu0 %v5886
        %7085 = vmatpush1.bf16.msra.mxu0 %v5885
        %7086 = vmatprep.subr.bf16.mxu0 %v5883
        %7087 = vmatpush1.bf16.msra.mxu0 %v5882
        %7088 = vmatprep.subr.bf16.mxu0 %v5880
        %7089 = vmatpush1.bf16.msra.mxu0 %v5879
        %7090 = vmatprep.subr.bf16.mxu0 %v5877
        %7091 = vmatpush1.bf16.msra.mxu0 %v5876
        %7092 = vmatprep.subr.bf16.mxu0 %v5874
        %7093 = vmatpush1.bf16.msra.mxu0 %v5873
        %7094 = vmatprep.subr.bf16.mxu0 %v5871
        %7095 = vmatpush1.bf16.msra.mxu0 %v5870
        %7096 = vmatprep.subr.bf16.mxu0 %v5868
        %7097 = vmatpush1.bf16.msra.mxu0 %v5867
        %7098 = vmatprep.subr.bf16.mxu0 %v5865
        %7099 = vmatpush1.bf16.msra.mxu0 %v5864
        %7100 = vmatprep.subr.bf16.mxu0 %v5910
        %7101 = vmatpush2.bf16.msra.mxu0 %v5909
        %7102 = vmatprep.subr.bf16.mxu0 %v5907
        %7103 = vmatpush2.bf16.msra.mxu0 %v5906
        %7104 = vmatprep.subr.bf16.mxu0 %v5904
        %7105 = vmatpush2.bf16.msra.mxu0 %v5903
        %7106 = vmatprep.subr.bf16.mxu0 %v5901
        %7107 = vmatpush2.bf16.msra.mxu0 %v5900
        %7108 = vmatprep.subr.bf16.mxu0 %v5898
        %7109 = vmatpush2.bf16.msra.mxu0 %v5897
        %7110 = vmatprep.subr.bf16.mxu0 %v5895
        %7111 = vmatpush2.bf16.msra.mxu0 %v5894
        %7112 = vmatprep.subr.bf16.mxu0 %v5892
        %7113 = vmatpush2.bf16.msra.mxu0 %v5891
        %7114 = vmatprep.subr.bf16.mxu0 %v5889
        %7115 = vmatpush2.bf16.msra.mxu0 %v5888
        %7116 = vmatprep.mubr.bf16.mxu0 %v3761
        %7117 = vmatmul.mubr.bf16.gmra.mxu0 %v3760
        %v7118 = vpop.f32.mrf.mxu0
        %v7119 = vadd.f32 %v7006, %v7118
        %v7120 = vpop.f32.mrf.mxu0
        %v7121 = vadd.f32 %v7008, %v7120
        %v7122 = vpop.f32.mrf.mxu0
        %v7123 = vadd.f32 %v7010, %v7122
        %v7124 = vpop.f32.mrf.mxu0
        %v7125 = vadd.f32 %v7012, %v7124
        %7126 = vmatprep.mubr.bf16.mxu0 %v3781
        %7127 = vmatmul.mubr.bf16.gmra.mxu0 %v3780
        %v7128 = vpop.f32.mrf.mxu0
        %v7129 = vadd.f32 %v7016, %v7128
        %v7130 = vpop.f32.mrf.mxu0
        %v7131 = vadd.f32 %v7018, %v7130
        %v7132 = vpop.f32.mrf.mxu0
        %v7133 = vadd.f32 %v7020, %v7132
        %v7134 = vpop.f32.mrf.mxu0
        %v7135 = vadd.f32 %v7022, %v7134
        %7136 = vmatprep.mubr.bf16.mxu0 %v3801
        %7137 = vmatmul.mubr.bf16.gmra.mxu0 %v3800
        %v7138 = vpop.f32.mrf.mxu0
        %v7139 = vadd.f32 %v7026, %v7138
        %v7140 = vpop.f32.mrf.mxu0
        %v7141 = vadd.f32 %v7028, %v7140
        %v7142 = vpop.f32.mrf.mxu0
        %v7143 = vadd.f32 %v7030, %v7142
        %v7144 = vpop.f32.mrf.mxu0
        %v7145 = vadd.f32 %v7032, %v7144
        %7146 = vmatprep.mubr.bf16.mxu0 %v3821
        %7147 = vmatmul.mubr.bf16.gmra.mxu0 %v3820
        %v7148 = vpop.f32.mrf.mxu0
        %v7149 = vadd.f32 %v7036, %v7148
        %v7150 = vpop.f32.mrf.mxu0
        %v7151 = vadd.f32 %v7038, %v7150
        %v7152 = vpop.f32.mrf.mxu0
        %v7153 = vadd.f32 %v7040, %v7152
        %v7154 = vpop.f32.mrf.mxu0
        %v7155 = vadd.f32 %v7042, %v7154
        %7156 = vmatprep.mubr.bf16.mxu0 %v3841
        %7157 = vmatmul.mubr.bf16.gmra.mxu0 %v3840
        %v7158 = vpop.f32.mrf.mxu0
        %v7159 = vadd.f32 %v7046, %v7158
        %v7160 = vpop.f32.mrf.mxu0
        %v7161 = vadd.f32 %v7048, %v7160
        %v7162 = vpop.f32.mrf.mxu0
        %v7163 = vadd.f32 %v7050, %v7162
        %v7164 = vpop.f32.mrf.mxu0
        %v7165 = vadd.f32 %v7052, %v7164
        %7166 = vmatprep.mubr.bf16.mxu0 %v3861
        %7167 = vmatmul.mubr.bf16.gmra.mxu0 %v3860
        %v7168 = vpop.f32.mrf.mxu0
        %v7169 = vadd.f32 %v7056, %v7168
        %v7170 = vpop.f32.mrf.mxu0
        %v7171 = vadd.f32 %v7058, %v7170
        %v7172 = vpop.f32.mrf.mxu0
        %v7173 = vadd.f32 %v7060, %v7172
        %v7174 = vpop.f32.mrf.mxu0
        %v7175 = vadd.f32 %v7062, %v7174
        %7176 = vmatprep.mubr.bf16.mxu0 %v3881
        %7177 = vmatmul.mubr.bf16.gmra.mxu0 %v3880
        %v7178 = vpop.f32.mrf.mxu0
        %v7179 = vadd.f32 %v7066, %v7178
        %v7180 = vpop.f32.mrf.mxu0
        %v7181 = vadd.f32 %v7068, %v7180
        %v7182 = vpop.f32.mrf.mxu0
        %v7183 = vadd.f32 %v7070, %v7182
        %v7184 = vpop.f32.mrf.mxu0
        %v7185 = vadd.f32 %v7072, %v7184
        %7186 = vmatprep.mubr.bf16.mxu0 %v3901
        %7187 = vmatmul.mubr.bf16.gmra.mxu0 %v3900
        %v7188 = vpop.f32.mrf.mxu0
        %v7189 = vadd.f32 %v7076, %v7188
        %v7190 = vpop.f32.mrf.mxu0
        %v7191 = vadd.f32 %v7078, %v7190
        %v7192 = vpop.f32.mrf.mxu0
        %v7193 = vadd.f32 %v7080, %v7192
        %v7194 = vpop.f32.mrf.mxu0
        %v7195 = vadd.f32 %v7082, %v7194
        %7196 = vdwg.mxu0
        %7197 = vmatprep.subr.bf16.mxu0 %v5934
        %7198 = vmatpush1.bf16.msra.mxu0 %v5933
        %7199 = vmatprep.subr.bf16.mxu0 %v5931
        %7200 = vmatpush1.bf16.msra.mxu0 %v5930
        %7201 = vmatprep.subr.bf16.mxu0 %v5928
        %7202 = vmatpush1.bf16.msra.mxu0 %v5927
        %7203 = vmatprep.subr.bf16.mxu0 %v5925
        %7204 = vmatpush1.bf16.msra.mxu0 %v5924
        %7205 = vmatprep.subr.bf16.mxu0 %v5922
        %7206 = vmatpush1.bf16.msra.mxu0 %v5921
        %7207 = vmatprep.subr.bf16.mxu0 %v5919
        %7208 = vmatpush1.bf16.msra.mxu0 %v5918
        %7209 = vmatprep.subr.bf16.mxu0 %v5916
        %7210 = vmatpush1.bf16.msra.mxu0 %v5915
        %7211 = vmatprep.subr.bf16.mxu0 %v5913
        %7212 = vmatpush1.bf16.msra.mxu0 %v5912
        %7213 = vmatprep.subr.bf16.mxu0 %v5958
        %7214 = vmatpush2.bf16.msra.mxu0 %v5957
        %7215 = vmatprep.subr.bf16.mxu0 %v5955
        %7216 = vmatpush2.bf16.msra.mxu0 %v5954
        %7217 = vmatprep.subr.bf16.mxu0 %v5952
        %7218 = vmatpush2.bf16.msra.mxu0 %v5951
        %7219 = vmatprep.subr.bf16.mxu0 %v5949
        %7220 = vmatpush2.bf16.msra.mxu0 %v5948
        %7221 = vmatprep.subr.bf16.mxu0 %v5946
        %7222 = vmatpush2.bf16.msra.mxu0 %v5945
        %7223 = vmatprep.subr.bf16.mxu0 %v5943
        %7224 = vmatpush2.bf16.msra.mxu0 %v5942
        %7225 = vmatprep.subr.bf16.mxu0 %v5940
        %7226 = vmatpush2.bf16.msra.mxu0 %v5939
        %7227 = vmatprep.subr.bf16.mxu0 %v5937
        %7228 = vmatpush2.bf16.msra.mxu0 %v5936
        %7229 = vmatprep.mubr.bf16.mxu0 %v3763
        %7230 = vmatmul.mubr.bf16.gmra.mxu0 %v3762
        %v7231 = vpop.f32.mrf.mxu0
        %v7232 = vadd.f32 %v7119, %v7231
        %v7233 = vpop.f32.mrf.mxu0
        %v7234 = vadd.f32 %v7121, %v7233
        %v7235 = vpop.f32.mrf.mxu0
        %v7236 = vadd.f32 %v7123, %v7235
        %v7237 = vpop.f32.mrf.mxu0
        %v7238 = vadd.f32 %v7125, %v7237
        %7239 = vmatprep.mubr.bf16.mxu0 %v3783
        %7240 = vmatmul.mubr.bf16.gmra.mxu0 %v3782
        %v7241 = vpop.f32.mrf.mxu0
        %v7242 = vadd.f32 %v7129, %v7241
        %v7243 = vpop.f32.mrf.mxu0
        %v7244 = vadd.f32 %v7131, %v7243
        %v7245 = vpop.f32.mrf.mxu0
        %v7246 = vadd.f32 %v7133, %v7245
        %v7247 = vpop.f32.mrf.mxu0
        %v7248 = vadd.f32 %v7135, %v7247
        %7249 = vmatprep.mubr.bf16.mxu0 %v3803
        %7250 = vmatmul.mubr.bf16.gmra.mxu0 %v3802
        %v7251 = vpop.f32.mrf.mxu0
        %v7252 = vadd.f32 %v7139, %v7251
        %v7253 = vpop.f32.mrf.mxu0
        %v7254 = vadd.f32 %v7141, %v7253
        %v7255 = vpop.f32.mrf.mxu0
        %v7256 = vadd.f32 %v7143, %v7255
        %v7257 = vpop.f32.mrf.mxu0
        %v7258 = vadd.f32 %v7145, %v7257
        %7259 = vmatprep.mubr.bf16.mxu0 %v3823
        %7260 = vmatmul.mubr.bf16.gmra.mxu0 %v3822
        %v7261 = vpop.f32.mrf.mxu0
        %v7262 = vadd.f32 %v7149, %v7261
        %v7263 = vpop.f32.mrf.mxu0
        %v7264 = vadd.f32 %v7151, %v7263
        %v7265 = vpop.f32.mrf.mxu0
        %v7266 = vadd.f32 %v7153, %v7265
        %v7267 = vpop.f32.mrf.mxu0
        %v7268 = vadd.f32 %v7155, %v7267
        %7269 = vmatprep.mubr.bf16.mxu0 %v3843
        %7270 = vmatmul.mubr.bf16.gmra.mxu0 %v3842
        %v7271 = vpop.f32.mrf.mxu0
        %v7272 = vadd.f32 %v7159, %v7271
        %v7273 = vpop.f32.mrf.mxu0
        %v7274 = vadd.f32 %v7161, %v7273
        %v7275 = vpop.f32.mrf.mxu0
        %v7276 = vadd.f32 %v7163, %v7275
        %v7277 = vpop.f32.mrf.mxu0
        %v7278 = vadd.f32 %v7165, %v7277
        %7279 = vmatprep.mubr.bf16.mxu0 %v3863
        %7280 = vmatmul.mubr.bf16.gmra.mxu0 %v3862
        %v7281 = vpop.f32.mrf.mxu0
        %v7282 = vadd.f32 %v7169, %v7281
        %v7283 = vpop.f32.mrf.mxu0
        %v7284 = vadd.f32 %v7171, %v7283
        %v7285 = vpop.f32.mrf.mxu0
        %v7286 = vadd.f32 %v7173, %v7285
        %v7287 = vpop.f32.mrf.mxu0
        %v7288 = vadd.f32 %v7175, %v7287
        %7289 = vmatprep.mubr.bf16.mxu0 %v3883
        %7290 = vmatmul.mubr.bf16.gmra.mxu0 %v3882
        %v7291 = vpop.f32.mrf.mxu0
        %v7292 = vadd.f32 %v7179, %v7291
        %v7293 = vpop.f32.mrf.mxu0
        %v7294 = vadd.f32 %v7181, %v7293
        %v7295 = vpop.f32.mrf.mxu0
        %v7296 = vadd.f32 %v7183, %v7295
        %v7297 = vpop.f32.mrf.mxu0
        %v7298 = vadd.f32 %v7185, %v7297
        %7299 = vmatprep.mubr.bf16.mxu0 %v3903
        %7300 = vmatmul.mubr.bf16.gmra.mxu0 %v3902
        %v7301 = vpop.f32.mrf.mxu0
        %v7302 = vadd.f32 %v7189, %v7301
        %v7303 = vpop.f32.mrf.mxu0
        %v7304 = vadd.f32 %v7191, %v7303
        %v7305 = vpop.f32.mrf.mxu0
        %v7306 = vadd.f32 %v7193, %v7305
        %v7307 = vpop.f32.mrf.mxu0
        %v7308 = vadd.f32 %v7195, %v7307
        %7309 = vdwg.mxu0
        %7310 = vmatprep.subr.bf16.mxu0 %v5982
        %7311 = vmatpush1.bf16.msra.mxu0 %v5981
        %7312 = vmatprep.subr.bf16.mxu0 %v5979
        %7313 = vmatpush1.bf16.msra.mxu0 %v5978
        %7314 = vmatprep.subr.bf16.mxu0 %v5976
        %7315 = vmatpush1.bf16.msra.mxu0 %v5975
        %7316 = vmatprep.subr.bf16.mxu0 %v5973
        %7317 = vmatpush1.bf16.msra.mxu0 %v5972
        %7318 = vmatprep.subr.bf16.mxu0 %v5970
        %7319 = vmatpush1.bf16.msra.mxu0 %v5969
        %7320 = vmatprep.subr.bf16.mxu0 %v5967
        %7321 = vmatpush1.bf16.msra.mxu0 %v5966
        %7322 = vmatprep.subr.bf16.mxu0 %v5964
        %7323 = vmatpush1.bf16.msra.mxu0 %v5963
        %7324 = vmatprep.subr.bf16.mxu0 %v5961
        %7325 = vmatpush1.bf16.msra.mxu0 %v5960
        %7326 = vmatprep.subr.bf16.mxu0 %v6006
        %7327 = vmatpush2.bf16.msra.mxu0 %v6005
        %7328 = vmatprep.subr.bf16.mxu0 %v6003
        %7329 = vmatpush2.bf16.msra.mxu0 %v6002
        %7330 = vmatprep.subr.bf16.mxu0 %v6000
        %7331 = vmatpush2.bf16.msra.mxu0 %v5999
        %7332 = vmatprep.subr.bf16.mxu0 %v5997
        %7333 = vmatpush2.bf16.msra.mxu0 %v5996
        %7334 = vmatprep.subr.bf16.mxu0 %v5994
        %7335 = vmatpush2.bf16.msra.mxu0 %v5993
        %7336 = vmatprep.subr.bf16.mxu0 %v5991
        %7337 = vmatpush2.bf16.msra.mxu0 %v5990
        %7338 = vmatprep.subr.bf16.mxu0 %v5988
        %7339 = vmatpush2.bf16.msra.mxu0 %v5987
        %7340 = vmatprep.subr.bf16.mxu0 %v5985
        %7341 = vmatpush2.bf16.msra.mxu0 %v5984
        %7342 = vmatprep.mubr.bf16.mxu0 %v3765
        %7343 = vmatmul.mubr.bf16.gmra.mxu0 %v3764
        %v7344 = vpop.f32.mrf.mxu0
        %v7345 = vadd.f32 %v7232, %v7344
        %v7346 = vpop.f32.mrf.mxu0
        %v7347 = vadd.f32 %v7234, %v7346
        %v7348 = vpop.f32.mrf.mxu0
        %v7349 = vadd.f32 %v7236, %v7348
        %v7350 = vpop.f32.mrf.mxu0
        %v7351 = vadd.f32 %v7238, %v7350
        %7352 = vmatprep.mubr.bf16.mxu0 %v3785
        %7353 = vmatmul.mubr.bf16.gmra.mxu0 %v3784
        %v7354 = vpop.f32.mrf.mxu0
        %v7355 = vadd.f32 %v7242, %v7354
        %v7356 = vpop.f32.mrf.mxu0
        %v7357 = vadd.f32 %v7244, %v7356
        %v7358 = vpop.f32.mrf.mxu0
        %v7359 = vadd.f32 %v7246, %v7358
        %v7360 = vpop.f32.mrf.mxu0
        %v7361 = vadd.f32 %v7248, %v7360
        %7362 = vmatprep.mubr.bf16.mxu0 %v3805
        %7363 = vmatmul.mubr.bf16.gmra.mxu0 %v3804
        %v7364 = vpop.f32.mrf.mxu0
        %v7365 = vadd.f32 %v7252, %v7364
        %v7366 = vpop.f32.mrf.mxu0
        %v7367 = vadd.f32 %v7254, %v7366
        %v7368 = vpop.f32.mrf.mxu0
        %v7369 = vadd.f32 %v7256, %v7368
        %v7370 = vpop.f32.mrf.mxu0
        %v7371 = vadd.f32 %v7258, %v7370
        %7372 = vmatprep.mubr.bf16.mxu0 %v3825
        %7373 = vmatmul.mubr.bf16.gmra.mxu0 %v3824
        %v7374 = vpop.f32.mrf.mxu0
        %v7375 = vadd.f32 %v7262, %v7374
        %v7376 = vpop.f32.mrf.mxu0
        %v7377 = vadd.f32 %v7264, %v7376
        %v7378 = vpop.f32.mrf.mxu0
        %v7379 = vadd.f32 %v7266, %v7378
        %v7380 = vpop.f32.mrf.mxu0
        %v7381 = vadd.f32 %v7268, %v7380
        %7382 = vmatprep.mubr.bf16.mxu0 %v3845
        %7383 = vmatmul.mubr.bf16.gmra.mxu0 %v3844
        %v7384 = vpop.f32.mrf.mxu0
        %v7385 = vadd.f32 %v7272, %v7384
        %v7386 = vpop.f32.mrf.mxu0
        %v7387 = vadd.f32 %v7274, %v7386
        %v7388 = vpop.f32.mrf.mxu0
        %v7389 = vadd.f32 %v7276, %v7388
        %v7390 = vpop.f32.mrf.mxu0
        %v7391 = vadd.f32 %v7278, %v7390
        %7392 = vmatprep.mubr.bf16.mxu0 %v3865
        %7393 = vmatmul.mubr.bf16.gmra.mxu0 %v3864
        %v7394 = vpop.f32.mrf.mxu0
        %v7395 = vadd.f32 %v7282, %v7394
        %v7396 = vpop.f32.mrf.mxu0
        %v7397 = vadd.f32 %v7284, %v7396
        %v7398 = vpop.f32.mrf.mxu0
        %v7399 = vadd.f32 %v7286, %v7398
        %v7400 = vpop.f32.mrf.mxu0
        %v7401 = vadd.f32 %v7288, %v7400
        %7402 = vmatprep.mubr.bf16.mxu0 %v3885
        %7403 = vmatmul.mubr.bf16.gmra.mxu0 %v3884
        %v7404 = vpop.f32.mrf.mxu0
        %v7405 = vadd.f32 %v7292, %v7404
        %v7406 = vpop.f32.mrf.mxu0
        %v7407 = vadd.f32 %v7294, %v7406
        %v7408 = vpop.f32.mrf.mxu0
        %v7409 = vadd.f32 %v7296, %v7408
        %v7410 = vpop.f32.mrf.mxu0
        %v7411 = vadd.f32 %v7298, %v7410
        %7412 = vmatprep.mubr.bf16.mxu0 %v3905
        %7413 = vmatmul.mubr.bf16.gmra.mxu0 %v3904
        %v7414 = vpop.f32.mrf.mxu0
        %v7415 = vadd.f32 %v7302, %v7414
        %v7416 = vpop.f32.mrf.mxu0
        %v7417 = vadd.f32 %v7304, %v7416
        %v7418 = vpop.f32.mrf.mxu0
        %v7419 = vadd.f32 %v7306, %v7418
        %v7420 = vpop.f32.mrf.mxu0
        %v7421 = vadd.f32 %v7308, %v7420
        %7422 = vdwg.mxu0
        %7423 = vmatprep.subr.bf16.mxu0 %v6030
        %7424 = vmatpush1.bf16.msra.mxu0 %v6029
        %7425 = vmatprep.subr.bf16.mxu0 %v6027
        %7426 = vmatpush1.bf16.msra.mxu0 %v6026
        %7427 = vmatprep.subr.bf16.mxu0 %v6024
        %7428 = vmatpush1.bf16.msra.mxu0 %v6023
        %7429 = vmatprep.subr.bf16.mxu0 %v6021
        %7430 = vmatpush1.bf16.msra.mxu0 %v6020
        %7431 = vmatprep.subr.bf16.mxu0 %v6018
        %7432 = vmatpush1.bf16.msra.mxu0 %v6017
        %7433 = vmatprep.subr.bf16.mxu0 %v6015
        %7434 = vmatpush1.bf16.msra.mxu0 %v6014
        %7435 = vmatprep.subr.bf16.mxu0 %v6012
        %7436 = vmatpush1.bf16.msra.mxu0 %v6011
        %7437 = vmatprep.subr.bf16.mxu0 %v6009
        %7438 = vmatpush1.bf16.msra.mxu0 %v6008
        %7439 = vmatprep.subr.bf16.mxu0 %v6054
        %7440 = vmatpush2.bf16.msra.mxu0 %v6053
        %7441 = vmatprep.subr.bf16.mxu0 %v6051
        %7442 = vmatpush2.bf16.msra.mxu0 %v6050
        %7443 = vmatprep.subr.bf16.mxu0 %v6048
        %7444 = vmatpush2.bf16.msra.mxu0 %v6047
        %7445 = vmatprep.subr.bf16.mxu0 %v6045
        %7446 = vmatpush2.bf16.msra.mxu0 %v6044
        %7447 = vmatprep.subr.bf16.mxu0 %v6042
        %7448 = vmatpush2.bf16.msra.mxu0 %v6041
        %7449 = vmatprep.subr.bf16.mxu0 %v6039
        %7450 = vmatpush2.bf16.msra.mxu0 %v6038
        %7451 = vmatprep.subr.bf16.mxu0 %v6036
        %7452 = vmatpush2.bf16.msra.mxu0 %v6035
        %7453 = vmatprep.subr.bf16.mxu0 %v6033
        %7454 = vmatpush2.bf16.msra.mxu0 %v6032
        %7455 = vmatprep.mubr.bf16.mxu0 %v3767
        %7456 = vmatmul.mubr.bf16.gmra.mxu0 %v3766
        %v7457 = vpop.f32.mrf.mxu0
        %v7458 = vadd.f32 %v7345, %v7457
        %v7459 = vpop.f32.mrf.mxu0
        %v7460 = vadd.f32 %v7347, %v7459
        %v7461 = vpop.f32.mrf.mxu0
        %v7462 = vadd.f32 %v7349, %v7461
        %v7463 = vpop.f32.mrf.mxu0
        %v7464 = vadd.f32 %v7351, %v7463
        %7465 = vmatprep.mubr.bf16.mxu0 %v3787
        %7466 = vmatmul.mubr.bf16.gmra.mxu0 %v3786
        %v7467 = vpop.f32.mrf.mxu0
        %v7468 = vadd.f32 %v7355, %v7467
        %v7469 = vpop.f32.mrf.mxu0
        %v7470 = vadd.f32 %v7357, %v7469
        %v7471 = vpop.f32.mrf.mxu0
        %v7472 = vadd.f32 %v7359, %v7471
        %v7473 = vpop.f32.mrf.mxu0
        %v7474 = vadd.f32 %v7361, %v7473
        %7475 = vmatprep.mubr.bf16.mxu0 %v3807
        %7476 = vmatmul.mubr.bf16.gmra.mxu0 %v3806
        %v7477 = vpop.f32.mrf.mxu0
        %v7478 = vadd.f32 %v7365, %v7477
        %v7479 = vpop.f32.mrf.mxu0
        %v7480 = vadd.f32 %v7367, %v7479
        %v7481 = vpop.f32.mrf.mxu0
        %v7482 = vadd.f32 %v7369, %v7481
        %v7483 = vpop.f32.mrf.mxu0
        %v7484 = vadd.f32 %v7371, %v7483
        %7485 = vmatprep.mubr.bf16.mxu0 %v3827
        %7486 = vmatmul.mubr.bf16.gmra.mxu0 %v3826
        %v7487 = vpop.f32.mrf.mxu0
        %v7488 = vadd.f32 %v7375, %v7487
        %v7489 = vpop.f32.mrf.mxu0
        %v7490 = vadd.f32 %v7377, %v7489
        %v7491 = vpop.f32.mrf.mxu0
        %v7492 = vadd.f32 %v7379, %v7491
        %v7493 = vpop.f32.mrf.mxu0
        %v7494 = vadd.f32 %v7381, %v7493
        %7495 = vmatprep.mubr.bf16.mxu0 %v3847
        %7496 = vmatmul.mubr.bf16.gmra.mxu0 %v3846
        %v7497 = vpop.f32.mrf.mxu0
        %v7498 = vadd.f32 %v7385, %v7497
        %v7499 = vpop.f32.mrf.mxu0
        %v7500 = vadd.f32 %v7387, %v7499
        %v7501 = vpop.f32.mrf.mxu0
        %v7502 = vadd.f32 %v7389, %v7501
        %v7503 = vpop.f32.mrf.mxu0
        %v7504 = vadd.f32 %v7391, %v7503
        %7505 = vmatprep.mubr.bf16.mxu0 %v3867
        %7506 = vmatmul.mubr.bf16.gmra.mxu0 %v3866
        %v7507 = vpop.f32.mrf.mxu0
        %v7508 = vadd.f32 %v7395, %v7507
        %v7509 = vpop.f32.mrf.mxu0
        %v7510 = vadd.f32 %v7397, %v7509
        %v7511 = vpop.f32.mrf.mxu0
        %v7512 = vadd.f32 %v7399, %v7511
        %v7513 = vpop.f32.mrf.mxu0
        %v7514 = vadd.f32 %v7401, %v7513
        %7515 = vmatprep.mubr.bf16.mxu0 %v3887
        %7516 = vmatmul.mubr.bf16.gmra.mxu0 %v3886
        %v7517 = vpop.f32.mrf.mxu0
        %v7518 = vadd.f32 %v7405, %v7517
        %v7519 = vpop.f32.mrf.mxu0
        %v7520 = vadd.f32 %v7407, %v7519
        %v7521 = vpop.f32.mrf.mxu0
        %v7522 = vadd.f32 %v7409, %v7521
        %v7523 = vpop.f32.mrf.mxu0
        %v7524 = vadd.f32 %v7411, %v7523
        %7525 = vmatprep.mubr.bf16.mxu0 %v3907
        %7526 = vmatmul.mubr.bf16.gmra.mxu0 %v3906
        %v7527 = vpop.f32.mrf.mxu0
        %v7528 = vadd.f32 %v7415, %v7527
        %v7529 = vpop.f32.mrf.mxu0
        %v7530 = vadd.f32 %v7417, %v7529
        %v7531 = vpop.f32.mrf.mxu0
        %v7532 = vadd.f32 %v7419, %v7531
        %v7533 = vpop.f32.mrf.mxu0
        %v7534 = vadd.f32 %v7421, %v7533
        %7535 = vdwg.mxu0
        %7536 = vmatprep.subr.bf16.mxu0 %v6078
        %7537 = vmatpush1.bf16.msra.mxu0 %v6077
        %7538 = vmatprep.subr.bf16.mxu0 %v6075
        %7539 = vmatpush1.bf16.msra.mxu0 %v6074
        %7540 = vmatprep.subr.bf16.mxu0 %v6072
        %7541 = vmatpush1.bf16.msra.mxu0 %v6071
        %7542 = vmatprep.subr.bf16.mxu0 %v6069
        %7543 = vmatpush1.bf16.msra.mxu0 %v6068
        %7544 = vmatprep.subr.bf16.mxu0 %v6066
        %7545 = vmatpush1.bf16.msra.mxu0 %v6065
        %7546 = vmatprep.subr.bf16.mxu0 %v6063
        %7547 = vmatpush1.bf16.msra.mxu0 %v6062
        %7548 = vmatprep.subr.bf16.mxu0 %v6060
        %7549 = vmatpush1.bf16.msra.mxu0 %v6059
        %7550 = vmatprep.subr.bf16.mxu0 %v6057
        %7551 = vmatpush1.bf16.msra.mxu0 %v6056
        %7552 = vmatprep.subr.bf16.mxu0 %v6102
        %7553 = vmatpush2.bf16.msra.mxu0 %v6101
        %7554 = vmatprep.subr.bf16.mxu0 %v6099
        %7555 = vmatpush2.bf16.msra.mxu0 %v6098
        %7556 = vmatprep.subr.bf16.mxu0 %v6096
        %7557 = vmatpush2.bf16.msra.mxu0 %v6095
        %7558 = vmatprep.subr.bf16.mxu0 %v6093
        %7559 = vmatpush2.bf16.msra.mxu0 %v6092
        %7560 = vmatprep.subr.bf16.mxu0 %v6090
        %7561 = vmatpush2.bf16.msra.mxu0 %v6089
        %7562 = vmatprep.subr.bf16.mxu0 %v6087
        %7563 = vmatpush2.bf16.msra.mxu0 %v6086
        %7564 = vmatprep.subr.bf16.mxu0 %v6084
        %7565 = vmatpush2.bf16.msra.mxu0 %v6083
        %7566 = vmatprep.subr.bf16.mxu0 %v6081
        %7567 = vmatpush2.bf16.msra.mxu0 %v6080
        %7568 = vmatprep.mubr.bf16.mxu0 %v3769
        %7569 = vmatmul.mubr.bf16.gmra.mxu0 %v3768
        %v7570 = vpop.f32.mrf.mxu0
        %v7571 = vadd.f32 %v7458, %v7570
        %v7572 = vpop.f32.mrf.mxu0
        %v7573 = vadd.f32 %v7460, %v7572
        %v7574 = vpop.f32.mrf.mxu0
        %v7575 = vadd.f32 %v7462, %v7574
        %v7576 = vpop.f32.mrf.mxu0
        %v7577 = vadd.f32 %v7464, %v7576
        %7578 = vmatprep.mubr.bf16.mxu0 %v3789
        %7579 = vmatmul.mubr.bf16.gmra.mxu0 %v3788
        %v7580 = vpop.f32.mrf.mxu0
        %v7581 = vadd.f32 %v7468, %v7580
        %v7582 = vpop.f32.mrf.mxu0
        %v7583 = vadd.f32 %v7470, %v7582
        %v7584 = vpop.f32.mrf.mxu0
        %v7585 = vadd.f32 %v7472, %v7584
        %v7586 = vpop.f32.mrf.mxu0
        %v7587 = vadd.f32 %v7474, %v7586
        %7588 = vmatprep.mubr.bf16.mxu0 %v3809
        %7589 = vmatmul.mubr.bf16.gmra.mxu0 %v3808
        %v7590 = vpop.f32.mrf.mxu0
        %v7591 = vadd.f32 %v7478, %v7590
        %v7592 = vpop.f32.mrf.mxu0
        %v7593 = vadd.f32 %v7480, %v7592
        %v7594 = vpop.f32.mrf.mxu0
        %v7595 = vadd.f32 %v7482, %v7594
        %v7596 = vpop.f32.mrf.mxu0
        %v7597 = vadd.f32 %v7484, %v7596
        %7598 = vmatprep.mubr.bf16.mxu0 %v3829
        %7599 = vmatmul.mubr.bf16.gmra.mxu0 %v3828
        %v7600 = vpop.f32.mrf.mxu0
        %v7601 = vadd.f32 %v7488, %v7600
        %v7602 = vpop.f32.mrf.mxu0
        %v7603 = vadd.f32 %v7490, %v7602
        %v7604 = vpop.f32.mrf.mxu0
        %v7605 = vadd.f32 %v7492, %v7604
        %v7606 = vpop.f32.mrf.mxu0
        %v7607 = vadd.f32 %v7494, %v7606
        %7608 = vmatprep.mubr.bf16.mxu0 %v3849
        %7609 = vmatmul.mubr.bf16.gmra.mxu0 %v3848
        %v7610 = vpop.f32.mrf.mxu0
        %v7611 = vadd.f32 %v7498, %v7610
        %v7612 = vpop.f32.mrf.mxu0
        %v7613 = vadd.f32 %v7500, %v7612
        %v7614 = vpop.f32.mrf.mxu0
        %v7615 = vadd.f32 %v7502, %v7614
        %v7616 = vpop.f32.mrf.mxu0
        %v7617 = vadd.f32 %v7504, %v7616
        %7618 = vmatprep.mubr.bf16.mxu0 %v3869
        %7619 = vmatmul.mubr.bf16.gmra.mxu0 %v3868
        %v7620 = vpop.f32.mrf.mxu0
        %v7621 = vadd.f32 %v7508, %v7620
        %v7622 = vpop.f32.mrf.mxu0
        %v7623 = vadd.f32 %v7510, %v7622
        %v7624 = vpop.f32.mrf.mxu0
        %v7625 = vadd.f32 %v7512, %v7624
        %v7626 = vpop.f32.mrf.mxu0
        %v7627 = vadd.f32 %v7514, %v7626
        %7628 = vmatprep.mubr.bf16.mxu0 %v3889
        %7629 = vmatmul.mubr.bf16.gmra.mxu0 %v3888
        %v7630 = vpop.f32.mrf.mxu0
        %v7631 = vadd.f32 %v7518, %v7630
        %v7632 = vpop.f32.mrf.mxu0
        %v7633 = vadd.f32 %v7520, %v7632
        %v7634 = vpop.f32.mrf.mxu0
        %v7635 = vadd.f32 %v7522, %v7634
        %v7636 = vpop.f32.mrf.mxu0
        %v7637 = vadd.f32 %v7524, %v7636
        %7638 = vmatprep.mubr.bf16.mxu0 %v3909
        %7639 = vmatmul.mubr.bf16.gmra.mxu0 %v3908
        %v7640 = vpop.f32.mrf.mxu0
        %v7641 = vadd.f32 %v7528, %v7640
        %v7642 = vpop.f32.mrf.mxu0
        %v7643 = vadd.f32 %v7530, %v7642
        %v7644 = vpop.f32.mrf.mxu0
        %v7645 = vadd.f32 %v7532, %v7644
        %v7646 = vpop.f32.mrf.mxu0
        %v7647 = vadd.f32 %v7534, %v7646
        %7648 = vdwg.mxu0
        %7649 = vmatprep.subr.bf16.mxu0 %v6126
        %7650 = vmatpush1.bf16.msra.mxu0 %v6125
        %7651 = vmatprep.subr.bf16.mxu0 %v6123
        %7652 = vmatpush1.bf16.msra.mxu0 %v6122
        %7653 = vmatprep.subr.bf16.mxu0 %v6120
        %7654 = vmatpush1.bf16.msra.mxu0 %v6119
        %7655 = vmatprep.subr.bf16.mxu0 %v6117
        %7656 = vmatpush1.bf16.msra.mxu0 %v6116
        %7657 = vmatprep.subr.bf16.mxu0 %v6114
        %7658 = vmatpush1.bf16.msra.mxu0 %v6113
        %7659 = vmatprep.subr.bf16.mxu0 %v6111
        %7660 = vmatpush1.bf16.msra.mxu0 %v6110
        %7661 = vmatprep.subr.bf16.mxu0 %v6108
        %7662 = vmatpush1.bf16.msra.mxu0 %v6107
        %7663 = vmatprep.subr.bf16.mxu0 %v6105
        %7664 = vmatpush1.bf16.msra.mxu0 %v6104
        %7665 = vmatprep.subr.bf16.mxu0 %v6150
        %7666 = vmatpush2.bf16.msra.mxu0 %v6149
        %7667 = vmatprep.subr.bf16.mxu0 %v6147
        %7668 = vmatpush2.bf16.msra.mxu0 %v6146
        %7669 = vmatprep.subr.bf16.mxu0 %v6144
        %7670 = vmatpush2.bf16.msra.mxu0 %v6143
        %7671 = vmatprep.subr.bf16.mxu0 %v6141
        %7672 = vmatpush2.bf16.msra.mxu0 %v6140
        %7673 = vmatprep.subr.bf16.mxu0 %v6138
        %7674 = vmatpush2.bf16.msra.mxu0 %v6137
        %7675 = vmatprep.subr.bf16.mxu0 %v6135
        %7676 = vmatpush2.bf16.msra.mxu0 %v6134
        %7677 = vmatprep.subr.bf16.mxu0 %v6132
        %7678 = vmatpush2.bf16.msra.mxu0 %v6131
        %7679 = vmatprep.subr.bf16.mxu0 %v6129
        %7680 = vmatpush2.bf16.msra.mxu0 %v6128
        %7681 = vmatprep.mubr.bf16.mxu0 %v3771
        %7682 = vmatmul.mubr.bf16.gmra.mxu0 %v3770
        %v7683 = vpop.f32.mrf.mxu0
        %v7684 = vadd.f32 %v7571, %v7683
        %v7685 = vpop.f32.mrf.mxu0
        %v7686 = vadd.f32 %v7573, %v7685
        %v7687 = vpop.f32.mrf.mxu0
        %v7688 = vadd.f32 %v7575, %v7687
        %v7689 = vpop.f32.mrf.mxu0
        %v7690 = vadd.f32 %v7577, %v7689
        %7691 = vmatprep.mubr.bf16.mxu0 %v3791
        %7692 = vmatmul.mubr.bf16.gmra.mxu0 %v3790
        %v7693 = vpop.f32.mrf.mxu0
        %v7694 = vadd.f32 %v7581, %v7693
        %v7695 = vpop.f32.mrf.mxu0
        %v7696 = vadd.f32 %v7583, %v7695
        %v7697 = vpop.f32.mrf.mxu0
        %v7698 = vadd.f32 %v7585, %v7697
        %v7699 = vpop.f32.mrf.mxu0
        %v7700 = vadd.f32 %v7587, %v7699
        %7701 = vmatprep.mubr.bf16.mxu0 %v3811
        %7702 = vmatmul.mubr.bf16.gmra.mxu0 %v3810
        %v7703 = vpop.f32.mrf.mxu0
        %v7704 = vadd.f32 %v7591, %v7703
        %v7705 = vpop.f32.mrf.mxu0
        %v7706 = vadd.f32 %v7593, %v7705
        %v7707 = vpop.f32.mrf.mxu0
        %v7708 = vadd.f32 %v7595, %v7707
        %v7709 = vpop.f32.mrf.mxu0
        %v7710 = vadd.f32 %v7597, %v7709
        %7711 = vmatprep.mubr.bf16.mxu0 %v3831
        %7712 = vmatmul.mubr.bf16.gmra.mxu0 %v3830
        %v7713 = vpop.f32.mrf.mxu0
        %v7714 = vadd.f32 %v7601, %v7713
        %v7715 = vpop.f32.mrf.mxu0
        %v7716 = vadd.f32 %v7603, %v7715
        %v7717 = vpop.f32.mrf.mxu0
        %v7718 = vadd.f32 %v7605, %v7717
        %v7719 = vpop.f32.mrf.mxu0
        %v7720 = vadd.f32 %v7607, %v7719
        %7721 = vmatprep.mubr.bf16.mxu0 %v3851
        %7722 = vmatmul.mubr.bf16.gmra.mxu0 %v3850
        %v7723 = vpop.f32.mrf.mxu0
        %v7724 = vadd.f32 %v7611, %v7723
        %v7725 = vpop.f32.mrf.mxu0
        %v7726 = vadd.f32 %v7613, %v7725
        %v7727 = vpop.f32.mrf.mxu0
        %v7728 = vadd.f32 %v7615, %v7727
        %v7729 = vpop.f32.mrf.mxu0
        %v7730 = vadd.f32 %v7617, %v7729
        %7731 = vmatprep.mubr.bf16.mxu0 %v3871
        %7732 = vmatmul.mubr.bf16.gmra.mxu0 %v3870
        %v7733 = vpop.f32.mrf.mxu0
        %v7734 = vadd.f32 %v7621, %v7733
        %v7735 = vpop.f32.mrf.mxu0
        %v7736 = vadd.f32 %v7623, %v7735
        %v7737 = vpop.f32.mrf.mxu0
        %v7738 = vadd.f32 %v7625, %v7737
        %v7739 = vpop.f32.mrf.mxu0
        %v7740 = vadd.f32 %v7627, %v7739
        %7741 = vmatprep.mubr.bf16.mxu0 %v3891
        %7742 = vmatmul.mubr.bf16.gmra.mxu0 %v3890
        %v7743 = vpop.f32.mrf.mxu0
        %v7744 = vadd.f32 %v7631, %v7743
        %v7745 = vpop.f32.mrf.mxu0
        %v7746 = vadd.f32 %v7633, %v7745
        %v7747 = vpop.f32.mrf.mxu0
        %v7748 = vadd.f32 %v7635, %v7747
        %v7749 = vpop.f32.mrf.mxu0
        %v7750 = vadd.f32 %v7637, %v7749
        %7751 = vmatprep.mubr.bf16.mxu0 %v3911
        %7752 = vmatmul.mubr.bf16.gmra.mxu0 %v3910
        %v7753 = vpop.f32.mrf.mxu0
        %v7754 = vadd.f32 %v7641, %v7753
        %v7755 = vpop.f32.mrf.mxu0
        %v7756 = vadd.f32 %v7643, %v7755
        %v7757 = vpop.f32.mrf.mxu0
        %v7758 = vadd.f32 %v7645, %v7757
        %v7759 = vpop.f32.mrf.mxu0
        %v7760 = vadd.f32 %v7647, %v7759
        %7761 = vdwg.mxu0
        %7762 = vmatprep.subr.bf16.mxu0 0
        %7763 = vmatpush1.bf16.msra.mxu0 %v5695
        %7764 = vmatprep.subr.bf16.mxu0 0
        %7765 = vmatpush1.bf16.msra.mxu0 %v5692
        %7766 = vmatprep.subr.bf16.mxu0 0
        %7767 = vmatpush1.bf16.msra.mxu0 %v5689
        %7768 = vmatprep.subr.bf16.mxu0 0
        %7769 = vmatpush1.bf16.msra.mxu0 %v5686
        %7770 = vmatprep.subr.bf16.mxu0 0
        %7771 = vmatpush1.bf16.msra.mxu0 %v5683
        %7772 = vmatprep.subr.bf16.mxu0 0
        %7773 = vmatpush1.bf16.msra.mxu0 %v5680
        %7774 = vmatprep.subr.bf16.mxu0 0
        %7775 = vmatpush1.bf16.msra.mxu0 %v5677
        %7776 = vmatprep.subr.bf16.mxu0 0
        %7777 = vmatpush1.bf16.msra.mxu0 %v5674
        %7778 = vmatprep.subr.bf16.mxu0 0
        %7779 = vmatpush2.bf16.msra.mxu0 %v5719
        %7780 = vmatprep.subr.bf16.mxu0 0
        %7781 = vmatpush2.bf16.msra.mxu0 %v5716
        %7782 = vmatprep.subr.bf16.mxu0 0
        %7783 = vmatpush2.bf16.msra.mxu0 %v5713
        %7784 = vmatprep.subr.bf16.mxu0 0
        %7785 = vmatpush2.bf16.msra.mxu0 %v5710
        %7786 = vmatprep.subr.bf16.mxu0 0
        %7787 = vmatpush2.bf16.msra.mxu0 %v5707
        %7788 = vmatprep.subr.bf16.mxu0 0
        %7789 = vmatpush2.bf16.msra.mxu0 %v5704
        %7790 = vmatprep.subr.bf16.mxu0 0
        %7791 = vmatpush2.bf16.msra.mxu0 %v5701
        %7792 = vmatprep.subr.bf16.mxu0 0
        %7793 = vmatpush2.bf16.msra.mxu0 %v5698
        %7794 = vmatprep.mubr.bf16.mxu0 %v3753
        %7795 = vmatmul.mubr.bf16.gmra.mxu0 %v3752
        %v7796 = vpop.f32.mrf.mxu0
        %v7797 = vadd.f32 %v3268, %v7796
        %v7798 = vpop.f32.mrf.mxu0
        %v7799 = vpop.f32.mrf.mxu0
        %v7800 = vadd.f32 %v3268, %v7799
        %v7801 = vpop.f32.mrf.mxu0
        %7802 = vmatprep.mubr.bf16.mxu0 %v3773
        %7803 = vmatmul.mubr.bf16.gmra.mxu0 %v3772
        %v7804 = vpop.f32.mrf.mxu0
        %v7805 = vadd.f32 %v3268, %v7804
        %v7806 = vpop.f32.mrf.mxu0
        %v7807 = vpop.f32.mrf.mxu0
        %v7808 = vadd.f32 %v3268, %v7807
        %v7809 = vpop.f32.mrf.mxu0
        %7810 = vmatprep.mubr.bf16.mxu0 %v3793
        %7811 = vmatmul.mubr.bf16.gmra.mxu0 %v3792
        %v7812 = vpop.f32.mrf.mxu0
        %v7813 = vadd.f32 %v3268, %v7812
        %v7814 = vpop.f32.mrf.mxu0
        %v7815 = vpop.f32.mrf.mxu0
        %v7816 = vadd.f32 %v3268, %v7815
        %v7817 = vpop.f32.mrf.mxu0
        %7818 = vmatprep.mubr.bf16.mxu0 %v3813
        %7819 = vmatmul.mubr.bf16.gmra.mxu0 %v3812
        %v7820 = vpop.f32.mrf.mxu0
        %v7821 = vadd.f32 %v3268, %v7820
        %v7822 = vpop.f32.mrf.mxu0
        %v7823 = vpop.f32.mrf.mxu0
        %v7824 = vadd.f32 %v3268, %v7823
        %v7825 = vpop.f32.mrf.mxu0
        %7826 = vmatprep.mubr.bf16.mxu0 %v3833
        %7827 = vmatmul.mubr.bf16.gmra.mxu0 %v3832
        %v7828 = vpop.f32.mrf.mxu0
        %v7829 = vadd.f32 %v3268, %v7828
        %v7830 = vpop.f32.mrf.mxu0
        %v7831 = vpop.f32.mrf.mxu0
        %v7832 = vadd.f32 %v3268, %v7831
        %v7833 = vpop.f32.mrf.mxu0
        %7834 = vmatprep.mubr.bf16.mxu0 %v3853
        %7835 = vmatmul.mubr.bf16.gmra.mxu0 %v3852
        %v7836 = vpop.f32.mrf.mxu0
        %v7837 = vadd.f32 %v3268, %v7836
        %v7838 = vpop.f32.mrf.mxu0
        %v7839 = vpop.f32.mrf.mxu0
        %v7840 = vadd.f32 %v3268, %v7839
        %v7841 = vpop.f32.mrf.mxu0
        %7842 = vmatprep.mubr.bf16.mxu0 %v3873
        %7843 = vmatmul.mubr.bf16.gmra.mxu0 %v3872
        %v7844 = vpop.f32.mrf.mxu0
        %v7845 = vadd.f32 %v3268, %v7844
        %v7846 = vpop.f32.mrf.mxu0
        %v7847 = vpop.f32.mrf.mxu0
        %v7848 = vadd.f32 %v3268, %v7847
        %v7849 = vpop.f32.mrf.mxu0
        %7850 = vmatprep.mubr.bf16.mxu0 %v3893
        %7851 = vmatmul.mubr.bf16.gmra.mxu0 %v3892
        %v7852 = vpop.f32.mrf.mxu0
        %v7853 = vadd.f32 %v3268, %v7852
        %v7854 = vpop.f32.mrf.mxu0
        %v7855 = vpop.f32.mrf.mxu0
        %v7856 = vadd.f32 %v3268, %v7855
        %v7857 = vpop.f32.mrf.mxu0
        %7858 = vdwg.mxu0
        %7859 = vmatprep.subr.bf16.mxu0 0
        %7860 = vmatpush1.bf16.msra.mxu0 %v5743
        %7861 = vmatprep.subr.bf16.mxu0 0
        %7862 = vmatpush1.bf16.msra.mxu0 %v5740
        %7863 = vmatprep.subr.bf16.mxu0 0
        %7864 = vmatpush1.bf16.msra.mxu0 %v5737
        %7865 = vmatprep.subr.bf16.mxu0 0
        %7866 = vmatpush1.bf16.msra.mxu0 %v5734
        %7867 = vmatprep.subr.bf16.mxu0 0
        %7868 = vmatpush1.bf16.msra.mxu0 %v5731
        %7869 = vmatprep.subr.bf16.mxu0 0
        %7870 = vmatpush1.bf16.msra.mxu0 %v5728
        %7871 = vmatprep.subr.bf16.mxu0 0
        %7872 = vmatpush1.bf16.msra.mxu0 %v5725
        %7873 = vmatprep.subr.bf16.mxu0 0
        %7874 = vmatpush1.bf16.msra.mxu0 %v5722
        %7875 = vmatprep.subr.bf16.mxu0 0
        %7876 = vmatpush2.bf16.msra.mxu0 %v5767
        %7877 = vmatprep.subr.bf16.mxu0 0
        %7878 = vmatpush2.bf16.msra.mxu0 %v5764
        %7879 = vmatprep.subr.bf16.mxu0 0
        %7880 = vmatpush2.bf16.msra.mxu0 %v5761
        %7881 = vmatprep.subr.bf16.mxu0 0
        %7882 = vmatpush2.bf16.msra.mxu0 %v5758
        %7883 = vmatprep.subr.bf16.mxu0 0
        %7884 = vmatpush2.bf16.msra.mxu0 %v5755
        %7885 = vmatprep.subr.bf16.mxu0 0
        %7886 = vmatpush2.bf16.msra.mxu0 %v5752
        %7887 = vmatprep.subr.bf16.mxu0 0
        %7888 = vmatpush2.bf16.msra.mxu0 %v5749
        %7889 = vmatprep.subr.bf16.mxu0 0
        %7890 = vmatpush2.bf16.msra.mxu0 %v5746
        %7891 = vmatprep.mubr.bf16.mxu0 %v3755
        %7892 = vmatmul.mubr.bf16.gmra.mxu0 %v3754
        %v7893 = vpop.f32.mrf.mxu0
        %v7894 = vadd.f32 %v7797, %v7893
        %v7895 = vpop.f32.mrf.mxu0
        %v7896 = vpop.f32.mrf.mxu0
        %v7897 = vadd.f32 %v7800, %v7896
        %v7898 = vpop.f32.mrf.mxu0
        %7899 = vmatprep.mubr.bf16.mxu0 %v3775
        %7900 = vmatmul.mubr.bf16.gmra.mxu0 %v3774
        %v7901 = vpop.f32.mrf.mxu0
        %v7902 = vadd.f32 %v7805, %v7901
        %v7903 = vpop.f32.mrf.mxu0
        %v7904 = vpop.f32.mrf.mxu0
        %v7905 = vadd.f32 %v7808, %v7904
        %v7906 = vpop.f32.mrf.mxu0
        %7907 = vmatprep.mubr.bf16.mxu0 %v3795
        %7908 = vmatmul.mubr.bf16.gmra.mxu0 %v3794
        %v7909 = vpop.f32.mrf.mxu0
        %v7910 = vadd.f32 %v7813, %v7909
        %v7911 = vpop.f32.mrf.mxu0
        %v7912 = vpop.f32.mrf.mxu0
        %v7913 = vadd.f32 %v7816, %v7912
        %v7914 = vpop.f32.mrf.mxu0
        %7915 = vmatprep.mubr.bf16.mxu0 %v3815
        %7916 = vmatmul.mubr.bf16.gmra.mxu0 %v3814
        %v7917 = vpop.f32.mrf.mxu0
        %v7918 = vadd.f32 %v7821, %v7917
        %v7919 = vpop.f32.mrf.mxu0
        %v7920 = vpop.f32.mrf.mxu0
        %v7921 = vadd.f32 %v7824, %v7920
        %v7922 = vpop.f32.mrf.mxu0
        %7923 = vmatprep.mubr.bf16.mxu0 %v3835
        %7924 = vmatmul.mubr.bf16.gmra.mxu0 %v3834
        %v7925 = vpop.f32.mrf.mxu0
        %v7926 = vadd.f32 %v7829, %v7925
        %v7927 = vpop.f32.mrf.mxu0
        %v7928 = vpop.f32.mrf.mxu0
        %v7929 = vadd.f32 %v7832, %v7928
        %v7930 = vpop.f32.mrf.mxu0
        %7931 = vmatprep.mubr.bf16.mxu0 %v3855
        %7932 = vmatmul.mubr.bf16.gmra.mxu0 %v3854
        %v7933 = vpop.f32.mrf.mxu0
        %v7934 = vadd.f32 %v7837, %v7933
        %v7935 = vpop.f32.mrf.mxu0
        %v7936 = vpop.f32.mrf.mxu0
        %v7937 = vadd.f32 %v7840, %v7936
        %v7938 = vpop.f32.mrf.mxu0
        %7939 = vmatprep.mubr.bf16.mxu0 %v3875
        %7940 = vmatmul.mubr.bf16.gmra.mxu0 %v3874
        %v7941 = vpop.f32.mrf.mxu0
        %v7942 = vadd.f32 %v7845, %v7941
        %v7943 = vpop.f32.mrf.mxu0
        %v7944 = vpop.f32.mrf.mxu0
        %v7945 = vadd.f32 %v7848, %v7944
        %v7946 = vpop.f32.mrf.mxu0
        %7947 = vmatprep.mubr.bf16.mxu0 %v3895
        %7948 = vmatmul.mubr.bf16.gmra.mxu0 %v3894
        %v7949 = vpop.f32.mrf.mxu0
        %v7950 = vadd.f32 %v7853, %v7949
        %v7951 = vpop.f32.mrf.mxu0
        %v7952 = vpop.f32.mrf.mxu0
        %v7953 = vadd.f32 %v7856, %v7952
        %v7954 = vpop.f32.mrf.mxu0
        %7955 = vdwg.mxu0
        %7956 = vmatprep.subr.bf16.mxu0 0
        %7957 = vmatpush1.bf16.msra.mxu0 %v5791
        %7958 = vmatprep.subr.bf16.mxu0 0
        %7959 = vmatpush1.bf16.msra.mxu0 %v5788
        %7960 = vmatprep.subr.bf16.mxu0 0
        %7961 = vmatpush1.bf16.msra.mxu0 %v5785
        %7962 = vmatprep.subr.bf16.mxu0 0
        %7963 = vmatpush1.bf16.msra.mxu0 %v5782
        %7964 = vmatprep.subr.bf16.mxu0 0
        %7965 = vmatpush1.bf16.msra.mxu0 %v5779
        %7966 = vmatprep.subr.bf16.mxu0 0
        %7967 = vmatpush1.bf16.msra.mxu0 %v5776
        %7968 = vmatprep.subr.bf16.mxu0 0
        %7969 = vmatpush1.bf16.msra.mxu0 %v5773
        %7970 = vmatprep.subr.bf16.mxu0 0
        %7971 = vmatpush1.bf16.msra.mxu0 %v5770
        %7972 = vmatprep.subr.bf16.mxu0 0
        %7973 = vmatpush2.bf16.msra.mxu0 %v5815
        %7974 = vmatprep.subr.bf16.mxu0 0
        %7975 = vmatpush2.bf16.msra.mxu0 %v5812
        %7976 = vmatprep.subr.bf16.mxu0 0
        %7977 = vmatpush2.bf16.msra.mxu0 %v5809
        %7978 = vmatprep.subr.bf16.mxu0 0
        %7979 = vmatpush2.bf16.msra.mxu0 %v5806
        %7980 = vmatprep.subr.bf16.mxu0 0
        %7981 = vmatpush2.bf16.msra.mxu0 %v5803
        %7982 = vmatprep.subr.bf16.mxu0 0
        %7983 = vmatpush2.bf16.msra.mxu0 %v5800
        %7984 = vmatprep.subr.bf16.mxu0 0
        %7985 = vmatpush2.bf16.msra.mxu0 %v5797
        %7986 = vmatprep.subr.bf16.mxu0 0
        %7987 = vmatpush2.bf16.msra.mxu0 %v5794
        %7988 = vmatprep.mubr.bf16.mxu0 %v3757
        %7989 = vmatmul.mubr.bf16.gmra.mxu0 %v3756
        %v7990 = vpop.f32.mrf.mxu0
        %v7991 = vadd.f32 %v7894, %v7990
        %v7992 = vpop.f32.mrf.mxu0
        %v7993 = vpop.f32.mrf.mxu0
        %v7994 = vadd.f32 %v7897, %v7993
        %v7995 = vpop.f32.mrf.mxu0
        %7996 = vmatprep.mubr.bf16.mxu0 %v3777
        %7997 = vmatmul.mubr.bf16.gmra.mxu0 %v3776
        %v7998 = vpop.f32.mrf.mxu0
        %v7999 = vadd.f32 %v7902, %v7998
        %v8000 = vpop.f32.mrf.mxu0
        %v8001 = vpop.f32.mrf.mxu0
        %v8002 = vadd.f32 %v7905, %v8001
        %v8003 = vpop.f32.mrf.mxu0
        %8004 = vmatprep.mubr.bf16.mxu0 %v3797
        %8005 = vmatmul.mubr.bf16.gmra.mxu0 %v3796
        %v8006 = vpop.f32.mrf.mxu0
        %v8007 = vadd.f32 %v7910, %v8006
        %v8008 = vpop.f32.mrf.mxu0
        %v8009 = vpop.f32.mrf.mxu0
        %v8010 = vadd.f32 %v7913, %v8009
        %v8011 = vpop.f32.mrf.mxu0
        %8012 = vmatprep.mubr.bf16.mxu0 %v3817
        %8013 = vmatmul.mubr.bf16.gmra.mxu0 %v3816
        %v8014 = vpop.f32.mrf.mxu0
        %v8015 = vadd.f32 %v7918, %v8014
        %v8016 = vpop.f32.mrf.mxu0
        %v8017 = vpop.f32.mrf.mxu0
        %v8018 = vadd.f32 %v7921, %v8017
        %v8019 = vpop.f32.mrf.mxu0
        %8020 = vmatprep.mubr.bf16.mxu0 %v3837
        %8021 = vmatmul.mubr.bf16.gmra.mxu0 %v3836
        %v8022 = vpop.f32.mrf.mxu0
        %v8023 = vadd.f32 %v7926, %v8022
        %v8024 = vpop.f32.mrf.mxu0
        %v8025 = vpop.f32.mrf.mxu0
        %v8026 = vadd.f32 %v7929, %v8025
        %v8027 = vpop.f32.mrf.mxu0
        %8028 = vmatprep.mubr.bf16.mxu0 %v3857
        %8029 = vmatmul.mubr.bf16.gmra.mxu0 %v3856
        %v8030 = vpop.f32.mrf.mxu0
        %v8031 = vadd.f32 %v7934, %v8030
        %v8032 = vpop.f32.mrf.mxu0
        %v8033 = vpop.f32.mrf.mxu0
        %v8034 = vadd.f32 %v7937, %v8033
        %v8035 = vpop.f32.mrf.mxu0
        %8036 = vmatprep.mubr.bf16.mxu0 %v3877
        %8037 = vmatmul.mubr.bf16.gmra.mxu0 %v3876
        %v8038 = vpop.f32.mrf.mxu0
        %v8039 = vadd.f32 %v7942, %v8038
        %v8040 = vpop.f32.mrf.mxu0
        %v8041 = vpop.f32.mrf.mxu0
        %v8042 = vadd.f32 %v7945, %v8041
        %v8043 = vpop.f32.mrf.mxu0
        %8044 = vmatprep.mubr.bf16.mxu0 %v3897
        %8045 = vmatmul.mubr.bf16.gmra.mxu0 %v3896
        %v8046 = vpop.f32.mrf.mxu0
        %v8047 = vadd.f32 %v7950, %v8046
        %v8048 = vpop.f32.mrf.mxu0
        %v8049 = vpop.f32.mrf.mxu0
        %v8050 = vadd.f32 %v7953, %v8049
        %v8051 = vpop.f32.mrf.mxu0
        %8052 = vdwg.mxu0
        %8053 = vmatprep.subr.bf16.mxu0 0
        %8054 = vmatpush1.bf16.msra.mxu0 %v5839
        %8055 = vmatprep.subr.bf16.mxu0 0
        %8056 = vmatpush1.bf16.msra.mxu0 %v5836
        %8057 = vmatprep.subr.bf16.mxu0 0
        %8058 = vmatpush1.bf16.msra.mxu0 %v5833
        %8059 = vmatprep.subr.bf16.mxu0 0
        %8060 = vmatpush1.bf16.msra.mxu0 %v5830
        %8061 = vmatprep.subr.bf16.mxu0 0
        %8062 = vmatpush1.bf16.msra.mxu0 %v5827
        %8063 = vmatprep.subr.bf16.mxu0 0
        %8064 = vmatpush1.bf16.msra.mxu0 %v5824
        %8065 = vmatprep.subr.bf16.mxu0 0
        %8066 = vmatpush1.bf16.msra.mxu0 %v5821
        %8067 = vmatprep.subr.bf16.mxu0 0
        %8068 = vmatpush1.bf16.msra.mxu0 %v5818
        %8069 = vmatprep.subr.bf16.mxu0 0
        %8070 = vmatpush2.bf16.msra.mxu0 %v5863
        %8071 = vmatprep.subr.bf16.mxu0 0
        %8072 = vmatpush2.bf16.msra.mxu0 %v5860
        %8073 = vmatprep.subr.bf16.mxu0 0
        %8074 = vmatpush2.bf16.msra.mxu0 %v5857
        %8075 = vmatprep.subr.bf16.mxu0 0
        %8076 = vmatpush2.bf16.msra.mxu0 %v5854
        %8077 = vmatprep.subr.bf16.mxu0 0
        %8078 = vmatpush2.bf16.msra.mxu0 %v5851
        %8079 = vmatprep.subr.bf16.mxu0 0
        %8080 = vmatpush2.bf16.msra.mxu0 %v5848
        %8081 = vmatprep.subr.bf16.mxu0 0
        %8082 = vmatpush2.bf16.msra.mxu0 %v5845
        %8083 = vmatprep.subr.bf16.mxu0 0
        %8084 = vmatpush2.bf16.msra.mxu0 %v5842
        %8085 = vmatprep.mubr.bf16.mxu0 %v3759
        %8086 = vmatmul.mubr.bf16.gmra.mxu0 %v3758
        %v8087 = vpop.f32.mrf.mxu0
        %v8088 = vadd.f32 %v7991, %v8087
        %v8089 = vpop.f32.mrf.mxu0
        %v8090 = vpop.f32.mrf.mxu0
        %v8091 = vadd.f32 %v7994, %v8090
        %v8092 = vpop.f32.mrf.mxu0
        %8093 = vmatprep.mubr.bf16.mxu0 %v3779
        %8094 = vmatmul.mubr.bf16.gmra.mxu0 %v3778
        %v8095 = vpop.f32.mrf.mxu0
        %v8096 = vadd.f32 %v7999, %v8095
        %v8097 = vpop.f32.mrf.mxu0
        %v8098 = vpop.f32.mrf.mxu0
        %v8099 = vadd.f32 %v8002, %v8098
        %v8100 = vpop.f32.mrf.mxu0
        %8101 = vmatprep.mubr.bf16.mxu0 %v3799
        %8102 = vmatmul.mubr.bf16.gmra.mxu0 %v3798
        %v8103 = vpop.f32.mrf.mxu0
        %v8104 = vadd.f32 %v8007, %v8103
        %v8105 = vpop.f32.mrf.mxu0
        %v8106 = vpop.f32.mrf.mxu0
        %v8107 = vadd.f32 %v8010, %v8106
        %v8108 = vpop.f32.mrf.mxu0
        %8109 = vmatprep.mubr.bf16.mxu0 %v3819
        %8110 = vmatmul.mubr.bf16.gmra.mxu0 %v3818
        %v8111 = vpop.f32.mrf.mxu0
        %v8112 = vadd.f32 %v8015, %v8111
        %v8113 = vpop.f32.mrf.mxu0
        %v8114 = vpop.f32.mrf.mxu0
        %v8115 = vadd.f32 %v8018, %v8114
        %v8116 = vpop.f32.mrf.mxu0
        %8117 = vmatprep.mubr.bf16.mxu0 %v3839
        %8118 = vmatmul.mubr.bf16.gmra.mxu0 %v3838
        %v8119 = vpop.f32.mrf.mxu0
        %v8120 = vadd.f32 %v8023, %v8119
        %v8121 = vpop.f32.mrf.mxu0
        %v8122 = vpop.f32.mrf.mxu0
        %v8123 = vadd.f32 %v8026, %v8122
        %v8124 = vpop.f32.mrf.mxu0
        %8125 = vmatprep.mubr.bf16.mxu0 %v3859
        %8126 = vmatmul.mubr.bf16.gmra.mxu0 %v3858
        %v8127 = vpop.f32.mrf.mxu0
        %v8128 = vadd.f32 %v8031, %v8127
        %v8129 = vpop.f32.mrf.mxu0
        %v8130 = vpop.f32.mrf.mxu0
        %v8131 = vadd.f32 %v8034, %v8130
        %v8132 = vpop.f32.mrf.mxu0
        %8133 = vmatprep.mubr.bf16.mxu0 %v3879
        %8134 = vmatmul.mubr.bf16.gmra.mxu0 %v3878
        %v8135 = vpop.f32.mrf.mxu0
        %v8136 = vadd.f32 %v8039, %v8135
        %v8137 = vpop.f32.mrf.mxu0
        %v8138 = vpop.f32.mrf.mxu0
        %v8139 = vadd.f32 %v8042, %v8138
        %v8140 = vpop.f32.mrf.mxu0
        %8141 = vmatprep.mubr.bf16.mxu0 %v3899
        %8142 = vmatmul.mubr.bf16.gmra.mxu0 %v3898
        %v8143 = vpop.f32.mrf.mxu0
        %v8144 = vadd.f32 %v8047, %v8143
        %v8145 = vpop.f32.mrf.mxu0
        %v8146 = vpop.f32.mrf.mxu0
        %v8147 = vadd.f32 %v8050, %v8146
        %v8148 = vpop.f32.mrf.mxu0
        %8149 = vdwg.mxu0
        %8150 = vmatprep.subr.bf16.mxu0 0
        %8151 = vmatpush1.bf16.msra.mxu0 %v5887
        %8152 = vmatprep.subr.bf16.mxu0 0
        %8153 = vmatpush1.bf16.msra.mxu0 %v5884
        %8154 = vmatprep.subr.bf16.mxu0 0
        %8155 = vmatpush1.bf16.msra.mxu0 %v5881
        %8156 = vmatprep.subr.bf16.mxu0 0
        %8157 = vmatpush1.bf16.msra.mxu0 %v5878
        %8158 = vmatprep.subr.bf16.mxu0 0
        %8159 = vmatpush1.bf16.msra.mxu0 %v5875
        %8160 = vmatprep.subr.bf16.mxu0 0
        %8161 = vmatpush1.bf16.msra.mxu0 %v5872
        %8162 = vmatprep.subr.bf16.mxu0 0
        %8163 = vmatpush1.bf16.msra.mxu0 %v5869
        %8164 = vmatprep.subr.bf16.mxu0 0
        %8165 = vmatpush1.bf16.msra.mxu0 %v5866
        %8166 = vmatprep.subr.bf16.mxu0 0
        %8167 = vmatpush2.bf16.msra.mxu0 %v5911
        %8168 = vmatprep.subr.bf16.mxu0 0
        %8169 = vmatpush2.bf16.msra.mxu0 %v5908
        %8170 = vmatprep.subr.bf16.mxu0 0
        %8171 = vmatpush2.bf16.msra.mxu0 %v5905
        %8172 = vmatprep.subr.bf16.mxu0 0
        %8173 = vmatpush2.bf16.msra.mxu0 %v5902
        %8174 = vmatprep.subr.bf16.mxu0 0
        %8175 = vmatpush2.bf16.msra.mxu0 %v5899
        %8176 = vmatprep.subr.bf16.mxu0 0
        %8177 = vmatpush2.bf16.msra.mxu0 %v5896
        %8178 = vmatprep.subr.bf16.mxu0 0
        %8179 = vmatpush2.bf16.msra.mxu0 %v5893
        %8180 = vmatprep.subr.bf16.mxu0 0
        %8181 = vmatpush2.bf16.msra.mxu0 %v5890
        %8182 = vmatprep.mubr.bf16.mxu0 %v3761
        %8183 = vmatmul.mubr.bf16.gmra.mxu0 %v3760
        %v8184 = vpop.f32.mrf.mxu0
        %v8185 = vadd.f32 %v8088, %v8184
        %v8186 = vpop.f32.mrf.mxu0
        %v8187 = vpop.f32.mrf.mxu0
        %v8188 = vadd.f32 %v8091, %v8187
        %v8189 = vpop.f32.mrf.mxu0
        %8190 = vmatprep.mubr.bf16.mxu0 %v3781
        %8191 = vmatmul.mubr.bf16.gmra.mxu0 %v3780
        %v8192 = vpop.f32.mrf.mxu0
        %v8193 = vadd.f32 %v8096, %v8192
        %v8194 = vpop.f32.mrf.mxu0
        %v8195 = vpop.f32.mrf.mxu0
        %v8196 = vadd.f32 %v8099, %v8195
        %v8197 = vpop.f32.mrf.mxu0
        %8198 = vmatprep.mubr.bf16.mxu0 %v3801
        %8199 = vmatmul.mubr.bf16.gmra.mxu0 %v3800
        %v8200 = vpop.f32.mrf.mxu0
        %v8201 = vadd.f32 %v8104, %v8200
        %v8202 = vpop.f32.mrf.mxu0
        %v8203 = vpop.f32.mrf.mxu0
        %v8204 = vadd.f32 %v8107, %v8203
        %v8205 = vpop.f32.mrf.mxu0
        %8206 = vmatprep.mubr.bf16.mxu0 %v3821
        %8207 = vmatmul.mubr.bf16.gmra.mxu0 %v3820
        %v8208 = vpop.f32.mrf.mxu0
        %v8209 = vadd.f32 %v8112, %v8208
        %v8210 = vpop.f32.mrf.mxu0
        %v8211 = vpop.f32.mrf.mxu0
        %v8212 = vadd.f32 %v8115, %v8211
        %v8213 = vpop.f32.mrf.mxu0
        %8214 = vmatprep.mubr.bf16.mxu0 %v3841
        %8215 = vmatmul.mubr.bf16.gmra.mxu0 %v3840
        %v8216 = vpop.f32.mrf.mxu0
        %v8217 = vadd.f32 %v8120, %v8216
        %v8218 = vpop.f32.mrf.mxu0
        %v8219 = vpop.f32.mrf.mxu0
        %v8220 = vadd.f32 %v8123, %v8219
        %v8221 = vpop.f32.mrf.mxu0
        %8222 = vmatprep.mubr.bf16.mxu0 %v3861
        %8223 = vmatmul.mubr.bf16.gmra.mxu0 %v3860
        %v8224 = vpop.f32.mrf.mxu0
        %v8225 = vadd.f32 %v8128, %v8224
        %v8226 = vpop.f32.mrf.mxu0
        %v8227 = vpop.f32.mrf.mxu0
        %v8228 = vadd.f32 %v8131, %v8227
        %v8229 = vpop.f32.mrf.mxu0
        %8230 = vmatprep.mubr.bf16.mxu0 %v3881
        %8231 = vmatmul.mubr.bf16.gmra.mxu0 %v3880
        %v8232 = vpop.f32.mrf.mxu0
        %v8233 = vadd.f32 %v8136, %v8232
        %v8234 = vpop.f32.mrf.mxu0
        %v8235 = vpop.f32.mrf.mxu0
        %v8236 = vadd.f32 %v8139, %v8235
        %v8237 = vpop.f32.mrf.mxu0
        %8238 = vmatprep.mubr.bf16.mxu0 %v3901
        %8239 = vmatmul.mubr.bf16.gmra.mxu0 %v3900
        %v8240 = vpop.f32.mrf.mxu0
        %v8241 = vadd.f32 %v8144, %v8240
        %v8242 = vpop.f32.mrf.mxu0
        %v8243 = vpop.f32.mrf.mxu0
        %v8244 = vadd.f32 %v8147, %v8243
        %v8245 = vpop.f32.mrf.mxu0
        %8246 = vdwg.mxu0
        %8247 = vmatprep.subr.bf16.mxu0 0
        %8248 = vmatpush1.bf16.msra.mxu0 %v5935
        %8249 = vmatprep.subr.bf16.mxu0 0
        %8250 = vmatpush1.bf16.msra.mxu0 %v5932
        %8251 = vmatprep.subr.bf16.mxu0 0
        %8252 = vmatpush1.bf16.msra.mxu0 %v5929
        %8253 = vmatprep.subr.bf16.mxu0 0
        %8254 = vmatpush1.bf16.msra.mxu0 %v5926
        %8255 = vmatprep.subr.bf16.mxu0 0
        %8256 = vmatpush1.bf16.msra.mxu0 %v5923
        %8257 = vmatprep.subr.bf16.mxu0 0
        %8258 = vmatpush1.bf16.msra.mxu0 %v5920
        %8259 = vmatprep.subr.bf16.mxu0 0
        %8260 = vmatpush1.bf16.msra.mxu0 %v5917
        %8261 = vmatprep.subr.bf16.mxu0 0
        %8262 = vmatpush1.bf16.msra.mxu0 %v5914
        %8263 = vmatprep.subr.bf16.mxu0 0
        %8264 = vmatpush2.bf16.msra.mxu0 %v5959
        %8265 = vmatprep.subr.bf16.mxu0 0
        %8266 = vmatpush2.bf16.msra.mxu0 %v5956
        %8267 = vmatprep.subr.bf16.mxu0 0
        %8268 = vmatpush2.bf16.msra.mxu0 %v5953
        %8269 = vmatprep.subr.bf16.mxu0 0
        %8270 = vmatpush2.bf16.msra.mxu0 %v5950
        %8271 = vmatprep.subr.bf16.mxu0 0
        %8272 = vmatpush2.bf16.msra.mxu0 %v5947
        %8273 = vmatprep.subr.bf16.mxu0 0
        %8274 = vmatpush2.bf16.msra.mxu0 %v5944
        %8275 = vmatprep.subr.bf16.mxu0 0
        %8276 = vmatpush2.bf16.msra.mxu0 %v5941
        %8277 = vmatprep.subr.bf16.mxu0 0
        %8278 = vmatpush2.bf16.msra.mxu0 %v5938
        %8279 = vmatprep.mubr.bf16.mxu0 %v3763
        %8280 = vmatmul.mubr.bf16.gmra.mxu0 %v3762
        %v8281 = vpop.f32.mrf.mxu0
        %v8282 = vadd.f32 %v8185, %v8281
        %v8283 = vpop.f32.mrf.mxu0
        %v8284 = vpop.f32.mrf.mxu0
        %v8285 = vadd.f32 %v8188, %v8284
        %v8286 = vpop.f32.mrf.mxu0
        %8287 = vmatprep.mubr.bf16.mxu0 %v3783
        %8288 = vmatmul.mubr.bf16.gmra.mxu0 %v3782
        %v8289 = vpop.f32.mrf.mxu0
        %v8290 = vadd.f32 %v8193, %v8289
        %v8291 = vpop.f32.mrf.mxu0
        %v8292 = vpop.f32.mrf.mxu0
        %v8293 = vadd.f32 %v8196, %v8292
        %v8294 = vpop.f32.mrf.mxu0
        %8295 = vmatprep.mubr.bf16.mxu0 %v3803
        %8296 = vmatmul.mubr.bf16.gmra.mxu0 %v3802
        %v8297 = vpop.f32.mrf.mxu0
        %v8298 = vadd.f32 %v8201, %v8297
        %v8299 = vpop.f32.mrf.mxu0
        %v8300 = vpop.f32.mrf.mxu0
        %v8301 = vadd.f32 %v8204, %v8300
        %v8302 = vpop.f32.mrf.mxu0
        %8303 = vmatprep.mubr.bf16.mxu0 %v3823
        %8304 = vmatmul.mubr.bf16.gmra.mxu0 %v3822
        %v8305 = vpop.f32.mrf.mxu0
        %v8306 = vadd.f32 %v8209, %v8305
        %v8307 = vpop.f32.mrf.mxu0
        %v8308 = vpop.f32.mrf.mxu0
        %v8309 = vadd.f32 %v8212, %v8308
        %v8310 = vpop.f32.mrf.mxu0
        %8311 = vmatprep.mubr.bf16.mxu0 %v3843
        %8312 = vmatmul.mubr.bf16.gmra.mxu0 %v3842
        %v8313 = vpop.f32.mrf.mxu0
        %v8314 = vadd.f32 %v8217, %v8313
        %v8315 = vpop.f32.mrf.mxu0
        %v8316 = vpop.f32.mrf.mxu0
        %v8317 = vadd.f32 %v8220, %v8316
        %v8318 = vpop.f32.mrf.mxu0
        %8319 = vmatprep.mubr.bf16.mxu0 %v3863
        %8320 = vmatmul.mubr.bf16.gmra.mxu0 %v3862
        %v8321 = vpop.f32.mrf.mxu0
        %v8322 = vadd.f32 %v8225, %v8321
        %v8323 = vpop.f32.mrf.mxu0
        %v8324 = vpop.f32.mrf.mxu0
        %v8325 = vadd.f32 %v8228, %v8324
        %v8326 = vpop.f32.mrf.mxu0
        %8327 = vmatprep.mubr.bf16.mxu0 %v3883
        %8328 = vmatmul.mubr.bf16.gmra.mxu0 %v3882
        %v8329 = vpop.f32.mrf.mxu0
        %v8330 = vadd.f32 %v8233, %v8329
        %v8331 = vpop.f32.mrf.mxu0
        %v8332 = vpop.f32.mrf.mxu0
        %v8333 = vadd.f32 %v8236, %v8332
        %v8334 = vpop.f32.mrf.mxu0
        %8335 = vmatprep.mubr.bf16.mxu0 %v3903
        %8336 = vmatmul.mubr.bf16.gmra.mxu0 %v3902
        %v8337 = vpop.f32.mrf.mxu0
        %v8338 = vadd.f32 %v8241, %v8337
        %v8339 = vpop.f32.mrf.mxu0
        %v8340 = vpop.f32.mrf.mxu0
        %v8341 = vadd.f32 %v8244, %v8340
        %v8342 = vpop.f32.mrf.mxu0
        %8343 = vdwg.mxu0
        %8344 = vmatprep.subr.bf16.mxu0 0
        %8345 = vmatpush1.bf16.msra.mxu0 %v5983
        %8346 = vmatprep.subr.bf16.mxu0 0
        %8347 = vmatpush1.bf16.msra.mxu0 %v5980
        %8348 = vmatprep.subr.bf16.mxu0 0
        %8349 = vmatpush1.bf16.msra.mxu0 %v5977
        %8350 = vmatprep.subr.bf16.mxu0 0
        %8351 = vmatpush1.bf16.msra.mxu0 %v5974
        %8352 = vmatprep.subr.bf16.mxu0 0
        %8353 = vmatpush1.bf16.msra.mxu0 %v5971
        %8354 = vmatprep.subr.bf16.mxu0 0
        %8355 = vmatpush1.bf16.msra.mxu0 %v5968
        %8356 = vmatprep.subr.bf16.mxu0 0
        %8357 = vmatpush1.bf16.msra.mxu0 %v5965
        %8358 = vmatprep.subr.bf16.mxu0 0
        %8359 = vmatpush1.bf16.msra.mxu0 %v5962
        %8360 = vmatprep.subr.bf16.mxu0 0
        %8361 = vmatpush2.bf16.msra.mxu0 %v6007
        %8362 = vmatprep.subr.bf16.mxu0 0
        %8363 = vmatpush2.bf16.msra.mxu0 %v6004
        %8364 = vmatprep.subr.bf16.mxu0 0
        %8365 = vmatpush2.bf16.msra.mxu0 %v6001
        %8366 = vmatprep.subr.bf16.mxu0 0
        %8367 = vmatpush2.bf16.msra.mxu0 %v5998
        %8368 = vmatprep.subr.bf16.mxu0 0
        %8369 = vmatpush2.bf16.msra.mxu0 %v5995
        %8370 = vmatprep.subr.bf16.mxu0 0
        %8371 = vmatpush2.bf16.msra.mxu0 %v5992
        %8372 = vmatprep.subr.bf16.mxu0 0
        %8373 = vmatpush2.bf16.msra.mxu0 %v5989
        %8374 = vmatprep.subr.bf16.mxu0 0
        %8375 = vmatpush2.bf16.msra.mxu0 %v5986
        %8376 = vmatprep.mubr.bf16.mxu0 %v3765
        %8377 = vmatmul.mubr.bf16.gmra.mxu0 %v3764
        %v8378 = vpop.f32.mrf.mxu0
        %v8379 = vadd.f32 %v8282, %v8378
        %v8380 = vpop.f32.mrf.mxu0
        %v8381 = vpop.f32.mrf.mxu0
        %v8382 = vadd.f32 %v8285, %v8381
        %v8383 = vpop.f32.mrf.mxu0
        %8384 = vmatprep.mubr.bf16.mxu0 %v3785
        %8385 = vmatmul.mubr.bf16.gmra.mxu0 %v3784
        %v8386 = vpop.f32.mrf.mxu0
        %v8387 = vadd.f32 %v8290, %v8386
        %v8388 = vpop.f32.mrf.mxu0
        %v8389 = vpop.f32.mrf.mxu0
        %v8390 = vadd.f32 %v8293, %v8389
        %v8391 = vpop.f32.mrf.mxu0
        %8392 = vmatprep.mubr.bf16.mxu0 %v3805
        %8393 = vmatmul.mubr.bf16.gmra.mxu0 %v3804
        %v8394 = vpop.f32.mrf.mxu0
        %v8395 = vadd.f32 %v8298, %v8394
        %v8396 = vpop.f32.mrf.mxu0
        %v8397 = vpop.f32.mrf.mxu0
        %v8398 = vadd.f32 %v8301, %v8397
        %v8399 = vpop.f32.mrf.mxu0
        %8400 = vmatprep.mubr.bf16.mxu0 %v3825
        %8401 = vmatmul.mubr.bf16.gmra.mxu0 %v3824
        %v8402 = vpop.f32.mrf.mxu0
        %v8403 = vadd.f32 %v8306, %v8402
        %v8404 = vpop.f32.mrf.mxu0
        %v8405 = vpop.f32.mrf.mxu0
        %v8406 = vadd.f32 %v8309, %v8405
        %v8407 = vpop.f32.mrf.mxu0
        %8408 = vmatprep.mubr.bf16.mxu0 %v3845
        %8409 = vmatmul.mubr.bf16.gmra.mxu0 %v3844
        %v8410 = vpop.f32.mrf.mxu0
        %v8411 = vadd.f32 %v8314, %v8410
        %v8412 = vpop.f32.mrf.mxu0
        %v8413 = vpop.f32.mrf.mxu0
        %v8414 = vadd.f32 %v8317, %v8413
        %v8415 = vpop.f32.mrf.mxu0
        %8416 = vmatprep.mubr.bf16.mxu0 %v3865
        %8417 = vmatmul.mubr.bf16.gmra.mxu0 %v3864
        %v8418 = vpop.f32.mrf.mxu0
        %v8419 = vadd.f32 %v8322, %v8418
        %v8420 = vpop.f32.mrf.mxu0
        %v8421 = vpop.f32.mrf.mxu0
        %v8422 = vadd.f32 %v8325, %v8421
        %v8423 = vpop.f32.mrf.mxu0
        %8424 = vmatprep.mubr.bf16.mxu0 %v3885
        %8425 = vmatmul.mubr.bf16.gmra.mxu0 %v3884
        %v8426 = vpop.f32.mrf.mxu0
        %v8427 = vadd.f32 %v8330, %v8426
        %v8428 = vpop.f32.mrf.mxu0
        %v8429 = vpop.f32.mrf.mxu0
        %v8430 = vadd.f32 %v8333, %v8429
        %v8431 = vpop.f32.mrf.mxu0
        %8432 = vmatprep.mubr.bf16.mxu0 %v3905
        %8433 = vmatmul.mubr.bf16.gmra.mxu0 %v3904
        %v8434 = vpop.f32.mrf.mxu0
        %v8435 = vadd.f32 %v8338, %v8434
        %v8436 = vpop.f32.mrf.mxu0
        %v8437 = vpop.f32.mrf.mxu0
        %v8438 = vadd.f32 %v8341, %v8437
        %v8439 = vpop.f32.mrf.mxu0
        %8440 = vdwg.mxu0
        %8441 = vmatprep.subr.bf16.mxu0 0
        %8442 = vmatpush1.bf16.msra.mxu0 %v6031
        %8443 = vmatprep.subr.bf16.mxu0 0
        %8444 = vmatpush1.bf16.msra.mxu0 %v6028
        %8445 = vmatprep.subr.bf16.mxu0 0
        %8446 = vmatpush1.bf16.msra.mxu0 %v6025
        %8447 = vmatprep.subr.bf16.mxu0 0
        %8448 = vmatpush1.bf16.msra.mxu0 %v6022
        %8449 = vmatprep.subr.bf16.mxu0 0
        %8450 = vmatpush1.bf16.msra.mxu0 %v6019
        %8451 = vmatprep.subr.bf16.mxu0 0
        %8452 = vmatpush1.bf16.msra.mxu0 %v6016
        %8453 = vmatprep.subr.bf16.mxu0 0
        %8454 = vmatpush1.bf16.msra.mxu0 %v6013
        %8455 = vmatprep.subr.bf16.mxu0 0
        %8456 = vmatpush1.bf16.msra.mxu0 %v6010
        %8457 = vmatprep.subr.bf16.mxu0 0
        %8458 = vmatpush2.bf16.msra.mxu0 %v6055
        %8459 = vmatprep.subr.bf16.mxu0 0
        %8460 = vmatpush2.bf16.msra.mxu0 %v6052
        %8461 = vmatprep.subr.bf16.mxu0 0
        %8462 = vmatpush2.bf16.msra.mxu0 %v6049
        %8463 = vmatprep.subr.bf16.mxu0 0
        %8464 = vmatpush2.bf16.msra.mxu0 %v6046
        %8465 = vmatprep.subr.bf16.mxu0 0
        %8466 = vmatpush2.bf16.msra.mxu0 %v6043
        %8467 = vmatprep.subr.bf16.mxu0 0
        %8468 = vmatpush2.bf16.msra.mxu0 %v6040
        %8469 = vmatprep.subr.bf16.mxu0 0
        %8470 = vmatpush2.bf16.msra.mxu0 %v6037
        %8471 = vmatprep.subr.bf16.mxu0 0
        %8472 = vmatpush2.bf16.msra.mxu0 %v6034
        %8473 = vmatprep.mubr.bf16.mxu0 %v3767
        %8474 = vmatmul.mubr.bf16.gmra.mxu0 %v3766
        %v8475 = vpop.f32.mrf.mxu0
        %v8476 = vadd.f32 %v8379, %v8475
        %v8477 = vpop.f32.mrf.mxu0
        %v8478 = vpop.f32.mrf.mxu0
        %v8479 = vadd.f32 %v8382, %v8478
        %v8480 = vpop.f32.mrf.mxu0
        %8481 = vmatprep.mubr.bf16.mxu0 %v3787
        %8482 = vmatmul.mubr.bf16.gmra.mxu0 %v3786
        %v8483 = vpop.f32.mrf.mxu0
        %v8484 = vadd.f32 %v8387, %v8483
        %v8485 = vpop.f32.mrf.mxu0
        %v8486 = vpop.f32.mrf.mxu0
        %v8487 = vadd.f32 %v8390, %v8486
        %v8488 = vpop.f32.mrf.mxu0
        %8489 = vmatprep.mubr.bf16.mxu0 %v3807
        %8490 = vmatmul.mubr.bf16.gmra.mxu0 %v3806
        %v8491 = vpop.f32.mrf.mxu0
        %v8492 = vadd.f32 %v8395, %v8491
        %v8493 = vpop.f32.mrf.mxu0
        %v8494 = vpop.f32.mrf.mxu0
        %v8495 = vadd.f32 %v8398, %v8494
        %v8496 = vpop.f32.mrf.mxu0
        %8497 = vmatprep.mubr.bf16.mxu0 %v3827
        %8498 = vmatmul.mubr.bf16.gmra.mxu0 %v3826
        %v8499 = vpop.f32.mrf.mxu0
        %v8500 = vadd.f32 %v8403, %v8499
        %v8501 = vpop.f32.mrf.mxu0
        %v8502 = vpop.f32.mrf.mxu0
        %v8503 = vadd.f32 %v8406, %v8502
        %v8504 = vpop.f32.mrf.mxu0
        %8505 = vmatprep.mubr.bf16.mxu0 %v3847
        %8506 = vmatmul.mubr.bf16.gmra.mxu0 %v3846
        %v8507 = vpop.f32.mrf.mxu0
        %v8508 = vadd.f32 %v8411, %v8507
        %v8509 = vpop.f32.mrf.mxu0
        %v8510 = vpop.f32.mrf.mxu0
        %v8511 = vadd.f32 %v8414, %v8510
        %v8512 = vpop.f32.mrf.mxu0
        %8513 = vmatprep.mubr.bf16.mxu0 %v3867
        %8514 = vmatmul.mubr.bf16.gmra.mxu0 %v3866
        %v8515 = vpop.f32.mrf.mxu0
        %v8516 = vadd.f32 %v8419, %v8515
        %v8517 = vpop.f32.mrf.mxu0
        %v8518 = vpop.f32.mrf.mxu0
        %v8519 = vadd.f32 %v8422, %v8518
        %v8520 = vpop.f32.mrf.mxu0
        %8521 = vmatprep.mubr.bf16.mxu0 %v3887
        %8522 = vmatmul.mubr.bf16.gmra.mxu0 %v3886
        %v8523 = vpop.f32.mrf.mxu0
        %v8524 = vadd.f32 %v8427, %v8523
        %v8525 = vpop.f32.mrf.mxu0
        %v8526 = vpop.f32.mrf.mxu0
        %v8527 = vadd.f32 %v8430, %v8526
        %v8528 = vpop.f32.mrf.mxu0
        %8529 = vmatprep.mubr.bf16.mxu0 %v3907
        %8530 = vmatmul.mubr.bf16.gmra.mxu0 %v3906
        %v8531 = vpop.f32.mrf.mxu0
        %v8532 = vadd.f32 %v8435, %v8531
        %v8533 = vpop.f32.mrf.mxu0
        %v8534 = vpop.f32.mrf.mxu0
        %v8535 = vadd.f32 %v8438, %v8534
        %v8536 = vpop.f32.mrf.mxu0
        %8537 = vdwg.mxu0
        %8538 = vmatprep.subr.bf16.mxu0 0
        %8539 = vmatpush1.bf16.msra.mxu0 %v6079
        %8540 = vmatprep.subr.bf16.mxu0 0
        %8541 = vmatpush1.bf16.msra.mxu0 %v6076
        %8542 = vmatprep.subr.bf16.mxu0 0
        %8543 = vmatpush1.bf16.msra.mxu0 %v6073
        %8544 = vmatprep.subr.bf16.mxu0 0
        %8545 = vmatpush1.bf16.msra.mxu0 %v6070
        %8546 = vmatprep.subr.bf16.mxu0 0
        %8547 = vmatpush1.bf16.msra.mxu0 %v6067
        %8548 = vmatprep.subr.bf16.mxu0 0
        %8549 = vmatpush1.bf16.msra.mxu0 %v6064
        %8550 = vmatprep.subr.bf16.mxu0 0
        %8551 = vmatpush1.bf16.msra.mxu0 %v6061
        %8552 = vmatprep.subr.bf16.mxu0 0
        %8553 = vmatpush1.bf16.msra.mxu0 %v6058
        %8554 = vmatprep.subr.bf16.mxu0 0
        %8555 = vmatpush2.bf16.msra.mxu0 %v6103
        %8556 = vmatprep.subr.bf16.mxu0 0
        %8557 = vmatpush2.bf16.msra.mxu0 %v6100
        %8558 = vmatprep.subr.bf16.mxu0 0
        %8559 = vmatpush2.bf16.msra.mxu0 %v6097
        %8560 = vmatprep.subr.bf16.mxu0 0
        %8561 = vmatpush2.bf16.msra.mxu0 %v6094
        %8562 = vmatprep.subr.bf16.mxu0 0
        %8563 = vmatpush2.bf16.msra.mxu0 %v6091
        %8564 = vmatprep.subr.bf16.mxu0 0
        %8565 = vmatpush2.bf16.msra.mxu0 %v6088
        %8566 = vmatprep.subr.bf16.mxu0 0
        %8567 = vmatpush2.bf16.msra.mxu0 %v6085
        %8568 = vmatprep.subr.bf16.mxu0 0
        %8569 = vmatpush2.bf16.msra.mxu0 %v6082
        %8570 = vmatprep.mubr.bf16.mxu0 %v3769
        %8571 = vmatmul.mubr.bf16.gmra.mxu0 %v3768
        %v8572 = vpop.f32.mrf.mxu0
        %v8573 = vadd.f32 %v8476, %v8572
        %v8574 = vpop.f32.mrf.mxu0
        %v8575 = vpop.f32.mrf.mxu0
        %v8576 = vadd.f32 %v8479, %v8575
        %v8577 = vpop.f32.mrf.mxu0
        %8578 = vmatprep.mubr.bf16.mxu0 %v3789
        %8579 = vmatmul.mubr.bf16.gmra.mxu0 %v3788
        %v8580 = vpop.f32.mrf.mxu0
        %v8581 = vadd.f32 %v8484, %v8580
        %v8582 = vpop.f32.mrf.mxu0
        %v8583 = vpop.f32.mrf.mxu0
        %v8584 = vadd.f32 %v8487, %v8583
        %v8585 = vpop.f32.mrf.mxu0
        %8586 = vmatprep.mubr.bf16.mxu0 %v3809
        %8587 = vmatmul.mubr.bf16.gmra.mxu0 %v3808
        %v8588 = vpop.f32.mrf.mxu0
        %v8589 = vadd.f32 %v8492, %v8588
        %v8590 = vpop.f32.mrf.mxu0
        %v8591 = vpop.f32.mrf.mxu0
        %v8592 = vadd.f32 %v8495, %v8591
        %v8593 = vpop.f32.mrf.mxu0
        %8594 = vmatprep.mubr.bf16.mxu0 %v3829
        %8595 = vmatmul.mubr.bf16.gmra.mxu0 %v3828
        %v8596 = vpop.f32.mrf.mxu0
        %v8597 = vadd.f32 %v8500, %v8596
        %v8598 = vpop.f32.mrf.mxu0
        %v8599 = vpop.f32.mrf.mxu0
        %v8600 = vadd.f32 %v8503, %v8599
        %v8601 = vpop.f32.mrf.mxu0
        %8602 = vmatprep.mubr.bf16.mxu0 %v3849
        %8603 = vmatmul.mubr.bf16.gmra.mxu0 %v3848
        %v8604 = vpop.f32.mrf.mxu0
        %v8605 = vadd.f32 %v8508, %v8604
        %v8606 = vpop.f32.mrf.mxu0
        %v8607 = vpop.f32.mrf.mxu0
        %v8608 = vadd.f32 %v8511, %v8607
        %v8609 = vpop.f32.mrf.mxu0
        %8610 = vmatprep.mubr.bf16.mxu0 %v3869
        %8611 = vmatmul.mubr.bf16.gmra.mxu0 %v3868
        %v8612 = vpop.f32.mrf.mxu0
        %v8613 = vadd.f32 %v8516, %v8612
        %v8614 = vpop.f32.mrf.mxu0
        %v8615 = vpop.f32.mrf.mxu0
        %v8616 = vadd.f32 %v8519, %v8615
        %v8617 = vpop.f32.mrf.mxu0
        %8618 = vmatprep.mubr.bf16.mxu0 %v3889
        %8619 = vmatmul.mubr.bf16.gmra.mxu0 %v3888
        %v8620 = vpop.f32.mrf.mxu0
        %v8621 = vadd.f32 %v8524, %v8620
        %v8622 = vpop.f32.mrf.mxu0
        %v8623 = vpop.f32.mrf.mxu0
        %v8624 = vadd.f32 %v8527, %v8623
        %v8625 = vpop.f32.mrf.mxu0
        %8626 = vmatprep.mubr.bf16.mxu0 %v3909
        %8627 = vmatmul.mubr.bf16.gmra.mxu0 %v3908
        %v8628 = vpop.f32.mrf.mxu0
        %v8629 = vadd.f32 %v8532, %v8628
        %v8630 = vpop.f32.mrf.mxu0
        %v8631 = vpop.f32.mrf.mxu0
        %v8632 = vadd.f32 %v8535, %v8631
        %v8633 = vpop.f32.mrf.mxu0
        %8634 = vdwg.mxu0
        %8635 = vmatprep.subr.bf16.mxu0 0
        %8636 = vmatpush1.bf16.msra.mxu0 %v6127
        %8637 = vmatprep.subr.bf16.mxu0 0
        %8638 = vmatpush1.bf16.msra.mxu0 %v6124
        %8639 = vmatprep.subr.bf16.mxu0 0
        %8640 = vmatpush1.bf16.msra.mxu0 %v6121
        %8641 = vmatprep.subr.bf16.mxu0 0
        %8642 = vmatpush1.bf16.msra.mxu0 %v6118
        %8643 = vmatprep.subr.bf16.mxu0 0
        %8644 = vmatpush1.bf16.msra.mxu0 %v6115
        %8645 = vmatprep.subr.bf16.mxu0 0
        %8646 = vmatpush1.bf16.msra.mxu0 %v6112
        %8647 = vmatprep.subr.bf16.mxu0 0
        %8648 = vmatpush1.bf16.msra.mxu0 %v6109
        %8649 = vmatprep.subr.bf16.mxu0 0
        %8650 = vmatpush1.bf16.msra.mxu0 %v6106
        %8651 = vmatprep.subr.bf16.mxu0 0
        %8652 = vmatpush2.bf16.msra.mxu0 %v6151
        %8653 = vmatprep.subr.bf16.mxu0 0
        %8654 = vmatpush2.bf16.msra.mxu0 %v6148
        %8655 = vmatprep.subr.bf16.mxu0 0
        %8656 = vmatpush2.bf16.msra.mxu0 %v6145
        %8657 = vmatprep.subr.bf16.mxu0 0
        %8658 = vmatpush2.bf16.msra.mxu0 %v6142
        %8659 = vmatprep.subr.bf16.mxu0 0
        %8660 = vmatpush2.bf16.msra.mxu0 %v6139
        %8661 = vmatprep.subr.bf16.mxu0 0
        %8662 = vmatpush2.bf16.msra.mxu0 %v6136
        %8663 = vmatprep.subr.bf16.mxu0 0
        %8664 = vmatpush2.bf16.msra.mxu0 %v6133
        %8665 = vmatprep.subr.bf16.mxu0 0
        %8666 = vmatpush2.bf16.msra.mxu0 %v6130
        %8667 = vmatprep.mubr.bf16.mxu0 %v3771
        %8668 = vmatmul.mubr.bf16.gmra.mxu0 %v3770
        %v8669 = vpop.f32.mrf.mxu0
        %v8670 = vadd.f32 %v8573, %v8669
        %v8671 = vpop.f32.mrf.mxu0
        %v8672 = vpop.f32.mrf.mxu0
        %v8673 = vadd.f32 %v8576, %v8672
        %v8674 = vpop.f32.mrf.mxu0
        %8675 = vmatprep.mubr.bf16.mxu0 %v3791
        %8676 = vmatmul.mubr.bf16.gmra.mxu0 %v3790
        %v8677 = vpop.f32.mrf.mxu0
        %v8678 = vadd.f32 %v8581, %v8677
        %v8679 = vpop.f32.mrf.mxu0
        %v8680 = vpop.f32.mrf.mxu0
        %v8681 = vadd.f32 %v8584, %v8680
        %v8682 = vpop.f32.mrf.mxu0
        %8683 = vmatprep.mubr.bf16.mxu0 %v3811
        %8684 = vmatmul.mubr.bf16.gmra.mxu0 %v3810
        %v8685 = vpop.f32.mrf.mxu0
        %v8686 = vadd.f32 %v8589, %v8685
        %v8687 = vpop.f32.mrf.mxu0
        %v8688 = vpop.f32.mrf.mxu0
        %v8689 = vadd.f32 %v8592, %v8688
        %v8690 = vpop.f32.mrf.mxu0
        %8691 = vmatprep.mubr.bf16.mxu0 %v3831
        %8692 = vmatmul.mubr.bf16.gmra.mxu0 %v3830
        %v8693 = vpop.f32.mrf.mxu0
        %v8694 = vadd.f32 %v8597, %v8693
        %v8695 = vpop.f32.mrf.mxu0
        %v8696 = vpop.f32.mrf.mxu0
        %v8697 = vadd.f32 %v8600, %v8696
        %v8698 = vpop.f32.mrf.mxu0
        %8699 = vmatprep.mubr.bf16.mxu0 %v3851
        %8700 = vmatmul.mubr.bf16.gmra.mxu0 %v3850
        %v8701 = vpop.f32.mrf.mxu0
        %v8702 = vadd.f32 %v8605, %v8701
        %v8703 = vpop.f32.mrf.mxu0
        %v8704 = vpop.f32.mrf.mxu0
        %v8705 = vadd.f32 %v8608, %v8704
        %v8706 = vpop.f32.mrf.mxu0
        %8707 = vmatprep.mubr.bf16.mxu0 %v3871
        %8708 = vmatmul.mubr.bf16.gmra.mxu0 %v3870
        %v8709 = vpop.f32.mrf.mxu0
        %v8710 = vadd.f32 %v8613, %v8709
        %v8711 = vpop.f32.mrf.mxu0
        %v8712 = vpop.f32.mrf.mxu0
        %v8713 = vadd.f32 %v8616, %v8712
        %v8714 = vpop.f32.mrf.mxu0
        %8715 = vmatprep.mubr.bf16.mxu0 %v3891
        %8716 = vmatmul.mubr.bf16.gmra.mxu0 %v3890
        %v8717 = vpop.f32.mrf.mxu0
        %v8718 = vadd.f32 %v8621, %v8717
        %v8719 = vpop.f32.mrf.mxu0
        %v8720 = vpop.f32.mrf.mxu0
        %v8721 = vadd.f32 %v8624, %v8720
        %v8722 = vpop.f32.mrf.mxu0
        %8723 = vmatprep.mubr.bf16.mxu0 %v3911
        %8724 = vmatmul.mubr.bf16.gmra.mxu0 %v3910
        %v8725 = vpop.f32.mrf.mxu0
        %v8726 = vadd.f32 %v8629, %v8725
        %v8727 = vpop.f32.mrf.mxu0
        %v8728 = vpop.f32.mrf.mxu0
        %v8729 = vadd.f32 %v8632, %v8728
        %v8730 = vpop.f32.mrf.mxu0
        %8731 = vdwg.mxu0
        %v8732 = vxor.u32 %v7684, 2147483648
        %v8733 = vxor.u32 %v7688, 2147483648
        %v8734 = vxor.u32 %v7694, 2147483648
        %v8735 = vxor.u32 %v7698, 2147483648
        %v8736 = vxor.u32 %v7704, 2147483648
        %v8737 = vxor.u32 %v7708, 2147483648
        %v8738 = vxor.u32 %v7714, 2147483648
        %v8739 = vxor.u32 %v7718, 2147483648
        %v8740 = vxor.u32 %v7724, 2147483648
        %v8741 = vxor.u32 %v7728, 2147483648
        %v8742 = vxor.u32 %v7734, 2147483648
        %v8743 = vxor.u32 %v7738, 2147483648
        %v8744 = vxor.u32 %v7744, 2147483648
        %v8745 = vxor.u32 %v7748, 2147483648
        %v8746 = vxor.u32 %v7754, 2147483648
        %v8747 = vxor.u32 %v7758, 2147483648
        %v8748 = vmul.f32 %v8732, 1.442695
        %v8749 = vpow.pop %v8748
        %v8750 = vmul.f32 %v8733, 1.442695
        %v8751 = vpow.pop %v8750
        %v8752 = vmul.f32 %v8734, 1.442695
        %v8753 = vpow.pop %v8752
        %v8754 = vmul.f32 %v8735, 1.442695
        %v8755 = vpow.pop %v8754
        %v8756 = vmul.f32 %v8736, 1.442695
        %v8757 = vpow.pop %v8756
        %v8758 = vmul.f32 %v8737, 1.442695
        %v8759 = vpow.pop %v8758
        %v8760 = vmul.f32 %v8738, 1.442695
        %v8761 = vpow.pop %v8760
        %v8762 = vmul.f32 %v8739, 1.442695
        %v8763 = vpow.pop %v8762
        %v8764 = vmul.f32 %v8740, 1.442695
        %v8765 = vpow.pop %v8764
        %v8766 = vmul.f32 %v8741, 1.442695
        %v8767 = vpow.pop %v8766
        %v8768 = vmul.f32 %v8742, 1.442695
        %v8769 = vpow.pop %v8768
        %v8770 = vmul.f32 %v8743, 1.442695
        %v8771 = vpow.pop %v8770
        %v8772 = vmul.f32 %v8744, 1.442695
        %v8773 = vpow.pop %v8772
        %v8774 = vmul.f32 %v8745, 1.442695
        %v8775 = vpow.pop %v8774
        %v8776 = vmul.f32 %v8746, 1.442695
        %v8777 = vpow.pop %v8776
        %v8778 = vmul.f32 %v8747, 1.442695
        %v8779 = vpow.pop %v8778
        %v8780 = vadd.f32 %v8749, 1.0
        %v8781 = vadd.f32 %v8751, 1.0
        %v8782 = vadd.f32 %v8753, 1.0
        %v8783 = vadd.f32 %v8755, 1.0
        %v8784 = vadd.f32 %v8757, 1.0
        %v8785 = vadd.f32 %v8759, 1.0
        %v8786 = vadd.f32 %v8761, 1.0
        %v8787 = vadd.f32 %v8763, 1.0
        %v8788 = vadd.f32 %v8765, 1.0
        %v8789 = vadd.f32 %v8767, 1.0
        %v8790 = vadd.f32 %v8769, 1.0
        %v8791 = vadd.f32 %v8771, 1.0
        %v8792 = vadd.f32 %v8773, 1.0
        %v8793 = vadd.f32 %v8775, 1.0
        %v8794 = vadd.f32 %v8777, 1.0
        %v8795 = vadd.f32 %v8779, 1.0
        %v8796 = vrcp.pop %v8780
        %v8797 = vmul.f32 1.0, %v8796
        %v8798 = vrcp.pop %v8781
        %v8799 = vmul.f32 1.0, %v8798
        %v8800 = vrcp.pop %v8782
        %v8801 = vmul.f32 1.0, %v8800
        %v8802 = vrcp.pop %v8783
        %v8803 = vmul.f32 1.0, %v8802
        %v8804 = vrcp.pop %v8784
        %v8805 = vmul.f32 1.0, %v8804
        %v8806 = vrcp.pop %v8785
        %v8807 = vmul.f32 1.0, %v8806
        %v8808 = vrcp.pop %v8786
        %v8809 = vmul.f32 1.0, %v8808
        %v8810 = vrcp.pop %v8787
        %v8811 = vmul.f32 1.0, %v8810
        %v8812 = vrcp.pop %v8788
        %v8813 = vmul.f32 1.0, %v8812
        %v8814 = vrcp.pop %v8789
        %v8815 = vmul.f32 1.0, %v8814
        %v8816 = vrcp.pop %v8790
        %v8817 = vmul.f32 1.0, %v8816
        %v8818 = vrcp.pop %v8791
        %v8819 = vmul.f32 1.0, %v8818
        %v8820 = vrcp.pop %v8792
        %v8821 = vmul.f32 1.0, %v8820
        %v8822 = vrcp.pop %v8793
        %v8823 = vmul.f32 1.0, %v8822
        %v8824 = vrcp.pop %v8794
        %v8825 = vmul.f32 1.0, %v8824
        %v8826 = vrcp.pop %v8795
        %v8827 = vmul.f32 1.0, %v8826
        %v8828 = vxor.u32 %v7686, 2147483648
        %v8829 = vxor.u32 %v7690, 2147483648
        %v8830 = vxor.u32 %v7696, 2147483648
        %v8831 = vxor.u32 %v7700, 2147483648
        %v8832 = vxor.u32 %v7706, 2147483648
        %v8833 = vxor.u32 %v7710, 2147483648
        %v8834 = vxor.u32 %v7716, 2147483648
        %v8835 = vxor.u32 %v7720, 2147483648
        %v8836 = vxor.u32 %v7726, 2147483648
        %v8837 = vxor.u32 %v7730, 2147483648
        %v8838 = vxor.u32 %v7736, 2147483648
        %v8839 = vxor.u32 %v7740, 2147483648
        %v8840 = vxor.u32 %v7746, 2147483648
        %v8841 = vxor.u32 %v7750, 2147483648
        %v8842 = vxor.u32 %v7756, 2147483648
        %v8843 = vxor.u32 %v7760, 2147483648
        %v8844 = vmul.f32 %v8828, 1.442695
        %v8845 = vpow.pop %v8844
        %v8846 = vmul.f32 %v8829, 1.442695
        %v8847 = vpow.pop %v8846
        %v8848 = vmul.f32 %v8830, 1.442695
        %v8849 = vpow.pop %v8848
        %v8850 = vmul.f32 %v8831, 1.442695
        %v8851 = vpow.pop %v8850
        %v8852 = vmul.f32 %v8832, 1.442695
        %v8853 = vpow.pop %v8852
        %v8854 = vmul.f32 %v8833, 1.442695
        %v8855 = vpow.pop %v8854
        %v8856 = vmul.f32 %v8834, 1.442695
        %v8857 = vpow.pop %v8856
        %v8858 = vmul.f32 %v8835, 1.442695
        %v8859 = vpow.pop %v8858
        %v8860 = vmul.f32 %v8836, 1.442695
        %v8861 = vpow.pop %v8860
        %v8862 = vmul.f32 %v8837, 1.442695
        %v8863 = vpow.pop %v8862
        %v8864 = vmul.f32 %v8838, 1.442695
        %v8865 = vpow.pop %v8864
        %v8866 = vmul.f32 %v8839, 1.442695
        %v8867 = vpow.pop %v8866
        %v8868 = vmul.f32 %v8840, 1.442695
        %v8869 = vpow.pop %v8868
        %v8870 = vmul.f32 %v8841, 1.442695
        %v8871 = vpow.pop %v8870
        %v8872 = vmul.f32 %v8842, 1.442695
        %v8873 = vpow.pop %v8872
        %v8874 = vmul.f32 %v8843, 1.442695
        %v8875 = vpow.pop %v8874
        %v8876 = vadd.f32 %v8845, 1.0
        %v8877 = vadd.f32 %v8847, 1.0
        %v8878 = vadd.f32 %v8849, 1.0
        %v8879 = vadd.f32 %v8851, 1.0
        %v8880 = vadd.f32 %v8853, 1.0
        %v8881 = vadd.f32 %v8855, 1.0
        %v8882 = vadd.f32 %v8857, 1.0
        %v8883 = vadd.f32 %v8859, 1.0
        %v8884 = vadd.f32 %v8861, 1.0
        %v8885 = vadd.f32 %v8863, 1.0
        %v8886 = vadd.f32 %v8865, 1.0
        %v8887 = vadd.f32 %v8867, 1.0
        %v8888 = vadd.f32 %v8869, 1.0
        %v8889 = vadd.f32 %v8871, 1.0
        %v8890 = vadd.f32 %v8873, 1.0
        %v8891 = vadd.f32 %v8875, 1.0
        %v8892 = vrcp.pop %v8876
        %v8893 = vmul.f32 1.0, %v8892
        %v8894 = vrcp.pop %v8877
        %v8895 = vmul.f32 1.0, %v8894
        %v8896 = vrcp.pop %v8878
        %v8897 = vmul.f32 1.0, %v8896
        %v8898 = vrcp.pop %v8879
        %v8899 = vmul.f32 1.0, %v8898
        %v8900 = vrcp.pop %v8880
        %v8901 = vmul.f32 1.0, %v8900
        %v8902 = vrcp.pop %v8881
        %v8903 = vmul.f32 1.0, %v8902
        %v8904 = vrcp.pop %v8882
        %v8905 = vmul.f32 1.0, %v8904
        %v8906 = vrcp.pop %v8883
        %v8907 = vmul.f32 1.0, %v8906
        %v8908 = vrcp.pop %v8884
        %v8909 = vmul.f32 1.0, %v8908
        %v8910 = vrcp.pop %v8885
        %v8911 = vmul.f32 1.0, %v8910
        %v8912 = vrcp.pop %v8886
        %v8913 = vmul.f32 1.0, %v8912
        %v8914 = vrcp.pop %v8887
        %v8915 = vmul.f32 1.0, %v8914
        %v8916 = vrcp.pop %v8888
        %v8917 = vmul.f32 1.0, %v8916
        %v8918 = vrcp.pop %v8889
        %v8919 = vmul.f32 1.0, %v8918
        %v8920 = vrcp.pop %v8890
        %v8921 = vmul.f32 1.0, %v8920
        %v8922 = vrcp.pop %v8891
        %v8923 = vmul.f32 1.0, %v8922
        %v8924 = vmul.f32 %v8893, %v352
        %v8925 = vmul.f32 %v8895, %v353
        %v8926 = vmul.f32 %v8897, %v354
        %v8927 = vmul.f32 %v8899, %v355
        %v8928 = vmul.f32 %v8901, %v356
        %v8929 = vmul.f32 %v8903, %v357
        %v8930 = vmul.f32 %v8905, %v358
        %v8931 = vmul.f32 %v8907, %v359
        %v8932 = vmul.f32 %v8909, %v360
        %v8933 = vmul.f32 %v8911, %v361
        %v8934 = vmul.f32 %v8913, %v362
        %v8935 = vmul.f32 %v8915, %v363
        %v8936 = vmul.f32 %v8917, %v364
        %v8937 = vmul.f32 %v8919, %v365
        %v8938 = vmul.f32 %v8921, %v366
        %v8939 = vmul.f32 %v8923, %v367
        %v8940 = vpack.c.bf16 %v8925, %v8924
        %v8941 = vpack.c.bf16 %v8927, %v8926
        %v8942 = vpack.c.bf16 %v8929, %v8928
        %v8943 = vpack.c.bf16 %v8931, %v8930
        %v8944 = vpack.c.bf16 %v8933, %v8932
        %v8945 = vpack.c.bf16 %v8935, %v8934
        %v8946 = vpack.c.bf16 %v8937, %v8936
        %v8947 = vpack.c.bf16 %v8939, %v8938
        %8948 = vst [vmem:[#allocation4] sm:$0x1] 0
        %8949 = vst [vmem:[#allocation4 + $0xc] sm:$0x1] 0
        %8950 = vst [vmem:[#allocation4 + $0x18] sm:$0x1] 0
        %8951 = vst [vmem:[#allocation4 + $0x24] sm:$0x1] 0
        %8952 = vst [vmem:[#allocation4 + $0x30] sm:$0x1] 0
        %8953 = vst [vmem:[#allocation4 + $0x3c] sm:$0x1] 0
        %8954 = vst [vmem:[#allocation4 + $0x48] sm:$0x1] 0
        %8955 = vst [vmem:[#allocation4 + $0x54] sm:$0x1] 0
        %8956 = vst [vmem:[#allocation4 + $0x8] sm:$0x2] 0
        %8957 = vst [vmem:[#allocation4 + $0x14] sm:$0x2] 0
        %8958 = vst [vmem:[#allocation4 + $0x20] sm:$0x2] 0
        %8959 = vst [vmem:[#allocation4 + $0x2c] sm:$0x2] 0
        %8960 = vst [vmem:[#allocation4 + $0x38] sm:$0x2] 0
        %8961 = vst [vmem:[#allocation4 + $0x44] sm:$0x2] 0
        %8962 = vst [vmem:[#allocation4 + $0x50] sm:$0x2] 0
        %8963 = vst [vmem:[#allocation4 + $0x5c] sm:$0x2] 0
        %v8972 = vunpack.c.l.b16 %v8940
        %v8973 = vunpack.c.h.b16 %v8940
        %v8974 = vunpack.c.l.b16 %v8941
        %v8975 = vunpack.c.h.b16 %v8941
        %v8976 = vunpack.c.l.b16 %v8942
        %v8977 = vunpack.c.h.b16 %v8942
        %v8978 = vunpack.c.l.b16 %v8943
        %v8979 = vunpack.c.h.b16 %v8943
        %v8980 = vunpack.c.l.b16 %v8944
        %v8981 = vunpack.c.h.b16 %v8944
        %v8982 = vunpack.c.l.b16 %v8945
        %v8983 = vunpack.c.h.b16 %v8945
        %v8984 = vunpack.c.l.b16 %v8946
        %v8985 = vunpack.c.h.b16 %v8946
        %v8986 = vunpack.c.l.b16 %v8947
        %v8987 = vunpack.c.h.b16 %v8947
        %v8988 = vpack.c.b16 %v8972, %v8972
        %v8989 = vpack.c.b16 %v8973, %v8973
        %v8990 = vpack.c.b16 %v8974, %v8974
        %v8991 = vpack.c.b16 %v8975, %v8975
        %v8992 = vpack.c.b16 %v8976, %v8976
        %v8993 = vpack.c.b16 %v8977, %v8977
        %v8994 = vpack.c.b16 %v8978, %v8978
        %v8995 = vpack.c.b16 %v8979, %v8979
        %v8996 = vpack.c.b16 %v8980, %v8980
        %v8997 = vpack.c.b16 %v8981, %v8981
        %v8998 = vpack.c.b16 %v8982, %v8982
        %v8999 = vpack.c.b16 %v8983, %v8983
        %v9000 = vpack.c.b16 %v8984, %v8984
        %v9001 = vpack.c.b16 %v8985, %v8985
        %v9002 = vpack.c.b16 %v8986, %v8986
        %v9003 = vpack.c.b16 %v8987, %v8987
        %v9004 = vrot.slane %v8988, 7
        %v9005 = vrot.slane %v9004, 4
        %v9006 = vrot.slane %v8989, 7
        %v9007 = vsel %vm450, %v9005, %v9006
        %v9008 = vrot.slane %v9006, 4
        %v9009 = vrot.slane %v8990, 7
        %v9010 = vrot.slane %v9009, 4
        %v9011 = vrot.slane %v8991, 7
        %v9012 = vsel %vm450, %v9010, %v9011
        %v9013 = vrot.slane %v9011, 4
        %v9014 = vrot.slane %v8992, 7
        %v9015 = vrot.slane %v9014, 4
        %v9016 = vrot.slane %v8993, 7
        %v9017 = vsel %vm450, %v9015, %v9016
        %v9018 = vrot.slane %v9016, 4
        %v9019 = vrot.slane %v8994, 7
        %v9020 = vrot.slane %v9019, 4
        %v9021 = vrot.slane %v8995, 7
        %v9022 = vsel %vm450, %v9020, %v9021
        %v9023 = vrot.slane %v9021, 4
        %v9024 = vrot.slane %v8996, 7
        %v9025 = vrot.slane %v9024, 4
        %v9026 = vrot.slane %v8997, 7
        %v9027 = vsel %vm450, %v9025, %v9026
        %v9028 = vrot.slane %v9026, 4
        %v9029 = vrot.slane %v8998, 7
        %v9030 = vrot.slane %v9029, 4
        %v9031 = vrot.slane %v8999, 7
        %v9032 = vsel %vm450, %v9030, %v9031
        %v9033 = vrot.slane %v9031, 4
        %v9034 = vrot.slane %v9000, 7
        %v9035 = vrot.slane %v9034, 4
        %v9036 = vrot.slane %v9001, 7
        %v9037 = vsel %vm450, %v9035, %v9036
        %v9038 = vrot.slane %v9036, 4
        %v9039 = vrot.slane %v9002, 7
        %v9040 = vrot.slane %v9039, 4
        %v9041 = vrot.slane %v9003, 7
        %v9042 = vsel %vm450, %v9040, %v9041
        %v9043 = vrot.slane %v9041, 4
        %9068 = vst [vmem:[#allocation4] sm:$0xe] %v9004
        %9069 = vst [vmem:[#allocation4 + $0x4] sm:$0xf] %v9007
        %9070 = vst [vmem:[#allocation4 + $0x8] sm:$0x1] %v9008
        %9071 = vst [vmem:[#allocation4 + $0xc] sm:$0xe] %v9009
        %9072 = vst [vmem:[#allocation4 + $0x10] sm:$0xf] %v9012
        %9073 = vst [vmem:[#allocation4 + $0x14] sm:$0x1] %v9013
        %9074 = vst [vmem:[#allocation4 + $0x18] sm:$0xe] %v9014
        %9075 = vst [vmem:[#allocation4 + $0x1c] sm:$0xf] %v9017
        %9076 = vst [vmem:[#allocation4 + $0x20] sm:$0x1] %v9018
        %9077 = vst [vmem:[#allocation4 + $0x24] sm:$0xe] %v9019
        %9078 = vst [vmem:[#allocation4 + $0x28] sm:$0xf] %v9022
        %9079 = vst [vmem:[#allocation4 + $0x2c] sm:$0x1] %v9023
        %9080 = vst [vmem:[#allocation4 + $0x30] sm:$0xe] %v9024
        %9081 = vst [vmem:[#allocation4 + $0x34] sm:$0xf] %v9027
        %9082 = vst [vmem:[#allocation4 + $0x38] sm:$0x1] %v9028
        %9083 = vst [vmem:[#allocation4 + $0x3c] sm:$0xe] %v9029
        %9084 = vst [vmem:[#allocation4 + $0x40] sm:$0xf] %v9032
        %9085 = vst [vmem:[#allocation4 + $0x44] sm:$0x1] %v9033
        %9086 = vst [vmem:[#allocation4 + $0x48] sm:$0xe] %v9034
        %9087 = vst [vmem:[#allocation4 + $0x4c] sm:$0xf] %v9037
        %9088 = vst [vmem:[#allocation4 + $0x50] sm:$0x1] %v9038
        %9089 = vst [vmem:[#allocation4 + $0x54] sm:$0xe] %v9039
        %9090 = vst [vmem:[#allocation4 + $0x58] sm:$0xf] %v9042
        %9091 = vst [vmem:[#allocation4 + $0x5c] sm:$0x1] %v9043
        %v9092 = vld [vmem:[#allocation4] sm:$0xf]
        %v9093 = vld [vmem:[#allocation4 + $0x4] sm:$0xf]
        %v9094 = vld [vmem:[#allocation4 + $0xc] sm:$0xf]
        %v9095 = vld [vmem:[#allocation4 + $0x10] sm:$0xf]
        %v9096 = vld [vmem:[#allocation4 + $0x18] sm:$0xf]
        %v9097 = vld [vmem:[#allocation4 + $0x1c] sm:$0xf]
        %v9098 = vld [vmem:[#allocation4 + $0x24] sm:$0xf]
        %v9099 = vld [vmem:[#allocation4 + $0x28] sm:$0xf]
        %v9100 = vld [vmem:[#allocation4 + $0x30] sm:$0xf]
        %v9101 = vld [vmem:[#allocation4 + $0x34] sm:$0xf]
        %v9102 = vld [vmem:[#allocation4 + $0x3c] sm:$0xf]
        %v9103 = vld [vmem:[#allocation4 + $0x40] sm:$0xf]
        %v9104 = vld [vmem:[#allocation4 + $0x48] sm:$0xf]
        %v9105 = vld [vmem:[#allocation4 + $0x4c] sm:$0xf]
        %v9106 = vld [vmem:[#allocation4 + $0x54] sm:$0xf]
        %v9107 = vld [vmem:[#allocation4 + $0x58] sm:$0xf]
        %9108 = vst [vmem:[#allocation5] sm:$0xf] %v9092
        %9109 = vst [vmem:[#allocation5 + $0x14] sm:$0xf] %v9093
        %9110 = vst [vmem:[#allocation5 + $0x28] sm:$0xf] %v9094
        %9111 = vst [vmem:[#allocation5 + $0x3c] sm:$0xf] %v9095
        %9112 = vst [vmem:[#allocation5 + $0x50] sm:$0xf] %v9096
        %9113 = vst [vmem:[#allocation5 + $0x64] sm:$0xf] %v9097
        %9114 = vst [vmem:[#allocation5 + $0x78] sm:$0xf] %v9098
        %9115 = vst [vmem:[#allocation5 + $0x8c] sm:$0xf] %v9099
        %9116 = vst [vmem:[#allocation5 + $0xa0] sm:$0xf] %v9100
        %9117 = vst [vmem:[#allocation5 + $0xb4] sm:$0xf] %v9101
        %9118 = vst [vmem:[#allocation5 + $0xc8] sm:$0xf] %v9102
        %9119 = vst [vmem:[#allocation5 + $0xdc] sm:$0xf] %v9103
        %9120 = vst [vmem:[#allocation5 + $0xf0] sm:$0xf] %v9104
        %9121 = vst [vmem:[#allocation5 + $0x104] sm:$0xf] %v9105
        %9122 = vst [vmem:[#allocation5 + $0x118] sm:$0xf] %v9106
        %9123 = vst [vmem:[#allocation5 + $0x12c] sm:$0xf] %v9107
        %v9124 = vld [vmem:[#allocation4] sm:$0xf]
        %v9125 = vld [vmem:[#allocation4 + $0x4] sm:$0xf]
        %v9126 = vld [vmem:[#allocation4 + $0x8] sm:$0x1]
        %v9127 = vld [vmem:[#allocation4 + $0xc] sm:$0xf]
        %v9128 = vld [vmem:[#allocation4 + $0x10] sm:$0xf]
        %v9129 = vld [vmem:[#allocation4 + $0x14] sm:$0x1]
        %v9130 = vld [vmem:[#allocation4 + $0x18] sm:$0xf]
        %v9131 = vld [vmem:[#allocation4 + $0x1c] sm:$0xf]
        %v9132 = vld [vmem:[#allocation4 + $0x20] sm:$0x1]
        %v9133 = vld [vmem:[#allocation4 + $0x24] sm:$0xf]
        %v9134 = vld [vmem:[#allocation4 + $0x28] sm:$0xf]
        %v9135 = vld [vmem:[#allocation4 + $0x2c] sm:$0x1]
        %v9136 = vld [vmem:[#allocation4 + $0x30] sm:$0xf]
        %v9137 = vld [vmem:[#allocation4 + $0x34] sm:$0xf]
        %v9138 = vld [vmem:[#allocation4 + $0x38] sm:$0x1]
        %v9139 = vld [vmem:[#allocation4 + $0x3c] sm:$0xf]
        %v9140 = vld [vmem:[#allocation4 + $0x40] sm:$0xf]
        %v9141 = vld [vmem:[#allocation4 + $0x44] sm:$0x1]
        %v9142 = vld [vmem:[#allocation4 + $0x48] sm:$0xf]
        %v9143 = vld [vmem:[#allocation4 + $0x4c] sm:$0xf]
        %v9144 = vld [vmem:[#allocation4 + $0x50] sm:$0x1]
        %v9145 = vld [vmem:[#allocation4 + $0x54] sm:$0xf]
        %v9146 = vld [vmem:[#allocation4 + $0x58] sm:$0xf]
        %v9147 = vld [vmem:[#allocation4 + $0x5c] sm:$0x1]
        %v9149 = vshrl.u32 %v9124, 16
        %v9151 = vrot.slane %v9149, 4
        %v9152 = vshll.u32 %v9124, 16
        %v9154 = vrot.slane %v9152, 5
        %v9155 = vor.u32 %v9151, %v9154
        %v9156 = vrot.slane %v9155, 4
        %v9158 = vshll.u32 %v9125, 16
        %v9160 = vrot.slane %v9158, 5
        %v9161 = vsel %vm893, %v9156, %v9160
        %v9162 = vshrl.u32 %v9125, 16
        %v9164 = vrot.slane %v9162, 4
        %v9165 = vor.u32 %v9164, %v9160
        %v9166 = vrot.slane %v9165, 4
        %v9168 = vshll.u32 %v9126, 16
        %v9170 = vrot.slane %v9168, 5
        %v9171 = vsel %vm893, %v9166, %v9170
        %v9173 = vshrl.u32 %v9127, 16
        %v9175 = vrot.slane %v9173, 4
        %v9176 = vshll.u32 %v9127, 16
        %v9178 = vrot.slane %v9176, 5
        %v9179 = vor.u32 %v9175, %v9178
        %v9180 = vrot.slane %v9179, 4
        %v9182 = vshll.u32 %v9128, 16
        %v9184 = vrot.slane %v9182, 5
        %v9185 = vsel %vm893, %v9180, %v9184
        %v9186 = vshrl.u32 %v9128, 16
        %v9188 = vrot.slane %v9186, 4
        %v9189 = vor.u32 %v9188, %v9184
        %v9190 = vrot.slane %v9189, 4
        %v9192 = vshll.u32 %v9129, 16
        %v9194 = vrot.slane %v9192, 5
        %v9195 = vsel %vm893, %v9190, %v9194
        %v9197 = vshrl.u32 %v9130, 16
        %v9199 = vrot.slane %v9197, 4
        %v9200 = vshll.u32 %v9130, 16
        %v9202 = vrot.slane %v9200, 5
        %v9203 = vor.u32 %v9199, %v9202
        %v9204 = vrot.slane %v9203, 4
        %v9206 = vshll.u32 %v9131, 16
        %v9208 = vrot.slane %v9206, 5
        %v9209 = vsel %vm893, %v9204, %v9208
        %v9210 = vshrl.u32 %v9131, 16
        %v9212 = vrot.slane %v9210, 4
        %v9213 = vor.u32 %v9212, %v9208
        %v9214 = vrot.slane %v9213, 4
        %v9216 = vshll.u32 %v9132, 16
        %v9218 = vrot.slane %v9216, 5
        %v9219 = vsel %vm893, %v9214, %v9218
        %v9221 = vshrl.u32 %v9133, 16
        %v9223 = vrot.slane %v9221, 4
        %v9224 = vshll.u32 %v9133, 16
        %v9226 = vrot.slane %v9224, 5
        %v9227 = vor.u32 %v9223, %v9226
        %v9228 = vrot.slane %v9227, 4
        %v9230 = vshll.u32 %v9134, 16
        %v9232 = vrot.slane %v9230, 5
        %v9233 = vsel %vm893, %v9228, %v9232
        %v9234 = vshrl.u32 %v9134, 16
        %v9236 = vrot.slane %v9234, 4
        %v9237 = vor.u32 %v9236, %v9232
        %v9238 = vrot.slane %v9237, 4
        %v9240 = vshll.u32 %v9135, 16
        %v9242 = vrot.slane %v9240, 5
        %v9243 = vsel %vm893, %v9238, %v9242
        %v9245 = vshrl.u32 %v9136, 16
        %v9247 = vrot.slane %v9245, 4
        %v9248 = vshll.u32 %v9136, 16
        %v9250 = vrot.slane %v9248, 5
        %v9251 = vor.u32 %v9247, %v9250
        %v9252 = vrot.slane %v9251, 4
        %v9254 = vshll.u32 %v9137, 16
        %v9256 = vrot.slane %v9254, 5
        %v9257 = vsel %vm893, %v9252, %v9256
        %v9258 = vshrl.u32 %v9137, 16
        %v9260 = vrot.slane %v9258, 4
        %v9261 = vor.u32 %v9260, %v9256
        %v9262 = vrot.slane %v9261, 4
        %v9264 = vshll.u32 %v9138, 16
        %v9266 = vrot.slane %v9264, 5
        %v9267 = vsel %vm893, %v9262, %v9266
        %v9269 = vshrl.u32 %v9139, 16
        %v9271 = vrot.slane %v9269, 4
        %v9272 = vshll.u32 %v9139, 16
        %v9274 = vrot.slane %v9272, 5
        %v9275 = vor.u32 %v9271, %v9274
        %v9276 = vrot.slane %v9275, 4
        %v9278 = vshll.u32 %v9140, 16
        %v9280 = vrot.slane %v9278, 5
        %v9281 = vsel %vm893, %v9276, %v9280
        %v9282 = vshrl.u32 %v9140, 16
        %v9284 = vrot.slane %v9282, 4
        %v9285 = vor.u32 %v9284, %v9280
        %v9286 = vrot.slane %v9285, 4
        %v9288 = vshll.u32 %v9141, 16
        %v9290 = vrot.slane %v9288, 5
        %v9291 = vsel %vm893, %v9286, %v9290
        %v9293 = vshrl.u32 %v9142, 16
        %v9295 = vrot.slane %v9293, 4
        %v9296 = vshll.u32 %v9142, 16
        %v9298 = vrot.slane %v9296, 5
        %v9299 = vor.u32 %v9295, %v9298
        %v9300 = vrot.slane %v9299, 4
        %v9302 = vshll.u32 %v9143, 16
        %v9304 = vrot.slane %v9302, 5
        %v9305 = vsel %vm893, %v9300, %v9304
        %v9306 = vshrl.u32 %v9143, 16
        %v9308 = vrot.slane %v9306, 4
        %v9309 = vor.u32 %v9308, %v9304
        %v9310 = vrot.slane %v9309, 4
        %v9312 = vshll.u32 %v9144, 16
        %v9314 = vrot.slane %v9312, 5
        %v9315 = vsel %vm893, %v9310, %v9314
        %v9317 = vshrl.u32 %v9145, 16
        %v9319 = vrot.slane %v9317, 4
        %v9320 = vshll.u32 %v9145, 16
        %v9322 = vrot.slane %v9320, 5
        %v9323 = vor.u32 %v9319, %v9322
        %v9324 = vrot.slane %v9323, 4
        %v9326 = vshll.u32 %v9146, 16
        %v9328 = vrot.slane %v9326, 5
        %v9329 = vsel %vm893, %v9324, %v9328
        %v9330 = vshrl.u32 %v9146, 16
        %v9332 = vrot.slane %v9330, 4
        %v9333 = vor.u32 %v9332, %v9328
        %v9334 = vrot.slane %v9333, 4
        %v9336 = vshll.u32 %v9147, 16
        %v9338 = vrot.slane %v9336, 5
        %v9339 = vsel %vm893, %v9334, %v9338
        %9356 = vst [vmem:[#allocation5 + $0x4] sm:$0xf] %v9161
        %9357 = vst [vmem:[#allocation5 + $0x18] sm:$0xf] %v9171
        %9358 = vst [vmem:[#allocation5 + $0x2c] sm:$0xf] %v9185
        %9359 = vst [vmem:[#allocation5 + $0x40] sm:$0xf] %v9195
        %9360 = vst [vmem:[#allocation5 + $0x54] sm:$0xf] %v9209
        %9361 = vst [vmem:[#allocation5 + $0x68] sm:$0xf] %v9219
        %9362 = vst [vmem:[#allocation5 + $0x7c] sm:$0xf] %v9233
        %9363 = vst [vmem:[#allocation5 + $0x90] sm:$0xf] %v9243
        %9364 = vst [vmem:[#allocation5 + $0xa4] sm:$0xf] %v9257
        %9365 = vst [vmem:[#allocation5 + $0xb8] sm:$0xf] %v9267
        %9366 = vst [vmem:[#allocation5 + $0xcc] sm:$0xf] %v9281
        %9367 = vst [vmem:[#allocation5 + $0xe0] sm:$0xf] %v9291
        %9368 = vst [vmem:[#allocation5 + $0xf4] sm:$0xf] %v9305
        %9369 = vst [vmem:[#allocation5 + $0x108] sm:$0xf] %v9315
        %9370 = vst [vmem:[#allocation5 + $0x11c] sm:$0xf] %v9329
        %9371 = vst [vmem:[#allocation5 + $0x130] sm:$0xf] %v9339
        %v9372 = vld [vmem:[#allocation4] sm:$0xe]
        %v9373 = vld [vmem:[#allocation4 + $0x4] sm:$0xf]
        %v9374 = vld [vmem:[#allocation4 + $0x8] sm:$0x1]
        %v9375 = vld [vmem:[#allocation4 + $0xc] sm:$0xe]
        %v9376 = vld [vmem:[#allocation4 + $0x10] sm:$0xf]
        %v9377 = vld [vmem:[#allocation4 + $0x14] sm:$0x1]
        %v9378 = vld [vmem:[#allocation4 + $0x18] sm:$0xe]
        %v9379 = vld [vmem:[#allocation4 + $0x1c] sm:$0xf]
        %v9380 = vld [vmem:[#allocation4 + $0x20] sm:$0x1]
        %v9381 = vld [vmem:[#allocation4 + $0x24] sm:$0xe]
        %v9382 = vld [vmem:[#allocation4 + $0x28] sm:$0xf]
        %v9383 = vld [vmem:[#allocation4 + $0x2c] sm:$0x1]
        %v9384 = vld [vmem:[#allocation4 + $0x30] sm:$0xe]
        %v9385 = vld [vmem:[#allocation4 + $0x34] sm:$0xf]
        %v9386 = vld [vmem:[#allocation4 + $0x38] sm:$0x1]
        %v9387 = vld [vmem:[#allocation4 + $0x3c] sm:$0xe]
        %v9388 = vld [vmem:[#allocation4 + $0x40] sm:$0xf]
        %v9389 = vld [vmem:[#allocation4 + $0x44] sm:$0x1]
        %v9390 = vld [vmem:[#allocation4 + $0x48] sm:$0xe]
        %v9391 = vld [vmem:[#allocation4 + $0x4c] sm:$0xf]
        %v9392 = vld [vmem:[#allocation4 + $0x50] sm:$0x1]
        %v9393 = vld [vmem:[#allocation4 + $0x54] sm:$0xe]
        %v9394 = vld [vmem:[#allocation4 + $0x58] sm:$0xf]
        %v9395 = vld [vmem:[#allocation4 + $0x5c] sm:$0x1]
        %v9420 = vrot.slane %v9372, 5
        %v9421 = vrot.slane %v9420, 4
        %v9422 = vrot.slane %v9373, 5
        %v9423 = vsel %vm1440, %v9421, %v9422
        %v9424 = vrot.slane %v9422, 4
        %v9425 = vrot.slane %v9374, 5
        %v9426 = vsel %vm1440, %v9424, %v9425
        %v9427 = vrot.slane %v9375, 5
        %v9428 = vrot.slane %v9427, 4
        %v9429 = vrot.slane %v9376, 5
        %v9430 = vsel %vm1440, %v9428, %v9429
        %v9431 = vrot.slane %v9429, 4
        %v9432 = vrot.slane %v9377, 5
        %v9433 = vsel %vm1440, %v9431, %v9432
        %v9434 = vrot.slane %v9378, 5
        %v9435 = vrot.slane %v9434, 4
        %v9436 = vrot.slane %v9379, 5
        %v9437 = vsel %vm1440, %v9435, %v9436
        %v9438 = vrot.slane %v9436, 4
        %v9439 = vrot.slane %v9380, 5
        %v9440 = vsel %vm1440, %v9438, %v9439
        %v9441 = vrot.slane %v9381, 5
        %v9442 = vrot.slane %v9441, 4
        %v9443 = vrot.slane %v9382, 5
        %v9444 = vsel %vm1440, %v9442, %v9443
        %v9445 = vrot.slane %v9443, 4
        %v9446 = vrot.slane %v9383, 5
        %v9447 = vsel %vm1440, %v9445, %v9446
        %v9448 = vrot.slane %v9384, 5
        %v9449 = vrot.slane %v9448, 4
        %v9450 = vrot.slane %v9385, 5
        %v9451 = vsel %vm1440, %v9449, %v9450
        %v9452 = vrot.slane %v9450, 4
        %v9453 = vrot.slane %v9386, 5
        %v9454 = vsel %vm1440, %v9452, %v9453
        %v9455 = vrot.slane %v9387, 5
        %v9456 = vrot.slane %v9455, 4
        %v9457 = vrot.slane %v9388, 5
        %v9458 = vsel %vm1440, %v9456, %v9457
        %v9459 = vrot.slane %v9457, 4
        %v9460 = vrot.slane %v9389, 5
        %v9461 = vsel %vm1440, %v9459, %v9460
        %v9462 = vrot.slane %v9390, 5
        %v9463 = vrot.slane %v9462, 4
        %v9464 = vrot.slane %v9391, 5
        %v9465 = vsel %vm1440, %v9463, %v9464
        %v9466 = vrot.slane %v9464, 4
        %v9467 = vrot.slane %v9392, 5
        %v9468 = vsel %vm1440, %v9466, %v9467
        %v9469 = vrot.slane %v9393, 5
        %v9470 = vrot.slane %v9469, 4
        %v9471 = vrot.slane %v9394, 5
        %v9472 = vsel %vm1440, %v9470, %v9471
        %v9473 = vrot.slane %v9471, 4
        %v9474 = vrot.slane %v9395, 5
        %v9475 = vsel %vm1440, %v9473, %v9474
        %9492 = vst [vmem:[#allocation5 + $0x8] sm:$0xf] %v9423
        %9493 = vst [vmem:[#allocation5 + $0x1c] sm:$0xf] %v9426
        %9494 = vst [vmem:[#allocation5 + $0x30] sm:$0xf] %v9430
        %9495 = vst [vmem:[#allocation5 + $0x44] sm:$0xf] %v9433
        %9496 = vst [vmem:[#allocation5 + $0x58] sm:$0xf] %v9437
        %9497 = vst [vmem:[#allocation5 + $0x6c] sm:$0xf] %v9440
        %9498 = vst [vmem:[#allocation5 + $0x80] sm:$0xf] %v9444
        %9499 = vst [vmem:[#allocation5 + $0x94] sm:$0xf] %v9447
        %9500 = vst [vmem:[#allocation5 + $0xa8] sm:$0xf] %v9451
        %9501 = vst [vmem:[#allocation5 + $0xbc] sm:$0xf] %v9454
        %9502 = vst [vmem:[#allocation5 + $0xd0] sm:$0xf] %v9458
        %9503 = vst [vmem:[#allocation5 + $0xe4] sm:$0xf] %v9461
        %9504 = vst [vmem:[#allocation5 + $0xf8] sm:$0xf] %v9465
        %9505 = vst [vmem:[#allocation5 + $0x10c] sm:$0xf] %v9468
        %9506 = vst [vmem:[#allocation5 + $0x120] sm:$0xf] %v9472
        %9507 = vst [vmem:[#allocation5 + $0x134] sm:$0xf] %v9475
        %v9508 = vld [vmem:[#allocation4] sm:$0xe]
        %v9509 = vld [vmem:[#allocation4 + $0x4] sm:$0xf]
        %v9510 = vld [vmem:[#allocation4 + $0x8] sm:$0x3]
        %v9511 = vld [vmem:[#allocation4 + $0xc] sm:$0xe]
        %v9512 = vld [vmem:[#allocation4 + $0x10] sm:$0xf]
        %v9513 = vld [vmem:[#allocation4 + $0x14] sm:$0x3]
        %v9514 = vld [vmem:[#allocation4 + $0x18] sm:$0xe]
        %v9515 = vld [vmem:[#allocation4 + $0x1c] sm:$0xf]
        %v9516 = vld [vmem:[#allocation4 + $0x20] sm:$0x3]
        %v9517 = vld [vmem:[#allocation4 + $0x24] sm:$0xe]
        %v9518 = vld [vmem:[#allocation4 + $0x28] sm:$0xf]
        %v9519 = vld [vmem:[#allocation4 + $0x2c] sm:$0x3]
        %v9520 = vld [vmem:[#allocation4 + $0x30] sm:$0xe]
        %v9521 = vld [vmem:[#allocation4 + $0x34] sm:$0xf]
        %v9522 = vld [vmem:[#allocation4 + $0x38] sm:$0x3]
        %v9523 = vld [vmem:[#allocation4 + $0x3c] sm:$0xe]
        %v9524 = vld [vmem:[#allocation4 + $0x40] sm:$0xf]
        %v9525 = vld [vmem:[#allocation4 + $0x44] sm:$0x3]
        %v9526 = vld [vmem:[#allocation4 + $0x48] sm:$0xe]
        %v9527 = vld [vmem:[#allocation4 + $0x4c] sm:$0xf]
        %v9528 = vld [vmem:[#allocation4 + $0x50] sm:$0x3]
        %v9529 = vld [vmem:[#allocation4 + $0x54] sm:$0xe]
        %v9530 = vld [vmem:[#allocation4 + $0x58] sm:$0xf]
        %v9531 = vld [vmem:[#allocation4 + $0x5c] sm:$0x3]
        %v9533 = vshrl.u32 %v9508, 16
        %v9535 = vrot.slane %v9533, 5
        %v9536 = vshll.u32 %v9508, 16
        %v9538 = vrot.slane %v9536, 6
        %v9539 = vor.u32 %v9535, %v9538
        %v9540 = vrot.slane %v9539, 4
        %v9542 = vshrl.u32 %v9509, 16
        %v9544 = vrot.slane %v9542, 5
        %v9545 = vshll.u32 %v9509, 16
        %v9547 = vrot.slane %v9545, 6
        %v9548 = vor.u32 %v9544, %v9547
        %v9549 = vsel %vm1667, %v9540, %v9548
        %v9550 = vrot.slane %v9548, 4
        %v9552 = vshrl.u32 %v9510, 16
        %v9554 = vrot.slane %v9552, 5
        %v9555 = vshll.u32 %v9510, 16
        %v9557 = vrot.slane %v9555, 6
        %v9558 = vor.u32 %v9554, %v9557
        %v9559 = vsel %vm1667, %v9550, %v9558
        %v9561 = vshrl.u32 %v9511, 16
        %v9563 = vrot.slane %v9561, 5
        %v9564 = vshll.u32 %v9511, 16
        %v9566 = vrot.slane %v9564, 6
        %v9567 = vor.u32 %v9563, %v9566
        %v9568 = vrot.slane %v9567, 4
        %v9570 = vshrl.u32 %v9512, 16
        %v9572 = vrot.slane %v9570, 5
        %v9573 = vshll.u32 %v9512, 16
        %v9575 = vrot.slane %v9573, 6
        %v9576 = vor.u32 %v9572, %v9575
        %v9577 = vsel %vm1667, %v9568, %v9576
        %v9578 = vrot.slane %v9576, 4
        %v9580 = vshrl.u32 %v9513, 16
        %v9582 = vrot.slane %v9580, 5
        %v9583 = vshll.u32 %v9513, 16
        %v9585 = vrot.slane %v9583, 6
        %v9586 = vor.u32 %v9582, %v9585
        %v9587 = vsel %vm1667, %v9578, %v9586
        %v9589 = vshrl.u32 %v9514, 16
        %v9591 = vrot.slane %v9589, 5
        %v9592 = vshll.u32 %v9514, 16
        %v9594 = vrot.slane %v9592, 6
        %v9595 = vor.u32 %v9591, %v9594
        %v9596 = vrot.slane %v9595, 4
        %v9598 = vshrl.u32 %v9515, 16
        %v9600 = vrot.slane %v9598, 5
        %v9601 = vshll.u32 %v9515, 16
        %v9603 = vrot.slane %v9601, 6
        %v9604 = vor.u32 %v9600, %v9603
        %v9605 = vsel %vm1667, %v9596, %v9604
        %v9606 = vrot.slane %v9604, 4
        %v9608 = vshrl.u32 %v9516, 16
        %v9610 = vrot.slane %v9608, 5
        %v9611 = vshll.u32 %v9516, 16
        %v9613 = vrot.slane %v9611, 6
        %v9614 = vor.u32 %v9610, %v9613
        %v9615 = vsel %vm1667, %v9606, %v9614
        %v9617 = vshrl.u32 %v9517, 16
        %v9619 = vrot.slane %v9617, 5
        %v9620 = vshll.u32 %v9517, 16
        %v9622 = vrot.slane %v9620, 6
        %v9623 = vor.u32 %v9619, %v9622
        %v9624 = vrot.slane %v9623, 4
        %v9626 = vshrl.u32 %v9518, 16
        %v9628 = vrot.slane %v9626, 5
        %v9629 = vshll.u32 %v9518, 16
        %v9631 = vrot.slane %v9629, 6
        %v9632 = vor.u32 %v9628, %v9631
        %v9633 = vsel %vm1667, %v9624, %v9632
        %v9634 = vrot.slane %v9632, 4
        %v9636 = vshrl.u32 %v9519, 16
        %v9638 = vrot.slane %v9636, 5
        %v9639 = vshll.u32 %v9519, 16
        %v9641 = vrot.slane %v9639, 6
        %v9642 = vor.u32 %v9638, %v9641
        %v9643 = vsel %vm1667, %v9634, %v9642
        %v9645 = vshrl.u32 %v9520, 16
        %v9647 = vrot.slane %v9645, 5
        %v9648 = vshll.u32 %v9520, 16
        %v9650 = vrot.slane %v9648, 6
        %v9651 = vor.u32 %v9647, %v9650
        %v9652 = vrot.slane %v9651, 4
        %v9654 = vshrl.u32 %v9521, 16
        %v9656 = vrot.slane %v9654, 5
        %v9657 = vshll.u32 %v9521, 16
        %v9659 = vrot.slane %v9657, 6
        %v9660 = vor.u32 %v9656, %v9659
        %v9661 = vsel %vm1667, %v9652, %v9660
        %v9662 = vrot.slane %v9660, 4
        %v9664 = vshrl.u32 %v9522, 16
        %v9666 = vrot.slane %v9664, 5
        %v9667 = vshll.u32 %v9522, 16
        %v9669 = vrot.slane %v9667, 6
        %v9670 = vor.u32 %v9666, %v9669
        %v9671 = vsel %vm1667, %v9662, %v9670
        %v9673 = vshrl.u32 %v9523, 16
        %v9675 = vrot.slane %v9673, 5
        %v9676 = vshll.u32 %v9523, 16
        %v9678 = vrot.slane %v9676, 6
        %v9679 = vor.u32 %v9675, %v9678
        %v9680 = vrot.slane %v9679, 4
        %v9682 = vshrl.u32 %v9524, 16
        %v9684 = vrot.slane %v9682, 5
        %v9685 = vshll.u32 %v9524, 16
        %v9687 = vrot.slane %v9685, 6
        %v9688 = vor.u32 %v9684, %v9687
        %v9689 = vsel %vm1667, %v9680, %v9688
        %v9690 = vrot.slane %v9688, 4
        %v9692 = vshrl.u32 %v9525, 16
        %v9694 = vrot.slane %v9692, 5
        %v9695 = vshll.u32 %v9525, 16
        %v9697 = vrot.slane %v9695, 6
        %v9698 = vor.u32 %v9694, %v9697
        %v9699 = vsel %vm1667, %v9690, %v9698
        %v9701 = vshrl.u32 %v9526, 16
        %v9703 = vrot.slane %v9701, 5
        %v9704 = vshll.u32 %v9526, 16
        %v9706 = vrot.slane %v9704, 6
        %v9707 = vor.u32 %v9703, %v9706
        %v9708 = vrot.slane %v9707, 4
        %v9710 = vshrl.u32 %v9527, 16
        %v9712 = vrot.slane %v9710, 5
        %v9713 = vshll.u32 %v9527, 16
        %v9715 = vrot.slane %v9713, 6
        %v9716 = vor.u32 %v9712, %v9715
        %v9717 = vsel %vm1667, %v9708, %v9716
        %v9718 = vrot.slane %v9716, 4
        %v9720 = vshrl.u32 %v9528, 16
        %v9722 = vrot.slane %v9720, 5
        %v9723 = vshll.u32 %v9528, 16
        %v9725 = vrot.slane %v9723, 6
        %v9726 = vor.u32 %v9722, %v9725
        %v9727 = vsel %vm1667, %v9718, %v9726
        %v9729 = vshrl.u32 %v9529, 16
        %v9731 = vrot.slane %v9729, 5
        %v9732 = vshll.u32 %v9529, 16
        %v9734 = vrot.slane %v9732, 6
        %v9735 = vor.u32 %v9731, %v9734
        %v9736 = vrot.slane %v9735, 4
        %v9738 = vshrl.u32 %v9530, 16
        %v9740 = vrot.slane %v9738, 5
        %v9741 = vshll.u32 %v9530, 16
        %v9743 = vrot.slane %v9741, 6
        %v9744 = vor.u32 %v9740, %v9743
        %v9745 = vsel %vm1667, %v9736, %v9744
        %v9746 = vrot.slane %v9744, 4
        %v9748 = vshrl.u32 %v9531, 16
        %v9750 = vrot.slane %v9748, 5
        %v9751 = vshll.u32 %v9531, 16
        %v9753 = vrot.slane %v9751, 6
        %v9754 = vor.u32 %v9750, %v9753
        %v9755 = vsel %vm1667, %v9746, %v9754
        %9772 = vst [vmem:[#allocation5 + $0xc] sm:$0xf] %v9549
        %9773 = vst [vmem:[#allocation5 + $0x20] sm:$0xf] %v9559
        %9774 = vst [vmem:[#allocation5 + $0x34] sm:$0xf] %v9577
        %9775 = vst [vmem:[#allocation5 + $0x48] sm:$0xf] %v9587
        %9776 = vst [vmem:[#allocation5 + $0x5c] sm:$0xf] %v9605
        %9777 = vst [vmem:[#allocation5 + $0x70] sm:$0xf] %v9615
        %9778 = vst [vmem:[#allocation5 + $0x84] sm:$0xf] %v9633
        %9779 = vst [vmem:[#allocation5 + $0x98] sm:$0xf] %v9643
        %9780 = vst [vmem:[#allocation5 + $0xac] sm:$0xf] %v9661
        %9781 = vst [vmem:[#allocation5 + $0xc0] sm:$0xf] %v9671
        %9782 = vst [vmem:[#allocation5 + $0xd4] sm:$0xf] %v9689
        %9783 = vst [vmem:[#allocation5 + $0xe8] sm:$0xf] %v9699
        %9784 = vst [vmem:[#allocation5 + $0xfc] sm:$0xf] %v9717
        %9785 = vst [vmem:[#allocation5 + $0x110] sm:$0xf] %v9727
        %9786 = vst [vmem:[#allocation5 + $0x124] sm:$0xf] %v9745
        %9787 = vst [vmem:[#allocation5 + $0x138] sm:$0xf] %v9755
        %v9788 = vld [vmem:[#allocation4] sm:$0xc]
        %v9789 = vld [vmem:[#allocation4 + $0x4] sm:$0xf]
        %v9790 = vld [vmem:[#allocation4 + $0x8] sm:$0x3]
        %v9791 = vld [vmem:[#allocation4 + $0xc] sm:$0xc]
        %v9792 = vld [vmem:[#allocation4 + $0x10] sm:$0xf]
        %v9793 = vld [vmem:[#allocation4 + $0x14] sm:$0x3]
        %v9794 = vld [vmem:[#allocation4 + $0x18] sm:$0xc]
        %v9795 = vld [vmem:[#allocation4 + $0x1c] sm:$0xf]
        %v9796 = vld [vmem:[#allocation4 + $0x20] sm:$0x3]
        %v9797 = vld [vmem:[#allocation4 + $0x24] sm:$0xc]
        %v9798 = vld [vmem:[#allocation4 + $0x28] sm:$0xf]
        %v9799 = vld [vmem:[#allocation4 + $0x2c] sm:$0x3]
        %v9800 = vld [vmem:[#allocation4 + $0x30] sm:$0xc]
        %v9801 = vld [vmem:[#allocation4 + $0x34] sm:$0xf]
        %v9802 = vld [vmem:[#allocation4 + $0x38] sm:$0x3]
        %v9803 = vld [vmem:[#allocation4 + $0x3c] sm:$0xc]
        %v9804 = vld [vmem:[#allocation4 + $0x40] sm:$0xf]
        %v9805 = vld [vmem:[#allocation4 + $0x44] sm:$0x3]
        %v9806 = vld [vmem:[#allocation4 + $0x48] sm:$0xc]
        %v9807 = vld [vmem:[#allocation4 + $0x4c] sm:$0xf]
        %v9808 = vld [vmem:[#allocation4 + $0x50] sm:$0x3]
        %v9809 = vld [vmem:[#allocation4 + $0x54] sm:$0xc]
        %v9810 = vld [vmem:[#allocation4 + $0x58] sm:$0xf]
        %v9811 = vld [vmem:[#allocation4 + $0x5c] sm:$0x3]
        %v9836 = vrot.slane %v9788, 6
        %v9837 = vrot.slane %v9836, 4
        %v9838 = vrot.slane %v9789, 6
        %v9839 = vsel %vm2278, %v9837, %v9838
        %v9840 = vrot.slane %v9838, 4
        %v9841 = vrot.slane %v9790, 6
        %v9842 = vsel %vm2278, %v9840, %v9841
        %v9843 = vrot.slane %v9791, 6
        %v9844 = vrot.slane %v9843, 4
        %v9845 = vrot.slane %v9792, 6
        %v9846 = vsel %vm2278, %v9844, %v9845
        %v9847 = vrot.slane %v9845, 4
        %v9848 = vrot.slane %v9793, 6
        %v9849 = vsel %vm2278, %v9847, %v9848
        %v9850 = vrot.slane %v9794, 6
        %v9851 = vrot.slane %v9850, 4
        %v9852 = vrot.slane %v9795, 6
        %v9853 = vsel %vm2278, %v9851, %v9852
        %v9854 = vrot.slane %v9852, 4
        %v9855 = vrot.slane %v9796, 6
        %v9856 = vsel %vm2278, %v9854, %v9855
        %v9857 = vrot.slane %v9797, 6
        %v9858 = vrot.slane %v9857, 4
        %v9859 = vrot.slane %v9798, 6
        %v9860 = vsel %vm2278, %v9858, %v9859
        %v9861 = vrot.slane %v9859, 4
        %v9862 = vrot.slane %v9799, 6
        %v9863 = vsel %vm2278, %v9861, %v9862
        %v9864 = vrot.slane %v9800, 6
        %v9865 = vrot.slane %v9864, 4
        %v9866 = vrot.slane %v9801, 6
        %v9867 = vsel %vm2278, %v9865, %v9866
        %v9868 = vrot.slane %v9866, 4
        %v9869 = vrot.slane %v9802, 6
        %v9870 = vsel %vm2278, %v9868, %v9869
        %v9871 = vrot.slane %v9803, 6
        %v9872 = vrot.slane %v9871, 4
        %v9873 = vrot.slane %v9804, 6
        %v9874 = vsel %vm2278, %v9872, %v9873
        %v9875 = vrot.slane %v9873, 4
        %v9876 = vrot.slane %v9805, 6
        %v9877 = vsel %vm2278, %v9875, %v9876
        %v9878 = vrot.slane %v9806, 6
        %v9879 = vrot.slane %v9878, 4
        %v9880 = vrot.slane %v9807, 6
        %v9881 = vsel %vm2278, %v9879, %v9880
        %v9882 = vrot.slane %v9880, 4
        %v9883 = vrot.slane %v9808, 6
        %v9884 = vsel %vm2278, %v9882, %v9883
        %v9885 = vrot.slane %v9809, 6
        %v9886 = vrot.slane %v9885, 4
        %v9887 = vrot.slane %v9810, 6
        %v9888 = vsel %vm2278, %v9886, %v9887
        %v9889 = vrot.slane %v9887, 4
        %v9890 = vrot.slane %v9811, 6
        %v9891 = vsel %vm2278, %v9889, %v9890
        %9908 = vst [vmem:[#allocation5 + $0x10] sm:$0xf] %v9839
        %9909 = vst [vmem:[#allocation5 + $0x24] sm:$0xf] %v9842
        %9910 = vst [vmem:[#allocation5 + $0x38] sm:$0xf] %v9846
        %9911 = vst [vmem:[#allocation5 + $0x4c] sm:$0xf] %v9849
        %9912 = vst [vmem:[#allocation5 + $0x60] sm:$0xf] %v9853
        %9913 = vst [vmem:[#allocation5 + $0x74] sm:$0xf] %v9856
        %9914 = vst [vmem:[#allocation5 + $0x88] sm:$0xf] %v9860
        %9915 = vst [vmem:[#allocation5 + $0x9c] sm:$0xf] %v9863
        %9916 = vst [vmem:[#allocation5 + $0xb0] sm:$0xf] %v9867
        %9917 = vst [vmem:[#allocation5 + $0xc4] sm:$0xf] %v9870
        %9918 = vst [vmem:[#allocation5 + $0xd8] sm:$0xf] %v9874
        %9919 = vst [vmem:[#allocation5 + $0xec] sm:$0xf] %v9877
        %9920 = vst [vmem:[#allocation5 + $0x100] sm:$0xf] %v9881
        %9921 = vst [vmem:[#allocation5 + $0x114] sm:$0xf] %v9884
        %9922 = vst [vmem:[#allocation5 + $0x128] sm:$0xf] %v9888
        %9923 = vst [vmem:[#allocation5 + $0x13c] sm:$0xf] %v9891
        %v9924 = vld [vmem:[#allocation5] sm:$0xff]
        %v9925 = vld [vmem:[#allocation5 + $0x8] sm:$0xff]
        %v9926 = vld [vmem:[#allocation5 + $0x10] sm:$0xf]
        %v9927 = vld [vmem:[#allocation5 + $0x14] sm:$0xff]
        %v9928 = vld [vmem:[#allocation5 + $0x1c] sm:$0xff]
        %v9929 = vld [vmem:[#allocation5 + $0x24] sm:$0xf]
        %v9930 = vld [vmem:[#allocation5 + $0x28] sm:$0xff]
        %v9931 = vld [vmem:[#allocation5 + $0x30] sm:$0xff]
        %v9932 = vld [vmem:[#allocation5 + $0x38] sm:$0xf]
        %v9933 = vld [vmem:[#allocation5 + $0x3c] sm:$0xff]
        %v9934 = vld [vmem:[#allocation5 + $0x44] sm:$0xff]
        %v9935 = vld [vmem:[#allocation5 + $0x4c] sm:$0xf]
        %v9936 = vld [vmem:[#allocation5 + $0x50] sm:$0xff]
        %v9937 = vld [vmem:[#allocation5 + $0x58] sm:$0xff]
        %v9938 = vld [vmem:[#allocation5 + $0x60] sm:$0xf]
        %v9939 = vld [vmem:[#allocation5 + $0x64] sm:$0xff]
        %v9940 = vld [vmem:[#allocation5 + $0x6c] sm:$0xff]
        %v9941 = vld [vmem:[#allocation5 + $0x74] sm:$0xf]
        %v9942 = vld [vmem:[#allocation5 + $0x78] sm:$0xff]
        %v9943 = vld [vmem:[#allocation5 + $0x80] sm:$0xff]
        %v9944 = vld [vmem:[#allocation5 + $0x88] sm:$0xf]
        %v9945 = vld [vmem:[#allocation5 + $0x8c] sm:$0xff]
        %v9946 = vld [vmem:[#allocation5 + $0x94] sm:$0xff]
        %v9947 = vld [vmem:[#allocation5 + $0x9c] sm:$0xf]
        %v9948 = vld [vmem:[#allocation5 + $0xa0] sm:$0xff]
        %v9949 = vld [vmem:[#allocation5 + $0xa8] sm:$0xff]
        %v9950 = vld [vmem:[#allocation5 + $0xb0] sm:$0xf]
        %v9951 = vld [vmem:[#allocation5 + $0xb4] sm:$0xff]
        %v9952 = vld [vmem:[#allocation5 + $0xbc] sm:$0xff]
        %v9953 = vld [vmem:[#allocation5 + $0xc4] sm:$0xf]
        %v9954 = vld [vmem:[#allocation5 + $0xc8] sm:$0xff]
        %v9955 = vld [vmem:[#allocation5 + $0xd0] sm:$0xff]
        %v9956 = vld [vmem:[#allocation5 + $0xd8] sm:$0xf]
        %v9957 = vld [vmem:[#allocation5 + $0xdc] sm:$0xff]
        %v9958 = vld [vmem:[#allocation5 + $0xe4] sm:$0xff]
        %v9959 = vld [vmem:[#allocation5 + $0xec] sm:$0xf]
        %v9960 = vld [vmem:[#allocation5 + $0xf0] sm:$0xff]
        %v9961 = vld [vmem:[#allocation5 + $0xf8] sm:$0xff]
        %v9962 = vld [vmem:[#allocation5 + $0x100] sm:$0xf]
        %v9963 = vld [vmem:[#allocation5 + $0x104] sm:$0xff]
        %v9964 = vld [vmem:[#allocation5 + $0x10c] sm:$0xff]
        %v9965 = vld [vmem:[#allocation5 + $0x114] sm:$0xf]
        %v9966 = vld [vmem:[#allocation5 + $0x118] sm:$0xff]
        %v9967 = vld [vmem:[#allocation5 + $0x120] sm:$0xff]
        %v9968 = vld [vmem:[#allocation5 + $0x128] sm:$0xf]
        %v9969 = vld [vmem:[#allocation5 + $0x12c] sm:$0xff]
        %v9970 = vld [vmem:[#allocation5 + $0x134] sm:$0xff]
        %v9971 = vld [vmem:[#allocation5 + $0x13c] sm:$0xf]
        %v9972 = vld [vmem:[#allocation14] sm:$0xf]
        %v9973 = vld [vmem:[#allocation14 + $0x4] sm:$0xf]
        %v9974 = vld [vmem:[#allocation14 + $0x8] sm:$0xf]
        %v9975 = vld [vmem:[#allocation14 + $0xc] sm:$0xf]
        %v9976 = vld [vmem:[#allocation14 + $0x10] sm:$0xf]
        %v9977 = vld [vmem:[#allocation14 + $0x14] sm:$0xf]
        %v9978 = vld [vmem:[#allocation14 + $0x18] sm:$0xf]
        %v9979 = vld [vmem:[#allocation14 + $0x1c] sm:$0xf]
        %v9980 = vld [vmem:[#allocation14 + $0x20] sm:$0xf]
        %v9981 = vld [vmem:[#allocation14 + $0x24] sm:$0xf]
        %v9982 = vld [vmem:[#allocation14 + $0x28] sm:$0xf]
        %v9983 = vld [vmem:[#allocation14 + $0x2c] sm:$0xf]
        %v9984 = vld [vmem:[#allocation14 + $0x30] sm:$0xf]
        %v9985 = vld [vmem:[#allocation14 + $0x34] sm:$0xf]
        %v9986 = vld [vmem:[#allocation14 + $0x38] sm:$0xf]
        %v9987 = vld [vmem:[#allocation14 + $0x3c] sm:$0xf]
        %v9988 = vld [vmem:[#allocation14 + $0x40] sm:$0xf]
        %v9989 = vld [vmem:[#allocation14 + $0x44] sm:$0xf]
        %v9990 = vld [vmem:[#allocation14 + $0x48] sm:$0xf]
        %v9991 = vld [vmem:[#allocation14 + $0x4c] sm:$0xf]
        %v9992 = vld [vmem:[#allocation14 + $0x50] sm:$0xf]
        %v9993 = vld [vmem:[#allocation14 + $0x54] sm:$0xf]
        %v9994 = vld [vmem:[#allocation14 + $0x58] sm:$0xf]
        %v9995 = vld [vmem:[#allocation14 + $0x5c] sm:$0xf]
        %v9996 = vld [vmem:[#allocation14 + $0x60] sm:$0xf]
        %v9997 = vld [vmem:[#allocation14 + $0x64] sm:$0xf]
        %v9998 = vld [vmem:[#allocation14 + $0x68] sm:$0xf]
        %v9999 = vld [vmem:[#allocation14 + $0x6c] sm:$0xf]
        %v10000 = vld [vmem:[#allocation14 + $0x70] sm:$0xf]
        %v10001 = vld [vmem:[#allocation14 + $0x74] sm:$0xf]
        %v10002 = vld [vmem:[#allocation14 + $0x78] sm:$0xf]
        %v10003 = vld [vmem:[#allocation14 + $0x7c] sm:$0xf]
        %v10004 = vld [vmem:[#allocation14 + $0x80] sm:$0xf]
        %v10005 = vld [vmem:[#allocation14 + $0x84] sm:$0xf]
        %v10006 = vld [vmem:[#allocation14 + $0x88] sm:$0xf]
        %v10007 = vld [vmem:[#allocation14 + $0x8c] sm:$0xf]
        %v10008 = vld [vmem:[#allocation14 + $0x90] sm:$0xf]
        %v10009 = vld [vmem:[#allocation14 + $0x94] sm:$0xf]
        %v10010 = vld [vmem:[#allocation14 + $0x98] sm:$0xf]
        %v10011 = vld [vmem:[#allocation14 + $0x9c] sm:$0xf]
        %v10012 = vld [vmem:[#allocation14 + $0xa0] sm:$0xf]
        %v10013 = vld [vmem:[#allocation14 + $0xa4] sm:$0xf]
        %v10014 = vld [vmem:[#allocation14 + $0xa8] sm:$0xf]
        %v10015 = vld [vmem:[#allocation14 + $0xac] sm:$0xf]
        %v10016 = vld [vmem:[#allocation14 + $0xb0] sm:$0xf]
        %v10017 = vld [vmem:[#allocation14 + $0xb4] sm:$0xf]
        %v10018 = vld [vmem:[#allocation14 + $0xb8] sm:$0xf]
        %v10019 = vld [vmem:[#allocation14 + $0xbc] sm:$0xf]
        %v10020 = vld [vmem:[#allocation14 + $0xc0] sm:$0xf]
        %v10021 = vld [vmem:[#allocation14 + $0xc4] sm:$0xf]
        %v10022 = vld [vmem:[#allocation14 + $0xc8] sm:$0xf]
        %v10023 = vld [vmem:[#allocation14 + $0xcc] sm:$0xf]
        %v10024 = vld [vmem:[#allocation14 + $0xd0] sm:$0xf]
        %v10025 = vld [vmem:[#allocation14 + $0xd4] sm:$0xf]
        %v10026 = vld [vmem:[#allocation14 + $0xd8] sm:$0xf]
        %v10027 = vld [vmem:[#allocation14 + $0xdc] sm:$0xf]
        %v10028 = vld [vmem:[#allocation14 + $0xe0] sm:$0xf]
        %v10029 = vld [vmem:[#allocation14 + $0xe4] sm:$0xf]
        %v10030 = vld [vmem:[#allocation14 + $0xe8] sm:$0xf]
        %v10031 = vld [vmem:[#allocation14 + $0xec] sm:$0xf]
        %v10032 = vld [vmem:[#allocation14 + $0xf0] sm:$0xf]
        %v10033 = vld [vmem:[#allocation14 + $0xf4] sm:$0xf]
        %v10034 = vld [vmem:[#allocation14 + $0xf8] sm:$0xf]
        %v10035 = vld [vmem:[#allocation14 + $0xfc] sm:$0xf]
        %v10036 = vld [vmem:[#allocation14 + $0x100] sm:$0xf]
        %v10037 = vld [vmem:[#allocation14 + $0x104] sm:$0xf]
        %v10038 = vld [vmem:[#allocation14 + $0x108] sm:$0xf]
        %v10039 = vld [vmem:[#allocation14 + $0x10c] sm:$0xf]
        %v10040 = vld [vmem:[#allocation14 + $0x110] sm:$0xf]
        %v10041 = vld [vmem:[#allocation14 + $0x114] sm:$0xf]
        %v10042 = vld [vmem:[#allocation14 + $0x118] sm:$0xf]
        %v10043 = vld [vmem:[#allocation14 + $0x11c] sm:$0xf]
        %v10044 = vld [vmem:[#allocation14 + $0x120] sm:$0xf]
        %v10045 = vld [vmem:[#allocation14 + $0x124] sm:$0xf]
        %v10046 = vld [vmem:[#allocation14 + $0x128] sm:$0xf]
        %v10047 = vld [vmem:[#allocation14 + $0x12c] sm:$0xf]
        %v10048 = vld [vmem:[#allocation14 + $0x130] sm:$0xf]
        %v10049 = vld [vmem:[#allocation14 + $0x134] sm:$0xf]
        %v10050 = vld [vmem:[#allocation14 + $0x138] sm:$0xf]
        %v10051 = vld [vmem:[#allocation14 + $0x13c] sm:$0xf]
        %v10100 = vunpack.c.l.b16 %v9924
        %v10101 = vunpack.c.h.b16 %v9924
        %v10102 = vunpack.c.l.b16 %v9925
        %v10103 = vunpack.c.h.b16 %v9925
        %v10104 = vunpack.c.l.b16 %v9926
        %v10105 = vunpack.c.l.b16 %v9927
        %v10106 = vunpack.c.h.b16 %v9927
        %v10107 = vunpack.c.l.b16 %v9928
        %v10108 = vunpack.c.h.b16 %v9928
        %v10109 = vunpack.c.l.b16 %v9929
        %v10110 = vunpack.c.l.b16 %v9930
        %v10111 = vunpack.c.h.b16 %v9930
        %v10112 = vunpack.c.l.b16 %v9931
        %v10113 = vunpack.c.h.b16 %v9931
        %v10114 = vunpack.c.l.b16 %v9932
        %v10115 = vunpack.c.l.b16 %v9933
        %v10116 = vunpack.c.h.b16 %v9933
        %v10117 = vunpack.c.l.b16 %v9934
        %v10118 = vunpack.c.h.b16 %v9934
        %v10119 = vunpack.c.l.b16 %v9935
        %v10120 = vunpack.c.l.b16 %v9936
        %v10121 = vunpack.c.h.b16 %v9936
        %v10122 = vunpack.c.l.b16 %v9937
        %v10123 = vunpack.c.h.b16 %v9937
        %v10124 = vunpack.c.l.b16 %v9938
        %v10125 = vunpack.c.l.b16 %v9939
        %v10126 = vunpack.c.h.b16 %v9939
        %v10127 = vunpack.c.l.b16 %v9940
        %v10128 = vunpack.c.h.b16 %v9940
        %v10129 = vunpack.c.l.b16 %v9941
        %v10130 = vunpack.c.l.b16 %v9942
        %v10131 = vunpack.c.h.b16 %v9942
        %v10132 = vunpack.c.l.b16 %v9943
        %v10133 = vunpack.c.h.b16 %v9943
        %v10134 = vunpack.c.l.b16 %v9944
        %v10135 = vunpack.c.l.b16 %v9945
        %v10136 = vunpack.c.h.b16 %v9945
        %v10137 = vunpack.c.l.b16 %v9946
        %v10138 = vunpack.c.h.b16 %v9946
        %v10139 = vunpack.c.l.b16 %v9947
        %v10140 = vunpack.c.l.b16 %v9948
        %v10141 = vunpack.c.h.b16 %v9948
        %v10142 = vunpack.c.l.b16 %v9949
        %v10143 = vunpack.c.h.b16 %v9949
        %v10144 = vunpack.c.l.b16 %v9950
        %v10145 = vunpack.c.l.b16 %v9951
        %v10146 = vunpack.c.h.b16 %v9951
        %v10147 = vunpack.c.l.b16 %v9952
        %v10148 = vunpack.c.h.b16 %v9952
        %v10149 = vunpack.c.l.b16 %v9953
        %v10150 = vunpack.c.l.b16 %v9954
        %v10151 = vunpack.c.h.b16 %v9954
        %v10152 = vunpack.c.l.b16 %v9955
        %v10153 = vunpack.c.h.b16 %v9955
        %v10154 = vunpack.c.l.b16 %v9956
        %v10155 = vunpack.c.l.b16 %v9957
        %v10156 = vunpack.c.h.b16 %v9957
        %v10157 = vunpack.c.l.b16 %v9958
        %v10158 = vunpack.c.h.b16 %v9958
        %v10159 = vunpack.c.l.b16 %v9959
        %v10160 = vunpack.c.l.b16 %v9960
        %v10161 = vunpack.c.h.b16 %v9960
        %v10162 = vunpack.c.l.b16 %v9961
        %v10163 = vunpack.c.h.b16 %v9961
        %v10164 = vunpack.c.l.b16 %v9962
        %v10165 = vunpack.c.l.b16 %v9963
        %v10166 = vunpack.c.h.b16 %v9963
        %v10167 = vunpack.c.l.b16 %v9964
        %v10168 = vunpack.c.h.b16 %v9964
        %v10169 = vunpack.c.l.b16 %v9965
        %v10170 = vunpack.c.l.b16 %v9966
        %v10171 = vunpack.c.h.b16 %v9966
        %v10172 = vunpack.c.l.b16 %v9967
        %v10173 = vunpack.c.h.b16 %v9967
        %v10174 = vunpack.c.l.b16 %v9968
        %v10175 = vunpack.c.l.b16 %v9969
        %v10176 = vunpack.c.h.b16 %v9969
        %v10177 = vunpack.c.l.b16 %v9970
        %v10178 = vunpack.c.h.b16 %v9970
        %v10179 = vunpack.c.l.b16 %v9971
        %v10180 = vpack.c.b16 %v10105, %v10100
        %v10181 = vpack.c.b16 %v10106, %v10101
        %v10182 = vpack.c.b16 %v10107, %v10102
        %v10183 = vpack.c.b16 %v10108, %v10103
        %v10184 = vpack.c.b16 %v10109, %v10104
        %v10185 = vpack.c.b16 %v10115, %v10110
        %v10186 = vpack.c.b16 %v10116, %v10111
        %v10187 = vpack.c.b16 %v10117, %v10112
        %v10188 = vpack.c.b16 %v10118, %v10113
        %v10189 = vpack.c.b16 %v10119, %v10114
        %v10190 = vpack.c.b16 %v10125, %v10120
        %v10191 = vpack.c.b16 %v10126, %v10121
        %v10192 = vpack.c.b16 %v10127, %v10122
        %v10193 = vpack.c.b16 %v10128, %v10123
        %v10194 = vpack.c.b16 %v10129, %v10124
        %v10195 = vpack.c.b16 %v10135, %v10130
        %v10196 = vpack.c.b16 %v10136, %v10131
        %v10197 = vpack.c.b16 %v10137, %v10132
        %v10198 = vpack.c.b16 %v10138, %v10133
        %v10199 = vpack.c.b16 %v10139, %v10134
        %v10200 = vpack.c.b16 %v10145, %v10140
        %v10201 = vpack.c.b16 %v10146, %v10141
        %v10202 = vpack.c.b16 %v10147, %v10142
        %v10203 = vpack.c.b16 %v10148, %v10143
        %v10204 = vpack.c.b16 %v10149, %v10144
        %v10205 = vpack.c.b16 %v10155, %v10150
        %v10206 = vpack.c.b16 %v10156, %v10151
        %v10207 = vpack.c.b16 %v10157, %v10152
        %v10208 = vpack.c.b16 %v10158, %v10153
        %v10209 = vpack.c.b16 %v10159, %v10154
        %v10210 = vpack.c.b16 %v10165, %v10160
        %v10211 = vpack.c.b16 %v10166, %v10161
        %v10212 = vpack.c.b16 %v10167, %v10162
        %v10213 = vpack.c.b16 %v10168, %v10163
        %v10214 = vpack.c.b16 %v10169, %v10164
        %v10215 = vpack.c.b16 %v10175, %v10170
        %v10216 = vpack.c.b16 %v10176, %v10171
        %v10217 = vpack.c.b16 %v10177, %v10172
        %v10218 = vpack.c.b16 %v10178, %v10173
        %v10219 = vpack.c.b16 %v10179, %v10174
        %v10340 = vunpack.c.l.b16 %v9972
        %v10341 = vunpack.c.l.b16 %v9973
        %v10342 = vunpack.c.l.b16 %v9974
        %v10343 = vunpack.c.l.b16 %v9975
        %v10344 = vunpack.c.l.b16 %v9976
        %v10345 = vunpack.c.l.b16 %v9977
        %v10346 = vunpack.c.l.b16 %v9978
        %v10347 = vunpack.c.l.b16 %v9979
        %v10348 = vunpack.c.l.b16 %v9980
        %v10349 = vunpack.c.l.b16 %v9981
        %v10350 = vunpack.c.l.b16 %v9982
        %v10351 = vunpack.c.l.b16 %v9983
        %v10352 = vunpack.c.l.b16 %v9984
        %v10353 = vunpack.c.l.b16 %v9985
        %v10354 = vunpack.c.l.b16 %v9986
        %v10355 = vunpack.c.l.b16 %v9987
        %v10356 = vunpack.c.l.b16 %v9988
        %v10357 = vunpack.c.l.b16 %v9989
        %v10358 = vunpack.c.l.b16 %v9990
        %v10359 = vunpack.c.l.b16 %v9991
        %v10360 = vunpack.c.l.b16 %v9992
        %v10361 = vunpack.c.l.b16 %v9993
        %v10362 = vunpack.c.l.b16 %v9994
        %v10363 = vunpack.c.l.b16 %v9995
        %v10364 = vunpack.c.l.b16 %v9996
        %v10365 = vunpack.c.l.b16 %v9997
        %v10366 = vunpack.c.l.b16 %v9998
        %v10367 = vunpack.c.l.b16 %v9999
        %v10368 = vunpack.c.l.b16 %v10000
        %v10369 = vunpack.c.l.b16 %v10001
        %v10370 = vunpack.c.l.b16 %v10002
        %v10371 = vunpack.c.l.b16 %v10003
        %v10372 = vunpack.c.l.b16 %v10004
        %v10373 = vunpack.c.l.b16 %v10005
        %v10374 = vunpack.c.l.b16 %v10006
        %v10375 = vunpack.c.l.b16 %v10007
        %v10376 = vunpack.c.l.b16 %v10008
        %v10377 = vunpack.c.l.b16 %v10009
        %v10378 = vunpack.c.l.b16 %v10010
        %v10379 = vunpack.c.l.b16 %v10011
        %v10380 = vunpack.c.l.b16 %v10012
        %v10381 = vunpack.c.l.b16 %v10013
        %v10382 = vunpack.c.l.b16 %v10014
        %v10383 = vunpack.c.l.b16 %v10015
        %v10384 = vunpack.c.l.b16 %v10016
        %v10385 = vunpack.c.l.b16 %v10017
        %v10386 = vunpack.c.l.b16 %v10018
        %v10387 = vunpack.c.l.b16 %v10019
        %v10388 = vunpack.c.l.b16 %v10020
        %v10389 = vunpack.c.l.b16 %v10021
        %v10390 = vunpack.c.l.b16 %v10022
        %v10391 = vunpack.c.l.b16 %v10023
        %v10392 = vunpack.c.l.b16 %v10024
        %v10393 = vunpack.c.l.b16 %v10025
        %v10394 = vunpack.c.l.b16 %v10026
        %v10395 = vunpack.c.l.b16 %v10027
        %v10396 = vunpack.c.l.b16 %v10028
        %v10397 = vunpack.c.l.b16 %v10029
        %v10398 = vunpack.c.l.b16 %v10030
        %v10399 = vunpack.c.l.b16 %v10031
        %v10400 = vunpack.c.l.b16 %v10032
        %v10401 = vunpack.c.l.b16 %v10033
        %v10402 = vunpack.c.l.b16 %v10034
        %v10403 = vunpack.c.l.b16 %v10035
        %v10404 = vunpack.c.l.b16 %v10036
        %v10405 = vunpack.c.l.b16 %v10037
        %v10406 = vunpack.c.l.b16 %v10038
        %v10407 = vunpack.c.l.b16 %v10039
        %v10408 = vunpack.c.l.b16 %v10040
        %v10409 = vunpack.c.l.b16 %v10041
        %v10410 = vunpack.c.l.b16 %v10042
        %v10411 = vunpack.c.l.b16 %v10043
        %v10412 = vunpack.c.l.b16 %v10044
        %v10413 = vunpack.c.l.b16 %v10045
        %v10414 = vunpack.c.l.b16 %v10046
        %v10415 = vunpack.c.l.b16 %v10047
        %v10416 = vunpack.c.l.b16 %v10048
        %v10417 = vunpack.c.l.b16 %v10049
        %v10418 = vunpack.c.l.b16 %v10050
        %v10419 = vunpack.c.l.b16 %v10051
        %v10420 = vpack.c.b16 %v10341, %v10340
        %v10421 = vpack.c.b16 %v10343, %v10342
        %v10422 = vpack.c.b16 %v10345, %v10344
        %v10423 = vpack.c.b16 %v10347, %v10346
        %v10424 = vpack.c.b16 %v10349, %v10348
        %v10425 = vpack.c.b16 %v10351, %v10350
        %v10426 = vpack.c.b16 %v10353, %v10352
        %v10427 = vpack.c.b16 %v10355, %v10354
        %v10428 = vpack.c.b16 %v10357, %v10356
        %v10429 = vpack.c.b16 %v10359, %v10358
        %v10430 = vpack.c.b16 %v10361, %v10360
        %v10431 = vpack.c.b16 %v10363, %v10362
        %v10432 = vpack.c.b16 %v10365, %v10364
        %v10433 = vpack.c.b16 %v10367, %v10366
        %v10434 = vpack.c.b16 %v10369, %v10368
        %v10435 = vpack.c.b16 %v10371, %v10370
        %v10436 = vpack.c.b16 %v10373, %v10372
        %v10437 = vpack.c.b16 %v10375, %v10374
        %v10438 = vpack.c.b16 %v10377, %v10376
        %v10439 = vpack.c.b16 %v10379, %v10378
        %v10440 = vpack.c.b16 %v10381, %v10380
        %v10441 = vpack.c.b16 %v10383, %v10382
        %v10442 = vpack.c.b16 %v10385, %v10384
        %v10443 = vpack.c.b16 %v10387, %v10386
        %v10444 = vpack.c.b16 %v10389, %v10388
        %v10445 = vpack.c.b16 %v10391, %v10390
        %v10446 = vpack.c.b16 %v10393, %v10392
        %v10447 = vpack.c.b16 %v10395, %v10394
        %v10448 = vpack.c.b16 %v10397, %v10396
        %v10449 = vpack.c.b16 %v10399, %v10398
        %v10450 = vpack.c.b16 %v10401, %v10400
        %v10451 = vpack.c.b16 %v10403, %v10402
        %v10452 = vpack.c.b16 %v10405, %v10404
        %v10453 = vpack.c.b16 %v10407, %v10406
        %v10454 = vpack.c.b16 %v10409, %v10408
        %v10455 = vpack.c.b16 %v10411, %v10410
        %v10456 = vpack.c.b16 %v10413, %v10412
        %v10457 = vpack.c.b16 %v10415, %v10414
        %v10458 = vpack.c.b16 %v10417, %v10416
        %v10459 = vpack.c.b16 %v10419, %v10418
        %10500 = vmatprep.subr.bf16.mxu0 0
        %10501 = vmatpush1.bf16.msra.mxu0 %v10427
        %10502 = vmatprep.subr.bf16.mxu0 0
        %10503 = vmatpush1.bf16.msra.mxu0 %v10426
        %10504 = vmatprep.subr.bf16.mxu0 0
        %10505 = vmatpush1.bf16.msra.mxu0 %v10425
        %10506 = vmatprep.subr.bf16.mxu0 0
        %10507 = vmatpush1.bf16.msra.mxu0 %v10424
        %10508 = vmatprep.subr.bf16.mxu0 0
        %10509 = vmatpush1.bf16.msra.mxu0 %v10423
        %10510 = vmatprep.subr.bf16.mxu0 0
        %10511 = vmatpush1.bf16.msra.mxu0 %v10422
        %10512 = vmatprep.subr.bf16.mxu0 0
        %10513 = vmatpush1.bf16.msra.mxu0 %v10421
        %10514 = vmatprep.subr.bf16.mxu0 0
        %10515 = vmatpush1.bf16.msra.mxu0 %v10420
        %10516 = vmatprep.subr.bf16.mxu0 0
        %10517 = vmatpush2.bf16.msra.mxu0 %v10435
        %10518 = vmatprep.subr.bf16.mxu0 0
        %10519 = vmatpush2.bf16.msra.mxu0 %v10434
        %10520 = vmatprep.subr.bf16.mxu0 0
        %10521 = vmatpush2.bf16.msra.mxu0 %v10433
        %10522 = vmatprep.subr.bf16.mxu0 0
        %10523 = vmatpush2.bf16.msra.mxu0 %v10432
        %10524 = vmatprep.subr.bf16.mxu0 0
        %10525 = vmatpush2.bf16.msra.mxu0 %v10431
        %10526 = vmatprep.subr.bf16.mxu0 0
        %10527 = vmatpush2.bf16.msra.mxu0 %v10430
        %10528 = vmatprep.subr.bf16.mxu0 0
        %10529 = vmatpush2.bf16.msra.mxu0 %v10429
        %10530 = vmatprep.subr.bf16.mxu0 0
        %10531 = vmatpush2.bf16.msra.mxu0 %v10428
        %10532 = vmatprep.mubr.bf16.mxu0 %v10181
        %10533 = vmatmul.mubr.bf16.gmra.mxu0 %v10180
        %v10534 = vpop.f32.mrf.mxu0
        %v10535 = vadd.f32 0.0, %v10534
        %v10536 = vpop.f32.mrf.mxu0
        %v10537 = vpop.f32.mrf.mxu0
        %v10538 = vadd.f32 0.0, %v10537
        %v10539 = vpop.f32.mrf.mxu0
        %10540 = vmatprep.mubr.bf16.mxu0 %v10186
        %10541 = vmatmul.mubr.bf16.gmra.mxu0 %v10185
        %v10542 = vpop.f32.mrf.mxu0
        %v10543 = vadd.f32 0.0, %v10542
        %v10544 = vpop.f32.mrf.mxu0
        %v10545 = vpop.f32.mrf.mxu0
        %v10546 = vadd.f32 0.0, %v10545
        %v10547 = vpop.f32.mrf.mxu0
        %10548 = vmatprep.mubr.bf16.mxu0 %v10191
        %10549 = vmatmul.mubr.bf16.gmra.mxu0 %v10190
        %v10550 = vpop.f32.mrf.mxu0
        %v10551 = vadd.f32 0.0, %v10550
        %v10552 = vpop.f32.mrf.mxu0
        %v10553 = vpop.f32.mrf.mxu0
        %v10554 = vadd.f32 0.0, %v10553
        %v10555 = vpop.f32.mrf.mxu0
        %10556 = vmatprep.mubr.bf16.mxu0 %v10196
        %10557 = vmatmul.mubr.bf16.gmra.mxu0 %v10195
        %v10558 = vpop.f32.mrf.mxu0
        %v10559 = vadd.f32 0.0, %v10558
        %v10560 = vpop.f32.mrf.mxu0
        %v10561 = vpop.f32.mrf.mxu0
        %v10562 = vadd.f32 0.0, %v10561
        %v10563 = vpop.f32.mrf.mxu0
        %10564 = vmatprep.mubr.bf16.mxu0 %v10201
        %10565 = vmatmul.mubr.bf16.gmra.mxu0 %v10200
        %v10566 = vpop.f32.mrf.mxu0
        %v10567 = vadd.f32 0.0, %v10566
        %v10568 = vpop.f32.mrf.mxu0
        %v10569 = vpop.f32.mrf.mxu0
        %v10570 = vadd.f32 0.0, %v10569
        %v10571 = vpop.f32.mrf.mxu0
        %10572 = vmatprep.mubr.bf16.mxu0 %v10206
        %10573 = vmatmul.mubr.bf16.gmra.mxu0 %v10205
        %v10574 = vpop.f32.mrf.mxu0
        %v10575 = vadd.f32 0.0, %v10574
        %v10576 = vpop.f32.mrf.mxu0
        %v10577 = vpop.f32.mrf.mxu0
        %v10578 = vadd.f32 0.0, %v10577
        %v10579 = vpop.f32.mrf.mxu0
        %10580 = vmatprep.mubr.bf16.mxu0 %v10211
        %10581 = vmatmul.mubr.bf16.gmra.mxu0 %v10210
        %v10582 = vpop.f32.mrf.mxu0
        %v10583 = vadd.f32 0.0, %v10582
        %v10584 = vpop.f32.mrf.mxu0
        %v10585 = vpop.f32.mrf.mxu0
        %v10586 = vadd.f32 0.0, %v10585
        %v10587 = vpop.f32.mrf.mxu0
        %10588 = vmatprep.mubr.bf16.mxu0 %v10216
        %10589 = vmatmul.mubr.bf16.gmra.mxu0 %v10215
        %v10590 = vpop.f32.mrf.mxu0
        %v10591 = vadd.f32 0.0, %v10590
        %v10592 = vpop.f32.mrf.mxu0
        %v10593 = vpop.f32.mrf.mxu0
        %v10594 = vadd.f32 0.0, %v10593
        %v10595 = vpop.f32.mrf.mxu0
        %10596 = vdwg.mxu0
        %10597 = vmatprep.subr.bf16.mxu0 0
        %10598 = vmatpush1.bf16.msra.mxu0 %v10443
        %10599 = vmatprep.subr.bf16.mxu0 0
        %10600 = vmatpush1.bf16.msra.mxu0 %v10442
        %10601 = vmatprep.subr.bf16.mxu0 0
        %10602 = vmatpush1.bf16.msra.mxu0 %v10441
        %10603 = vmatprep.subr.bf16.mxu0 0
        %10604 = vmatpush1.bf16.msra.mxu0 %v10440
        %10605 = vmatprep.subr.bf16.mxu0 0
        %10606 = vmatpush1.bf16.msra.mxu0 %v10439
        %10607 = vmatprep.subr.bf16.mxu0 0
        %10608 = vmatpush1.bf16.msra.mxu0 %v10438
        %10609 = vmatprep.subr.bf16.mxu0 0
        %10610 = vmatpush1.bf16.msra.mxu0 %v10437
        %10611 = vmatprep.subr.bf16.mxu0 0
        %10612 = vmatpush1.bf16.msra.mxu0 %v10436
        %10613 = vmatprep.subr.bf16.mxu0 0
        %10614 = vmatpush2.bf16.msra.mxu0 %v10451
        %10615 = vmatprep.subr.bf16.mxu0 0
        %10616 = vmatpush2.bf16.msra.mxu0 %v10450
        %10617 = vmatprep.subr.bf16.mxu0 0
        %10618 = vmatpush2.bf16.msra.mxu0 %v10449
        %10619 = vmatprep.subr.bf16.mxu0 0
        %10620 = vmatpush2.bf16.msra.mxu0 %v10448
        %10621 = vmatprep.subr.bf16.mxu0 0
        %10622 = vmatpush2.bf16.msra.mxu0 %v10447
        %10623 = vmatprep.subr.bf16.mxu0 0
        %10624 = vmatpush2.bf16.msra.mxu0 %v10446
        %10625 = vmatprep.subr.bf16.mxu0 0
        %10626 = vmatpush2.bf16.msra.mxu0 %v10445
        %10627 = vmatprep.subr.bf16.mxu0 0
        %10628 = vmatpush2.bf16.msra.mxu0 %v10444
        %10629 = vmatprep.mubr.bf16.mxu0 %v10183
        %10630 = vmatmul.mubr.bf16.gmra.mxu0 %v10182
        %v10631 = vpop.f32.mrf.mxu0
        %v10632 = vadd.f32 %v10535, %v10631
        %v10633 = vpop.f32.mrf.mxu0
        %v10634 = vpop.f32.mrf.mxu0
        %v10635 = vadd.f32 %v10538, %v10634
        %v10636 = vpop.f32.mrf.mxu0
        %10637 = vmatprep.mubr.bf16.mxu0 %v10188
        %10638 = vmatmul.mubr.bf16.gmra.mxu0 %v10187
        %v10639 = vpop.f32.mrf.mxu0
        %v10640 = vadd.f32 %v10543, %v10639
        %v10641 = vpop.f32.mrf.mxu0
        %v10642 = vpop.f32.mrf.mxu0
        %v10643 = vadd.f32 %v10546, %v10642
        %v10644 = vpop.f32.mrf.mxu0
        %10645 = vmatprep.mubr.bf16.mxu0 %v10193
        %10646 = vmatmul.mubr.bf16.gmra.mxu0 %v10192
        %v10647 = vpop.f32.mrf.mxu0
        %v10648 = vadd.f32 %v10551, %v10647
        %v10649 = vpop.f32.mrf.mxu0
        %v10650 = vpop.f32.mrf.mxu0
        %v10651 = vadd.f32 %v10554, %v10650
        %v10652 = vpop.f32.mrf.mxu0
        %10653 = vmatprep.mubr.bf16.mxu0 %v10198
        %10654 = vmatmul.mubr.bf16.gmra.mxu0 %v10197
        %v10655 = vpop.f32.mrf.mxu0
        %v10656 = vadd.f32 %v10559, %v10655
        %v10657 = vpop.f32.mrf.mxu0
        %v10658 = vpop.f32.mrf.mxu0
        %v10659 = vadd.f32 %v10562, %v10658
        %v10660 = vpop.f32.mrf.mxu0
        %10661 = vmatprep.mubr.bf16.mxu0 %v10203
        %10662 = vmatmul.mubr.bf16.gmra.mxu0 %v10202
        %v10663 = vpop.f32.mrf.mxu0
        %v10664 = vadd.f32 %v10567, %v10663
        %v10665 = vpop.f32.mrf.mxu0
        %v10666 = vpop.f32.mrf.mxu0
        %v10667 = vadd.f32 %v10570, %v10666
        %v10668 = vpop.f32.mrf.mxu0
        %10669 = vmatprep.mubr.bf16.mxu0 %v10208
        %10670 = vmatmul.mubr.bf16.gmra.mxu0 %v10207
        %v10671 = vpop.f32.mrf.mxu0
        %v10672 = vadd.f32 %v10575, %v10671
        %v10673 = vpop.f32.mrf.mxu0
        %v10674 = vpop.f32.mrf.mxu0
        %v10675 = vadd.f32 %v10578, %v10674
        %v10676 = vpop.f32.mrf.mxu0
        %10677 = vmatprep.mubr.bf16.mxu0 %v10213
        %10678 = vmatmul.mubr.bf16.gmra.mxu0 %v10212
        %v10679 = vpop.f32.mrf.mxu0
        %v10680 = vadd.f32 %v10583, %v10679
        %v10681 = vpop.f32.mrf.mxu0
        %v10682 = vpop.f32.mrf.mxu0
        %v10683 = vadd.f32 %v10586, %v10682
        %v10684 = vpop.f32.mrf.mxu0
        %10685 = vmatprep.mubr.bf16.mxu0 %v10218
        %10686 = vmatmul.mubr.bf16.gmra.mxu0 %v10217
        %v10687 = vpop.f32.mrf.mxu0
        %v10688 = vadd.f32 %v10591, %v10687
        %v10689 = vpop.f32.mrf.mxu0
        %v10690 = vpop.f32.mrf.mxu0
        %v10691 = vadd.f32 %v10594, %v10690
        %v10692 = vpop.f32.mrf.mxu0
        %10693 = vdwg.mxu0
        %10694 = vmatprep.subr.bf16.mxu0 0
        %10695 = vmatpush1.bf16.msra.mxu0 %v10459
        %10696 = vmatprep.subr.bf16.mxu0 0
        %10697 = vmatpush1.bf16.msra.mxu0 %v10458
        %10698 = vmatprep.subr.bf16.mxu0 0
        %10699 = vmatpush1.bf16.msra.mxu0 %v10457
        %10700 = vmatprep.subr.bf16.mxu0 0
        %10701 = vmatpush1.bf16.msra.mxu0 %v10456
        %10702 = vmatprep.subr.bf16.mxu0 0
        %10703 = vmatpush1.bf16.msra.mxu0 %v10455
        %10704 = vmatprep.subr.bf16.mxu0 0
        %10705 = vmatpush1.bf16.msra.mxu0 %v10454
        %10706 = vmatprep.subr.bf16.mxu0 0
        %10707 = vmatpush1.bf16.msra.mxu0 %v10453
        %10708 = vmatprep.subr.bf16.mxu0 0
        %10709 = vmatpush1.bf16.msra.mxu0 %v10452
        %10710 = vmatprep.subr.bf16.mxu0 0
        %10711 = vmatpush2.bf16.msra.mxu0 0
        %10712 = vmatprep.subr.bf16.mxu0 0
        %10713 = vmatpush2.bf16.msra.mxu0 0
        %10714 = vmatprep.subr.bf16.mxu0 0
        %10715 = vmatpush2.bf16.msra.mxu0 0
        %10716 = vmatprep.subr.bf16.mxu0 0
        %10717 = vmatpush2.bf16.msra.mxu0 0
        %10718 = vmatprep.subr.bf16.mxu0 0
        %10719 = vmatpush2.bf16.msra.mxu0 0
        %10720 = vmatprep.subr.bf16.mxu0 0
        %10721 = vmatpush2.bf16.msra.mxu0 0
        %10722 = vmatprep.subr.bf16.mxu0 0
        %10723 = vmatpush2.bf16.msra.mxu0 0
        %10724 = vmatprep.subr.bf16.mxu0 0
        %10725 = vmatpush2.bf16.msra.mxu0 0
        %10726 = vmatprep.mubr.bf16.mxu0 0
        %10727 = vmatmul.mubr.bf16.gmra.mxu0 %v10184
        %v10728 = vpop.f32.mrf.mxu0
        %v10729 = vadd.f32 %v10632, %v10728
        %v10730 = vpop.f32.mrf.mxu0
        %v10731 = vpop.f32.mrf.mxu0
        %v10732 = vadd.f32 %v10635, %v10731
        %v10733 = vpop.f32.mrf.mxu0
        %10734 = vmatprep.mubr.bf16.mxu0 0
        %10735 = vmatmul.mubr.bf16.gmra.mxu0 %v10189
        %v10736 = vpop.f32.mrf.mxu0
        %v10737 = vadd.f32 %v10640, %v10736
        %v10738 = vpop.f32.mrf.mxu0
        %v10739 = vpop.f32.mrf.mxu0
        %v10740 = vadd.f32 %v10643, %v10739
        %v10741 = vpop.f32.mrf.mxu0
        %10742 = vmatprep.mubr.bf16.mxu0 0
        %10743 = vmatmul.mubr.bf16.gmra.mxu0 %v10194
        %v10744 = vpop.f32.mrf.mxu0
        %v10745 = vadd.f32 %v10648, %v10744
        %v10746 = vpop.f32.mrf.mxu0
        %v10747 = vpop.f32.mrf.mxu0
        %v10748 = vadd.f32 %v10651, %v10747
        %v10749 = vpop.f32.mrf.mxu0
        %10750 = vmatprep.mubr.bf16.mxu0 0
        %10751 = vmatmul.mubr.bf16.gmra.mxu0 %v10199
        %v10752 = vpop.f32.mrf.mxu0
        %v10753 = vadd.f32 %v10656, %v10752
        %v10754 = vpop.f32.mrf.mxu0
        %v10755 = vpop.f32.mrf.mxu0
        %v10756 = vadd.f32 %v10659, %v10755
        %v10757 = vpop.f32.mrf.mxu0
        %10758 = vmatprep.mubr.bf16.mxu0 0
        %10759 = vmatmul.mubr.bf16.gmra.mxu0 %v10204
        %v10760 = vpop.f32.mrf.mxu0
        %v10761 = vadd.f32 %v10664, %v10760
        %v10762 = vpop.f32.mrf.mxu0
        %v10763 = vpop.f32.mrf.mxu0
        %v10764 = vadd.f32 %v10667, %v10763
        %v10765 = vpop.f32.mrf.mxu0
        %10766 = vmatprep.mubr.bf16.mxu0 0
        %10767 = vmatmul.mubr.bf16.gmra.mxu0 %v10209
        %v10768 = vpop.f32.mrf.mxu0
        %v10769 = vadd.f32 %v10672, %v10768
        %v10770 = vpop.f32.mrf.mxu0
        %v10771 = vpop.f32.mrf.mxu0
        %v10772 = vadd.f32 %v10675, %v10771
        %v10773 = vpop.f32.mrf.mxu0
        %10774 = vmatprep.mubr.bf16.mxu0 0
        %10775 = vmatmul.mubr.bf16.gmra.mxu0 %v10214
        %v10776 = vpop.f32.mrf.mxu0
        %v10777 = vadd.f32 %v10680, %v10776
        %v10778 = vpop.f32.mrf.mxu0
        %v10779 = vpop.f32.mrf.mxu0
        %v10780 = vadd.f32 %v10683, %v10779
        %v10781 = vpop.f32.mrf.mxu0
        %10782 = vmatprep.mubr.bf16.mxu0 0
        %10783 = vmatmul.mubr.bf16.gmra.mxu0 %v10219
        %v10784 = vpop.f32.mrf.mxu0
        %v10785 = vadd.f32 %v10688, %v10784
        %v10786 = vpop.f32.mrf.mxu0
        %v10787 = vpop.f32.mrf.mxu0
        %v10788 = vadd.f32 %v10691, %v10787
        %v10789 = vpop.f32.mrf.mxu0
        %10790 = vdwg.mxu0
        %v10791 = vadd.f32 %v8670, %v10729
        %v10792 = vadd.f32 %v8673, %v10732
        %v10793 = vadd.f32 %v8678, %v10737
        %v10794 = vadd.f32 %v8681, %v10740
        %v10795 = vadd.f32 %v8686, %v10745
        %v10796 = vadd.f32 %v8689, %v10748
        %v10797 = vadd.f32 %v8694, %v10753
        %v10798 = vadd.f32 %v8697, %v10756
        %v10799 = vadd.f32 %v8702, %v10761
        %v10800 = vadd.f32 %v8705, %v10764
        %v10801 = vadd.f32 %v8710, %v10769
        %v10802 = vadd.f32 %v8713, %v10772
        %v10803 = vadd.f32 %v8718, %v10777
        %v10804 = vadd.f32 %v8721, %v10780
        %v10805 = vadd.f32 %v8726, %v10785
        %v10806 = vadd.f32 %v8729, %v10788
        %v10807 = vtanh.pop %v10791
        %v10808 = vtanh.pop %v10792
        %v10809 = vtanh.pop %v10793
        %v10810 = vtanh.pop %v10794
        %v10811 = vtanh.pop %v10795
        %v10812 = vtanh.pop %v10796
        %v10813 = vtanh.pop %v10797
        %v10814 = vtanh.pop %v10798
        %v10815 = vtanh.pop %v10799
        %v10816 = vtanh.pop %v10800
        %v10817 = vtanh.pop %v10801
        %v10818 = vtanh.pop %v10802
        %v10819 = vtanh.pop %v10803
        %v10820 = vtanh.pop %v10804
        %v10821 = vtanh.pop %v10805
        %v10822 = vtanh.pop %v10806
        %v10823 = vsub.f32 1.0, %v8797
        %v10824 = vsub.f32 1.0, %v8799
        %v10825 = vsub.f32 1.0, %v8801
        %v10826 = vsub.f32 1.0, %v8803
        %v10827 = vsub.f32 1.0, %v8805
        %v10828 = vsub.f32 1.0, %v8807
        %v10829 = vsub.f32 1.0, %v8809
        %v10830 = vsub.f32 1.0, %v8811
        %v10831 = vsub.f32 1.0, %v8813
        %v10832 = vsub.f32 1.0, %v8815
        %v10833 = vsub.f32 1.0, %v8817
        %v10834 = vsub.f32 1.0, %v8819
        %v10835 = vsub.f32 1.0, %v8821
        %v10836 = vsub.f32 1.0, %v8823
        %v10837 = vsub.f32 1.0, %v8825
        %v10838 = vsub.f32 1.0, %v8827
        %v10839 = vmul.f32 %v10823, %v352
        %v10840 = vmul.f32 %v10824, %v353
        %v10841 = vmul.f32 %v10825, %v354
        %v10842 = vmul.f32 %v10826, %v355
        %v10843 = vmul.f32 %v10827, %v356
        %v10844 = vmul.f32 %v10828, %v357
        %v10845 = vmul.f32 %v10829, %v358
        %v10846 = vmul.f32 %v10830, %v359
        %v10847 = vmul.f32 %v10831, %v360
        %v10848 = vmul.f32 %v10832, %v361
        %v10849 = vmul.f32 %v10833, %v362
        %v10850 = vmul.f32 %v10834, %v363
        %v10851 = vmul.f32 %v10835, %v364
        %v10852 = vmul.f32 %v10836, %v365
        %v10853 = vmul.f32 %v10837, %v366
        %v10854 = vmul.f32 %v10838, %v367
        %v10855 = vmul.f32 %v8797, %v10807
        %v10856 = vmul.f32 %v8799, %v10808
        %v10857 = vmul.f32 %v8801, %v10809
        %v10858 = vmul.f32 %v8803, %v10810
        %v10859 = vmul.f32 %v8805, %v10811
        %v10860 = vmul.f32 %v8807, %v10812
        %v10861 = vmul.f32 %v8809, %v10813
        %v10862 = vmul.f32 %v8811, %v10814
        %v10863 = vmul.f32 %v8813, %v10815
        %v10864 = vmul.f32 %v8815, %v10816
        %v10865 = vmul.f32 %v8817, %v10817
        %v10866 = vmul.f32 %v8819, %v10818
        %v10867 = vmul.f32 %v8821, %v10819
        %v10868 = vmul.f32 %v8823, %v10820
        %v10869 = vmul.f32 %v8825, %v10821
        %v10870 = vmul.f32 %v8827, %v10822
        %v10871 = vadd.f32 %v10839, %v10855
        %v10872 = vadd.f32 %v10840, %v10856
        %v10873 = vadd.f32 %v10841, %v10857
        %v10874 = vadd.f32 %v10842, %v10858
        %v10875 = vadd.f32 %v10843, %v10859
        %v10876 = vadd.f32 %v10844, %v10860
        %v10877 = vadd.f32 %v10845, %v10861
        %v10878 = vadd.f32 %v10846, %v10862
        %v10879 = vadd.f32 %v10847, %v10863
        %v10880 = vadd.f32 %v10848, %v10864
        %v10881 = vadd.f32 %v10849, %v10865
        %v10882 = vadd.f32 %v10850, %v10866
        %v10883 = vadd.f32 %v10851, %v10867
        %v10884 = vadd.f32 %v10852, %v10868
        %v10885 = vadd.f32 %v10853, %v10869
        %v10886 = vadd.f32 %v10854, %v10870
        %10887 = vst [vmem:[%s347] sm:$0xff] %v10871
        %10888 = vst [vmem:[%s347 + $0x8] sm:$0xff] %v10872
        %10889 = vst [vmem:[%s347 + $0x10] sm:$0xff] %v10873
        %10890 = vst [vmem:[%s347 + $0x18] sm:$0xff] %v10874
        %10891 = vst [vmem:[%s347 + $0x20] sm:$0xff] %v10875
        %10892 = vst [vmem:[%s347 + $0x28] sm:$0xff] %v10876
        %10893 = vst [vmem:[%s347 + $0x30] sm:$0xff] %v10877
        %10894 = vst [vmem:[%s347 + $0x38] sm:$0xff] %v10878
        %10895 = vst [vmem:[%s347 + $0x40] sm:$0xff] %v10879
        %10896 = vst [vmem:[%s347 + $0x48] sm:$0xff] %v10880
        %10897 = vst [vmem:[%s347 + $0x50] sm:$0xff] %v10881
        %10898 = vst [vmem:[%s347 + $0x58] sm:$0xff] %v10882
        %10899 = vst [vmem:[%s347 + $0x60] sm:$0xff] %v10883
        %10900 = vst [vmem:[%s347 + $0x68] sm:$0xff] %v10884
        %10901 = vst [vmem:[%s347 + $0x70] sm:$0xff] %v10885
        %10902 = vst [vmem:[%s347 + $0x78] sm:$0xff] %v10886
        %s10903 = sand.u32 %s167, 1
        %s10904 = scalar_lea.sflag [#allocation8], %s10903
        %s10905 = sand.u32 %s167, 1
        %s10906 = smul.addr %s10905, 128
        %s10907 = scalar_lea.vmem [#allocation15], %s10906
        // Predicated region
        $region61: #{tpu_custom_call.1} parent=39 // pred_check
          %p10908 = pneg %p177
        $region62: #{tpu_custom_call.1} parent=39 // pred_check_branch
          %10910 = sbr.rel (%p10908) target = $region64
        $region63: #{tpu_custom_call.1} parent=39 // pred_region
          %s10911 = smul.u32 8, %s31
          %s10913 = ssub.s32 2048, 2048
          %10914 = vsyncadd %s10904, %s10913
          %s10915 = smul.addr %s10911, 2
          %s10916 = smul.addr %s30, 32
          %s10917 = sadd.s32 %s10915, %s10916
          %s10918 = smul.addr %s10917, 128
          %s10919 = scalar_lea.hbm %s5, %s10918
          %s10920 = sshll.u32 %s10907, 4
          %s10921 = int_to_ptr.vmem [resolvable:$true] %s10920
          %10926 = dma.vmem_to_hbm [thread:$0]  %s10921, 2048, %s10919, %s10904, 128, 128, 8
        $region64: #{tpu_custom_call.1} parent=39 // pred_fallthru
          _
      $region40: #{tpu_custom_call.1} parent=5 // pred_fallthru
        _
      %p10927 = scmp.le.s32.totalorder 2, %s21
      // Predicated region
      $region65: #{tpu_custom_call.1} parent=5 // pred_check
        %p10928 = pneg %p10927
      $region66: #{tpu_custom_call.1} parent=5 // pred_check_branch
        %10930 = sbr.rel (%p10928) target = $region68
      $region67: #{tpu_custom_call.1} parent=5 // pred_region
        %s10931 = ssub.s32 %s21, 2
        // Predicated region
        $region69: #{tpu_custom_call.1} parent=67 // pred_check
          %p10932 = pneg %p183
        $region70: #{tpu_custom_call.1} parent=67 // pred_check_branch
          %10934 = sbr.rel (%p10932) target = $region72
        $region71: #{tpu_custom_call.1} parent=67 // pred_region
          %s10935 = sand.u32 %s168, 1
          %s10936 = scalar_lea.sflag [#allocation8], %s10935
          %s10937 = sand.u32 %s168, 1
          %s10938 = smul.addr %s10937, 128
          %s10939 = scalar_lea.vmem [#allocation15], %s10938
          %10940 = dma.done %s10936, 2048
        $region72: #{tpu_custom_call.1} parent=67 // pred_fallthru
          _
      $region68: #{tpu_custom_call.1} parent=5 // pred_fallthru
        _
    $region6: #{tpu_custom_call.1} parent=1 // loop_footer
      %s25 = sadd.s32 1, %s21
    $region7: #{tpu_custom_call.1} parent=1 // loop_footer_branch
      %20 = sbr.rel target = $region3
    $region8: #{tpu_custom_call.1} parent=1 // loop_exit
      _
    %10941 = vsyncpa [#allocation7], 1
    %s10942 = scalar_lea.sflag [#allocation7], 1
    %10943 = vsyncpa %s10942, 1
    %10944 = vsyncpa [#allocation10], 1
    %s10945 = scalar_lea.sflag [#allocation10], 1
    %10946 = vsyncpa %s10945, 1
    %10947 = vsyncpa [#allocation13], 1
    %10948 = vsyncpa [#allocation8], 1
    %s10949 = scalar_lea.sflag [#allocation8], 1
    %10950 = vsyncpa %s10949, 1

</llo_original>
